<compile_context>
chip_gen: v7x
topology: tpu7x:2x2x1
jax: 0.10.0
libtpu: 0.0.40
codegen_flags: <defaults>
</compile_context>

<pallas_src>
import math
import functools

import jax
import jax.numpy as jnp
from jax.experimental import pallas as pl
from jax.experimental.pallas import tpu as pltpu


LN_EPS = 1e-5          # PyTorch nn.LayerNorm default
NEG_INF = -1e9


# ----------------------------- in-kernel helpers -----------------------------

def _ln(x, g, b, eps):
    """LayerNorm over the last axis (f32 math)."""
    mu = jnp.mean(x, axis=-1, keepdims=True)
    xc = x - mu
    var = jnp.mean(xc * xc, axis=-1, keepdims=True)
    return xc * jax.lax.rsqrt(var + eps) * g + b


def _proj(x, w_ref, b_ref):
    """Linear layer: bf16 operands on the MXU, f32 accumulate, f32 bias add."""
    return jnp.dot(x.astype(jnp.bfloat16), w_ref[...],
                   preferred_element_type=jnp.float32) + b_ref[...]


def _mha(q, k, v, add_mask, ctx_ref, *, B, Sq, Sk, num_heads):
    """Multi-head scaled-dot attention on batch-folded operands.

    q: (B*Sq, D) f32; k, v: (B*Sk, D) f32; add_mask broadcastable to
    (B, Sq, Sk) additive f32 (-1e9 where masked).  Heads are a static unroll;
    within a head the score / P.V matmuls are batched over B via a single
    leading-batch-dim einsum with bf16 MXU operands and f32 accumulation.
    Each head's context is written into the VMEM scratch `ctx_ref` at a static
    column offset (no lane-axis concatenate).
    """
    D = q.shape[-1]
    Dh = D // num_heads
    scale = 1.0 / math.sqrt(Dh)
    qb = q.reshape(B, Sq, D).astype(jnp.bfloat16)
    kb = k.reshape(B, Sk, D).astype(jnp.bfloat16)
    vb = v.reshape(B, Sk, D).astype(jnp.bfloat16)
    for h in range(num_heads):
        lo, hi = h * Dh, (h + 1) * Dh
        s = jnp.einsum('bqd,bkd->bqk', qb[:, :, lo:hi], kb[:, :, lo:hi],
                       preferred_element_type=jnp.float32) * scale
        s = s + add_mask                                   # f32 mask add
        s = s - jnp.max(s, axis=-1, keepdims=True)
        e = jnp.exp(s)
        p = e * pl.reciprocal(jnp.sum(e, axis=-1, keepdims=True), approx=True)
        ctx = jnp.einsum('bqk,bkd->bqd', p.astype(jnp.bfloat16),
                         vb[:, :, lo:hi], preferred_element_type=jnp.float32)
        ctx_ref[:, lo:hi] = ctx.reshape(B * Sq, Dh)
    return ctx_ref[...]


# ------------------------------- fused kernels -------------------------------

def _encoder_layer_kernel(x_ref, mask_ref,
                          wqkv_ref, bqkv_ref, wo_ref, bo_ref,
                          ln1_g_ref, ln1_b_ref,
                          w1_ref, b1_ref, w2_ref, b2_ref,
                          ln2_g_ref, ln2_b_ref,
                          o_ref, ctx_ref, *, B, S, num_heads, eps):
    x = x_ref[...].astype(jnp.float32)                    # (B*S, D)
    D = x.shape[-1]

    qkv = _proj(x, wqkv_ref, bqkv_ref)                    # (B*S, 3D) f32
    ctx = _mha(qkv[:, :D], qkv[:, D:2 * D], qkv[:, 2 * D:],
               mask_ref[...], ctx_ref, B=B, Sq=S, Sk=S, num_heads=num_heads)
    attn_out = _proj(ctx, wo_ref, bo_ref)

    h = _ln(x + attn_out, ln1_g_ref[...], ln1_b_ref[...], eps)

    f = jnp.maximum(_proj(h, w1_ref, b1_ref), 0.0)        # ReLU
    f = _proj(f, w2_ref, b2_ref)

    o_ref[...] = _ln(h + f, ln2_g_ref[...], ln2_b_ref[...], eps).astype(o_ref.dtype)


def _decoder_layer_kernel(x_ref, enc_ref, la_mask_ref, pad_mask_ref,
                          wqkv1_ref, bqkv1_ref, wo1_ref, bo1_ref,
                          ln1_g_ref, ln1_b_ref,
                          wq2_ref, bq2_ref, wkv2_ref, bkv2_ref,
                          wo2_ref, bo2_ref,
                          ln2_g_ref, ln2_b_ref,
                          w1_ref, b1_ref, w2_ref, b2_ref,
                          ln3_g_ref, ln3_b_ref,
                          o_ref, ctx_ref, *, B, St, Ss, num_heads, eps):
    x = x_ref[...].astype(jnp.float32)                    # (B*St, D)
    D = x.shape[-1]

    # --- masked self-attention ---
    qkv = _proj(x, wqkv1_ref, bqkv1_ref)                  # (B*St, 3D)
    ctx1 = _mha(qkv[:, :D], qkv[:, D:2 * D], qkv[:, 2 * D:],
                la_mask_ref[...], ctx_ref, B=B, Sq=St, Sk=St,
                num_heads=num_heads)
    h1 = _ln(x + _proj(ctx1, wo1_ref, bo1_ref),
             ln1_g_ref[...], ln1_b_ref[...], eps)

    # --- cross-attention (Q from decoder, K/V from encoder output) ---
    q2 = _proj(h1, wq2_ref, bq2_ref)                      # (B*St, D)
    kv2 = _proj(enc_ref[...], wkv2_ref, bkv2_ref)         # (B*Ss, 2D)
    ctx2 = _mha(q2, kv2[:, :D], kv2[:, D:],
                pad_mask_ref[...], ctx_ref, B=B, Sq=St, Sk=Ss,
                num_heads=num_heads)
    h2 = _ln(h1 + _proj(ctx2, wo2_ref, bo2_ref),
             ln2_g_ref[...], ln2_b_ref[...], eps)

    # --- feed-forward ---
    f = jnp.maximum(_proj(h2, w1_ref, b1_ref), 0.0)
    f = _proj(f, w2_ref, b2_ref)

    o_ref[...] = _ln(h2 + f, ln3_g_ref[...], ln3_b_ref[...], eps).astype(o_ref.dtype)


def _final_linear_kernel(x_ref, w_ref, b_ref, o_ref):
    o_ref[...] = (jnp.dot(x_ref[...], w_ref[...],
                          preferred_element_type=jnp.float32) + b_ref[...])


# ------------------------------- call wrappers --------------------------------

def encoder_layer_forward(x2d, add_mask, lw, B, S, num_heads):
    M, D = x2d.shape
    kernel = functools.partial(_encoder_layer_kernel, B=B, S=S,
                               num_heads=num_heads, eps=LN_EPS)
    # Grid-less call: whole (B*S, D) activation, compact mask and all weights
    # live in VMEM for the duration of the fused layer.
    # TODO(synk): at real speech lengths (S >= 1k) add Sq/Sk tiling (flash
    # style) and a batch-tile grid axis for v7x's 2 TensorCores / 64 MiB VMEM.
    return pl.pallas_call(
        kernel,
        out_shape=jax.ShapeDtypeStruct((M, D), jnp.bfloat16),
        scratch_shapes=[pltpu.VMEM((M, D), jnp.float32)],
    )(x2d, add_mask, *lw)


def decoder_layer_forward(x2d, enc2d, la_mask, pad_mask, lw, B, St, Ss, num_heads):
    M, D = x2d.shape
    kernel = functools.partial(_decoder_layer_kernel, B=B, St=St, Ss=Ss,
                               num_heads=num_heads, eps=LN_EPS)
    return pl.pallas_call(
        kernel,
        out_shape=jax.ShapeDtypeStruct((M, D), jnp.bfloat16),
        scratch_shapes=[pltpu.VMEM((M, D), jnp.float32)],
    )(x2d, enc2d, la_mask, pad_mask, *lw)


def final_projection(x2d, w_pad, b_pad):
    """Tiled, lane-dense vocab projection on the padded vocab."""
    M, D = x2d.shape
    Vp = w_pad.shape[1]
    tm = 128 if (M % 128 == 0) else M
    tv = 512 if (Vp % 512 == 0) else 128
    grid = (M // tm, Vp // tv)
    return pl.pallas_call(
        _final_linear_kernel,
        grid=grid,
        in_specs=[pl.BlockSpec((tm, D), lambda i, j: (i, 0)),
                  pl.BlockSpec((D, tv), lambda i, j: (0, j)),
                  pl.BlockSpec((1, tv), lambda i, j: (0, j))],
        out_specs=pl.BlockSpec((tm, tv), lambda i, j: (i, j)),
        out_shape=jax.ShapeDtypeStruct((M, Vp), jnp.float32),
        compiler_params=pltpu.CompilerParams(
            dimension_semantics=("parallel", "parallel")),
    )(x2d, w_pad, b_pad)


# ------------------------------ model glue ------------------------------------

def positional_encoding(length, d_model):
    pos = jnp.arange(length, dtype=jnp.float32)[:, None]
    i = jnp.arange(d_model)[None, :]
    angle_rates = 1.0 / jnp.power(
        10000.0, (2 * (i // 2)).astype(jnp.float32) / d_model)
    angle_rads = pos * angle_rates
    pe = jnp.where(i % 2 == 0, jnp.sin(angle_rads), jnp.cos(angle_rads))
    return pe[None, ...].astype(jnp.float32)              # (1, length, d_model)


def encoder_forward(inp, enc_add_mask, fast, num_heads):
    B, S, D = inp.shape
    x = inp * jnp.sqrt(jnp.float32(D)) + positional_encoding(S, D)
    # TODO(synk): dropout is identity in inference mode.
    x2d = x.reshape(B * S, D).astype(jnp.bfloat16)
    for lw in fast["enc"]:
        x2d = encoder_layer_forward(x2d, enc_add_mask, lw, B, S, num_heads)
    return x2d                                            # (B*S, D) bf16


def decoder_forward(tar, enc2d, Ss, la_add, pad_add, fast, num_heads, vocab):
    B, St = tar.shape
    D = enc2d.shape[-1]
    # TODO(synk): embedding gather stays in plain-JAX glue (tiny lookup).
    x = jnp.take(fast["embedding"], tar, axis=0) * jnp.sqrt(jnp.float32(D))
    x = x + positional_encoding(St, D)
    x2d = x.reshape(B * St, D).astype(jnp.bfloat16)
    for lw in fast["dec"]:
        x2d = decoder_layer_forward(x2d, enc2d, la_add, pad_add, lw,
                                    B, St, Ss, num_heads)
    logits_pad = final_projection(x2d, fast["final_w"], fast["final_b"])
    return logits_pad[:, :vocab].reshape(B, St, vocab)


def transformer_forward(inputs, enc_padding_mask, look_ahead_mask,
                        dec_padding_mask, fast, num_heads, vocab):
    inp, tar = inputs
    B, S_inp, _ = inp.shape
    # Compact additive masks (1.0 = masked, TF-tutorial convention):
    #   padding masks stay (B, 1, Sk) and broadcast inside the kernel;
    #   the look-ahead mask keeps its (B, St, St) structure.
    enc_add = enc_padding_mask.astype(jnp.float32)[:, 0, :, :] * NEG_INF  # (B,1,S)
    la_add = look_ahead_mask.astype(jnp.float32)[:, 0, :, :] * NEG_INF    # (B,St,St)
    dec_add = dec_padding_mask.astype(jnp.float32)[:, 0, :, :] * NEG_INF  # (B,1,S)
    enc2d = encoder_forward(inp, enc_add, fast, num_heads)
    return decoder_forward(tar, enc2d, S_inp, la_add, dec_add,
                           fast, num_heads, vocab)


# --------------------------- parameter preparation -----------------------------
# Done ONCE (outside the jitted forward): weight fusion, bf16 casts, bias
# reshapes and vocab padding never re-run per call.

def _prep_fused_qkv(mha):
    wqkv = jnp.concatenate([mha["wq"], mha["wk"], mha["wv"]],
                           axis=1).astype(jnp.bfloat16)
    bqkv = jnp.concatenate([mha["bq"], mha["bk"], mha["bv"]]).reshape(1, -1)
    return wqkv, bqkv


def prepare_params(params):
    D = params["final_w"].shape[0]
    V = params["final_w"].shape[1]
    Vp = ((V + 127) // 128) * 128                         # lane-dense vocab pad

    fast = {"enc": [], "dec": []}
    for lp in params["enc"]:
        wqkv, bqkv = _prep_fused_qkv(lp["mha"])
        fast["enc"].append((
            wqkv, bqkv,
            lp["mha"]["wo"].astype(jnp.bfloat16), lp["mha"]["bo"].reshape(1, -1),
            lp["ln1_g"].reshape(1, -1), lp["ln1_b"].reshape(1, -1),
            lp["ffn_w1"].astype(jnp.bfloat16), lp["ffn_b1"].reshape(1, -1),
            lp["ffn_w2"].astype(jnp.bfloat16), lp["ffn_b2"].reshape(1, -1),
            lp["ln2_g"].reshape(1, -1), lp["ln2_b"].reshape(1, -1),
        ))
    for lp in params["dec"]:
        m1, m2 = lp["mha1"], lp["mha2"]
        wqkv1, bqkv1 = _prep_fused_qkv(m1)
        wkv2 = jnp.concatenate([m2["wk"], m2["wv"]], axis=1).astype(jnp.bfloat16)
        bkv2 = jnp.concatenate([m2["bk"], m2["bv"]]).reshape(1, -1)
        fast["dec"].append((
            wqkv1, bqkv1,
            m1["wo"].astype(jnp.bfloat16), m1["bo"].reshape(1, -1),
            lp["ln1_g"].reshape(1, -1), lp["ln1_b"].reshape(1, -1),
            m2["wq"].astype(jnp.bfloat16), m2["bq"].reshape(1, -1),
            wkv2, bkv2,
            m2["wo"].astype(jnp.bfloat16), m2["bo"].reshape(1, -1),
            lp["ln2_g"].reshape(1, -1), lp["ln2_b"].reshape(1, -1),
            lp["ffn_w1"].astype(jnp.bfloat16), lp["ffn_b1"].reshape(1, -1),
            lp["ffn_w2"].astype(jnp.bfloat16), lp["ffn_b2"].reshape(1, -1),
            lp["ln3_g"].reshape(1, -1), lp["ln3_b"].reshape(1, -1),
        ))

    fw = jnp.zeros((D, Vp), jnp.float32).at[:, :V].set(params["final_w"])
    fb = jnp.zeros((1, Vp), jnp.float32).at[:, :V].set(params["final_b"][None, :])
    fast["final_w"] = fw.astype(jnp.bfloat16)
    fast["final_b"] = fb
    fast["embedding"] = params["embedding"]
    return fast


# ------------------------------ parameter init --------------------------------

def _init_mha(key, d_model):
    ks = jax.random.split(key, 4)
    s = 1.0 / math.sqrt(d_model)

    def lin(k):
        return (jax.random.normal(k, (d_model, d_model), jnp.float32) * s,
                jnp.zeros((d_model,), jnp.float32))

    wq, bq = lin(ks[0]); wk, bk = lin(ks[1])
    wv, bv = lin(ks[2]); wo, bo = lin(ks[3])
    return dict(wq=wq, bq=bq, wk=wk, bk=bk, wv=wv, bv=bv, wo=wo, bo=bo)


def _init_ffn(key, d_model, dff):
    k1, k2 = jax.random.split(key)
    return dict(
        ffn_w1=jax.random.normal(k1, (d_model, dff), jnp.float32) / math.sqrt(d_model),
        ffn_b1=jnp.zeros((dff,), jnp.float32),
        ffn_w2=jax.random.normal(k2, (dff, d_model), jnp.float32) / math.sqrt(dff),
        ffn_b2=jnp.zeros((d_model,), jnp.float32),
    )


def _init_enc_layer(key, d_model, dff):
    k_mha, k_ffn = jax.random.split(key)
    p = dict(mha=_init_mha(k_mha, d_model))
    p.update(_init_ffn(k_ffn, d_model, dff))
    p.update(ln1_g=jnp.ones((d_model,), jnp.float32),
             ln1_b=jnp.zeros((d_model,), jnp.float32),
             ln2_g=jnp.ones((d_model,), jnp.float32),
             ln2_b=jnp.zeros((d_model,), jnp.float32))
    return p


def _init_dec_layer(key, d_model, dff):
    k1, k2, k3 = jax.random.split(key, 3)
    p = dict(mha1=_init_mha(k1, d_model), mha2=_init_mha(k2, d_model))
    p.update(_init_ffn(k3, d_model, dff))
    p.update(ln1_g=jnp.ones((d_model,), jnp.float32),
             ln1_b=jnp.zeros((d_model,), jnp.float32),
             ln2_g=jnp.ones((d_model,), jnp.float32),
             ln2_b=jnp.zeros((d_model,), jnp.float32),
             ln3_g=jnp.ones((d_model,), jnp.float32),
             ln3_b=jnp.zeros((d_model,), jnp.float32))
    return p


def init_transformer(key, num_layers_enc, num_layers_dec, d_model, dff, vocab):
    k_enc, k_dec, k_emb, k_fin = jax.random.split(key, 4)
    enc = [_init_enc_layer(k, d_model, dff)
           for k in jax.random.split(k_enc, num_layers_enc)]
    dec = [_init_dec_layer(k, d_model, dff)
           for k in jax.random.split(k_dec, num_layers_dec)]
    embedding = jax.random.normal(k_emb, (vocab, d_model), jnp.float32) * 0.02
    final_w = jax.random.normal(k_fin, (d_model, vocab), jnp.float32) / math.sqrt(d_model)
    final_b = jnp.zeros((vocab,), jnp.float32)
    return dict(enc=enc, dec=dec, embedding=embedding,
                final_w=final_w, final_b=final_b)


# ----------------------------------- main --------------------------------------

if __name__ == "__main__":
    # module hyper-parameters (small, consistent with the forward)
    num_layers_enc = 2
    num_layers_dec = 2
    d_model = 32
    num_heads = 4
    dff = 64
    target_vocab_size = 50
    B, S_inp, S_tar = 2, 8, 8

    key = jax.random.PRNGKey(0)
    k_params, k_inp, k_tar = jax.random.split(key, 3)

    params = init_transformer(k_params, num_layers_enc, num_layers_dec,
                              d_model, dff, target_vocab_size)
    fast_params = prepare_params(params)   # one-time fusion / bf16 cast / padding

    # speech features already at d_model width: (B, S_inp, d_model)
    inp = jax.random.normal(k_inp, (B, S_inp, d_model), jnp.float32)
    # target token ids: (B, S_tar)
    tar = jax.random.randint(k_tar, (B, S_tar), 0, target_vocab_size)

    # masks: 1.0 = position is masked out (TF-tutorial convention)
    enc_padding_mask = jnp.zeros((B, 1, 1, S_inp), jnp.float32)
    enc_padding_mask = enc_padding_mask.at[1, 0, 0, -2:].set(1.0)
    dec_padding_mask = enc_padding_mask
    look_ahead = 1.0 - jnp.tril(jnp.ones((S_tar, S_tar), jnp.float32))
    look_ahead_mask = jnp.broadcast_to(look_ahead, (B, 1, S_tar, S_tar))

    fwd = jax.jit(lambda i, t, m1, m2, m3, p: transformer_forward(
        (i, t), m1, m2, m3, p, num_heads, target_vocab_size))

    out = fwd(inp, tar, enc_padding_mask, look_ahead_mask,
              dec_padding_mask, fast_params)
    jax.block_until_ready(out)
    assert out.shape == (B, S_tar, target_vocab_size), out.shape
    assert jnp.all(jnp.isfinite(out))
    print("KERNEL_OK")
</pallas_src>

<mosaic_0001>
module attributes {stable_mosaic.version = 11 : i64} {
  func.func @_final_linear_kernel(%arg0: i32, %arg1: i32, %arg2: memref<16x32xbf16, #tpu.memory_space<vmem>>, %arg3: memref<32x128xbf16, #tpu.memory_space<vmem>>, %arg4: memref<1x128xf32, #tpu.memory_space<vmem>>, %arg5: memref<16x128xf32, #tpu.memory_space<vmem>>) attributes {dimension_semantics = [#tpu.dimension_semantics<parallel>, #tpu.dimension_semantics<parallel>], iteration_bounds = array<i64: 1, 1>, scalar_prefetch = 0 : i64, scratch_operands = 0 : i64, tpu.core_type = #tpu.core_type<tc>, window_params = [{transform_indices = @transform_0, window_bounds = array<i64: 16, 32>}, {transform_indices = @transform_1, window_bounds = array<i64: 32, 128>}, {transform_indices = @transform_2, window_bounds = array<i64: 1, 128>}, {transform_indices = @transform_3, window_bounds = array<i64: 16, 128>}]} {
    %c0 = arith.constant 0 : index
    %c0_0 = arith.constant 0 : index
    %0 = vector.load %arg2[%c0, %c0_0] : memref<16x32xbf16, #tpu.memory_space<vmem>>, vector<16x32xbf16>
    %c0_1 = arith.constant 0 : index
    %c0_2 = arith.constant 0 : index
    %1 = vector.load %arg3[%c0_1, %c0_2] : memref<32x128xbf16, #tpu.memory_space<vmem>>, vector<32x128xbf16>
    %cst = arith.constant dense<0.000000e+00> : vector<16x128xf32>
    %2 = tpu.matmul %0, %1, %cst {dimension_numbers = #tpu.dot_dimension_numbers<[1], [0], [0], [1], [0, 0, 1, 1], [], []>} : vector<16x32xbf16>, vector<32x128xbf16>, vector<16x128xf32> -> vector<16x128xf32>
    %c0_3 = arith.constant 0 : index
    %c0_4 = arith.constant 0 : index
    %3 = vector.load %arg4[%c0_3, %c0_4] : memref<1x128xf32, #tpu.memory_space<vmem>>, vector<1x128xf32>
    %4 = vector.broadcast %3 : vector<1x128xf32> to vector<16x128xf32>
    %5 = arith.addf %2, %4 : vector<16x128xf32>
    %c0_5 = arith.constant 0 : index
    %c0_6 = arith.constant 0 : index
    %6 = vector.load %arg5[%c0_5, %c0_6] : memref<16x128xf32, #tpu.memory_space<vmem>>, vector<16x128xf32>
    tpu.vector_store %arg5[%c0_5, %c0_6], %5 {strides = array<i32>} : memref<16x128xf32, #tpu.memory_space<vmem>>, vector<16x128xf32>,
    return
  }
  func.func @transform_0(%arg0: i32, %arg1: i32) -> (i32, i32) {
    %c0_i32 = arith.constant 0 : i32
    %c0_i32_0 = arith.constant 0 : i32
    return %arg0, %c0_i32 : i32, i32
  }
  func.func @transform_1(%arg0: i32, %arg1: i32) -> (i32, i32) {
    %c0_i32 = arith.constant 0 : i32
    %c0_i32_0 = arith.constant 0 : i32
    return %c0_i32, %arg1 : i32, i32
  }
  func.func @transform_2(%arg0: i32, %arg1: i32) -> (i32, i32) {
    %c0_i32 = arith.constant 0 : i32
    %c0_i32_0 = arith.constant 0 : i32
    return %c0_i32, %arg1 : i32, i32
  }
  func.func @transform_3(%arg0: i32, %arg1: i32) -> (i32, i32) {
    %c0_i32 = arith.constant 0 : i32
    return %arg0, %arg1 : i32, i32
  }
}

module attributes {stable_mosaic.version = 11 : i64} {
  func.func @_encoder_layer_kernel(%arg0: memref<16x32xbf16, #tpu.memory_space<vmem>>, %arg1: memref<2x1x8xf32, #tpu.memory_space<vmem>>, %arg2: memref<32x96xbf16, #tpu.memory_space<vmem>>, %arg3: memref<1x96xf32, #tpu.memory_space<vmem>>, %arg4: memref<32x32xbf16, #tpu.memory_space<vmem>>, %arg5: memref<1x32xf32, #tpu.memory_space<vmem>>, %arg6: memref<1x32xf32, #tpu.memory_space<vmem>>, %arg7: memref<1x32xf32, #tpu.memory_space<vmem>>, %arg8: memref<32x64xbf16, #tpu.memory_space<vmem>>, %arg9: memref<1x64xf32, #tpu.memory_space<vmem>>, %arg10: memref<64x32xbf16, #tpu.memory_space<vmem>>, %arg11: memref<1x32xf32, #tpu.memory_space<vmem>>, %arg12: memref<1x32xf32, #tpu.memory_space<vmem>>, %arg13: memref<1x32xf32, #tpu.memory_space<vmem>>, %arg14: memref<16x32xbf16, #tpu.memory_space<vmem>>, %arg15: memref<16x32xf32, #tpu.memory_space<vmem>>) attributes {dimension_semantics = [], scalar_prefetch = 0 : i64, scratch_operands = 1 : i64, tpu.core_type = #tpu.core_type<tc>} {
    %c0 = arith.constant 0 : index
    %c0_0 = arith.constant 0 : index
    %0 = vector.load %arg0[%c0, %c0_0] : memref<16x32xbf16, #tpu.memory_space<vmem>>, vector<16x32xbf16>
    %1 = arith.extf %0 : vector<16x32xbf16> to vector<16x32xf32>
    %2 = arith.truncf %1 : vector<16x32xf32> to vector<16x32xbf16>
    %c0_1 = arith.constant 0 : index
    %c0_2 = arith.constant 0 : index
    %3 = vector.load %arg2[%c0_1, %c0_2] : memref<32x96xbf16, #tpu.memory_space<vmem>>, vector<32x96xbf16>
    %cst = arith.constant dense<0.000000e+00> : vector<16x96xf32>
    %4 = tpu.matmul %2, %3, %cst {dimension_numbers = #tpu.dot_dimension_numbers<[1], [0], [0], [1], [0, 0, 1, 1], [], []>} : vector<16x32xbf16>, vector<32x96xbf16>, vector<16x96xf32> -> vector<16x96xf32>
    %c0_3 = arith.constant 0 : index
    %c0_4 = arith.constant 0 : index
    %5 = vector.load %arg3[%c0_3, %c0_4] : memref<1x96xf32, #tpu.memory_space<vmem>>, vector<1x96xf32>
    %6 = vector.broadcast %5 : vector<1x96xf32> to vector<16x96xf32>
    %7 = arith.addf %4, %6 : vector<16x96xf32>
    %8 = vector.extract_strided_slice %7 {offsets = [0, 0], sizes = [16, 32], strides = [1, 1]} : vector<16x96xf32> to vector<16x32xf32>
    %9 = vector.extract_strided_slice %7 {offsets = [0, 32], sizes = [16, 32], strides = [1, 1]} : vector<16x96xf32> to vector<16x32xf32>
    %10 = vector.extract_strided_slice %7 {offsets = [0, 64], sizes = [16, 32], strides = [1, 1]} : vector<16x96xf32> to vector<16x32xf32>
    %c0_5 = arith.constant 0 : index
    %c0_6 = arith.constant 0 : index
    %c0_7 = arith.constant 0 : index
    %11 = vector.load %arg1[%c0_5, %c0_6, %c0_7] : memref<2x1x8xf32, #tpu.memory_space<vmem>>, vector<2x1x8xf32>
    %12 = vector.shape_cast %8 : vector<16x32xf32> to vector<2x8x32xf32>
    %13 = arith.truncf %12 : vector<2x8x32xf32> to vector<2x8x32xbf16>
    %14 = vector.shape_cast %9 : vector<16x32xf32> to vector<2x8x32xf32>
    %15 = arith.truncf %14 : vector<2x8x32xf32> to vector<2x8x32xbf16>
    %16 = vector.shape_cast %10 : vector<16x32xf32> to vector<2x8x32xf32>
    %17 = arith.truncf %16 : vector<2x8x32xf32> to vector<2x8x32xbf16>
    %18 = vector.extract_strided_slice %13 {offsets = [0, 0, 0], sizes = [2, 8, 8], strides = [1, 1, 1]} : vector<2x8x32xbf16> to vector<2x8x8xbf16>
    %19 = vector.extract_strided_slice %15 {offsets = [0, 0, 0], sizes = [2, 8, 8], strides = [1, 1, 1]} : vector<2x8x32xbf16> to vector<2x8x8xbf16>
    "tpu.trace_start"() <{level = 10 : i32, message = "bqd,bkd->bqk"}> : () -> ()
    %cst_8 = arith.constant dense<0.000000e+00> : vector<2x8x8xf32>
    %20 = tpu.matmul %18, %19, %cst_8 {dimension_numbers = #tpu.dot_dimension_numbers<[2], [2], [1], [1], [0, 0, 0, 1, 1, 1], [0], [0]>} : vector<2x8x8xbf16>, vector<2x8x8xbf16>, vector<2x8x8xf32> -> vector<2x8x8xf32>
    "tpu.trace_stop"() : () -> ()
    %cst_9 = arith.constant 0.353553385 : f32
    %21 = vector.broadcast %cst_9 : f32 to vector<2x8x8xf32>
    %22 = arith.mulf %20, %21 : vector<2x8x8xf32>
    %23 = vector.broadcast %11 : vector<2x1x8xf32> to vector<2x8x8xf32>
    %24 = arith.addf %22, %23 : vector<2x8x8xf32>
    %cst_10 = arith.constant dense<0xFF800000> : vector<2x8xf32>
    %25 = vector.multi_reduction <maximumf>, %24, %cst_10 [2] : vector<2x8x8xf32> to vector<2x8xf32>
    %26 = vector.shape_cast %25 : vector<2x8xf32> to vector<2x8x1xf32>
    %27 = vector.broadcast %26 : vector<2x8x1xf32> to vector<2x8x8xf32>
    %28 = arith.subf %24, %27 : vector<2x8x8xf32>
    %29 = math.exp %28 : vector<2x8x8xf32>
    %cst_11 = arith.constant dense<0.000000e+00> : vector<2x8xf32>
    %30 = vector.multi_reduction <add>, %29, %cst_11 [2] : vector<2x8x8xf32> to vector<2x8xf32>
    %31 = vector.shape_cast %30 : vector<2x8xf32> to vector<2x8x1xf32>
    %32 = tpu.reciprocal %31 {approx = true} : vector<2x8x1xf32> -> vector<2x8x1xf32>
    %33 = vector.broadcast %32 : vector<2x8x1xf32> to vector<2x8x8xf32>
    %34 = arith.mulf %29, %33 : vector<2x8x8xf32>
    %35 = arith.truncf %34 : vector<2x8x8xf32> to vector<2x8x8xbf16>
    %36 = vector.extract_strided_slice %17 {offsets = [0, 0, 0], sizes = [2, 8, 8], strides = [1, 1, 1]} : vector<2x8x32xbf16> to vector<2x8x8xbf16>
    "tpu.trace_start"() <{level = 10 : i32, message = "bqk,bkd->bqd"}> : () -> ()
    %cst_12 = arith.constant dense<0.000000e+00> : vector<2x8x8xf32>
    %37 = tpu.matmul %35, %36, %cst_12 {dimension_numbers = #tpu.dot_dimension_numbers<[2], [1], [1], [2], [0, 0, 0, 1, 1, 2], [0], [0]>} : vector<2x8x8xbf16>, vector<2x8x8xbf16>, vector<2x8x8xf32> -> vector<2x8x8xf32>
    "tpu.trace_stop"() : () -> ()
    %38 = vector.shape_cast %37 : vector<2x8x8xf32> to vector<16x8xf32>
    %c0_13 = arith.constant 0 : index
    %c0_14 = arith.constant 0 : index
    %39 = vector.load %arg15[%c0_13, %c0_14] : memref<16x32xf32, #tpu.memory_space<vmem>>, vector<16x8xf32>
    tpu.vector_store %arg15[%c0_13, %c0_14], %38 {strides = array<i32>} : memref<16x32xf32, #tpu.memory_space<vmem>>, vector<16x8xf32>,
    %40 = vector.extract_strided_slice %13 {offsets = [0, 0, 8], sizes = [2, 8, 8], strides = [1, 1, 1]} : vector<2x8x32xbf16> to vector<2x8x8xbf16>
    %41 = vector.extract_strided_slice %15 {offsets = [0, 0, 8], sizes = [2, 8, 8], strides = [1, 1, 1]} : vector<2x8x32xbf16> to vector<2x8x8xbf16>
    "tpu.trace_start"() <{level = 10 : i32, message = "bqd,bkd->bqk"}> : () -> ()
    %cst_15 = arith.constant dense<0.000000e+00> : vector<2x8x8xf32>
    %42 = tpu.matmul %40, %41, %cst_15 {dimension_numbers = #tpu.dot_dimension_numbers<[2], [2], [1], [1], [0, 0, 0, 1, 1, 1], [0], [0]>} : vector<2x8x8xbf16>, vector<2x8x8xbf16>, vector<2x8x8xf32> -> vector<2x8x8xf32>
    "tpu.trace_stop"() : () -> ()
    %cst_16 = arith.constant 0.353553385 : f32
    %43 = vector.broadcast %cst_16 : f32 to vector<2x8x8xf32>
    %44 = arith.mulf %42, %43 : vector<2x8x8xf32>
    %45 = vector.broadcast %11 : vector<2x1x8xf32> to vector<2x8x8xf32>
    %46 = arith.addf %44, %45 : vector<2x8x8xf32>
    %cst_17 = arith.constant dense<0xFF800000> : vector<2x8xf32>
    %47 = vector.multi_reduction <maximumf>, %46, %cst_17 [2] : vector<2x8x8xf32> to vector<2x8xf32>
    %48 = vector.shape_cast %47 : vector<2x8xf32> to vector<2x8x1xf32>
    %49 = vector.broadcast %48 : vector<2x8x1xf32> to vector<2x8x8xf32>
    %50 = arith.subf %46, %49 : vector<2x8x8xf32>
    %51 = math.exp %50 : vector<2x8x8xf32>
    %cst_18 = arith.constant dense<0.000000e+00> : vector<2x8xf32>
    %52 = vector.multi_reduction <add>, %51, %cst_18 [2] : vector<2x8x8xf32> to vector<2x8xf32>
    %53 = vector.shape_cast %52 : vector<2x8xf32> to vector<2x8x1xf32>
    %54 = tpu.reciprocal %53 {approx = true} : vector<2x8x1xf32> -> vector<2x8x1xf32>
    %55 = vector.broadcast %54 : vector<2x8x1xf32> to vector<2x8x8xf32>
    %56 = arith.mulf %51, %55 : vector<2x8x8xf32>
    %57 = arith.truncf %56 : vector<2x8x8xf32> to vector<2x8x8xbf16>
    %58 = vector.extract_strided_slice %17 {offsets = [0, 0, 8], sizes = [2, 8, 8], strides = [1, 1, 1]} : vector<2x8x32xbf16> to vector<2x8x8xbf16>
    "tpu.trace_start"() <{level = 10 : i32, message = "bqk,bkd->bqd"}> : () -> ()
    %cst_19 = arith.constant dense<0.000000e+00> : vector<2x8x8xf32>
    %59 = tpu.matmul %57, %58, %cst_19 {dimension_numbers = #tpu.dot_dimension_numbers<[2], [1], [1], [2], [0, 0, 0, 1, 1, 2], [0], [0]>} : vector<2x8x8xbf16>, vector<2x8x8xbf16>, vector<2x8x8xf32> -> vector<2x8x8xf32>
    "tpu.trace_stop"() : () -> ()
    %60 = vector.shape_cast %59 : vector<2x8x8xf32> to vector<16x8xf32>
    %c0_20 = arith.constant 0 : index
    %c8 = arith.constant 8 : index
    %61 = vector.load %arg15[%c0_20, %c8] : memref<16x32xf32, #tpu.memory_space<vmem>>, vector<16x8xf32>
    tpu.vector_store %arg15[%c0_20, %c8], %60 {strides = array<i32>} : memref<16x32xf32, #tpu.memory_space<vmem>>, vector<16x8xf32>,
    %62 = vector.extract_strided_slice %13 {offsets = [0, 0, 16], sizes = [2, 8, 8], strides = [1, 1, 1]} : vector<2x8x32xbf16> to vector<2x8x8xbf16>
    %63 = vector.extract_strided_slice %15 {offsets = [0, 0, 16], sizes = [2, 8, 8], strides = [1, 1, 1]} : vector<2x8x32xbf16> to vector<2x8x8xbf16>
    "tpu.trace_start"() <{level = 10 : i32, message = "bqd,bkd->bqk"}> : () -> ()
    %cst_21 = arith.constant dense<0.000000e+00> : vector<2x8x8xf32>
    %64 = tpu.matmul %62, %63, %cst_21 {dimension_numbers = #tpu.dot_dimension_numbers<[2], [2], [1], [1], [0, 0, 0, 1, 1, 1], [0], [0]>} : vector<2x8x8xbf16>, vector<2x8x8xbf16>, vector<2x8x8xf32> -> vector<2x8x8xf32>
    "tpu.trace_stop"() : () -> ()
    %cst_22 = arith.constant 0.353553385 : f32
    %65 = vector.broadcast %cst_22 : f32 to vector<2x8x8xf32>
    %66 = arith.mulf %64, %65 : vector<2x8x8xf32>
    %67 = vector.broadcast %11 : vector<2x1x8xf32> to vector<2x8x8xf32>
    %68 = arith.addf %66, %67 : vector<2x8x8xf32>
    %cst_23 = arith.constant dense<0xFF800000> : vector<2x8xf32>
    %69 = vector.multi_reduction <maximumf>, %68, %cst_23 [2] : vector<2x8x8xf32> to vector<2x8xf32>
    %70 = vector.shape_cast %69 : vector<2x8xf32> to vector<2x8x1xf32>
    %71 = vector.broadcast %70 : vector<2x8x1xf32> to vector<2x8x8xf32>
    %72 = arith.subf %68, %71 : vector<2x8x8xf32>
    %73 = math.exp %72 : vector<2x8x8xf32>
    %cst_24 = arith.constant dense<0.000000e+00> : vector<2x8xf32>
    %74 = vector.multi_reduction <add>, %73, %cst_24 [2] : vector<2x8x8xf32> to vector<2x8xf32>
    %75 = vector.shape_cast %74 : vector<2x8xf32> to vector<2x8x1xf32>
    %76 = tpu.reciprocal %75 {approx = true} : vector<2x8x1xf32> -> vector<2x8x1xf32>
    %77 = vector.broadcast %76 : vector<2x8x1xf32> to vector<2x8x8xf32>
    %78 = arith.mulf %73, %77 : vector<2x8x8xf32>
    %79 = arith.truncf %78 : vector<2x8x8xf32> to vector<2x8x8xbf16>
    %80 = vector.extract_strided_slice %17 {offsets = [0, 0, 16], sizes = [2, 8, 8], strides = [1, 1, 1]} : vector<2x8x32xbf16> to vector<2x8x8xbf16>
    "tpu.trace_start"() <{level = 10 : i32, message = "bqk,bkd->bqd"}> : () -> ()
    %cst_25 = arith.constant dense<0.000000e+00> : vector<2x8x8xf32>
    %81 = tpu.matmul %79, %80, %cst_25 {dimension_numbers = #tpu.dot_dimension_numbers<[2], [1], [1], [2], [0, 0, 0, 1, 1, 2], [0], [0]>} : vector<2x8x8xbf16>, vector<2x8x8xbf16>, vector<2x8x8xf32> -> vector<2x8x8xf32>
    "tpu.trace_stop"() : () -> ()
    %82 = vector.shape_cast %81 : vector<2x8x8xf32> to vector<16x8xf32>
    %c0_26 = arith.constant 0 : index
    %c16 = arith.constant 16 : index
    %83 = vector.load %arg15[%c0_26, %c16] : memref<16x32xf32, #tpu.memory_space<vmem>>, vector<16x8xf32>
    tpu.vector_store %arg15[%c0_26, %c16], %82 {strides = array<i32>} : memref<16x32xf32, #tpu.memory_space<vmem>>, vector<16x8xf32>,
    %84 = vector.extract_strided_slice %13 {offsets = [0, 0, 24], sizes = [2, 8, 8], strides = [1, 1, 1]} : vector<2x8x32xbf16> to vector<2x8x8xbf16>
    %85 = vector.extract_strided_slice %15 {offsets = [0, 0, 24], sizes = [2, 8, 8], strides = [1, 1, 1]} : vector<2x8x32xbf16> to vector<2x8x8xbf16>
    "tpu.trace_start"() <{level = 10 : i32, message = "bqd,bkd->bqk"}> : () -> ()
    %cst_27 = arith.constant dense<0.000000e+00> : vector<2x8x8xf32>
    %86 = tpu.matmul %84, %85, %cst_27 {dimension_numbers = #tpu.dot_dimension_numbers<[2], [2], [1], [1], [0, 0, 0, 1, 1, 1], [0], [0]>} : vector<2x8x8xbf16>, vector<2x8x8xbf16>, vector<2x8x8xf32> -> vector<2x8x8xf32>
    "tpu.trace_stop"() : () -> ()
    %cst_28 = arith.constant 0.353553385 : f32
    %87 = vector.broadcast %cst_28 : f32 to vector<2x8x8xf32>
    %88 = arith.mulf %86, %87 : vector<2x8x8xf32>
    %89 = vector.broadcast %11 : vector<2x1x8xf32> to vector<2x8x8xf32>
    %90 = arith.addf %88, %89 : vector<2x8x8xf32>
    %cst_29 = arith.constant dense<0xFF800000> : vector<2x8xf32>
    %91 = vector.multi_reduction <maximumf>, %90, %cst_29 [2] : vector<2x8x8xf32> to vector<2x8xf32>
    %92 = vector.shape_cast %91 : vector<2x8xf32> to vector<2x8x1xf32>
    %93 = vector.broadcast %92 : vector<2x8x1xf32> to vector<2x8x8xf32>
    %94 = arith.subf %90, %93 : vector<2x8x8xf32>
    %95 = math.exp %94 : vector<2x8x8xf32>
    %cst_30 = arith.constant dense<0.000000e+00> : vector<2x8xf32>
    %96 = vector.multi_reduction <add>, %95, %cst_30 [2] : vector<2x8x8xf32> to vector<2x8xf32>
    %97 = vector.shape_cast %96 : vector<2x8xf32> to vector<2x8x1xf32>
    %98 = tpu.reciprocal %97 {approx = true} : vector<2x8x1xf32> -> vector<2x8x1xf32>
    %99 = vector.broadcast %98 : vector<2x8x1xf32> to vector<2x8x8xf32>
    %100 = arith.mulf %95, %99 : vector<2x8x8xf32>
    %101 = arith.truncf %100 : vector<2x8x8xf32> to vector<2x8x8xbf16>
    %102 = vector.extract_strided_slice %17 {offsets = [0, 0, 24], sizes = [2, 8, 8], strides = [1, 1, 1]} : vector<2x8x32xbf16> to vector<2x8x8xbf16>
    "tpu.trace_start"() <{level = 10 : i32, message = "bqk,bkd->bqd"}> : () -> ()
    %cst_31 = arith.constant dense<0.000000e+00> : vector<2x8x8xf32>
    %103 = tpu.matmul %101, %102, %cst_31 {dimension_numbers = #tpu.dot_dimension_numbers<[2], [1], [1], [2], [0, 0, 0, 1, 1, 2], [0], [0]>} : vector<2x8x8xbf16>, vector<2x8x8xbf16>, vector<2x8x8xf32> -> vector<2x8x8xf32>
    "tpu.trace_stop"() : () -> ()
    %104 = vector.shape_cast %103 : vector<2x8x8xf32> to vector<16x8xf32>
    %c0_32 = arith.constant 0 : index
    %c24 = arith.constant 24 : index
    %105 = vector.load %arg15[%c0_32, %c24] : memref<16x32xf32, #tpu.memory_space<vmem>>, vector<16x8xf32>
    tpu.vector_store %arg15[%c0_32, %c24], %104 {strides = array<i32>} : memref<16x32xf32, #tpu.memory_space<vmem>>, vector<16x8xf32>,
    %c0_33 = arith.constant 0 : index
    %c0_34 = arith.constant 0 : index
    %106 = vector.load %arg15[%c0_33, %c0_34] : memref<16x32xf32, #tpu.memory_space<vmem>>, vector<16x32xf32>
    %107 = arith.truncf %106 : vector<16x32xf32> to vector<16x32xbf16>
    %c0_35 = arith.constant 0 : index
    %c0_36 = arith.constant 0 : index
    %108 = vector.load %arg4[%c0_35, %c0_36] : memref<32x32xbf16, #tpu.memory_space<vmem>>, vector<32x32xbf16>
    %cst_37 = arith.constant dense<0.000000e+00> : vector<16x32xf32>
    %109 = tpu.matmul %107, %108, %cst_37 {dimension_numbers = #tpu.dot_dimension_numbers<[1], [0], [0], [1], [0, 0, 1, 1], [], []>} : vector<16x32xbf16>, vector<32x32xbf16>, vector<16x32xf32> -> vector<16x32xf32>
    %c0_38 = arith.constant 0 : index
    %c0_39 = arith.constant 0 : index
    %110 = vector.load %arg5[%c0_38, %c0_39] : memref<1x32xf32, #tpu.memory_space<vmem>>, vector<1x32xf32>
    %111 = vector.broadcast %110 : vector<1x32xf32> to vector<16x32xf32>
    %112 = arith.addf %109, %111 : vector<16x32xf32>
    %113 = arith.addf %1, %112 : vector<16x32xf32>
    %c0_40 = arith.constant 0 : index
    %c0_41 = arith.constant 0 : index
    %114 = vector.load %arg6[%c0_40, %c0_41] : memref<1x32xf32, #tpu.memory_space<vmem>>, vector<1x32xf32>
    %c0_42 = arith.constant 0 : index
    %c0_43 = arith.constant 0 : index
    %115 = vector.load %arg7[%c0_42, %c0_43] : memref<1x32xf32, #tpu.memory_space<vmem>>, vector<1x32xf32>
    %cst_44 = arith.constant dense<0.000000e+00> : vector<16xf32>
    %116 = vector.multi_reduction <add>, %113, %cst_44 [1] : vector<16x32xf32> to vector<16xf32>
    %117 = vector.shape_cast %116 : vector<16xf32> to vector<16x1xf32>
    %cst_45 = arith.constant 3.200000e+01 : f32
    %118 = vector.broadcast %cst_45 : f32 to vector<16x1xf32>
    %119 = arith.divf %117, %118 : vector<16x1xf32>
    %120 = vector.broadcast %119 : vector<16x1xf32> to vector<16x32xf32>
    %121 = arith.subf %113, %120 : vector<16x32xf32>
    %122 = arith.mulf %121, %121 : vector<16x32xf32>
    %cst_46 = arith.constant dense<0.000000e+00> : vector<16xf32>
    %123 = vector.multi_reduction <add>, %122, %cst_46 [1] : vector<16x32xf32> to vector<16xf32>
    %124 = vector.shape_cast %123 : vector<16xf32> to vector<16x1xf32>
    %cst_47 = arith.constant 3.200000e+01 : f32
    %125 = vector.broadcast %cst_47 : f32 to vector<16x1xf32>
    %126 = arith.divf %124, %125 : vector<16x1xf32>
    %cst_48 = arith.constant 9.99999974E-6 : f32
    %127 = vector.broadcast %cst_48 : f32 to vector<16x1xf32>
    %128 = arith.addf %126, %127 : vector<16x1xf32>
    %129 = math.rsqrt %128 : vector<16x1xf32>
    %130 = vector.broadcast %129 : vector<16x1xf32> to vector<16x32xf32>
    %131 = arith.mulf %121, %130 : vector<16x32xf32>
    %132 = vector.broadcast %114 : vector<1x32xf32> to vector<16x32xf32>
    %133 = arith.mulf %131, %132 : vector<16x32xf32>
    %134 = vector.broadcast %115 : vector<1x32xf32> to vector<16x32xf32>
    %135 = arith.addf %133, %134 : vector<16x32xf32>
    %136 = arith.truncf %135 : vector<16x32xf32> to vector<16x32xbf16>
    %c0_49 = arith.constant 0 : index
    %c0_50 = arith.constant 0 : index
    %137 = vector.load %arg8[%c0_49, %c0_50] : memref<32x64xbf16, #tpu.memory_space<vmem>>, vector<32x64xbf16>
    %cst_51 = arith.constant dense<0.000000e+00> : vector<16x64xf32>
    %138 = tpu.matmul %136, %137, %cst_51 {dimension_numbers = #tpu.dot_dimension_numbers<[1], [0], [0], [1], [0, 0, 1, 1], [], []>} : vector<16x32xbf16>, vector<32x64xbf16>, vector<16x64xf32> -> vector<16x64xf32>
    %c0_52 = arith.constant 0 : index
    %c0_53 = arith.constant 0 : index
    %139 = vector.load %arg9[%c0_52, %c0_53] : memref<1x64xf32, #tpu.memory_space<vmem>>, vector<1x64xf32>
    %140 = vector.broadcast %139 : vector<1x64xf32> to vector<16x64xf32>
    %141 = arith.addf %138, %140 : vector<16x64xf32>
    %cst_54 = arith.constant 0.000000e+00 : f32
    %142 = vector.broadcast %cst_54 : f32 to vector<16x64xf32>
    %143 = arith.maximumf %141, %142 : vector<16x64xf32>
    %144 = arith.truncf %143 : vector<16x64xf32> to vector<16x64xbf16>
    %c0_55 = arith.constant 0 : index
    %c0_56 = arith.constant 0 : index
    %145 = vector.load %arg10[%c0_55, %c0_56] : memref<64x32xbf16, #tpu.memory_space<vmem>>, vector<64x32xbf16>
    %cst_57 = arith.constant dense<0.000000e+00> : vector<16x32xf32>
    %146 = tpu.matmul %144, %145, %cst_57 {dimension_numbers = #tpu.dot_dimension_numbers<[1], [0], [0], [1], [0, 0, 1, 1], [], []>} : vector<16x64xbf16>, vector<64x32xbf16>, vector<16x32xf32> -> vector<16x32xf32>
    %c0_58 = arith.constant 0 : index
    %c0_59 = arith.constant 0 : index
    %147 = vector.load %arg11[%c0_58, %c0_59] : memref<1x32xf32, #tpu.memory_space<vmem>>, vector<1x32xf32>
    %148 = vector.broadcast %147 : vector<1x32xf32> to vector<16x32xf32>
    %149 = arith.addf %146, %148 : vector<16x32xf32>
    %150 = arith.addf %135, %149 : vector<16x32xf32>
    %c0_60 = arith.constant 0 : index
    %c0_61 = arith.constant 0 : index
    %151 = vector.load %arg12[%c0_60, %c0_61] : memref<1x32xf32, #tpu.memory_space<vmem>>, vector<1x32xf32>
    %c0_62 = arith.constant 0 : index
    %c0_63 = arith.constant 0 : index
    %152 = vector.load %arg13[%c0_62, %c0_63] : memref<1x32xf32, #tpu.memory_space<vmem>>, vector<1x32xf32>
    %cst_64 = arith.constant dense<0.000000e+00> : vector<16xf32>
    %153 = vector.multi_reduction <add>, %150, %cst_64 [1] : vector<16x32xf32> to vector<16xf32>
    %154 = vector.shape_cast %153 : vector<16xf32> to vector<16x1xf32>
    %cst_65 = arith.constant 3.200000e+01 : f32
    %155 = vector.broadcast %cst_65 : f32 to vector<16x1xf32>
    %156 = arith.divf %154, %155 : vector<16x1xf32>
    %157 = vector.broadcast %156 : vector<16x1xf32> to vector<16x32xf32>
    %158 = arith.subf %150, %157 : vector<16x32xf32>
    %159 = arith.mulf %158, %158 : vector<16x32xf32>
    %cst_66 = arith.constant dense<0.000000e+00> : vector<16xf32>
    %160 = vector.multi_reduction <add>, %159, %cst_66 [1] : vector<16x32xf32> to vector<16xf32>
    %161 = vector.shape_cast %160 : vector<16xf32> to vector<16x1xf32>
    %cst_67 = arith.constant 3.200000e+01 : f32
    %162 = vector.broadcast %cst_67 : f32 to vector<16x1xf32>
    %163 = arith.divf %161, %162 : vector<16x1xf32>
    %cst_68 = arith.constant 9.99999974E-6 : f32
    %164 = vector.broadcast %cst_68 : f32 to vector<16x1xf32>
    %165 = arith.addf %163, %164 : vector<16x1xf32>
    %166 = math.rsqrt %165 : vector<16x1xf32>
    %167 = vector.broadcast %166 : vector<16x1xf32> to vector<16x32xf32>
    %168 = arith.mulf %158, %167 : vector<16x32xf32>
    %169 = vector.broadcast %151 : vector<1x32xf32> to vector<16x32xf32>
    %170 = arith.mulf %168, %169 : vector<16x32xf32>
    %171 = vector.broadcast %152 : vector<1x32xf32> to vector<16x32xf32>
    %172 = arith.addf %170, %171 : vector<16x32xf32>
    %173 = arith.truncf %172 : vector<16x32xf32> to vector<16x32xbf16>
    %c0_69 = arith.constant 0 : index
    %c0_70 = arith.constant 0 : index
    %174 = vector.load %arg14[%c0_69, %c0_70] : memref<16x32xbf16, #tpu.memory_space<vmem>>, vector<16x32xbf16>
    tpu.vector_store %arg14[%c0_69, %c0_70], %173 {strides = array<i32>} : memref<16x32xbf16, #tpu.memory_space<vmem>>, vector<16x32xbf16>,
    return
  }
}

module attributes {stable_mosaic.version = 11 : i64} {
  func.func @_decoder_layer_kernel(%arg0: memref<16x32xbf16, #tpu.memory_space<vmem>>, %arg1: memref<16x32xbf16, #tpu.memory_space<vmem>>, %arg2: memref<2x8x8xf32, #tpu.memory_space<vmem>>, %arg3: memref<2x1x8xf32, #tpu.memory_space<vmem>>, %arg4: memref<32x96xbf16, #tpu.memory_space<vmem>>, %arg5: memref<1x96xf32, #tpu.memory_space<vmem>>, %arg6: memref<32x32xbf16, #tpu.memory_space<vmem>>, %arg7: memref<1x32xf32, #tpu.memory_space<vmem>>, %arg8: memref<1x32xf32, #tpu.memory_space<vmem>>, %arg9: memref<1x32xf32, #tpu.memory_space<vmem>>, %arg10: memref<32x32xbf16, #tpu.memory_space<vmem>>, %arg11: memref<1x32xf32, #tpu.memory_space<vmem>>, %arg12: memref<32x64xbf16, #tpu.memory_space<vmem>>, %arg13: memref<1x64xf32, #tpu.memory_space<vmem>>, %arg14: memref<32x32xbf16, #tpu.memory_space<vmem>>, %arg15: memref<1x32xf32, #tpu.memory_space<vmem>>, %arg16: memref<1x32xf32, #tpu.memory_space<vmem>>, %arg17: memref<1x32xf32, #tpu.memory_space<vmem>>, %arg18: memref<32x64xbf16, #tpu.memory_space<vmem>>, %arg19: memref<1x64xf32, #tpu.memory_space<vmem>>, %arg20: memref<64x32xbf16, #tpu.memory_space<vmem>>, %arg21: memref<1x32xf32, #tpu.memory_space<vmem>>, %arg22: memref<1x32xf32, #tpu.memory_space<vmem>>, %arg23: memref<1x32xf32, #tpu.memory_space<vmem>>, %arg24: memref<16x32xbf16, #tpu.memory_space<vmem>>, %arg25: memref<16x32xf32, #tpu.memory_space<vmem>>) attributes {dimension_semantics = [], scalar_prefetch = 0 : i64, scratch_operands = 1 : i64, tpu.core_type = #tpu.core_type<tc>} {
    %c0 = arith.constant 0 : index
    %c0_0 = arith.constant 0 : index
    %0 = vector.load %arg0[%c0, %c0_0] : memref<16x32xbf16, #tpu.memory_space<vmem>>, vector<16x32xbf16>
    %1 = arith.extf %0 : vector<16x32xbf16> to vector<16x32xf32>
    %2 = arith.truncf %1 : vector<16x32xf32> to vector<16x32xbf16>
    %c0_1 = arith.constant 0 : index
    %c0_2 = arith.constant 0 : index
    %3 = vector.load %arg4[%c0_1, %c0_2] : memref<32x96xbf16, #tpu.memory_space<vmem>>, vector<32x96xbf16>
    %cst = arith.constant dense<0.000000e+00> : vector<16x96xf32>
    %4 = tpu.matmul %2, %3, %cst {dimension_numbers = #tpu.dot_dimension_numbers<[1], [0], [0], [1], [0, 0, 1, 1], [], []>} : vector<16x32xbf16>, vector<32x96xbf16>, vector<16x96xf32> -> vector<16x96xf32>
    %c0_3 = arith.constant 0 : index
    %c0_4 = arith.constant 0 : index
    %5 = vector.load %arg5[%c0_3, %c0_4] : memref<1x96xf32, #tpu.memory_space<vmem>>, vector<1x96xf32>
    %6 = vector.broadcast %5 : vector<1x96xf32> to vector<16x96xf32>
    %7 = arith.addf %4, %6 : vector<16x96xf32>
    %8 = vector.extract_strided_slice %7 {offsets = [0, 0], sizes = [16, 32], strides = [1, 1]} : vector<16x96xf32> to vector<16x32xf32>
    %9 = vector.extract_strided_slice %7 {offsets = [0, 32], sizes = [16, 32], strides = [1, 1]} : vector<16x96xf32> to vector<16x32xf32>
    %10 = vector.extract_strided_slice %7 {offsets = [0, 64], sizes = [16, 32], strides = [1, 1]} : vector<16x96xf32> to vector<16x32xf32>
    %c0_5 = arith.constant 0 : index
    %c0_6 = arith.constant 0 : index
    %c0_7 = arith.constant 0 : index
    %11 = vector.load %arg2[%c0_5, %c0_6, %c0_7] : memref<2x8x8xf32, #tpu.memory_space<vmem>>, vector<2x8x8xf32>
    %12 = vector.shape_cast %8 : vector<16x32xf32> to vector<2x8x32xf32>
    %13 = arith.truncf %12 : vector<2x8x32xf32> to vector<2x8x32xbf16>
    %14 = vector.shape_cast %9 : vector<16x32xf32> to vector<2x8x32xf32>
    %15 = arith.truncf %14 : vector<2x8x32xf32> to vector<2x8x32xbf16>
    %16 = vector.shape_cast %10 : vector<16x32xf32> to vector<2x8x32xf32>
    %17 = arith.truncf %16 : vector<2x8x32xf32> to vector<2x8x32xbf16>
    %18 = vector.extract_strided_slice %13 {offsets = [0, 0, 0], sizes = [2, 8, 8], strides = [1, 1, 1]} : vector<2x8x32xbf16> to vector<2x8x8xbf16>
    %19 = vector.extract_strided_slice %15 {offsets = [0, 0, 0], sizes = [2, 8, 8], strides = [1, 1, 1]} : vector<2x8x32xbf16> to vector<2x8x8xbf16>
    "tpu.trace_start"() <{level = 10 : i32, message = "bqd,bkd->bqk"}> : () -> ()
    %cst_8 = arith.constant dense<0.000000e+00> : vector<2x8x8xf32>
    %20 = tpu.matmul %18, %19, %cst_8 {dimension_numbers = #tpu.dot_dimension_numbers<[2], [2], [1], [1], [0, 0, 0, 1, 1, 1], [0], [0]>} : vector<2x8x8xbf16>, vector<2x8x8xbf16>, vector<2x8x8xf32> -> vector<2x8x8xf32>
    "tpu.trace_stop"() : () -> ()
    %cst_9 = arith.constant 0.353553385 : f32
    %21 = vector.broadcast %cst_9 : f32 to vector<2x8x8xf32>
    %22 = arith.mulf %20, %21 : vector<2x8x8xf32>
    %23 = arith.addf %22, %11 : vector<2x8x8xf32>
    %cst_10 = arith.constant dense<0xFF800000> : vector<2x8xf32>
    %24 = vector.multi_reduction <maximumf>, %23, %cst_10 [2] : vector<2x8x8xf32> to vector<2x8xf32>
    %25 = vector.shape_cast %24 : vector<2x8xf32> to vector<2x8x1xf32>
    %26 = vector.broadcast %25 : vector<2x8x1xf32> to vector<2x8x8xf32>
    %27 = arith.subf %23, %26 : vector<2x8x8xf32>
    %28 = math.exp %27 : vector<2x8x8xf32>
    %cst_11 = arith.constant dense<0.000000e+00> : vector<2x8xf32>
    %29 = vector.multi_reduction <add>, %28, %cst_11 [2] : vector<2x8x8xf32> to vector<2x8xf32>
    %30 = vector.shape_cast %29 : vector<2x8xf32> to vector<2x8x1xf32>
    %31 = tpu.reciprocal %30 {approx = true} : vector<2x8x1xf32> -> vector<2x8x1xf32>
    %32 = vector.broadcast %31 : vector<2x8x1xf32> to vector<2x8x8xf32>
    %33 = arith.mulf %28, %32 : vector<2x8x8xf32>
    %34 = arith.truncf %33 : vector<2x8x8xf32> to vector<2x8x8xbf16>
    %35 = vector.extract_strided_slice %17 {offsets = [0, 0, 0], sizes = [2, 8, 8], strides = [1, 1, 1]} : vector<2x8x32xbf16> to vector<2x8x8xbf16>
    "tpu.trace_start"() <{level = 10 : i32, message = "bqk,bkd->bqd"}> : () -> ()
    %cst_12 = arith.constant dense<0.000000e+00> : vector<2x8x8xf32>
    %36 = tpu.matmul %34, %35, %cst_12 {dimension_numbers = #tpu.dot_dimension_numbers<[2], [1], [1], [2], [0, 0, 0, 1, 1, 2], [0], [0]>} : vector<2x8x8xbf16>, vector<2x8x8xbf16>, vector<2x8x8xf32> -> vector<2x8x8xf32>
    "tpu.trace_stop"() : () -> ()
    %37 = vector.shape_cast %36 : vector<2x8x8xf32> to vector<16x8xf32>
    %c0_13 = arith.constant 0 : index
    %c0_14 = arith.constant 0 : index
    %38 = vector.load %arg25[%c0_13, %c0_14] : memref<16x32xf32, #tpu.memory_space<vmem>>, vector<16x8xf32>
    tpu.vector_store %arg25[%c0_13, %c0_14], %37 {strides = array<i32>} : memref<16x32xf32, #tpu.memory_space<vmem>>, vector<16x8xf32>,
    %39 = vector.extract_strided_slice %13 {offsets = [0, 0, 8], sizes = [2, 8, 8], strides = [1, 1, 1]} : vector<2x8x32xbf16> to vector<2x8x8xbf16>
    %40 = vector.extract_strided_slice %15 {offsets = [0, 0, 8], sizes = [2, 8, 8], strides = [1, 1, 1]} : vector<2x8x32xbf16> to vector<2x8x8xbf16>
    "tpu.trace_start"() <{level = 10 : i32, message = "bqd,bkd->bqk"}> : () -> ()
    %cst_15 = arith.constant dense<0.000000e+00> : vector<2x8x8xf32>
    %41 = tpu.matmul %39, %40, %cst_15 {dimension_numbers = #tpu.dot_dimension_numbers<[2], [2], [1], [1], [0, 0, 0, 1, 1, 1], [0], [0]>} : vector<2x8x8xbf16>, vector<2x8x8xbf16>, vector<2x8x8xf32> -> vector<2x8x8xf32>
    "tpu.trace_stop"() : () -> ()
    %cst_16 = arith.constant 0.353553385 : f32
    %42 = vector.broadcast %cst_16 : f32 to vector<2x8x8xf32>
    %43 = arith.mulf %41, %42 : vector<2x8x8xf32>
    %44 = arith.addf %43, %11 : vector<2x8x8xf32>
    %cst_17 = arith.constant dense<0xFF800000> : vector<2x8xf32>
    %45 = vector.multi_reduction <maximumf>, %44, %cst_17 [2] : vector<2x8x8xf32> to vector<2x8xf32>
    %46 = vector.shape_cast %45 : vector<2x8xf32> to vector<2x8x1xf32>
    %47 = vector.broadcast %46 : vector<2x8x1xf32> to vector<2x8x8xf32>
    %48 = arith.subf %44, %47 : vector<2x8x8xf32>
    %49 = math.exp %48 : vector<2x8x8xf32>
    %cst_18 = arith.constant dense<0.000000e+00> : vector<2x8xf32>
    %50 = vector.multi_reduction <add>, %49, %cst_18 [2] : vector<2x8x8xf32> to vector<2x8xf32>
    %51 = vector.shape_cast %50 : vector<2x8xf32> to vector<2x8x1xf32>
    %52 = tpu.reciprocal %51 {approx = true} : vector<2x8x1xf32> -> vector<2x8x1xf32>
    %53 = vector.broadcast %52 : vector<2x8x1xf32> to vector<2x8x8xf32>
    %54 = arith.mulf %49, %53 : vector<2x8x8xf32>
    %55 = arith.truncf %54 : vector<2x8x8xf32> to vector<2x8x8xbf16>
    %56 = vector.extract_strided_slice %17 {offsets = [0, 0, 8], sizes = [2, 8, 8], strides = [1, 1, 1]} : vector<2x8x32xbf16> to vector<2x8x8xbf16>
    "tpu.trace_start"() <{level = 10 : i32, message = "bqk,bkd->bqd"}> : () -> ()
    %cst_19 = arith.constant dense<0.000000e+00> : vector<2x8x8xf32>
    %57 = tpu.matmul %55, %56, %cst_19 {dimension_numbers = #tpu.dot_dimension_numbers<[2], [1], [1], [2], [0, 0, 0, 1, 1, 2], [0], [0]>} : vector<2x8x8xbf16>, vector<2x8x8xbf16>, vector<2x8x8xf32> -> vector<2x8x8xf32>
    "tpu.trace_stop"() : () -> ()
    %58 = vector.shape_cast %57 : vector<2x8x8xf32> to vector<16x8xf32>
    %c0_20 = arith.constant 0 : index
    %c8 = arith.constant 8 : index
    %59 = vector.load %arg25[%c0_20, %c8] : memref<16x32xf32, #tpu.memory_space<vmem>>, vector<16x8xf32>
    tpu.vector_store %arg25[%c0_20, %c8], %58 {strides = array<i32>} : memref<16x32xf32, #tpu.memory_space<vmem>>, vector<16x8xf32>,
    %60 = vector.extract_strided_slice %13 {offsets = [0, 0, 16], sizes = [2, 8, 8], strides = [1, 1, 1]} : vector<2x8x32xbf16> to vector<2x8x8xbf16>
    %61 = vector.extract_strided_slice %15 {offsets = [0, 0, 16], sizes = [2, 8, 8], strides = [1, 1, 1]} : vector<2x8x32xbf16> to vector<2x8x8xbf16>
    "tpu.trace_start"() <{level = 10 : i32, message = "bqd,bkd->bqk"}> : () -> ()
    %cst_21 = arith.constant dense<0.000000e+00> : vector<2x8x8xf32>
    %62 = tpu.matmul %60, %61, %cst_21 {dimension_numbers = #tpu.dot_dimension_numbers<[2], [2], [1], [1], [0, 0, 0, 1, 1, 1], [0], [0]>} : vector<2x8x8xbf16>, vector<2x8x8xbf16>, vector<2x8x8xf32> -> vector<2x8x8xf32>
    "tpu.trace_stop"() : () -> ()
    %cst_22 = arith.constant 0.353553385 : f32
    %63 = vector.broadcast %cst_22 : f32 to vector<2x8x8xf32>
    %64 = arith.mulf %62, %63 : vector<2x8x8xf32>
    %65 = arith.addf %64, %11 : vector<2x8x8xf32>
    %cst_23 = arith.constant dense<0xFF800000> : vector<2x8xf32>
    %66 = vector.multi_reduction <maximumf>, %65, %cst_23 [2] : vector<2x8x8xf32> to vector<2x8xf32>
    %67 = vector.shape_cast %66 : vector<2x8xf32> to vector<2x8x1xf32>
    %68 = vector.broadcast %67 : vector<2x8x1xf32> to vector<2x8x8xf32>
    %69 = arith.subf %65, %68 : vector<2x8x8xf32>
    %70 = math.exp %69 : vector<2x8x8xf32>
    %cst_24 = arith.constant dense<0.000000e+00> : vector<2x8xf32>
    %71 = vector.multi_reduction <add>, %70, %cst_24 [2] : vector<2x8x8xf32> to vector<2x8xf32>
    %72 = vector.shape_cast %71 : vector<2x8xf32> to vector<2x8x1xf32>
    %73 = tpu.reciprocal %72 {approx = true} : vector<2x8x1xf32> -> vector<2x8x1xf32>
    %74 = vector.broadcast %73 : vector<2x8x1xf32> to vector<2x8x8xf32>
    %75 = arith.mulf %70, %74 : vector<2x8x8xf32>
    %76 = arith.truncf %75 : vector<2x8x8xf32> to vector<2x8x8xbf16>
    %77 = vector.extract_strided_slice %17 {offsets = [0, 0, 16], sizes = [2, 8, 8], strides = [1, 1, 1]} : vector<2x8x32xbf16> to vector<2x8x8xbf16>
    "tpu.trace_start"() <{level = 10 : i32, message = "bqk,bkd->bqd"}> : () -> ()
    %cst_25 = arith.constant dense<0.000000e+00> : vector<2x8x8xf32>
    %78 = tpu.matmul %76, %77, %cst_25 {dimension_numbers = #tpu.dot_dimension_numbers<[2], [1], [1], [2], [0, 0, 0, 1, 1, 2], [0], [0]>} : vector<2x8x8xbf16>, vector<2x8x8xbf16>, vector<2x8x8xf32> -> vector<2x8x8xf32>
    "tpu.trace_stop"() : () -> ()
    %79 = vector.shape_cast %78 : vector<2x8x8xf32> to vector<16x8xf32>
    %c0_26 = arith.constant 0 : index
    %c16 = arith.constant 16 : index
    %80 = vector.load %arg25[%c0_26, %c16] : memref<16x32xf32, #tpu.memory_space<vmem>>, vector<16x8xf32>
    tpu.vector_store %arg25[%c0_26, %c16], %79 {strides = array<i32>} : memref<16x32xf32, #tpu.memory_space<vmem>>, vector<16x8xf32>,
    %81 = vector.extract_strided_slice %13 {offsets = [0, 0, 24], sizes = [2, 8, 8], strides = [1, 1, 1]} : vector<2x8x32xbf16> to vector<2x8x8xbf16>
    %82 = vector.extract_strided_slice %15 {offsets = [0, 0, 24], sizes = [2, 8, 8], strides = [1, 1, 1]} : vector<2x8x32xbf16> to vector<2x8x8xbf16>
    "tpu.trace_start"() <{level = 10 : i32, message = "bqd,bkd->bqk"}> : () -> ()
    %cst_27 = arith.constant dense<0.000000e+00> : vector<2x8x8xf32>
    %83 = tpu.matmul %81, %82, %cst_27 {dimension_numbers = #tpu.dot_dimension_numbers<[2], [2], [1], [1], [0, 0, 0, 1, 1, 1], [0], [0]>} : vector<2x8x8xbf16>, vector<2x8x8xbf16>, vector<2x8x8xf32> -> vector<2x8x8xf32>
    "tpu.trace_stop"() : () -> ()
    %cst_28 = arith.constant 0.353553385 : f32
    %84 = vector.broadcast %cst_28 : f32 to vector<2x8x8xf32>
    %85 = arith.mulf %83, %84 : vector<2x8x8xf32>
    %86 = arith.addf %85, %11 : vector<2x8x8xf32>
    %cst_29 = arith.constant dense<0xFF800000> : vector<2x8xf32>
    %87 = vector.multi_reduction <maximumf>, %86, %cst_29 [2] : vector<2x8x8xf32> to vector<2x8xf32>
    %88 = vector.shape_cast %87 : vector<2x8xf32> to vector<2x8x1xf32>
    %89 = vector.broadcast %88 : vector<2x8x1xf32> to vector<2x8x8xf32>
    %90 = arith.subf %86, %89 : vector<2x8x8xf32>
    %91 = math.exp %90 : vector<2x8x8xf32>
    %cst_30 = arith.constant dense<0.000000e+00> : vector<2x8xf32>
    %92 = vector.multi_reduction <add>, %91, %cst_30 [2] : vector<2x8x8xf32> to vector<2x8xf32>
    %93 = vector.shape_cast %92 : vector<2x8xf32> to vector<2x8x1xf32>
    %94 = tpu.reciprocal %93 {approx = true} : vector<2x8x1xf32> -> vector<2x8x1xf32>
    %95 = vector.broadcast %94 : vector<2x8x1xf32> to vector<2x8x8xf32>
    %96 = arith.mulf %91, %95 : vector<2x8x8xf32>
    %97 = arith.truncf %96 : vector<2x8x8xf32> to vector<2x8x8xbf16>
    %98 = vector.extract_strided_slice %17 {offsets = [0, 0, 24], sizes = [2, 8, 8], strides = [1, 1, 1]} : vector<2x8x32xbf16> to vector<2x8x8xbf16>
    "tpu.trace_start"() <{level = 10 : i32, message = "bqk,bkd->bqd"}> : () -> ()
    %cst_31 = arith.constant dense<0.000000e+00> : vector<2x8x8xf32>
    %99 = tpu.matmul %97, %98, %cst_31 {dimension_numbers = #tpu.dot_dimension_numbers<[2], [1], [1], [2], [0, 0, 0, 1, 1, 2], [0], [0]>} : vector<2x8x8xbf16>, vector<2x8x8xbf16>, vector<2x8x8xf32> -> vector<2x8x8xf32>
    "tpu.trace_stop"() : () -> ()
    %100 = vector.shape_cast %99 : vector<2x8x8xf32> to vector<16x8xf32>
    %c0_32 = arith.constant 0 : index
    %c24 = arith.constant 24 : index
    %101 = vector.load %arg25[%c0_32, %c24] : memref<16x32xf32, #tpu.memory_space<vmem>>, vector<16x8xf32>
    tpu.vector_store %arg25[%c0_32, %c24], %100 {strides = array<i32>} : memref<16x32xf32, #tpu.memory_space<vmem>>, vector<16x8xf32>,
    %c0_33 = arith.constant 0 : index
    %c0_34 = arith.constant 0 : index
    %102 = vector.load %arg25[%c0_33, %c0_34] : memref<16x32xf32, #tpu.memory_space<vmem>>, vector<16x32xf32>
    %103 = arith.truncf %102 : vector<16x32xf32> to vector<16x32xbf16>
    %c0_35 = arith.constant 0 : index
    %c0_36 = arith.constant 0 : index
    %104 = vector.load %arg6[%c0_35, %c0_36] : memref<32x32xbf16, #tpu.memory_space<vmem>>, vector<32x32xbf16>
    %cst_37 = arith.constant dense<0.000000e+00> : vector<16x32xf32>
    %105 = tpu.matmul %103, %104, %cst_37 {dimension_numbers = #tpu.dot_dimension_numbers<[1], [0], [0], [1], [0, 0, 1, 1], [], []>} : vector<16x32xbf16>, vector<32x32xbf16>, vector<16x32xf32> -> vector<16x32xf32>
    %c0_38 = arith.constant 0 : index
    %c0_39 = arith.constant 0 : index
    %106 = vector.load %arg7[%c0_38, %c0_39] : memref<1x32xf32, #tpu.memory_space<vmem>>, vector<1x32xf32>
    %107 = vector.broadcast %106 : vector<1x32xf32> to vector<16x32xf32>
    %108 = arith.addf %105, %107 : vector<16x32xf32>
    %109 = arith.addf %1, %108 : vector<16x32xf32>
    %c0_40 = arith.constant 0 : index
    %c0_41 = arith.constant 0 : index
    %110 = vector.load %arg8[%c0_40, %c0_41] : memref<1x32xf32, #tpu.memory_space<vmem>>, vector<1x32xf32>
    %c0_42 = arith.constant 0 : index
    %c0_43 = arith.constant 0 : index
    %111 = vector.load %arg9[%c0_42, %c0_43] : memref<1x32xf32, #tpu.memory_space<vmem>>, vector<1x32xf32>
    %cst_44 = arith.constant dense<0.000000e+00> : vector<16xf32>
    %112 = vector.multi_reduction <add>, %109, %cst_44 [1] : vector<16x32xf32> to vector<16xf32>
    %113 = vector.shape_cast %112 : vector<16xf32> to vector<16x1xf32>
    %cst_45 = arith.constant 3.200000e+01 : f32
    %114 = vector.broadcast %cst_45 : f32 to vector<16x1xf32>
    %115 = arith.divf %113, %114 : vector<16x1xf32>
    %116 = vector.broadcast %115 : vector<16x1xf32> to vector<16x32xf32>
    %117 = arith.subf %109, %116 : vector<16x32xf32>
    %118 = arith.mulf %117, %117 : vector<16x32xf32>
    %cst_46 = arith.constant dense<0.000000e+00> : vector<16xf32>
    %119 = vector.multi_reduction <add>, %118, %cst_46 [1] : vector<16x32xf32> to vector<16xf32>
    %120 = vector.shape_cast %119 : vector<16xf32> to vector<16x1xf32>
    %cst_47 = arith.constant 3.200000e+01 : f32
    %121 = vector.broadcast %cst_47 : f32 to vector<16x1xf32>
    %122 = arith.divf %120, %121 : vector<16x1xf32>
    %cst_48 = arith.constant 9.99999974E-6 : f32
    %123 = vector.broadcast %cst_48 : f32 to vector<16x1xf32>
    %124 = arith.addf %122, %123 : vector<16x1xf32>
    %125 = math.rsqrt %124 : vector<16x1xf32>
    %126 = vector.broadcast %125 : vector<16x1xf32> to vector<16x32xf32>
    %127 = arith.mulf %117, %126 : vector<16x32xf32>
    %128 = vector.broadcast %110 : vector<1x32xf32> to vector<16x32xf32>
    %129 = arith.mulf %127, %128 : vector<16x32xf32>
    %130 = vector.broadcast %111 : vector<1x32xf32> to vector<16x32xf32>
    %131 = arith.addf %129, %130 : vector<16x32xf32>
    %132 = arith.truncf %131 : vector<16x32xf32> to vector<16x32xbf16>
    %c0_49 = arith.constant 0 : index
    %c0_50 = arith.constant 0 : index
    %133 = vector.load %arg10[%c0_49, %c0_50] : memref<32x32xbf16, #tpu.memory_space<vmem>>, vector<32x32xbf16>
    %cst_51 = arith.constant dense<0.000000e+00> : vector<16x32xf32>
    %134 = tpu.matmul %132, %133, %cst_51 {dimension_numbers = #tpu.dot_dimension_numbers<[1], [0], [0], [1], [0, 0, 1, 1], [], []>} : vector<16x32xbf16>, vector<32x32xbf16>, vector<16x32xf32> -> vector<16x32xf32>
    %c0_52 = arith.constant 0 : index
    %c0_53 = arith.constant 0 : index
    %135 = vector.load %arg11[%c0_52, %c0_53] : memref<1x32xf32, #tpu.memory_space<vmem>>, vector<1x32xf32>
    %136 = vector.broadcast %135 : vector<1x32xf32> to vector<16x32xf32>
    %137 = arith.addf %134, %136 : vector<16x32xf32>
    %c0_54 = arith.constant 0 : index
    %c0_55 = arith.constant 0 : index
    %138 = vector.load %arg1[%c0_54, %c0_55] : memref<16x32xbf16, #tpu.memory_space<vmem>>, vector<16x32xbf16>
    %c0_56 = arith.constant 0 : index
    %c0_57 = arith.constant 0 : index
    %139 = vector.load %arg12[%c0_56, %c0_57] : memref<32x64xbf16, #tpu.memory_space<vmem>>, vector<32x64xbf16>
    %cst_58 = arith.constant dense<0.000000e+00> : vector<16x64xf32>
    %140 = tpu.matmul %138, %139, %cst_58 {dimension_numbers = #tpu.dot_dimension_numbers<[1], [0], [0], [1], [0, 0, 1, 1], [], []>} : vector<16x32xbf16>, vector<32x64xbf16>, vector<16x64xf32> -> vector<16x64xf32>
    %c0_59 = arith.constant 0 : index
    %c0_60 = arith.constant 0 : index
    %141 = vector.load %arg13[%c0_59, %c0_60] : memref<1x64xf32, #tpu.memory_space<vmem>>, vector<1x64xf32>
    %142 = vector.broadcast %141 : vector<1x64xf32> to vector<16x64xf32>
    %143 = arith.addf %140, %142 : vector<16x64xf32>
    %144 = vector.extract_strided_slice %143 {offsets = [0, 0], sizes = [16, 32], strides = [1, 1]} : vector<16x64xf32> to vector<16x32xf32>
    %145 = vector.extract_strided_slice %143 {offsets = [0, 32], sizes = [16, 32], strides = [1, 1]} : vector<16x64xf32> to vector<16x32xf32>
    %c0_61 = arith.constant 0 : index
    %c0_62 = arith.constant 0 : index
    %c0_63 = arith.constant 0 : index
    %146 = vector.load %arg3[%c0_61, %c0_62, %c0_63] : memref<2x1x8xf32, #tpu.memory_space<vmem>>, vector<2x1x8xf32>
    %147 = vector.shape_cast %137 : vector<16x32xf32> to vector<2x8x32xf32>
    %148 = arith.truncf %147 : vector<2x8x32xf32> to vector<2x8x32xbf16>
    %149 = vector.shape_cast %144 : vector<16x32xf32> to vector<2x8x32xf32>
    %150 = arith.truncf %149 : vector<2x8x32xf32> to vector<2x8x32xbf16>
    %151 = vector.shape_cast %145 : vector<16x32xf32> to vector<2x8x32xf32>
    %152 = arith.truncf %151 : vector<2x8x32xf32> to vector<2x8x32xbf16>
    %153 = vector.extract_strided_slice %148 {offsets = [0, 0, 0], sizes = [2, 8, 8], strides = [1, 1, 1]} : vector<2x8x32xbf16> to vector<2x8x8xbf16>
    %154 = vector.extract_strided_slice %150 {offsets = [0, 0, 0], sizes = [2, 8, 8], strides = [1, 1, 1]} : vector<2x8x32xbf16> to vector<2x8x8xbf16>
    "tpu.trace_start"() <{level = 10 : i32, message = "bqd,bkd->bqk"}> : () -> ()
    %cst_64 = arith.constant dense<0.000000e+00> : vector<2x8x8xf32>
    %155 = tpu.matmul %153, %154, %cst_64 {dimension_numbers = #tpu.dot_dimension_numbers<[2], [2], [1], [1], [0, 0, 0, 1, 1, 1], [0], [0]>} : vector<2x8x8xbf16>, vector<2x8x8xbf16>, vector<2x8x8xf32> -> vector<2x8x8xf32>
    "tpu.trace_stop"() : () -> ()
    %cst_65 = arith.constant 0.353553385 : f32
    %156 = vector.broadcast %cst_65 : f32 to vector<2x8x8xf32>
    %157 = arith.mulf %155, %156 : vector<2x8x8xf32>
    %158 = vector.broadcast %146 : vector<2x1x8xf32> to vector<2x8x8xf32>
    %159 = arith.addf %157, %158 : vector<2x8x8xf32>
    %cst_66 = arith.constant dense<0xFF800000> : vector<2x8xf32>
    %160 = vector.multi_reduction <maximumf>, %159, %cst_66 [2] : vector<2x8x8xf32> to vector<2x8xf32>
    %161 = vector.shape_cast %160 : vector<2x8xf32> to vector<2x8x1xf32>
    %162 = vector.broadcast %161 : vector<2x8x1xf32> to vector<2x8x8xf32>
    %163 = arith.subf %159, %162 : vector<2x8x8xf32>
    %164 = math.exp %163 : vector<2x8x8xf32>
    %cst_67 = arith.constant dense<0.000000e+00> : vector<2x8xf32>
    %165 = vector.multi_reduction <add>, %164, %cst_67 [2] : vector<2x8x8xf32> to vector<2x8xf32>
    %166 = vector.shape_cast %165 : vector<2x8xf32> to vector<2x8x1xf32>
    %167 = tpu.reciprocal %166 {approx = true} : vector<2x8x1xf32> -> vector<2x8x1xf32>
    %168 = vector.broadcast %167 : vector<2x8x1xf32> to vector<2x8x8xf32>
    %169 = arith.mulf %164, %168 : vector<2x8x8xf32>
    %170 = arith.truncf %169 : vector<2x8x8xf32> to vector<2x8x8xbf16>
    %171 = vector.extract_strided_slice %152 {offsets = [0, 0, 0], sizes = [2, 8, 8], strides = [1, 1, 1]} : vector<2x8x32xbf16> to vector<2x8x8xbf16>
    "tpu.trace_start"() <{level = 10 : i32, message = "bqk,bkd->bqd"}> : () -> ()
    %cst_68 = arith.constant dense<0.000000e+00> : vector<2x8x8xf32>
    %172 = tpu.matmul %170, %171, %cst_68 {dimension_numbers = #tpu.dot_dimension_numbers<[2], [1], [1], [2], [0, 0, 0, 1, 1, 2], [0], [0]>} : vector<2x8x8xbf16>, vector<2x8x8xbf16>, vector<2x8x8xf32> -> vector<2x8x8xf32>
    "tpu.trace_stop"() : () -> ()
    %173 = vector.shape_cast %172 : vector<2x8x8xf32> to vector<16x8xf32>
    %c0_69 = arith.constant 0 : index
    %c0_70 = arith.constant 0 : index
    %174 = vector.load %arg25[%c0_69, %c0_70] : memref<16x32xf32, #tpu.memory_space<vmem>>, vector<16x8xf32>
    tpu.vector_store %arg25[%c0_69, %c0_70], %173 {strides = array<i32>} : memref<16x32xf32, #tpu.memory_space<vmem>>, vector<16x8xf32>,
    %175 = vector.extract_strided_slice %148 {offsets = [0, 0, 8], sizes = [2, 8, 8], strides = [1, 1, 1]} : vector<2x8x32xbf16> to vector<2x8x8xbf16>
    %176 = vector.extract_strided_slice %150 {offsets = [0, 0, 8], sizes = [2, 8, 8], strides = [1, 1, 1]} : vector<2x8x32xbf16> to vector<2x8x8xbf16>
    "tpu.trace_start"() <{level = 10 : i32, message = "bqd,bkd->bqk"}> : () -> ()
    %cst_71 = arith.constant dense<0.000000e+00> : vector<2x8x8xf32>
    %177 = tpu.matmul %175, %176, %cst_71 {dimension_numbers = #tpu.dot_dimension_numbers<[2], [2], [1], [1], [0, 0, 0, 1, 1, 1], [0], [0]>} : vector<2x8x8xbf16>, vector<2x8x8xbf16>, vector<2x8x8xf32> -> vector<2x8x8xf32>
    "tpu.trace_stop"() : () -> ()
    %cst_72 = arith.constant 0.353553385 : f32
    %178 = vector.broadcast %cst_72 : f32 to vector<2x8x8xf32>
    %179 = arith.mulf %177, %178 : vector<2x8x8xf32>
    %180 = vector.broadcast %146 : vector<2x1x8xf32> to vector<2x8x8xf32>
    %181 = arith.addf %179, %180 : vector<2x8x8xf32>
    %cst_73 = arith.constant dense<0xFF800000> : vector<2x8xf32>
    %182 = vector.multi_reduction <maximumf>, %181, %cst_73 [2] : vector<2x8x8xf32> to vector<2x8xf32>
    %183 = vector.shape_cast %182 : vector<2x8xf32> to vector<2x8x1xf32>
    %184 = vector.broadcast %183 : vector<2x8x1xf32> to vector<2x8x8xf32>
    %185 = arith.subf %181, %184 : vector<2x8x8xf32>
    %186 = math.exp %185 : vector<2x8x8xf32>
    %cst_74 = arith.constant dense<0.000000e+00> : vector<2x8xf32>
    %187 = vector.multi_reduction <add>, %186, %cst_74 [2] : vector<2x8x8xf32> to vector<2x8xf32>
    %188 = vector.shape_cast %187 : vector<2x8xf32> to vector<2x8x1xf32>
    %189 = tpu.reciprocal %188 {approx = true} : vector<2x8x1xf32> -> vector<2x8x1xf32>
    %190 = vector.broadcast %189 : vector<2x8x1xf32> to vector<2x8x8xf32>
    %191 = arith.mulf %186, %190 : vector<2x8x8xf32>
    %192 = arith.truncf %191 : vector<2x8x8xf32> to vector<2x8x8xbf16>
    %193 = vector.extract_strided_slice %152 {offsets = [0, 0, 8], sizes = [2, 8, 8], strides = [1, 1, 1]} : vector<2x8x32xbf16> to vector<2x8x8xbf16>
    "tpu.trace_start"() <{level = 10 : i32, message = "bqk,bkd->bqd"}> : () -> ()
    %cst_75 = arith.constant dense<0.000000e+00> : vector<2x8x8xf32>
    %194 = tpu.matmul %192, %193, %cst_75 {dimension_numbers = #tpu.dot_dimension_numbers<[2], [1], [1], [2], [0, 0, 0, 1, 1, 2], [0], [0]>} : vector<2x8x8xbf16>, vector<2x8x8xbf16>, vector<2x8x8xf32> -> vector<2x8x8xf32>
    "tpu.trace_stop"() : () -> ()
    %195 = vector.shape_cast %194 : vector<2x8x8xf32> to vector<16x8xf32>
    %c0_76 = arith.constant 0 : index
    %c8_77 = arith.constant 8 : index
    %196 = vector.load %arg25[%c0_76, %c8_77] : memref<16x32xf32, #tpu.memory_space<vmem>>, vector<16x8xf32>
    tpu.vector_store %arg25[%c0_76, %c8_77], %195 {strides = array<i32>} : memref<16x32xf32, #tpu.memory_space<vmem>>, vector<16x8xf32>,
    %197 = vector.extract_strided_slice %148 {offsets = [0, 0, 16], sizes = [2, 8, 8], strides = [1, 1, 1]} : vector<2x8x32xbf16> to vector<2x8x8xbf16>
    %198 = vector.extract_strided_slice %150 {offsets = [0, 0, 16], sizes = [2, 8, 8], strides = [1, 1, 1]} : vector<2x8x32xbf16> to vector<2x8x8xbf16>
    "tpu.trace_start"() <{level = 10 : i32, message = "bqd,bkd->bqk"}> : () -> ()
    %cst_78 = arith.constant dense<0.000000e+00> : vector<2x8x8xf32>
    %199 = tpu.matmul %197, %198, %cst_78 {dimension_numbers = #tpu.dot_dimension_numbers<[2], [2], [1], [1], [0, 0, 0, 1, 1, 1], [0], [0]>} : vector<2x8x8xbf16>, vector<2x8x8xbf16>, vector<2x8x8xf32> -> vector<2x8x8xf32>
    "tpu.trace_stop"() : () -> ()
    %cst_79 = arith.constant 0.353553385 : f32
    %200 = vector.broadcast %cst_79 : f32 to vector<2x8x8xf32>
    %201 = arith.mulf %199, %200 : vector<2x8x8xf32>
    %202 = vector.broadcast %146 : vector<2x1x8xf32> to vector<2x8x8xf32>
    %203 = arith.addf %201, %202 : vector<2x8x8xf32>
    %cst_80 = arith.constant dense<0xFF800000> : vector<2x8xf32>
    %204 = vector.multi_reduction <maximumf>, %203, %cst_80 [2] : vector<2x8x8xf32> to vector<2x8xf32>
    %205 = vector.shape_cast %204 : vector<2x8xf32> to vector<2x8x1xf32>
    %206 = vector.broadcast %205 : vector<2x8x1xf32> to vector<2x8x8xf32>
    %207 = arith.subf %203, %206 : vector<2x8x8xf32>
    %208 = math.exp %207 : vector<2x8x8xf32>
    %cst_81 = arith.constant dense<0.000000e+00> : vector<2x8xf32>
    %209 = vector.multi_reduction <add>, %208, %cst_81 [2] : vector<2x8x8xf32> to vector<2x8xf32>
    %210 = vector.shape_cast %209 : vector<2x8xf32> to vector<2x8x1xf32>
    %211 = tpu.reciprocal %210 {approx = true} : vector<2x8x1xf32> -> vector<2x8x1xf32>
    %212 = vector.broadcast %211 : vector<2x8x1xf32> to vector<2x8x8xf32>
    %213 = arith.mulf %208, %212 : vector<2x8x8xf32>
    %214 = arith.truncf %213 : vector<2x8x8xf32> to vector<2x8x8xbf16>
    %215 = vector.extract_strided_slice %152 {offsets = [0, 0, 16], sizes = [2, 8, 8], strides = [1, 1, 1]} : vector<2x8x32xbf16> to vector<2x8x8xbf16>
    "tpu.trace_start"() <{level = 10 : i32, message = "bqk,bkd->bqd"}> : () -> ()
    %cst_82 = arith.constant dense<0.000000e+00> : vector<2x8x8xf32>
    %216 = tpu.matmul %214, %215, %cst_82 {dimension_numbers = #tpu.dot_dimension_numbers<[2], [1], [1], [2], [0, 0, 0, 1, 1, 2], [0], [0]>} : vector<2x8x8xbf16>, vector<2x8x8xbf16>, vector<2x8x8xf32> -> vector<2x8x8xf32>
    "tpu.trace_stop"() : () -> ()
    %217 = vector.shape_cast %216 : vector<2x8x8xf32> to vector<16x8xf32>
    %c0_83 = arith.constant 0 : index
    %c16_84 = arith.constant 16 : index
    %218 = vector.load %arg25[%c0_83, %c16_84] : memref<16x32xf32, #tpu.memory_space<vmem>>, vector<16x8xf32>
    tpu.vector_store %arg25[%c0_83, %c16_84], %217 {strides = array<i32>} : memref<16x32xf32, #tpu.memory_space<vmem>>, vector<16x8xf32>,
    %219 = vector.extract_strided_slice %148 {offsets = [0, 0, 24], sizes = [2, 8, 8], strides = [1, 1, 1]} : vector<2x8x32xbf16> to vector<2x8x8xbf16>
    %220 = vector.extract_strided_slice %150 {offsets = [0, 0, 24], sizes = [2, 8, 8], strides = [1, 1, 1]} : vector<2x8x32xbf16> to vector<2x8x8xbf16>
    "tpu.trace_start"() <{level = 10 : i32, message = "bqd,bkd->bqk"}> : () -> ()
    %cst_85 = arith.constant dense<0.000000e+00> : vector<2x8x8xf32>
    %221 = tpu.matmul %219, %220, %cst_85 {dimension_numbers = #tpu.dot_dimension_numbers<[2], [2], [1], [1], [0, 0, 0, 1, 1, 1], [0], [0]>} : vector<2x8x8xbf16>, vector<2x8x8xbf16>, vector<2x8x8xf32> -> vector<2x8x8xf32>
    "tpu.trace_stop"() : () -> ()
    %cst_86 = arith.constant 0.353553385 : f32
    %222 = vector.broadcast %cst_86 : f32 to vector<2x8x8xf32>
    %223 = arith.mulf %221, %222 : vector<2x8x8xf32>
    %224 = vector.broadcast %146 : vector<2x1x8xf32> to vector<2x8x8xf32>
    %225 = arith.addf %223, %224 : vector<2x8x8xf32>
    %cst_87 = arith.constant dense<0xFF800000> : vector<2x8xf32>
    %226 = vector.multi_reduction <maximumf>, %225, %cst_87 [2] : vector<2x8x8xf32> to vector<2x8xf32>
    %227 = vector.shape_cast %226 : vector<2x8xf32> to vector<2x8x1xf32>
    %228 = vector.broadcast %227 : vector<2x8x1xf32> to vector<2x8x8xf32>
    %229 = arith.subf %225, %228 : vector<2x8x8xf32>
    %230 = math.exp %229 : vector<2x8x8xf32>
    %cst_88 = arith.constant dense<0.000000e+00> : vector<2x8xf32>
    %231 = vector.multi_reduction <add>, %230, %cst_88 [2] : vector<2x8x8xf32> to vector<2x8xf32>
    %232 = vector.shape_cast %231 : vector<2x8xf32> to vector<2x8x1xf32>
    %233 = tpu.reciprocal %232 {approx = true} : vector<2x8x1xf32> -> vector<2x8x1xf32>
    %234 = vector.broadcast %233 : vector<2x8x1xf32> to vector<2x8x8xf32>
    %235 = arith.mulf %230, %234 : vector<2x8x8xf32>
    %236 = arith.truncf %235 : vector<2x8x8xf32> to vector<2x8x8xbf16>
    %237 = vector.extract_strided_slice %152 {offsets = [0, 0, 24], sizes = [2, 8, 8], strides = [1, 1, 1]} : vector<2x8x32xbf16> to vector<2x8x8xbf16>
    "tpu.trace_start"() <{level = 10 : i32, message = "bqk,bkd->bqd"}> : () -> ()
    %cst_89 = arith.constant dense<0.000000e+00> : vector<2x8x8xf32>
    %238 = tpu.matmul %236, %237, %cst_89 {dimension_numbers = #tpu.dot_dimension_numbers<[2], [1], [1], [2], [0, 0, 0, 1, 1, 2], [0], [0]>} : vector<2x8x8xbf16>, vector<2x8x8xbf16>, vector<2x8x8xf32> -> vector<2x8x8xf32>
    "tpu.trace_stop"() : () -> ()
    %239 = vector.shape_cast %238 : vector<2x8x8xf32> to vector<16x8xf32>
    %c0_90 = arith.constant 0 : index
    %c24_91 = arith.constant 24 : index
    %240 = vector.load %arg25[%c0_90, %c24_91] : memref<16x32xf32, #tpu.memory_space<vmem>>, vector<16x8xf32>
    tpu.vector_store %arg25[%c0_90, %c24_91], %239 {strides = array<i32>} : memref<16x32xf32, #tpu.memory_space<vmem>>, vector<16x8xf32>,
    %c0_92 = arith.constant 0 : index
    %c0_93 = arith.constant 0 : index
    %241 = vector.load %arg25[%c0_92, %c0_93] : memref<16x32xf32, #tpu.memory_space<vmem>>, vector<16x32xf32>
    %242 = arith.truncf %241 : vector<16x32xf32> to vector<16x32xbf16>
    %c0_94 = arith.constant 0 : index
    %c0_95 = arith.constant 0 : index
    %243 = vector.load %arg14[%c0_94, %c0_95] : memref<32x32xbf16, #tpu.memory_space<vmem>>, vector<32x32xbf16>
    %cst_96 = arith.constant dense<0.000000e+00> : vector<16x32xf32>
    %244 = tpu.matmul %242, %243, %cst_96 {dimension_numbers = #tpu.dot_dimension_numbers<[1], [0], [0], [1], [0, 0, 1, 1], [], []>} : vector<16x32xbf16>, vector<32x32xbf16>, vector<16x32xf32> -> vector<16x32xf32>
    %c0_97 = arith.constant 0 : index
    %c0_98 = arith.constant 0 : index
    %245 = vector.load %arg15[%c0_97, %c0_98] : memref<1x32xf32, #tpu.memory_space<vmem>>, vector<1x32xf32>
    %246 = vector.broadcast %245 : vector<1x32xf32> to vector<16x32xf32>
    %247 = arith.addf %244, %246 : vector<16x32xf32>
    %248 = arith.addf %131, %247 : vector<16x32xf32>
    %c0_99 = arith.constant 0 : index
    %c0_100 = arith.constant 0 : index
    %249 = vector.load %arg16[%c0_99, %c0_100] : memref<1x32xf32, #tpu.memory_space<vmem>>, vector<1x32xf32>
    %c0_101 = arith.constant 0 : index
    %c0_102 = arith.constant 0 : index
    %250 = vector.load %arg17[%c0_101, %c0_102] : memref<1x32xf32, #tpu.memory_space<vmem>>, vector<1x32xf32>
    %cst_103 = arith.constant dense<0.000000e+00> : vector<16xf32>
    %251 = vector.multi_reduction <add>, %248, %cst_103 [1] : vector<16x32xf32> to vector<16xf32>
    %252 = vector.shape_cast %251 : vector<16xf32> to vector<16x1xf32>
    %cst_104 = arith.constant 3.200000e+01 : f32
    %253 = vector.broadcast %cst_104 : f32 to vector<16x1xf32>
    %254 = arith.divf %252, %253 : vector<16x1xf32>
    %255 = vector.broadcast %254 : vector<16x1xf32> to vector<16x32xf32>
    %256 = arith.subf %248, %255 : vector<16x32xf32>
    %257 = arith.mulf %256, %256 : vector<16x32xf32>
    %cst_105 = arith.constant dense<0.000000e+00> : vector<16xf32>
    %258 = vector.multi_reduction <add>, %257, %cst_105 [1] : vector<16x32xf32> to vector<16xf32>
    %259 = vector.shape_cast %258 : vector<16xf32> to vector<16x1xf32>
    %cst_106 = arith.constant 3.200000e+01 : f32
    %260 = vector.broadcast %cst_106 : f32 to vector<16x1xf32>
    %261 = arith.divf %259, %260 : vector<16x1xf32>
    %cst_107 = arith.constant 9.99999974E-6 : f32
    %262 = vector.broadcast %cst_107 : f32 to vector<16x1xf32>
    %263 = arith.addf %261, %262 : vector<16x1xf32>
    %264 = math.rsqrt %263 : vector<16x1xf32>
    %265 = vector.broadcast %264 : vector<16x1xf32> to vector<16x32xf32>
    %266 = arith.mulf %256, %265 : vector<16x32xf32>
    %267 = vector.broadcast %249 : vector<1x32xf32> to vector<16x32xf32>
    %268 = arith.mulf %266, %267 : vector<16x32xf32>
    %269 = vector.broadcast %250 : vector<1x32xf32> to vector<16x32xf32>
    %270 = arith.addf %268, %269 : vector<16x32xf32>
    %271 = arith.truncf %270 : vector<16x32xf32> to vector<16x32xbf16>
    %c0_108 = arith.constant 0 : index
    %c0_109 = arith.constant 0 : index
    %272 = vector.load %arg18[%c0_108, %c0_109] : memref<32x64xbf16, #tpu.memory_space<vmem>>, vector<32x64xbf16>
    %cst_110 = arith.constant dense<0.000000e+00> : vector<16x64xf32>
    %273 = tpu.matmul %271, %272, %cst_110 {dimension_numbers = #tpu.dot_dimension_numbers<[1], [0], [0], [1], [0, 0, 1, 1], [], []>} : vector<16x32xbf16>, vector<32x64xbf16>, vector<16x64xf32> -> vector<16x64xf32>
    %c0_111 = arith.constant 0 : index
    %c0_112 = arith.constant 0 : index
    %274 = vector.load %arg19[%c0_111, %c0_112] : memref<1x64xf32, #tpu.memory_space<vmem>>, vector<1x64xf32>
    %275 = vector.broadcast %274 : vector<1x64xf32> to vector<16x64xf32>
    %276 = arith.addf %273, %275 : vector<16x64xf32>
    %cst_113 = arith.constant 0.000000e+00 : f32
    %277 = vector.broadcast %cst_113 : f32 to vector<16x64xf32>
    %278 = arith.maximumf %276, %277 : vector<16x64xf32>
    %279 = arith.truncf %278 : vector<16x64xf32> to vector<16x64xbf16>
    %c0_114 = arith.constant 0 : index
    %c0_115 = arith.constant 0 : index
    %280 = vector.load %arg20[%c0_114, %c0_115] : memref<64x32xbf16, #tpu.memory_space<vmem>>, vector<64x32xbf16>
    %cst_116 = arith.constant dense<0.000000e+00> : vector<16x32xf32>
    %281 = tpu.matmul %279, %280, %cst_116 {dimension_numbers = #tpu.dot_dimension_numbers<[1], [0], [0], [1], [0, 0, 1, 1], [], []>} : vector<16x64xbf16>, vector<64x32xbf16>, vector<16x32xf32> -> vector<16x32xf32>
    %c0_117 = arith.constant 0 : index
    %c0_118 = arith.constant 0 : index
    %282 = vector.load %arg21[%c0_117, %c0_118] : memref<1x32xf32, #tpu.memory_space<vmem>>, vector<1x32xf32>
    %283 = vector.broadcast %282 : vector<1x32xf32> to vector<16x32xf32>
    %284 = arith.addf %281, %283 : vector<16x32xf32>
    %285 = arith.addf %270, %284 : vector<16x32xf32>
    %c0_119 = arith.constant 0 : index
    %c0_120 = arith.constant 0 : index
    %286 = vector.load %arg22[%c0_119, %c0_120] : memref<1x32xf32, #tpu.memory_space<vmem>>, vector<1x32xf32>
    %c0_121 = arith.constant 0 : index
    %c0_122 = arith.constant 0 : index
    %287 = vector.load %arg23[%c0_121, %c0_122] : memref<1x32xf32, #tpu.memory_space<vmem>>, vector<1x32xf32>
    %cst_123 = arith.constant dense<0.000000e+00> : vector<16xf32>
    %288 = vector.multi_reduction <add>, %285, %cst_123 [1] : vector<16x32xf32> to vector<16xf32>
    %289 = vector.shape_cast %288 : vector<16xf32> to vector<16x1xf32>
    %cst_124 = arith.constant 3.200000e+01 : f32
    %290 = vector.broadcast %cst_124 : f32 to vector<16x1xf32>
    %291 = arith.divf %289, %290 : vector<16x1xf32>
    %292 = vector.broadcast %291 : vector<16x1xf32> to vector<16x32xf32>
    %293 = arith.subf %285, %292 : vector<16x32xf32>
    %294 = arith.mulf %293, %293 : vector<16x32xf32>
    %cst_125 = arith.constant dense<0.000000e+00> : vector<16xf32>
    %295 = vector.multi_reduction <add>, %294, %cst_125 [1] : vector<16x32xf32> to vector<16xf32>
    %296 = vector.shape_cast %295 : vector<16xf32> to vector<16x1xf32>
    %cst_126 = arith.constant 3.200000e+01 : f32
    %297 = vector.broadcast %cst_126 : f32 to vector<16x1xf32>
    %298 = arith.divf %296, %297 : vector<16x1xf32>
    %cst_127 = arith.constant 9.99999974E-6 : f32
    %299 = vector.broadcast %cst_127 : f32 to vector<16x1xf32>
    %300 = arith.addf %298, %299 : vector<16x1xf32>
    %301 = math.rsqrt %300 : vector<16x1xf32>
    %302 = vector.broadcast %301 : vector<16x1xf32> to vector<16x32xf32>
    %303 = arith.mulf %293, %302 : vector<16x32xf32>
    %304 = vector.broadcast %286 : vector<1x32xf32> to vector<16x32xf32>
    %305 = arith.mulf %303, %304 : vector<16x32xf32>
    %306 = vector.broadcast %287 : vector<1x32xf32> to vector<16x32xf32>
    %307 = arith.addf %305, %306 : vector<16x32xf32>
    %308 = arith.truncf %307 : vector<16x32xf32> to vector<16x32xbf16>
    %c0_128 = arith.constant 0 : index
    %c0_129 = arith.constant 0 : index
    %309 = vector.load %arg24[%c0_128, %c0_129] : memref<16x32xbf16, #tpu.memory_space<vmem>>, vector<16x32xbf16>
    tpu.vector_store %arg24[%c0_128, %c0_129], %308 {strides = array<i32>} : memref<16x32xbf16, #tpu.memory_space<vmem>>, vector<16x32xbf16>,
    return
  }
}

module attributes {stable_mosaic.version = 11 : i64} {
  func.func @_decoder_layer_kernel(%arg0: memref<16x32xbf16, #tpu.memory_space<vmem>>, %arg1: memref<16x32xbf16, #tpu.memory_space<vmem>>, %arg2: memref<2x8x8xf32, #tpu.memory_space<vmem>>, %arg3: memref<2x1x8xf32, #tpu.memory_space<vmem>>, %arg4: memref<32x96xbf16, #tpu.memory_space<vmem>>, %arg5: memref<1x96xf32, #tpu.memory_space<vmem>>, %arg6: memref<32x32xbf16, #tpu.memory_space<vmem>>, %arg7: memref<1x32xf32, #tpu.memory_space<vmem>>, %arg8: memref<1x32xf32, #tpu.memory_space<vmem>>, %arg9: memref<1x32xf32, #tpu.memory_space<vmem>>, %arg10: memref<32x32xbf16, #tpu.memory_space<vmem>>, %arg11: memref<1x32xf32, #tpu.memory_space<vmem>>, %arg12: memref<32x64xbf16, #tpu.memory_space<vmem>>, %arg13: memref<1x64xf32, #tpu.memory_space<vmem>>, %arg14: memref<32x32xbf16, #tpu.memory_space<vmem>>, %arg15: memref<1x32xf32, #tpu.memory_space<vmem>>, %arg16: memref<1x32xf32, #tpu.memory_space<vmem>>, %arg17: memref<1x32xf32, #tpu.memory_space<vmem>>, %arg18: memref<32x64xbf16, #tpu.memory_space<vmem>>, %arg19: memref<1x64xf32, #tpu.memory_space<vmem>>, %arg20: memref<64x32xbf16, #tpu.memory_space<vmem>>, %arg21: memref<1x32xf32, #tpu.memory_space<vmem>>, %arg22: memref<1x32xf32, #tpu.memory_space<vmem>>, %arg23: memref<1x32xf32, #tpu.memory_space<vmem>>, %arg24: memref<16x32xbf16, #tpu.memory_space<vmem>>, %arg25: memref<16x32xf32, #tpu.memory_space<vmem>>) attributes {dimension_semantics = [], scalar_prefetch = 0 : i64, scratch_operands = 1 : i64, tpu.core_type = #tpu.core_type<tc>} {
    %c0 = arith.constant 0 : index
    %c0_0 = arith.constant 0 : index
    %0 = vector.load %arg0[%c0, %c0_0] : memref<16x32xbf16, #tpu.memory_space<vmem>>, vector<16x32xbf16>
    %1 = arith.extf %0 : vector<16x32xbf16> to vector<16x32xf32>
    %2 = arith.truncf %1 : vector<16x32xf32> to vector<16x32xbf16>
    %c0_1 = arith.constant 0 : index
    %c0_2 = arith.constant 0 : index
    %3 = vector.load %arg4[%c0_1, %c0_2] : memref<32x96xbf16, #tpu.memory_space<vmem>>, vector<32x96xbf16>
    %cst = arith.constant dense<0.000000e+00> : vector<16x96xf32>
    %4 = tpu.matmul %2, %3, %cst {dimension_numbers = #tpu.dot_dimension_numbers<[1], [0], [0], [1], [0, 0, 1, 1], [], []>} : vector<16x32xbf16>, vector<32x96xbf16>, vector<16x96xf32> -> vector<16x96xf32>
    %c0_3 = arith.constant 0 : index
    %c0_4 = arith.constant 0 : index
    %5 = vector.load %arg5[%c0_3, %c0_4] : memref<1x96xf32, #tpu.memory_space<vmem>>, vector<1x96xf32>
    %6 = vector.broadcast %5 : vector<1x96xf32> to vector<16x96xf32>
    %7 = arith.addf %4, %6 : vector<16x96xf32>
    %8 = vector.extract_strided_slice %7 {offsets = [0, 0], sizes = [16, 32], strides = [1, 1]} : vector<16x96xf32> to vector<16x32xf32>
    %9 = vector.extract_strided_slice %7 {offsets = [0, 32], sizes = [16, 32], strides = [1, 1]} : vector<16x96xf32> to vector<16x32xf32>
    %10 = vector.extract_strided_slice %7 {offsets = [0, 64], sizes = [16, 32], strides = [1, 1]} : vector<16x96xf32> to vector<16x32xf32>
    %c0_5 = arith.constant 0 : index
    %c0_6 = arith.constant 0 : index
    %c0_7 = arith.constant 0 : index
    %11 = vector.load %arg2[%c0_5, %c0_6, %c0_7] : memref<2x8x8xf32, #tpu.memory_space<vmem>>, vector<2x8x8xf32>
    %12 = vector.shape_cast %8 : vector<16x32xf32> to vector<2x8x32xf32>
    %13 = arith.truncf %12 : vector<2x8x32xf32> to vector<2x8x32xbf16>
    %14 = vector.shape_cast %9 : vector<16x32xf32> to vector<2x8x32xf32>
    %15 = arith.truncf %14 : vector<2x8x32xf32> to vector<2x8x32xbf16>
    %16 = vector.shape_cast %10 : vector<16x32xf32> to vector<2x8x32xf32>
    %17 = arith.truncf %16 : vector<2x8x32xf32> to vector<2x8x32xbf16>
    %18 = vector.extract_strided_slice %13 {offsets = [0, 0, 0], sizes = [2, 8, 8], strides = [1, 1, 1]} : vector<2x8x32xbf16> to vector<2x8x8xbf16>
    %19 = vector.extract_strided_slice %15 {offsets = [0, 0, 0], sizes = [2, 8, 8], strides = [1, 1, 1]} : vector<2x8x32xbf16> to vector<2x8x8xbf16>
    "tpu.trace_start"() <{level = 10 : i32, message = "bqd,bkd->bqk"}> : () -> ()
    %cst_8 = arith.constant dense<0.000000e+00> : vector<2x8x8xf32>
    %20 = tpu.matmul %18, %19, %cst_8 {dimension_numbers = #tpu.dot_dimension_numbers<[2], [2], [1], [1], [0, 0, 0, 1, 1, 1], [0], [0]>} : vector<2x8x8xbf16>, vector<2x8x8xbf16>, vector<2x8x8xf32> -> vector<2x8x8xf32>
    "tpu.trace_stop"() : () -> ()
    %cst_9 = arith.constant 0.353553385 : f32
    %21 = vector.broadcast %cst_9 : f32 to vector<2x8x8xf32>
    %22 = arith.mulf %20, %21 : vector<2x8x8xf32>
    %23 = arith.addf %22, %11 : vector<2x8x8xf32>
    %cst_10 = arith.constant dense<0xFF800000> : vector<2x8xf32>
    %24 = vector.multi_reduction <maximumf>, %23, %cst_10 [2] : vector<2x8x8xf32> to vector<2x8xf32>
    %25 = vector.shape_cast %24 : vector<2x8xf32> to vector<2x8x1xf32>
    %26 = vector.broadcast %25 : vector<2x8x1xf32> to vector<2x8x8xf32>
    %27 = arith.subf %23, %26 : vector<2x8x8xf32>
    %28 = math.exp %27 : vector<2x8x8xf32>
    %cst_11 = arith.constant dense<0.000000e+00> : vector<2x8xf32>
    %29 = vector.multi_reduction <add>, %28, %cst_11 [2] : vector<2x8x8xf32> to vector<2x8xf32>
    %30 = vector.shape_cast %29 : vector<2x8xf32> to vector<2x8x1xf32>
    %31 = tpu.reciprocal %30 {approx = true} : vector<2x8x1xf32> -> vector<2x8x1xf32>
    %32 = vector.broadcast %31 : vector<2x8x1xf32> to vector<2x8x8xf32>
    %33 = arith.mulf %28, %32 : vector<2x8x8xf32>
    %34 = arith.truncf %33 : vector<2x8x8xf32> to vector<2x8x8xbf16>
    %35 = vector.extract_strided_slice %17 {offsets = [0, 0, 0], sizes = [2, 8, 8], strides = [1, 1, 1]} : vector<2x8x32xbf16> to vector<2x8x8xbf16>
    "tpu.trace_start"() <{level = 10 : i32, message = "bqk,bkd->bqd"}> : () -> ()
    %cst_12 = arith.constant dense<0.000000e+00> : vector<2x8x8xf32>
    %36 = tpu.matmul %34, %35, %cst_12 {dimension_numbers = #tpu.dot_dimension_numbers<[2], [1], [1], [2], [0, 0, 0, 1, 1, 2], [0], [0]>} : vector<2x8x8xbf16>, vector<2x8x8xbf16>, vector<2x8x8xf32> -> vector<2x8x8xf32>
    "tpu.trace_stop"() : () -> ()
    %37 = vector.shape_cast %36 : vector<2x8x8xf32> to vector<16x8xf32>
    %c0_13 = arith.constant 0 : index
    %c0_14 = arith.constant 0 : index
    %38 = vector.load %arg25[%c0_13, %c0_14] : memref<16x32xf32, #tpu.memory_space<vmem>>, vector<16x8xf32>
    tpu.vector_store %arg25[%c0_13, %c0_14], %37 {strides = array<i32>} : memref<16x32xf32, #tpu.memory_space<vmem>>, vector<16x8xf32>,
    %39 = vector.extract_strided_slice %13 {offsets = [0, 0, 8], sizes = [2, 8, 8], strides = [1, 1, 1]} : vector<2x8x32xbf16> to vector<2x8x8xbf16>
    %40 = vector.extract_strided_slice %15 {offsets = [0, 0, 8], sizes = [2, 8, 8], strides = [1, 1, 1]} : vector<2x8x32xbf16> to vector<2x8x8xbf16>
    "tpu.trace_start"() <{level = 10 : i32, message = "bqd,bkd->bqk"}> : () -> ()
    %cst_15 = arith.constant dense<0.000000e+00> : vector<2x8x8xf32>
    %41 = tpu.matmul %39, %40, %cst_15 {dimension_numbers = #tpu.dot_dimension_numbers<[2], [2], [1], [1], [0, 0, 0, 1, 1, 1], [0], [0]>} : vector<2x8x8xbf16>, vector<2x8x8xbf16>, vector<2x8x8xf32> -> vector<2x8x8xf32>
    "tpu.trace_stop"() : () -> ()
    %cst_16 = arith.constant 0.353553385 : f32
    %42 = vector.broadcast %cst_16 : f32 to vector<2x8x8xf32>
    %43 = arith.mulf %41, %42 : vector<2x8x8xf32>
    %44 = arith.addf %43, %11 : vector<2x8x8xf32>
    %cst_17 = arith.constant dense<0xFF800000> : vector<2x8xf32>
    %45 = vector.multi_reduction <maximumf>, %44, %cst_17 [2] : vector<2x8x8xf32> to vector<2x8xf32>
    %46 = vector.shape_cast %45 : vector<2x8xf32> to vector<2x8x1xf32>
    %47 = vector.broadcast %46 : vector<2x8x1xf32> to vector<2x8x8xf32>
    %48 = arith.subf %44, %47 : vector<2x8x8xf32>
    %49 = math.exp %48 : vector<2x8x8xf32>
    %cst_18 = arith.constant dense<0.000000e+00> : vector<2x8xf32>
    %50 = vector.multi_reduction <add>, %49, %cst_18 [2] : vector<2x8x8xf32> to vector<2x8xf32>
    %51 = vector.shape_cast %50 : vector<2x8xf32> to vector<2x8x1xf32>
    %52 = tpu.reciprocal %51 {approx = true} : vector<2x8x1xf32> -> vector<2x8x1xf32>
    %53 = vector.broadcast %52 : vector<2x8x1xf32> to vector<2x8x8xf32>
    %54 = arith.mulf %49, %53 : vector<2x8x8xf32>
    %55 = arith.truncf %54 : vector<2x8x8xf32> to vector<2x8x8xbf16>
    %56 = vector.extract_strided_slice %17 {offsets = [0, 0, 8], sizes = [2, 8, 8], strides = [1, 1, 1]} : vector<2x8x32xbf16> to vector<2x8x8xbf16>
    "tpu.trace_start"() <{level = 10 : i32, message = "bqk,bkd->bqd"}> : () -> ()
    %cst_19 = arith.constant dense<0.000000e+00> : vector<2x8x8xf32>
    %57 = tpu.matmul %55, %56, %cst_19 {dimension_numbers = #tpu.dot_dimension_numbers<[2], [1], [1], [2], [0, 0, 0, 1, 1, 2], [0], [0]>} : vector<2x8x8xbf16>, vector<2x8x8xbf16>, vector<2x8x8xf32> -> vector<2x8x8xf32>
    "tpu.trace_stop"() : () -> ()
    %58 = vector.shape_cast %57 : vector<2x8x8xf32> to vector<16x8xf32>
    %c0_20 = arith.constant 0 : index
    %c8 = arith.constant 8 : index
    %59 = vector.load %arg25[%c0_20, %c8] : memref<16x32xf32, #tpu.memory_space<vmem>>, vector<16x8xf32>
    tpu.vector_store %arg25[%c0_20, %c8], %58 {strides = array<i32>} : memref<16x32xf32, #tpu.memory_space<vmem>>, vector<16x8xf32>,
    %60 = vector.extract_strided_slice %13 {offsets = [0, 0, 16], sizes = [2, 8, 8], strides = [1, 1, 1]} : vector<2x8x32xbf16> to vector<2x8x8xbf16>
    %61 = vector.extract_strided_slice %15 {offsets = [0, 0, 16], sizes = [2, 8, 8], strides = [1, 1, 1]} : vector<2x8x32xbf16> to vector<2x8x8xbf16>
    "tpu.trace_start"() <{level = 10 : i32, message = "bqd,bkd->bqk"}> : () -> ()
    %cst_21 = arith.constant dense<0.000000e+00> : vector<2x8x8xf32>
    %62 = tpu.matmul %60, %61, %cst_21 {dimension_numbers = #tpu.dot_dimension_numbers<[2], [2], [1], [1], [0, 0, 0, 1, 1, 1], [0], [0]>} : vector<2x8x8xbf16>, vector<2x8x8xbf16>, vector<2x8x8xf32> -> vector<2x8x8xf32>
    "tpu.trace_stop"() : () -> ()
    %cst_22 = arith.constant 0.353553385 : f32
    %63 = vector.broadcast %cst_22 : f32 to vector<2x8x8xf32>
    %64 = arith.mulf %62, %63 : vector<2x8x8xf32>
    %65 = arith.addf %64, %11 : vector<2x8x8xf32>
    %cst_23 = arith.constant dense<0xFF800000> : vector<2x8xf32>
    %66 = vector.multi_reduction <maximumf>, %65, %cst_23 [2] : vector<2x8x8xf32> to vector<2x8xf32>
    %67 = vector.shape_cast %66 : vector<2x8xf32> to vector<2x8x1xf32>
    %68 = vector.broadcast %67 : vector<2x8x1xf32> to vector<2x8x8xf32>
    %69 = arith.subf %65, %68 : vector<2x8x8xf32>
    %70 = math.exp %69 : vector<2x8x8xf32>
    %cst_24 = arith.constant dense<0.000000e+00> : vector<2x8xf32>
    %71 = vector.multi_reduction <add>, %70, %cst_24 [2] : vector<2x8x8xf32> to vector<2x8xf32>
    %72 = vector.shape_cast %71 : vector<2x8xf32> to vector<2x8x1xf32>
    %73 = tpu.reciprocal %72 {approx = true} : vector<2x8x1xf32> -> vector<2x8x1xf32>
    %74 = vector.broadcast %73 : vector<2x8x1xf32> to vector<2x8x8xf32>
    %75 = arith.mulf %70, %74 : vector<2x8x8xf32>
    %76 = arith.truncf %75 : vector<2x8x8xf32> to vector<2x8x8xbf16>
    %77 = vector.extract_strided_slice %17 {offsets = [0, 0, 16], sizes = [2, 8, 8], strides = [1, 1, 1]} : vector<2x8x32xbf16> to vector<2x8x8xbf16>
    "tpu.trace_start"() <{level = 10 : i32, message = "bqk,bkd->bqd"}> : () -> ()
    %cst_25 = arith.constant dense<0.000000e+00> : vector<2x8x8xf32>
    %78 = tpu.matmul %76, %77, %cst_25 {dimension_numbers = #tpu.dot_dimension_numbers<[2], [1], [1], [2], [0, 0, 0, 1, 1, 2], [0], [0]>} : vector<2x8x8xbf16>, vector<2x8x8xbf16>, vector<2x8x8xf32> -> vector<2x8x8xf32>
    "tpu.trace_stop"() : () -> ()
    %79 = vector.shape_cast %78 : vector<2x8x8xf32> to vector<16x8xf32>
    %c0_26 = arith.constant 0 : index
    %c16 = arith.constant 16 : index
    %80 = vector.load %arg25[%c0_26, %c16] : memref<16x32xf32, #tpu.memory_space<vmem>>, vector<16x8xf32>
    tpu.vector_store %arg25[%c0_26, %c16], %79 {strides = array<i32>} : memref<16x32xf32, #tpu.memory_space<vmem>>, vector<16x8xf32>,
    %81 = vector.extract_strided_slice %13 {offsets = [0, 0, 24], sizes = [2, 8, 8], strides = [1, 1, 1]} : vector<2x8x32xbf16> to vector<2x8x8xbf16>
    %82 = vector.extract_strided_slice %15 {offsets = [0, 0, 24], sizes = [2, 8, 8], strides = [1, 1, 1]} : vector<2x8x32xbf16> to vector<2x8x8xbf16>
    "tpu.trace_start"() <{level = 10 : i32, message = "bqd,bkd->bqk"}> : () -> ()
    %cst_27 = arith.constant dense<0.000000e+00> : vector<2x8x8xf32>
    %83 = tpu.matmul %81, %82, %cst_27 {dimension_numbers = #tpu.dot_dimension_numbers<[2], [2], [1], [1], [0, 0, 0, 1, 1, 1], [0], [0]>} : vector<2x8x8xbf16>, vector<2x8x8xbf16>, vector<2x8x8xf32> -> vector<2x8x8xf32>
    "tpu.trace_stop"() : () -> ()
    %cst_28 = arith.constant 0.353553385 : f32
    %84 = vector.broadcast %cst_28 : f32 to vector<2x8x8xf32>
    %85 = arith.mulf %83, %84 : vector<2x8x8xf32>
    %86 = arith.addf %85, %11 : vector<2x8x8xf32>
    %cst_29 = arith.constant dense<0xFF800000> : vector<2x8xf32>
    %87 = vector.multi_reduction <maximumf>, %86, %cst_29 [2] : vector<2x8x8xf32> to vector<2x8xf32>
    %88 = vector.shape_cast %87 : vector<2x8xf32> to vector<2x8x1xf32>
    %89 = vector.broadcast %88 : vector<2x8x1xf32> to vector<2x8x8xf32>
    %90 = arith.subf %86, %89 : vector<2x8x8xf32>
    %91 = math.exp %90 : vector<2x8x8xf32>
    %cst_30 = arith.constant dense<0.000000e+00> : vector<2x8xf32>
    %92 = vector.multi_reduction <add>, %91, %cst_30 [2] : vector<2x8x8xf32> to vector<2x8xf32>
    %93 = vector.shape_cast %92 : vector<2x8xf32> to vector<2x8x1xf32>
    %94 = tpu.reciprocal %93 {approx = true} : vector<2x8x1xf32> -> vector<2x8x1xf32>
    %95 = vector.broadcast %94 : vector<2x8x1xf32> to vector<2x8x8xf32>
    %96 = arith.mulf %91, %95 : vector<2x8x8xf32>
    %97 = arith.truncf %96 : vector<2x8x8xf32> to vector<2x8x8xbf16>
    %98 = vector.extract_strided_slice %17 {offsets = [0, 0, 24], sizes = [2, 8, 8], strides = [1, 1, 1]} : vector<2x8x32xbf16> to vector<2x8x8xbf16>
    "tpu.trace_start"() <{level = 10 : i32, message = "bqk,bkd->bqd"}> : () -> ()
    %cst_31 = arith.constant dense<0.000000e+00> : vector<2x8x8xf32>
    %99 = tpu.matmul %97, %98, %cst_31 {dimension_numbers = #tpu.dot_dimension_numbers<[2], [1], [1], [2], [0, 0, 0, 1, 1, 2], [0], [0]>} : vector<2x8x8xbf16>, vector<2x8x8xbf16>, vector<2x8x8xf32> -> vector<2x8x8xf32>
    "tpu.trace_stop"() : () -> ()
    %100 = vector.shape_cast %99 : vector<2x8x8xf32> to vector<16x8xf32>
    %c0_32 = arith.constant 0 : index
    %c24 = arith.constant 24 : index
    %101 = vector.load %arg25[%c0_32, %c24] : memref<16x32xf32, #tpu.memory_space<vmem>>, vector<16x8xf32>
    tpu.vector_store %arg25[%c0_32, %c24], %100 {strides = array<i32>} : memref<16x32xf32, #tpu.memory_space<vmem>>, vector<16x8xf32>,
    %c0_33 = arith.constant 0 : index
    %c0_34 = arith.constant 0 : index
    %102 = vector.load %arg25[%c0_33, %c0_34] : memref<16x32xf32, #tpu.memory_space<vmem>>, vector<16x32xf32>
    %103 = arith.truncf %102 : vector<16x32xf32> to vector<16x32xbf16>
    %c0_35 = arith.constant 0 : index
    %c0_36 = arith.constant 0 : index
    %104 = vector.load %arg6[%c0_35, %c0_36] : memref<32x32xbf16, #tpu.memory_space<vmem>>, vector<32x32xbf16>
    %cst_37 = arith.constant dense<0.000000e+00> : vector<16x32xf32>
    %105 = tpu.matmul %103, %104, %cst_37 {dimension_numbers = #tpu.dot_dimension_numbers<[1], [0], [0], [1], [0, 0, 1, 1], [], []>} : vector<16x32xbf16>, vector<32x32xbf16>, vector<16x32xf32> -> vector<16x32xf32>
    %c0_38 = arith.constant 0 : index
    %c0_39 = arith.constant 0 : index
    %106 = vector.load %arg7[%c0_38, %c0_39] : memref<1x32xf32, #tpu.memory_space<vmem>>, vector<1x32xf32>
    %107 = vector.broadcast %106 : vector<1x32xf32> to vector<16x32xf32>
    %108 = arith.addf %105, %107 : vector<16x32xf32>
    %109 = arith.addf %1, %108 : vector<16x32xf32>
    %c0_40 = arith.constant 0 : index
    %c0_41 = arith.constant 0 : index
    %110 = vector.load %arg8[%c0_40, %c0_41] : memref<1x32xf32, #tpu.memory_space<vmem>>, vector<1x32xf32>
    %c0_42 = arith.constant 0 : index
    %c0_43 = arith.constant 0 : index
    %111 = vector.load %arg9[%c0_42, %c0_43] : memref<1x32xf32, #tpu.memory_space<vmem>>, vector<1x32xf32>
    %cst_44 = arith.constant dense<0.000000e+00> : vector<16xf32>
    %112 = vector.multi_reduction <add>, %109, %cst_44 [1] : vector<16x32xf32> to vector<16xf32>
    %113 = vector.shape_cast %112 : vector<16xf32> to vector<16x1xf32>
    %cst_45 = arith.constant 3.200000e+01 : f32
    %114 = vector.broadcast %cst_45 : f32 to vector<16x1xf32>
    %115 = arith.divf %113, %114 : vector<16x1xf32>
    %116 = vector.broadcast %115 : vector<16x1xf32> to vector<16x32xf32>
    %117 = arith.subf %109, %116 : vector<16x32xf32>
    %118 = arith.mulf %117, %117 : vector<16x32xf32>
    %cst_46 = arith.constant dense<0.000000e+00> : vector<16xf32>
    %119 = vector.multi_reduction <add>, %118, %cst_46 [1] : vector<16x32xf32> to vector<16xf32>
    %120 = vector.shape_cast %119 : vector<16xf32> to vector<16x1xf32>
    %cst_47 = arith.constant 3.200000e+01 : f32
    %121 = vector.broadcast %cst_47 : f32 to vector<16x1xf32>
    %122 = arith.divf %120, %121 : vector<16x1xf32>
    %cst_48 = arith.constant 9.99999974E-6 : f32
    %123 = vector.broadcast %cst_48 : f32 to vector<16x1xf32>
    %124 = arith.addf %122, %123 : vector<16x1xf32>
    %125 = math.rsqrt %124 : vector<16x1xf32>
    %126 = vector.broadcast %125 : vector<16x1xf32> to vector<16x32xf32>
    %127 = arith.mulf %117, %126 : vector<16x32xf32>
    %128 = vector.broadcast %110 : vector<1x32xf32> to vector<16x32xf32>
    %129 = arith.mulf %127, %128 : vector<16x32xf32>
    %130 = vector.broadcast %111 : vector<1x32xf32> to vector<16x32xf32>
    %131 = arith.addf %129, %130 : vector<16x32xf32>
    %132 = arith.truncf %131 : vector<16x32xf32> to vector<16x32xbf16>
    %c0_49 = arith.constant 0 : index
    %c0_50 = arith.constant 0 : index
    %133 = vector.load %arg10[%c0_49, %c0_50] : memref<32x32xbf16, #tpu.memory_space<vmem>>, vector<32x32xbf16>
    %cst_51 = arith.constant dense<0.000000e+00> : vector<16x32xf32>
    %134 = tpu.matmul %132, %133, %cst_51 {dimension_numbers = #tpu.dot_dimension_numbers<[1], [0], [0], [1], [0, 0, 1, 1], [], []>} : vector<16x32xbf16>, vector<32x32xbf16>, vector<16x32xf32> -> vector<16x32xf32>
    %c0_52 = arith.constant 0 : index
    %c0_53 = arith.constant 0 : index
    %135 = vector.load %arg11[%c0_52, %c0_53] : memref<1x32xf32, #tpu.memory_space<vmem>>, vector<1x32xf32>
    %136 = vector.broadcast %135 : vector<1x32xf32> to vector<16x32xf32>
    %137 = arith.addf %134, %136 : vector<16x32xf32>
    %c0_54 = arith.constant 0 : index
    %c0_55 = arith.constant 0 : index
    %138 = vector.load %arg1[%c0_54, %c0_55] : memref<16x32xbf16, #tpu.memory_space<vmem>>, vector<16x32xbf16>
    %c0_56 = arith.constant 0 : index
    %c0_57 = arith.constant 0 : index
    %139 = vector.load %arg12[%c0_56, %c0_57] : memref<32x64xbf16, #tpu.memory_space<vmem>>, vector<32x64xbf16>
    %cst_58 = arith.constant dense<0.000000e+00> : vector<16x64xf32>
    %140 = tpu.matmul %138, %139, %cst_58 {dimension_numbers = #tpu.dot_dimension_numbers<[1], [0], [0], [1], [0, 0, 1, 1], [], []>} : vector<16x32xbf16>, vector<32x64xbf16>, vector<16x64xf32> -> vector<16x64xf32>
    %c0_59 = arith.constant 0 : index
    %c0_60 = arith.constant 0 : index
    %141 = vector.load %arg13[%c0_59, %c0_60] : memref<1x64xf32, #tpu.memory_space<vmem>>, vector<1x64xf32>
    %142 = vector.broadcast %141 : vector<1x64xf32> to vector<16x64xf32>
    %143 = arith.addf %140, %142 : vector<16x64xf32>
    %144 = vector.extract_strided_slice %143 {offsets = [0, 0], sizes = [16, 32], strides = [1, 1]} : vector<16x64xf32> to vector<16x32xf32>
    %145 = vector.extract_strided_slice %143 {offsets = [0, 32], sizes = [16, 32], strides = [1, 1]} : vector<16x64xf32> to vector<16x32xf32>
    %c0_61 = arith.constant 0 : index
    %c0_62 = arith.constant 0 : index
    %c0_63 = arith.constant 0 : index
    %146 = vector.load %arg3[%c0_61, %c0_62, %c0_63] : memref<2x1x8xf32, #tpu.memory_space<vmem>>, vector<2x1x8xf32>
    %147 = vector.shape_cast %137 : vector<16x32xf32> to vector<2x8x32xf32>
    %148 = arith.truncf %147 : vector<2x8x32xf32> to vector<2x8x32xbf16>
    %149 = vector.shape_cast %144 : vector<16x32xf32> to vector<2x8x32xf32>
    %150 = arith.truncf %149 : vector<2x8x32xf32> to vector<2x8x32xbf16>
    %151 = vector.shape_cast %145 : vector<16x32xf32> to vector<2x8x32xf32>
    %152 = arith.truncf %151 : vector<2x8x32xf32> to vector<2x8x32xbf16>
    %153 = vector.extract_strided_slice %148 {offsets = [0, 0, 0], sizes = [2, 8, 8], strides = [1, 1, 1]} : vector<2x8x32xbf16> to vector<2x8x8xbf16>
    %154 = vector.extract_strided_slice %150 {offsets = [0, 0, 0], sizes = [2, 8, 8], strides = [1, 1, 1]} : vector<2x8x32xbf16> to vector<2x8x8xbf16>
    "tpu.trace_start"() <{level = 10 : i32, message = "bqd,bkd->bqk"}> : () -> ()
    %cst_64 = arith.constant dense<0.000000e+00> : vector<2x8x8xf32>
    %155 = tpu.matmul %153, %154, %cst_64 {dimension_numbers = #tpu.dot_dimension_numbers<[2], [2], [1], [1], [0, 0, 0, 1, 1, 1], [0], [0]>} : vector<2x8x8xbf16>, vector<2x8x8xbf16>, vector<2x8x8xf32> -> vector<2x8x8xf32>
    "tpu.trace_stop"() : () -> ()
    %cst_65 = arith.constant 0.353553385 : f32
    %156 = vector.broadcast %cst_65 : f32 to vector<2x8x8xf32>
    %157 = arith.mulf %155, %156 : vector<2x8x8xf32>
    %158 = vector.broadcast %146 : vector<2x1x8xf32> to vector<2x8x8xf32>
    %159 = arith.addf %157, %158 : vector<2x8x8xf32>
    %cst_66 = arith.constant dense<0xFF800000> : vector<2x8xf32>
    %160 = vector.multi_reduction <maximumf>, %159, %cst_66 [2] : vector<2x8x8xf32> to vector<2x8xf32>
    %161 = vector.shape_cast %160 : vector<2x8xf32> to vector<2x8x1xf32>
    %162 = vector.broadcast %161 : vector<2x8x1xf32> to vector<2x8x8xf32>
    %163 = arith.subf %159, %162 : vector<2x8x8xf32>
    %164 = math.exp %163 : vector<2x8x8xf32>
    %cst_67 = arith.constant dense<0.000000e+00> : vector<2x8xf32>
    %165 = vector.multi_reduction <add>, %164, %cst_67 [2] : vector<2x8x8xf32> to vector<2x8xf32>
    %166 = vector.shape_cast %165 : vector<2x8xf32> to vector<2x8x1xf32>
    %167 = tpu.reciprocal %166 {approx = true} : vector<2x8x1xf32> -> vector<2x8x1xf32>
    %168 = vector.broadcast %167 : vector<2x8x1xf32> to vector<2x8x8xf32>
    %169 = arith.mulf %164, %168 : vector<2x8x8xf32>
    %170 = arith.truncf %169 : vector<2x8x8xf32> to vector<2x8x8xbf16>
    %171 = vector.extract_strided_slice %152 {offsets = [0, 0, 0], sizes = [2, 8, 8], strides = [1, 1, 1]} : vector<2x8x32xbf16> to vector<2x8x8xbf16>
    "tpu.trace_start"() <{level = 10 : i32, message = "bqk,bkd->bqd"}> : () -> ()
    %cst_68 = arith.constant dense<0.000000e+00> : vector<2x8x8xf32>
    %172 = tpu.matmul %170, %171, %cst_68 {dimension_numbers = #tpu.dot_dimension_numbers<[2], [1], [1], [2], [0, 0, 0, 1, 1, 2], [0], [0]>} : vector<2x8x8xbf16>, vector<2x8x8xbf16>, vector<2x8x8xf32> -> vector<2x8x8xf32>
    "tpu.trace_stop"() : () -> ()
    %173 = vector.shape_cast %172 : vector<2x8x8xf32> to vector<16x8xf32>
    %c0_69 = arith.constant 0 : index
    %c0_70 = arith.constant 0 : index
    %174 = vector.load %arg25[%c0_69, %c0_70] : memref<16x32xf32, #tpu.memory_space<vmem>>, vector<16x8xf32>
    tpu.vector_store %arg25[%c0_69, %c0_70], %173 {strides = array<i32>} : memref<16x32xf32, #tpu.memory_space<vmem>>, vector<16x8xf32>,
    %175 = vector.extract_strided_slice %148 {offsets = [0, 0, 8], sizes = [2, 8, 8], strides = [1, 1, 1]} : vector<2x8x32xbf16> to vector<2x8x8xbf16>
    %176 = vector.extract_strided_slice %150 {offsets = [0, 0, 8], sizes = [2, 8, 8], strides = [1, 1, 1]} : vector<2x8x32xbf16> to vector<2x8x8xbf16>
    "tpu.trace_start"() <{level = 10 : i32, message = "bqd,bkd->bqk"}> : () -> ()
    %cst_71 = arith.constant dense<0.000000e+00> : vector<2x8x8xf32>
    %177 = tpu.matmul %175, %176, %cst_71 {dimension_numbers = #tpu.dot_dimension_numbers<[2], [2], [1], [1], [0, 0, 0, 1, 1, 1], [0], [0]>} : vector<2x8x8xbf16>, vector<2x8x8xbf16>, vector<2x8x8xf32> -> vector<2x8x8xf32>
    "tpu.trace_stop"() : () -> ()
    %cst_72 = arith.constant 0.353553385 : f32
    %178 = vector.broadcast %cst_72 : f32 to vector<2x8x8xf32>
    %179 = arith.mulf %177, %178 : vector<2x8x8xf32>
    %180 = vector.broadcast %146 : vector<2x1x8xf32> to vector<2x8x8xf32>
    %181 = arith.addf %179, %180 : vector<2x8x8xf32>
    %cst_73 = arith.constant dense<0xFF800000> : vector<2x8xf32>
    %182 = vector.multi_reduction <maximumf>, %181, %cst_73 [2] : vector<2x8x8xf32> to vector<2x8xf32>
    %183 = vector.shape_cast %182 : vector<2x8xf32> to vector<2x8x1xf32>
    %184 = vector.broadcast %183 : vector<2x8x1xf32> to vector<2x8x8xf32>
    %185 = arith.subf %181, %184 : vector<2x8x8xf32>
    %186 = math.exp %185 : vector<2x8x8xf32>
    %cst_74 = arith.constant dense<0.000000e+00> : vector<2x8xf32>
    %187 = vector.multi_reduction <add>, %186, %cst_74 [2] : vector<2x8x8xf32> to vector<2x8xf32>
    %188 = vector.shape_cast %187 : vector<2x8xf32> to vector<2x8x1xf32>
    %189 = tpu.reciprocal %188 {approx = true} : vector<2x8x1xf32> -> vector<2x8x1xf32>
    %190 = vector.broadcast %189 : vector<2x8x1xf32> to vector<2x8x8xf32>
    %191 = arith.mulf %186, %190 : vector<2x8x8xf32>
    %192 = arith.truncf %191 : vector<2x8x8xf32> to vector<2x8x8xbf16>
    %193 = vector.extract_strided_slice %152 {offsets = [0, 0, 8], sizes = [2, 8, 8], strides = [1, 1, 1]} : vector<2x8x32xbf16> to vector<2x8x8xbf16>
    "tpu.trace_start"() <{level = 10 : i32, message = "bqk,bkd->bqd"}> : () -> ()
    %cst_75 = arith.constant dense<0.000000e+00> : vector<2x8x8xf32>
    %194 = tpu.matmul %192, %193, %cst_75 {dimension_numbers = #tpu.dot_dimension_numbers<[2], [1], [1], [2], [0, 0, 0, 1, 1, 2], [0], [0]>} : vector<2x8x8xbf16>, vector<2x8x8xbf16>, vector<2x8x8xf32> -> vector<2x8x8xf32>
    "tpu.trace_stop"() : () -> ()
    %195 = vector.shape_cast %194 : vector<2x8x8xf32> to vector<16x8xf32>
    %c0_76 = arith.constant 0 : index
    %c8_77 = arith.constant 8 : index
    %196 = vector.load %arg25[%c0_76, %c8_77] : memref<16x32xf32, #tpu.memory_space<vmem>>, vector<16x8xf32>
    tpu.vector_store %arg25[%c0_76, %c8_77], %195 {strides = array<i32>} : memref<16x32xf32, #tpu.memory_space<vmem>>, vector<16x8xf32>,
    %197 = vector.extract_strided_slice %148 {offsets = [0, 0, 16], sizes = [2, 8, 8], strides = [1, 1, 1]} : vector<2x8x32xbf16> to vector<2x8x8xbf16>
    %198 = vector.extract_strided_slice %150 {offsets = [0, 0, 16], sizes = [2, 8, 8], strides = [1, 1, 1]} : vector<2x8x32xbf16> to vector<2x8x8xbf16>
    "tpu.trace_start"() <{level = 10 : i32, message = "bqd,bkd->bqk"}> : () -> ()
    %cst_78 = arith.constant dense<0.000000e+00> : vector<2x8x8xf32>
    %199 = tpu.matmul %197, %198, %cst_78 {dimension_numbers = #tpu.dot_dimension_numbers<[2], [2], [1], [1], [0, 0, 0, 1, 1, 1], [0], [0]>} : vector<2x8x8xbf16>, vector<2x8x8xbf16>, vector<2x8x8xf32> -> vector<2x8x8xf32>
    "tpu.trace_stop"() : () -> ()
    %cst_79 = arith.constant 0.353553385 : f32
    %200 = vector.broadcast %cst_79 : f32 to vector<2x8x8xf32>
    %201 = arith.mulf %199, %200 : vector<2x8x8xf32>
    %202 = vector.broadcast %146 : vector<2x1x8xf32> to vector<2x8x8xf32>
    %203 = arith.addf %201, %202 : vector<2x8x8xf32>
    %cst_80 = arith.constant dense<0xFF800000> : vector<2x8xf32>
    %204 = vector.multi_reduction <maximumf>, %203, %cst_80 [2] : vector<2x8x8xf32> to vector<2x8xf32>
    %205 = vector.shape_cast %204 : vector<2x8xf32> to vector<2x8x1xf32>
    %206 = vector.broadcast %205 : vector<2x8x1xf32> to vector<2x8x8xf32>
    %207 = arith.subf %203, %206 : vector<2x8x8xf32>
    %208 = math.exp %207 : vector<2x8x8xf32>
    %cst_81 = arith.constant dense<0.000000e+00> : vector<2x8xf32>
    %209 = vector.multi_reduction <add>, %208, %cst_81 [2] : vector<2x8x8xf32> to vector<2x8xf32>
    %210 = vector.shape_cast %209 : vector<2x8xf32> to vector<2x8x1xf32>
    %211 = tpu.reciprocal %210 {approx = true} : vector<2x8x1xf32> -> vector<2x8x1xf32>
    %212 = vector.broadcast %211 : vector<2x8x1xf32> to vector<2x8x8xf32>
    %213 = arith.mulf %208, %212 : vector<2x8x8xf32>
    %214 = arith.truncf %213 : vector<2x8x8xf32> to vector<2x8x8xbf16>
    %215 = vector.extract_strided_slice %152 {offsets = [0, 0, 16], sizes = [2, 8, 8], strides = [1, 1, 1]} : vector<2x8x32xbf16> to vector<2x8x8xbf16>
    "tpu.trace_start"() <{level = 10 : i32, message = "bqk,bkd->bqd"}> : () -> ()
    %cst_82 = arith.constant dense<0.000000e+00> : vector<2x8x8xf32>
    %216 = tpu.matmul %214, %215, %cst_82 {dimension_numbers = #tpu.dot_dimension_numbers<[2], [1], [1], [2], [0, 0, 0, 1, 1, 2], [0], [0]>} : vector<2x8x8xbf16>, vector<2x8x8xbf16>, vector<2x8x8xf32> -> vector<2x8x8xf32>
    "tpu.trace_stop"() : () -> ()
    %217 = vector.shape_cast %216 : vector<2x8x8xf32> to vector<16x8xf32>
    %c0_83 = arith.constant 0 : index
    %c16_84 = arith.constant 16 : index
    %218 = vector.load %arg25[%c0_83, %c16_84] : memref<16x32xf32, #tpu.memory_space<vmem>>, vector<16x8xf32>
    tpu.vector_store %arg25[%c0_83, %c16_84], %217 {strides = array<i32>} : memref<16x32xf32, #tpu.memory_space<vmem>>, vector<16x8xf32>,
    %219 = vector.extract_strided_slice %148 {offsets = [0, 0, 24], sizes = [2, 8, 8], strides = [1, 1, 1]} : vector<2x8x32xbf16> to vector<2x8x8xbf16>
    %220 = vector.extract_strided_slice %150 {offsets = [0, 0, 24], sizes = [2, 8, 8], strides = [1, 1, 1]} : vector<2x8x32xbf16> to vector<2x8x8xbf16>
    "tpu.trace_start"() <{level = 10 : i32, message = "bqd,bkd->bqk"}> : () -> ()
    %cst_85 = arith.constant dense<0.000000e+00> : vector<2x8x8xf32>
    %221 = tpu.matmul %219, %220, %cst_85 {dimension_numbers = #tpu.dot_dimension_numbers<[2], [2], [1], [1], [0, 0, 0, 1, 1, 1], [0], [0]>} : vector<2x8x8xbf16>, vector<2x8x8xbf16>, vector<2x8x8xf32> -> vector<2x8x8xf32>
    "tpu.trace_stop"() : () -> ()
    %cst_86 = arith.constant 0.353553385 : f32
    %222 = vector.broadcast %cst_86 : f32 to vector<2x8x8xf32>
    %223 = arith.mulf %221, %222 : vector<2x8x8xf32>
    %224 = vector.broadcast %146 : vector<2x1x8xf32> to vector<2x8x8xf32>
    %225 = arith.addf %223, %224 : vector<2x8x8xf32>
    %cst_87 = arith.constant dense<0xFF800000> : vector<2x8xf32>
    %226 = vector.multi_reduction <maximumf>, %225, %cst_87 [2] : vector<2x8x8xf32> to vector<2x8xf32>
    %227 = vector.shape_cast %226 : vector<2x8xf32> to vector<2x8x1xf32>
    %228 = vector.broadcast %227 : vector<2x8x1xf32> to vector<2x8x8xf32>
    %229 = arith.subf %225, %228 : vector<2x8x8xf32>
    %230 = math.exp %229 : vector<2x8x8xf32>
    %cst_88 = arith.constant dense<0.000000e+00> : vector<2x8xf32>
    %231 = vector.multi_reduction <add>, %230, %cst_88 [2] : vector<2x8x8xf32> to vector<2x8xf32>
    %232 = vector.shape_cast %231 : vector<2x8xf32> to vector<2x8x1xf32>
    %233 = tpu.reciprocal %232 {approx = true} : vector<2x8x1xf32> -> vector<2x8x1xf32>
    %234 = vector.broadcast %233 : vector<2x8x1xf32> to vector<2x8x8xf32>
    %235 = arith.mulf %230, %234 : vector<2x8x8xf32>
    %236 = arith.truncf %235 : vector<2x8x8xf32> to vector<2x8x8xbf16>
    %237 = vector.extract_strided_slice %152 {offsets = [0, 0, 24], sizes = [2, 8, 8], strides = [1, 1, 1]} : vector<2x8x32xbf16> to vector<2x8x8xbf16>
    "tpu.trace_start"() <{level = 10 : i32, message = "bqk,bkd->bqd"}> : () -> ()
    %cst_89 = arith.constant dense<0.000000e+00> : vector<2x8x8xf32>
    %238 = tpu.matmul %236, %237, %cst_89 {dimension_numbers = #tpu.dot_dimension_numbers<[2], [1], [1], [2], [0, 0, 0, 1, 1, 2], [0], [0]>} : vector<2x8x8xbf16>, vector<2x8x8xbf16>, vector<2x8x8xf32> -> vector<2x8x8xf32>
    "tpu.trace_stop"() : () -> ()
    %239 = vector.shape_cast %238 : vector<2x8x8xf32> to vector<16x8xf32>
    %c0_90 = arith.constant 0 : index
    %c24_91 = arith.constant 24 : index
    %240 = vector.load %arg25[%c0_90, %c24_91] : memref<16x32xf32, #tpu.memory_space<vmem>>, vector<16x8xf32>
    tpu.vector_store %arg25[%c0_90, %c24_91], %239 {strides = array<i32>} : memref<16x32xf32, #tpu.memory_space<vmem>>, vector<16x8xf32>,
    %c0_92 = arith.constant 0 : index
    %c0_93 = arith.constant 0 : index
    %241 = vector.load %arg25[%c0_92, %c0_93] : memref<16x32xf32, #tpu.memory_space<vmem>>, vector<16x32xf32>
    %242 = arith.truncf %241 : vector<16x32xf32> to vector<16x32xbf16>
    %c0_94 = arith.constant 0 : index
    %c0_95 = arith.constant 0 : index
    %243 = vector.load %arg14[%c0_94, %c0_95] : memref<32x32xbf16, #tpu.memory_space<vmem>>, vector<32x32xbf16>
    %cst_96 = arith.constant dense<0.000000e+00> : vector<16x32xf32>
    %244 = tpu.matmul %242, %243, %cst_96 {dimension_numbers = #tpu.dot_dimension_numbers<[1], [0], [0], [1], [0, 0, 1, 1], [], []>} : vector<16x32xbf16>, vector<32x32xbf16>, vector<16x32xf32> -> vector<16x32xf32>
    %c0_97 = arith.constant 0 : index
    %c0_98 = arith.constant 0 : index
    %245 = vector.load %arg15[%c0_97, %c0_98] : memref<1x32xf32, #tpu.memory_space<vmem>>, vector<1x32xf32>
    %246 = vector.broadcast %245 : vector<1x32xf32> to vector<16x32xf32>
    %247 = arith.addf %244, %246 : vector<16x32xf32>
    %248 = arith.addf %131, %247 : vector<16x32xf32>
    %c0_99 = arith.constant 0 : index
    %c0_100 = arith.constant 0 : index
    %249 = vector.load %arg16[%c0_99, %c0_100] : memref<1x32xf32, #tpu.memory_space<vmem>>, vector<1x32xf32>
    %c0_101 = arith.constant 0 : index
    %c0_102 = arith.constant 0 : index
    %250 = vector.load %arg17[%c0_101, %c0_102] : memref<1x32xf32, #tpu.memory_space<vmem>>, vector<1x32xf32>
    %cst_103 = arith.constant dense<0.000000e+00> : vector<16xf32>
    %251 = vector.multi_reduction <add>, %248, %cst_103 [1] : vector<16x32xf32> to vector<16xf32>
    %252 = vector.shape_cast %251 : vector<16xf32> to vector<16x1xf32>
    %cst_104 = arith.constant 3.200000e+01 : f32
    %253 = vector.broadcast %cst_104 : f32 to vector<16x1xf32>
    %254 = arith.divf %252, %253 : vector<16x1xf32>
    %255 = vector.broadcast %254 : vector<16x1xf32> to vector<16x32xf32>
    %256 = arith.subf %248, %255 : vector<16x32xf32>
    %257 = arith.mulf %256, %256 : vector<16x32xf32>
    %cst_105 = arith.constant dense<0.000000e+00> : vector<16xf32>
    %258 = vector.multi_reduction <add>, %257, %cst_105 [1] : vector<16x32xf32> to vector<16xf32>
    %259 = vector.shape_cast %258 : vector<16xf32> to vector<16x1xf32>
    %cst_106 = arith.constant 3.200000e+01 : f32
    %260 = vector.broadcast %cst_106 : f32 to vector<16x1xf32>
    %261 = arith.divf %259, %260 : vector<16x1xf32>
    %cst_107 = arith.constant 9.99999974E-6 : f32
    %262 = vector.broadcast %cst_107 : f32 to vector<16x1xf32>
    %263 = arith.addf %261, %262 : vector<16x1xf32>
    %264 = math.rsqrt %263 : vector<16x1xf32>
    %265 = vector.broadcast %264 : vector<16x1xf32> to vector<16x32xf32>
    %266 = arith.mulf %256, %265 : vector<16x32xf32>
    %267 = vector.broadcast %249 : vector<1x32xf32> to vector<16x32xf32>
    %268 = arith.mulf %266, %267 : vector<16x32xf32>
    %269 = vector.broadcast %250 : vector<1x32xf32> to vector<16x32xf32>
    %270 = arith.addf %268, %269 : vector<16x32xf32>
    %271 = arith.truncf %270 : vector<16x32xf32> to vector<16x32xbf16>
    %c0_108 = arith.constant 0 : index
    %c0_109 = arith.constant 0 : index
    %272 = vector.load %arg18[%c0_108, %c0_109] : memref<32x64xbf16, #tpu.memory_space<vmem>>, vector<32x64xbf16>
    %cst_110 = arith.constant dense<0.000000e+00> : vector<16x64xf32>
    %273 = tpu.matmul %271, %272, %cst_110 {dimension_numbers = #tpu.dot_dimension_numbers<[1], [0], [0], [1], [0, 0, 1, 1], [], []>} : vector<16x32xbf16>, vector<32x64xbf16>, vector<16x64xf32> -> vector<16x64xf32>
    %c0_111 = arith.constant 0 : index
    %c0_112 = arith.constant 0 : index
    %274 = vector.load %arg19[%c0_111, %c0_112] : memref<1x64xf32, #tpu.memory_space<vmem>>, vector<1x64xf32>
    %275 = vector.broadcast %274 : vector<1x64xf32> to vector<16x64xf32>
    %276 = arith.addf %273, %275 : vector<16x64xf32>
    %cst_113 = arith.constant 0.000000e+00 : f32
    %277 = vector.broadcast %cst_113 : f32 to vector<16x64xf32>
    %278 = arith.maximumf %276, %277 : vector<16x64xf32>
    %279 = arith.truncf %278 : vector<16x64xf32> to vector<16x64xbf16>
    %c0_114 = arith.constant 0 : index
    %c0_115 = arith.constant 0 : index
    %280 = vector.load %arg20[%c0_114, %c0_115] : memref<64x32xbf16, #tpu.memory_space<vmem>>, vector<64x32xbf16>
    %cst_116 = arith.constant dense<0.000000e+00> : vector<16x32xf32>
    %281 = tpu.matmul %279, %280, %cst_116 {dimension_numbers = #tpu.dot_dimension_numbers<[1], [0], [0], [1], [0, 0, 1, 1], [], []>} : vector<16x64xbf16>, vector<64x32xbf16>, vector<16x32xf32> -> vector<16x32xf32>
    %c0_117 = arith.constant 0 : index
    %c0_118 = arith.constant 0 : index
    %282 = vector.load %arg21[%c0_117, %c0_118] : memref<1x32xf32, #tpu.memory_space<vmem>>, vector<1x32xf32>
    %283 = vector.broadcast %282 : vector<1x32xf32> to vector<16x32xf32>
    %284 = arith.addf %281, %283 : vector<16x32xf32>
    %285 = arith.addf %270, %284 : vector<16x32xf32>
    %c0_119 = arith.constant 0 : index
    %c0_120 = arith.constant 0 : index
    %286 = vector.load %arg22[%c0_119, %c0_120] : memref<1x32xf32, #tpu.memory_space<vmem>>, vector<1x32xf32>
    %c0_121 = arith.constant 0 : index
    %c0_122 = arith.constant 0 : index
    %287 = vector.load %arg23[%c0_121, %c0_122] : memref<1x32xf32, #tpu.memory_space<vmem>>, vector<1x32xf32>
    %cst_123 = arith.constant dense<0.000000e+00> : vector<16xf32>
    %288 = vector.multi_reduction <add>, %285, %cst_123 [1] : vector<16x32xf32> to vector<16xf32>
    %289 = vector.shape_cast %288 : vector<16xf32> to vector<16x1xf32>
    %cst_124 = arith.constant 3.200000e+01 : f32
    %290 = vector.broadcast %cst_124 : f32 to vector<16x1xf32>
    %291 = arith.divf %289, %290 : vector<16x1xf32>
    %292 = vector.broadcast %291 : vector<16x1xf32> to vector<16x32xf32>
    %293 = arith.subf %285, %292 : vector<16x32xf32>
    %294 = arith.mulf %293, %293 : vector<16x32xf32>
    %cst_125 = arith.constant dense<0.000000e+00> : vector<16xf32>
    %295 = vector.multi_reduction <add>, %294, %cst_125 [1] : vector<16x32xf32> to vector<16xf32>
    %296 = vector.shape_cast %295 : vector<16xf32> to vector<16x1xf32>
    %cst_126 = arith.constant 3.200000e+01 : f32
    %297 = vector.broadcast %cst_126 : f32 to vector<16x1xf32>
    %298 = arith.divf %296, %297 : vector<16x1xf32>
    %cst_127 = arith.constant 9.99999974E-6 : f32
    %299 = vector.broadcast %cst_127 : f32 to vector<16x1xf32>
    %300 = arith.addf %298, %299 : vector<16x1xf32>
    %301 = math.rsqrt %300 : vector<16x1xf32>
    %302 = vector.broadcast %301 : vector<16x1xf32> to vector<16x32xf32>
    %303 = arith.mulf %293, %302 : vector<16x32xf32>
    %304 = vector.broadcast %286 : vector<1x32xf32> to vector<16x32xf32>
    %305 = arith.mulf %303, %304 : vector<16x32xf32>
    %306 = vector.broadcast %287 : vector<1x32xf32> to vector<16x32xf32>
    %307 = arith.addf %305, %306 : vector<16x32xf32>
    %308 = arith.truncf %307 : vector<16x32xf32> to vector<16x32xbf16>
    %c0_128 = arith.constant 0 : index
    %c0_129 = arith.constant 0 : index
    %309 = vector.load %arg24[%c0_128, %c0_129] : memref<16x32xbf16, #tpu.memory_space<vmem>>, vector<16x32xbf16>
    tpu.vector_store %arg24[%c0_128, %c0_129], %308 {strides = array<i32>} : memref<16x32xbf16, #tpu.memory_space<vmem>>, vector<16x32xbf16>,
    return
  }
}

</mosaic_0001>

<llo_original>
// kernel: _lambda_.9
$region0: #{_lambda_.9}
  #allocation0 [shape = 'u32[]', space=smem, size = 0x4, offset = 0x4, fixed_abs, tag = 'smem constant byte address 0x4 - core index']
  #allocation1 [shape = 'u32[144,128]{1,0:T(1,128)}', space=vmem, size = 0x12000, scoped, tag = 'internal scratch']
  %s0 = inlined_call_operand.vmem [shape: bf16[16,32], index: 0, kind: input, shape index: {}]
  %s1 = inlined_call_operand.vmem [shape: bf16[32,128], index: 1, kind: input, shape index: {}]
  %s2 = inlined_call_operand.vmem [shape: f32[1,128], index: 2, kind: input, shape index: {}]
  %s3 = inlined_call_operand.vmem [shape: f32[16,128], index: 3, kind: output, shape index: {}]
  %s4 = sld [smem:[#allocation0]]
  $region22: #{_lambda_.9} parent=0
    _
  %s6 = ssub.s32 1, %s4
  %s7 = scalar_select 0, %s6, %s4
  // Predicated region
  $region2: #{_lambda_.9} parent=0 // pred_check
    _
  $region3: #{_lambda_.9} parent=0 // pred_check_branch
    %9 = sbr.rel (0) target = $region5
  $region4: #{_lambda_.9} parent=0 // pred_region
    _
  $region5: #{_lambda_.9} parent=0 // pred_fallthru
    _
  // Predicated region
  $region6: #{_lambda_.9} parent=0 // pred_check
    _
  $region7: #{_lambda_.9} parent=0 // pred_check_branch
    %11 = sbr.rel (0) target = $region9
  $region8: #{_lambda_.9} parent=0 // pred_region
    _
  $region9: #{_lambda_.9} parent=0 // pred_fallthru
    _
  // Predicated region
  $region10: #{_lambda_.9} parent=0 // pred_check
    _
  $region11: #{_lambda_.9} parent=0 // pred_check_branch
    %13 = sbr.rel (0) target = $region13
  $region12: #{_lambda_.9} parent=0 // pred_region
    _
  $region13: #{_lambda_.9} parent=0 // pred_fallthru
    _
  %v15 = vld [vmem:[%s0] sm:$0xf]
  %v16 = vld [vmem:[%s0 + $0x4] sm:$0xf]
  %v17 = vld [vmem:[%s1] sm:$0xf]
  %v18 = vld [vmem:[%s1 + $0x4] sm:$0xf]
  %v19 = vld [vmem:[%s1 + $0x8] sm:$0xf]
  %v20 = vld [vmem:[%s1 + $0xc] sm:$0xf]
  %v21 = vld [vmem:[%s2] sm:$0x1]
  %v23 = vlaneseq
  %v24 = vshrl.u32 %v23, 7
  %v25 = vsub.s32 0, %v24
  %v26 = vrot.slane %v21, %v25
  %v30 = vunpack.c.l.b16 %v15
  %v31 = vunpack.c.l.b16 %v16
  %v32 = vpack.c.b16 %v31, %v30
  %v37 = vunpack.c.l.b16 %v17
  %v38 = vunpack.c.l.b16 %v18
  %v39 = vunpack.c.l.b16 %v19
  %v40 = vunpack.c.l.b16 %v20
  %v41 = vpack.c.b16 %v38, %v37
  %v42 = vpack.c.b16 %v40, %v39
  %vm45 = vcmask 261120
  %v47 = vsel %vm45, %v32, 0
  %49 = vmatprep.subr.bf16.mxu0 0
  %50 = vmatpush1.bf16.msra.mxu0 %v41
  %51 = vmatprep.subr.bf16.mxu0 0
  %52 = vmatpush1.bf16.msra.mxu0 %v42
  %53 = vmatprep.subr.bf16.mxu0 0
  %54 = vmatpush1.bf16.msra.mxu0 0
  %55 = vmatprep.subr.bf16.mxu0 0
  %56 = vmatpush1.bf16.msra.mxu0 0
  %57 = vmatprep.subr.bf16.mxu0 0
  %58 = vmatpush1.bf16.msra.mxu0 0
  %59 = vmatprep.subr.bf16.mxu0 0
  %60 = vmatpush1.bf16.msra.mxu0 0
  %61 = vmatprep.subr.bf16.mxu0 0
  %62 = vmatpush1.bf16.msra.mxu0 0
  %63 = vmatprep.subr.bf16.mxu0 0
  %64 = vmatpush1.bf16.msra.mxu0 0
  %65 = vmatprep.subr.bf16.mxu0 0
  %66 = vmatpush1.bf16.msra.mxu0 0
  %67 = vmatprep.subr.bf16.mxu0 0
  %68 = vmatpush1.bf16.msra.mxu0 0
  %69 = vmatprep.subr.bf16.mxu0 0
  %70 = vmatpush1.bf16.msra.mxu0 0
  %71 = vmatprep.subr.bf16.mxu0 0
  %72 = vmatpush1.bf16.msra.mxu0 0
  %73 = vmatprep.subr.bf16.mxu0 0
  %74 = vmatpush1.bf16.msra.mxu0 0
  %75 = vmatprep.subr.bf16.mxu0 0
  %76 = vmatpush1.bf16.msra.mxu0 0
  %77 = vmatprep.subr.bf16.mxu0 0
  %78 = vmatpush1.bf16.msra.mxu0 0
  %79 = vmatprep.subr.bf16.mxu0 0
  %80 = vmatpush1.bf16.msra.mxu0 0
  %81 = vmatprep.mubr.bf16.mxu0 0
  %82 = vmatmul.mubr.bf16.gmra.mrb[0].mxu0 %v47
  %v83 = vpop.f32.mrb[0].mxu0
  %v84 = vadd.f32 %v26, %v83
  %v85 = vpop.f32.mrb[0].mxu0
  %v86 = vpop.f32.mrb[0].mxu0
  %v87 = vadd.f32 %v26, %v86
  %v88 = vpop.f32.mrb[0].mxu0
  %89 = vdwg.mxu0
  %90 = vst [vmem:[%s3] sm:$0xff] %v84
  %91 = vst [vmem:[%s3 + $0x8] sm:$0xff] %v87
  // Predicated region
  $region14: #{_lambda_.9} parent=0 // pred_check
    _
  $region15: #{_lambda_.9} parent=0 // pred_check_branch
    %93 = sbr.rel (0) target = $region17
  $region16: #{_lambda_.9} parent=0 // pred_region
    _
  $region17: #{_lambda_.9} parent=0 // pred_fallthru
    _
  // Predicated region
  $region18: #{_lambda_.9} parent=0 // pred_check
    _
  $region19: #{_lambda_.9} parent=0 // pred_check_branch
    %95 = sbr.rel (0) target = $region21
  $region20: #{_lambda_.9} parent=0 // pred_region
    _
  $region21: #{_lambda_.9} parent=0 // pred_fallthru
    _

// kernel: _lambda_.5
$region0: #{_lambda_.5}
  #allocation0 [shape = 'u32[]', space=smem, size = 0x4, offset = 0x4, fixed_abs, tag = 'smem constant byte address 0x4 - core index']
  #allocation1 [shape = 'u32[144,128]{1,0:T(1,128)}', space=vmem, size = 0x12000, scoped, tag = 'internal scratch']
  #allocation2 [shape = 'f32[16,32]{1,0:T(8,128)}', space=vmem, size = 0x2000, scoped, tag = 'scratch operand']
  %s0 = inlined_call_operand.vmem [shape: bf16[16,32], index: 0, kind: input, shape index: {}]
  %s1 = inlined_call_operand.vmem [shape: f32[2,1,8], index: 1, kind: input, shape index: {}]
  %s2 = inlined_call_operand.vmem [shape: bf16[32,96], index: 2, kind: input, shape index: {}]
  %s3 = inlined_call_operand.vmem [shape: f32[1,96], index: 3, kind: input, shape index: {}]
  %s4 = inlined_call_operand.vmem [shape: bf16[32,32], index: 4, kind: input, shape index: {}]
  %s5 = inlined_call_operand.vmem [shape: f32[1,32], index: 5, kind: input, shape index: {}]
  %s6 = inlined_call_operand.vmem [shape: f32[1,32], index: 6, kind: input, shape index: {}]
  %s7 = inlined_call_operand.vmem [shape: f32[1,32], index: 7, kind: input, shape index: {}]
  %s8 = inlined_call_operand.vmem [shape: bf16[32,64], index: 8, kind: input, shape index: {}]
  %s9 = inlined_call_operand.vmem [shape: f32[1,64], index: 9, kind: input, shape index: {}]
  %s10 = inlined_call_operand.vmem [shape: bf16[64,32], index: 10, kind: input, shape index: {}]
  %s11 = inlined_call_operand.vmem [shape: f32[1,32], index: 11, kind: input, shape index: {}]
  %s12 = inlined_call_operand.vmem [shape: f32[1,32], index: 12, kind: input, shape index: {}]
  %s13 = inlined_call_operand.vmem [shape: f32[1,32], index: 13, kind: input, shape index: {}]
  %s14 = inlined_call_operand.vmem [shape: bf16[16,32], index: 14, kind: output, shape index: {}]
  %s15 = sld [smem:[#allocation0]]
  $region66: #{_lambda_.5} parent=0
    _
  %s17 = ssub.s32 1, %s15
  %s18 = scalar_select 0, %s17, %s15
  // Predicated region
  $region2: #{_lambda_.5} parent=0 // pred_check
    _
  $region3: #{_lambda_.5} parent=0 // pred_check_branch
    %20 = sbr.rel (0) target = $region5
  $region4: #{_lambda_.5} parent=0 // pred_region
    _
  $region5: #{_lambda_.5} parent=0 // pred_fallthru
    _
  // Predicated region
  $region6: #{_lambda_.5} parent=0 // pred_check
    _
  $region7: #{_lambda_.5} parent=0 // pred_check_branch
    %22 = sbr.rel (0) target = $region9
  $region8: #{_lambda_.5} parent=0 // pred_region
    _
  $region9: #{_lambda_.5} parent=0 // pred_fallthru
    _
  // Predicated region
  $region10: #{_lambda_.5} parent=0 // pred_check
    _
  $region11: #{_lambda_.5} parent=0 // pred_check_branch
    %24 = sbr.rel (0) target = $region13
  $region12: #{_lambda_.5} parent=0 // pred_region
    _
  $region13: #{_lambda_.5} parent=0 // pred_fallthru
    _
  // Predicated region
  $region14: #{_lambda_.5} parent=0 // pred_check
    _
  $region15: #{_lambda_.5} parent=0 // pred_check_branch
    %26 = sbr.rel (0) target = $region17
  $region16: #{_lambda_.5} parent=0 // pred_region
    _
  $region17: #{_lambda_.5} parent=0 // pred_fallthru
    _
  // Predicated region
  $region18: #{_lambda_.5} parent=0 // pred_check
    _
  $region19: #{_lambda_.5} parent=0 // pred_check_branch
    %28 = sbr.rel (0) target = $region21
  $region20: #{_lambda_.5} parent=0 // pred_region
    _
  $region21: #{_lambda_.5} parent=0 // pred_fallthru
    _
  // Predicated region
  $region22: #{_lambda_.5} parent=0 // pred_check
    _
  $region23: #{_lambda_.5} parent=0 // pred_check_branch
    %30 = sbr.rel (0) target = $region25
  $region24: #{_lambda_.5} parent=0 // pred_region
    _
  $region25: #{_lambda_.5} parent=0 // pred_fallthru
    _
  // Predicated region
  $region26: #{_lambda_.5} parent=0 // pred_check
    _
  $region27: #{_lambda_.5} parent=0 // pred_check_branch
    %32 = sbr.rel (0) target = $region29
  $region28: #{_lambda_.5} parent=0 // pred_region
    _
  $region29: #{_lambda_.5} parent=0 // pred_fallthru
    _
  // Predicated region
  $region30: #{_lambda_.5} parent=0 // pred_check
    _
  $region31: #{_lambda_.5} parent=0 // pred_check_branch
    %34 = sbr.rel (0) target = $region33
  $region32: #{_lambda_.5} parent=0 // pred_region
    _
  $region33: #{_lambda_.5} parent=0 // pred_fallthru
    _
  // Predicated region
  $region34: #{_lambda_.5} parent=0 // pred_check
    _
  $region35: #{_lambda_.5} parent=0 // pred_check_branch
    %36 = sbr.rel (0) target = $region37
  $region36: #{_lambda_.5} parent=0 // pred_region
    _
  $region37: #{_lambda_.5} parent=0 // pred_fallthru
    _
  // Predicated region
  $region38: #{_lambda_.5} parent=0 // pred_check
    _
  $region39: #{_lambda_.5} parent=0 // pred_check_branch
    %38 = sbr.rel (0) target = $region41
  $region40: #{_lambda_.5} parent=0 // pred_region
    _
  $region41: #{_lambda_.5} parent=0 // pred_fallthru
    _
  // Predicated region
  $region42: #{_lambda_.5} parent=0 // pred_check
    _
  $region43: #{_lambda_.5} parent=0 // pred_check_branch
    %40 = sbr.rel (0) target = $region45
  $region44: #{_lambda_.5} parent=0 // pred_region
    _
  $region45: #{_lambda_.5} parent=0 // pred_fallthru
    _
  // Predicated region
  $region46: #{_lambda_.5} parent=0 // pred_check
    _
  $region47: #{_lambda_.5} parent=0 // pred_check_branch
    %42 = sbr.rel (0) target = $region49
  $region48: #{_lambda_.5} parent=0 // pred_region
    _
  $region49: #{_lambda_.5} parent=0 // pred_fallthru
    _
  // Predicated region
  $region50: #{_lambda_.5} parent=0 // pred_check
    _
  $region51: #{_lambda_.5} parent=0 // pred_check_branch
    %44 = sbr.rel (0) target = $region53
  $region52: #{_lambda_.5} parent=0 // pred_region
    _
  $region53: #{_lambda_.5} parent=0 // pred_fallthru
    _
  // Predicated region
  $region54: #{_lambda_.5} parent=0 // pred_check
    _
  $region55: #{_lambda_.5} parent=0 // pred_check_branch
    %46 = sbr.rel (0) target = $region57
  $region56: #{_lambda_.5} parent=0 // pred_region
    _
  $region57: #{_lambda_.5} parent=0 // pred_fallthru
    _
  %v48 = vld [vmem:[%s0] sm:$0xf]
  %v49 = vld [vmem:[%s0 + $0x4] sm:$0xf]
  %v50 = vunpack.c.l.bf16 %v48
  %v51 = vunpack.c.l.bf16 %v49
  %v52 = vld [vmem:[%s2] sm:$0xf]
  %v53 = vld [vmem:[%s2 + $0x4] sm:$0xf]
  %v54 = vld [vmem:[%s2 + $0x8] sm:$0xf]
  %v55 = vld [vmem:[%s2 + $0xc] sm:$0xf]
  %v56 = vld [vmem:[%s3] sm:$0x1]
  %v58 = vlaneseq
  %v59 = vshrl.u32 %v58, 7
  %v60 = vsub.s32 0, %v59
  %v61 = vrot.slane %v56, %v60
  %v65 = vunpack.c.l.b16 %v48
  %v66 = vunpack.c.l.b16 %v49
  %v67 = vpack.c.b16 %v66, %v65
  %v72 = vunpack.c.l.b16 %v52
  %v73 = vunpack.c.l.b16 %v53
  %v74 = vunpack.c.l.b16 %v54
  %v75 = vunpack.c.l.b16 %v55
  %v76 = vpack.c.b16 %v73, %v72
  %v77 = vpack.c.b16 %v75, %v74
  %vm80 = vcmask 261120
  %v82 = vsel %vm80, %v67, 0
  %84 = vmatprep.subr.bf16.mxu0 0
  %85 = vmatpush1.bf16.msra.mxu0 %v76
  %86 = vmatprep.subr.bf16.mxu0 0
  %87 = vmatpush1.bf16.msra.mxu0 %v77
  %88 = vmatprep.subr.bf16.mxu0 0
  %89 = vmatpush1.bf16.msra.mxu0 0
  %90 = vmatprep.subr.bf16.mxu0 0
  %91 = vmatpush1.bf16.msra.mxu0 0
  %92 = vmatprep.subr.bf16.mxu0 0
  %93 = vmatpush1.bf16.msra.mxu0 0
  %94 = vmatprep.subr.bf16.mxu0 0
  %95 = vmatpush1.bf16.msra.mxu0 0
  %96 = vmatprep.subr.bf16.mxu0 0
  %97 = vmatpush1.bf16.msra.mxu0 0
  %98 = vmatprep.subr.bf16.mxu0 0
  %99 = vmatpush1.bf16.msra.mxu0 0
  %100 = vmatprep.subr.bf16.mxu0 0
  %101 = vmatpush1.bf16.msra.mxu0 0
  %102 = vmatprep.subr.bf16.mxu0 0
  %103 = vmatpush1.bf16.msra.mxu0 0
  %104 = vmatprep.subr.bf16.mxu0 0
  %105 = vmatpush1.bf16.msra.mxu0 0
  %106 = vmatprep.subr.bf16.mxu0 0
  %107 = vmatpush1.bf16.msra.mxu0 0
  %108 = vmatprep.subr.bf16.mxu0 0
  %109 = vmatpush1.bf16.msra.mxu0 0
  %110 = vmatprep.subr.bf16.mxu0 0
  %111 = vmatpush1.bf16.msra.mxu0 0
  %112 = vmatprep.subr.bf16.mxu0 0
  %113 = vmatpush1.bf16.msra.mxu0 0
  %114 = vmatprep.subr.bf16.mxu0 0
  %115 = vmatpush1.bf16.msra.mxu0 0
  %116 = vmatprep.mubr.bf16.mxu0 0
  %117 = vmatmul.mubr.bf16.gmra.mrb[0].mxu0 %v82
  %v118 = vpop.f32.mrb[0].mxu0
  %v119 = vadd.f32 %v61, %v118
  %v120 = vpop.f32.mrb[0].mxu0
  %v121 = vpop.f32.mrb[0].mxu0
  %v122 = vadd.f32 %v61, %v121
  %v123 = vpop.f32.mrb[0].mxu0
  %124 = vdwg.mxu0
  %v125 = vld [vmem:[%s1] sm:$0x1]
  %v126 = vld [vmem:[%s1 + $0x1] sm:$0x1]
  %v127 = vpack.c.bf16 %v119, %v119
  %v128 = vpack.c.bf16 %v122, %v122
  %130 = vrot.lane.b32.xlu0 %v127, 96
  %v131 = vpop.permute.xlu0 %130
  %vm132 = vcmask 64512
  %v134 = vsel %vm132, %v127, 0
  %v137 = vsel %vm132, %v131, 0
  %139 = vmatprep.subr.bf16.mxu0 0
  %140 = vmatpush1.bf16.xpose.msra.mxu0 %v137
  %141 = vmatprep.subr.bf16.mxu0 0
  %142 = vmatpush1.bf16.xpose.msra.mxu0 0
  %143 = vmatprep.subr.bf16.mxu0 0
  %144 = vmatpush1.bf16.xpose.msra.mxu0 0
  %145 = vmatprep.subr.bf16.mxu0 0
  %146 = vmatpush1.bf16.xpose.msra.mxu0 0
  %147 = vmatprep.subr.bf16.mxu0 0
  %148 = vmatpush1.bf16.xpose.msra.mxu0 0
  %149 = vmatprep.subr.bf16.mxu0 0
  %150 = vmatpush1.bf16.xpose.msra.mxu0 0
  %151 = vmatprep.subr.bf16.mxu0 0
  %152 = vmatpush1.bf16.xpose.msra.mxu0 0
  %153 = vmatprep.subr.bf16.mxu0 0
  %154 = vmatpush1.bf16.xpose.msra.mxu0 0
  %155 = vmatprep.subr.bf16.mxu0 0
  %156 = vmatpush1.bf16.xpose.msra.mxu0 0
  %157 = vmatprep.subr.bf16.mxu0 0
  %158 = vmatpush1.bf16.xpose.msra.mxu0 0
  %159 = vmatprep.subr.bf16.mxu0 0
  %160 = vmatpush1.bf16.xpose.msra.mxu0 0
  %161 = vmatprep.subr.bf16.mxu0 0
  %162 = vmatpush1.bf16.xpose.msra.mxu0 0
  %163 = vmatprep.subr.bf16.mxu0 0
  %164 = vmatpush1.bf16.xpose.msra.mxu0 0
  %165 = vmatprep.subr.bf16.mxu0 0
  %166 = vmatpush1.bf16.xpose.msra.mxu0 0
  %167 = vmatprep.subr.bf16.mxu0 0
  %168 = vmatpush1.bf16.xpose.msra.mxu0 0
  %169 = vmatprep.subr.bf16.mxu0 0
  %170 = vmatpush1.bf16.xpose.msra.mxu0 0
  %171 = vmatprep.mubr.bf16.mxu0 0
  %172 = vmatmul.mubr.bf16.gmra.mrb[0].mxu0 %v134
  %v173 = vpop.f32.mrb[0].mxu0
  %v174 = vadd.f32 0.0, %v173
  %v175 = vpop.f32.mrb[0].mxu0
  %v176 = vpop.f32.mrb[0].mxu0
  %v177 = vpop.f32.mrb[0].mxu0
  %178 = vdwg.mxu0
  %180 = vrot.lane.b32.xlu0 %v128, 96
  %v181 = vpop.permute.xlu0 %180
  %v183 = vsel %vm132, %v128, 0
  %v186 = vsel %vm132, %v181, 0
  %188 = vmatprep.subr.bf16.mxu0 0
  %189 = vmatpush1.bf16.xpose.msra.mxu0 %v186
  %190 = vmatprep.subr.bf16.mxu0 0
  %191 = vmatpush1.bf16.xpose.msra.mxu0 0
  %192 = vmatprep.subr.bf16.mxu0 0
  %193 = vmatpush1.bf16.xpose.msra.mxu0 0
  %194 = vmatprep.subr.bf16.mxu0 0
  %195 = vmatpush1.bf16.xpose.msra.mxu0 0
  %196 = vmatprep.subr.bf16.mxu0 0
  %197 = vmatpush1.bf16.xpose.msra.mxu0 0
  %198 = vmatprep.subr.bf16.mxu0 0
  %199 = vmatpush1.bf16.xpose.msra.mxu0 0
  %200 = vmatprep.subr.bf16.mxu0 0
  %201 = vmatpush1.bf16.xpose.msra.mxu0 0
  %202 = vmatprep.subr.bf16.mxu0 0
  %203 = vmatpush1.bf16.xpose.msra.mxu0 0
  %204 = vmatprep.subr.bf16.mxu0 0
  %205 = vmatpush1.bf16.xpose.msra.mxu0 0
  %206 = vmatprep.subr.bf16.mxu0 0
  %207 = vmatpush1.bf16.xpose.msra.mxu0 0
  %208 = vmatprep.subr.bf16.mxu0 0
  %209 = vmatpush1.bf16.xpose.msra.mxu0 0
  %210 = vmatprep.subr.bf16.mxu0 0
  %211 = vmatpush1.bf16.xpose.msra.mxu0 0
  %212 = vmatprep.subr.bf16.mxu0 0
  %213 = vmatpush1.bf16.xpose.msra.mxu0 0
  %214 = vmatprep.subr.bf16.mxu0 0
  %215 = vmatpush1.bf16.xpose.msra.mxu0 0
  %216 = vmatprep.subr.bf16.mxu0 0
  %217 = vmatpush1.bf16.xpose.msra.mxu0 0
  %218 = vmatprep.subr.bf16.mxu0 0
  %219 = vmatpush1.bf16.xpose.msra.mxu0 0
  %220 = vmatprep.mubr.bf16.mxu0 0
  %221 = vmatmul.mubr.bf16.gmra.mrb[0].mxu0 %v183
  %v222 = vpop.f32.mrb[0].mxu0
  %v223 = vadd.f32 0.0, %v222
  %v224 = vpop.f32.mrb[0].mxu0
  %v225 = vpop.f32.mrb[0].mxu0
  %v226 = vpop.f32.mrb[0].mxu0
  %227 = vdwg.mxu0
  %v228 = vmul.f32 %v174, 0.35355338
  %v229 = vmul.f32 %v223, 0.35355338
  %v232 = vlaneseq
  %v233 = vshrl.u32 %v232, 7
  %v234 = vsub.s32 0, %v233
  %v235 = vrot.slane %v125, %v234
  %v236 = vlaneseq
  %v237 = vshrl.u32 %v236, 7
  %v238 = vsub.s32 0, %v237
  %v239 = vrot.slane %v126, %v238
  %v242 = vadd.f32 %v228, %v235
  %v243 = vadd.f32 %v229, %v239
  %v244 = vsel %vm132, %v242, -inf
  %245 = vmax.xlane.f32.xlu0 %v244
  %v246 = vpop.xlane.xlu0 %245
  %v247 = vsel %vm132, %v243, -inf
  %248 = vmax.xlane.f32.xlu0 %v247
  %v249 = vpop.xlane.xlu0 %248
  %v250 = vsub.f32 %v242, %v246
  %v251 = vsub.f32 %v243, %v249
  %v252 = vmul.f32 %v250, 1.442695
  %v253 = vpow.pop %v252
  %v254 = vmul.f32 %v251, 1.442695
  %v255 = vpow.pop %v254
  %v256 = vsel %vm132, %v253, 0.0
  %257 = vadd.xlane.f32.xlu0 %v256
  %v258 = vpop.xlane.xlu0 %257
  %v259 = vsel %vm132, %v255, 0.0
  %260 = vadd.xlane.f32.xlu0 %v259
  %v261 = vpop.xlane.xlu0 %260
  %v262 = vrcp.pop %v258
  %v263 = vrcp.pop %v261
  %v264 = vmul.f32 %v253, %v262
  %v265 = vmul.f32 %v255, %v263
  %v266 = vpack.c.bf16 %v264, %v264
  %v267 = vpack.c.bf16 %v265, %v265
  %268 = vrot.lane.b32.xlu0 %v127, 64
  %v269 = vpop.permute.xlu0 %268
  %v271 = vsel %vm132, %v266, 0
  %vm273 = vcmask 1043456
  %v275 = vsel %vm273, %v269, 0
  %277 = vmatprep.subr.bf16.mxu0 0
  %278 = vmatpush1.bf16.msra.mxu0 %v275
  %279 = vmatprep.subr.bf16.mxu0 0
  %280 = vmatpush1.bf16.msra.mxu0 0
  %281 = vmatprep.subr.bf16.mxu0 0
  %282 = vmatpush1.bf16.msra.mxu0 0
  %283 = vmatprep.subr.bf16.mxu0 0
  %284 = vmatpush1.bf16.msra.mxu0 0
  %285 = vmatprep.subr.bf16.mxu0 0
  %286 = vmatpush1.bf16.msra.mxu0 0
  %287 = vmatprep.subr.bf16.mxu0 0
  %288 = vmatpush1.bf16.msra.mxu0 0
  %289 = vmatprep.subr.bf16.mxu0 0
  %290 = vmatpush1.bf16.msra.mxu0 0
  %291 = vmatprep.subr.bf16.mxu0 0
  %292 = vmatpush1.bf16.msra.mxu0 0
  %293 = vmatprep.subr.bf16.mxu0 0
  %294 = vmatpush1.bf16.msra.mxu0 0
  %295 = vmatprep.subr.bf16.mxu0 0
  %296 = vmatpush1.bf16.msra.mxu0 0
  %297 = vmatprep.subr.bf16.mxu0 0
  %298 = vmatpush1.bf16.msra.mxu0 0
  %299 = vmatprep.subr.bf16.mxu0 0
  %300 = vmatpush1.bf16.msra.mxu0 0
  %301 = vmatprep.subr.bf16.mxu0 0
  %302 = vmatpush1.bf16.msra.mxu0 0
  %303 = vmatprep.subr.bf16.mxu0 0
  %304 = vmatpush1.bf16.msra.mxu0 0
  %305 = vmatprep.subr.bf16.mxu0 0
  %306 = vmatpush1.bf16.msra.mxu0 0
  %307 = vmatprep.subr.bf16.mxu0 0
  %308 = vmatpush1.bf16.msra.mxu0 0
  %309 = vmatprep.mubr.bf16.mxu0 0
  %310 = vmatmul.mubr.bf16.gmra.mrb[0].mxu0 %v271
  %v311 = vpop.f32.mrb[0].mxu0
  %v312 = vadd.f32 0.0, %v311
  %v313 = vpop.f32.mrb[0].mxu0
  %v314 = vpop.f32.mrb[0].mxu0
  %v315 = vpop.f32.mrb[0].mxu0
  %316 = vdwg.mxu0
  %317 = vrot.lane.b32.xlu0 %v128, 64
  %v318 = vpop.permute.xlu0 %317
  %v320 = vsel %vm132, %v267, 0
  %v323 = vsel %vm273, %v318, 0
  %325 = vmatprep.subr.bf16.mxu0 0
  %326 = vmatpush1.bf16.msra.mxu0 %v323
  %327 = vmatprep.subr.bf16.mxu0 0
  %328 = vmatpush1.bf16.msra.mxu0 0
  %329 = vmatprep.subr.bf16.mxu0 0
  %330 = vmatpush1.bf16.msra.mxu0 0
  %331 = vmatprep.subr.bf16.mxu0 0
  %332 = vmatpush1.bf16.msra.mxu0 0
  %333 = vmatprep.subr.bf16.mxu0 0
  %334 = vmatpush1.bf16.msra.mxu0 0
  %335 = vmatprep.subr.bf16.mxu0 0
  %336 = vmatpush1.bf16.msra.mxu0 0
  %337 = vmatprep.subr.bf16.mxu0 0
  %338 = vmatpush1.bf16.msra.mxu0 0
  %339 = vmatprep.subr.bf16.mxu0 0
  %340 = vmatpush1.bf16.msra.mxu0 0
  %341 = vmatprep.subr.bf16.mxu0 0
  %342 = vmatpush1.bf16.msra.mxu0 0
  %343 = vmatprep.subr.bf16.mxu0 0
  %344 = vmatpush1.bf16.msra.mxu0 0
  %345 = vmatprep.subr.bf16.mxu0 0
  %346 = vmatpush1.bf16.msra.mxu0 0
  %347 = vmatprep.subr.bf16.mxu0 0
  %348 = vmatpush1.bf16.msra.mxu0 0
  %349 = vmatprep.subr.bf16.mxu0 0
  %350 = vmatpush1.bf16.msra.mxu0 0
  %351 = vmatprep.subr.bf16.mxu0 0
  %352 = vmatpush1.bf16.msra.mxu0 0
  %353 = vmatprep.subr.bf16.mxu0 0
  %354 = vmatpush1.bf16.msra.mxu0 0
  %355 = vmatprep.subr.bf16.mxu0 0
  %356 = vmatpush1.bf16.msra.mxu0 0
  %357 = vmatprep.mubr.bf16.mxu0 0
  %358 = vmatmul.mubr.bf16.gmra.mrb[0].mxu0 %v320
  %v359 = vpop.f32.mrb[0].mxu0
  %v360 = vadd.f32 0.0, %v359
  %v361 = vpop.f32.mrb[0].mxu0
  %v362 = vpop.f32.mrb[0].mxu0
  %v363 = vpop.f32.mrb[0].mxu0
  %364 = vdwg.mxu0
  %365 = vst.msk [vmem:[#allocation2] sm:$0xff] %vm132, %v312
  %366 = vst.msk [vmem:[#allocation2 + $0x8] sm:$0xff] %vm132, %v360
  %367 = vrot.lane.b32.xlu0 %v127, 120
  %v368 = vpop.permute.xlu0 %367
  %369 = vrot.lane.b32.xlu0 %v127, 88
  %v370 = vpop.permute.xlu0 %369
  %v372 = vsel %vm132, %v368, 0
  %v375 = vsel %vm132, %v370, 0
  %377 = vmatprep.subr.bf16.mxu0 0
  %378 = vmatpush1.bf16.xpose.msra.mxu0 %v375
  %379 = vmatprep.subr.bf16.mxu0 0
  %380 = vmatpush1.bf16.xpose.msra.mxu0 0
  %381 = vmatprep.subr.bf16.mxu0 0
  %382 = vmatpush1.bf16.xpose.msra.mxu0 0
  %383 = vmatprep.subr.bf16.mxu0 0
  %384 = vmatpush1.bf16.xpose.msra.mxu0 0
  %385 = vmatprep.subr.bf16.mxu0 0
  %386 = vmatpush1.bf16.xpose.msra.mxu0 0
  %387 = vmatprep.subr.bf16.mxu0 0
  %388 = vmatpush1.bf16.xpose.msra.mxu0 0
  %389 = vmatprep.subr.bf16.mxu0 0
  %390 = vmatpush1.bf16.xpose.msra.mxu0 0
  %391 = vmatprep.subr.bf16.mxu0 0
  %392 = vmatpush1.bf16.xpose.msra.mxu0 0
  %393 = vmatprep.subr.bf16.mxu0 0
  %394 = vmatpush1.bf16.xpose.msra.mxu0 0
  %395 = vmatprep.subr.bf16.mxu0 0
  %396 = vmatpush1.bf16.xpose.msra.mxu0 0
  %397 = vmatprep.subr.bf16.mxu0 0
  %398 = vmatpush1.bf16.xpose.msra.mxu0 0
  %399 = vmatprep.subr.bf16.mxu0 0
  %400 = vmatpush1.bf16.xpose.msra.mxu0 0
  %401 = vmatprep.subr.bf16.mxu0 0
  %402 = vmatpush1.bf16.xpose.msra.mxu0 0
  %403 = vmatprep.subr.bf16.mxu0 0
  %404 = vmatpush1.bf16.xpose.msra.mxu0 0
  %405 = vmatprep.subr.bf16.mxu0 0
  %406 = vmatpush1.bf16.xpose.msra.mxu0 0
  %407 = vmatprep.subr.bf16.mxu0 0
  %408 = vmatpush1.bf16.xpose.msra.mxu0 0
  %409 = vmatprep.mubr.bf16.mxu0 0
  %410 = vmatmul.mubr.bf16.gmra.mrb[0].mxu0 %v372
  %v411 = vpop.f32.mrb[0].mxu0
  %v412 = vadd.f32 0.0, %v411
  %v413 = vpop.f32.mrb[0].mxu0
  %v414 = vpop.f32.mrb[0].mxu0
  %v415 = vpop.f32.mrb[0].mxu0
  %416 = vdwg.mxu0
  %417 = vrot.lane.b32.xlu0 %v128, 120
  %v418 = vpop.permute.xlu0 %417
  %419 = vrot.lane.b32.xlu0 %v128, 88
  %v420 = vpop.permute.xlu0 %419
  %v422 = vsel %vm132, %v418, 0
  %v425 = vsel %vm132, %v420, 0
  %427 = vmatprep.subr.bf16.mxu0 0
  %428 = vmatpush1.bf16.xpose.msra.mxu0 %v425
  %429 = vmatprep.subr.bf16.mxu0 0
  %430 = vmatpush1.bf16.xpose.msra.mxu0 0
  %431 = vmatprep.subr.bf16.mxu0 0
  %432 = vmatpush1.bf16.xpose.msra.mxu0 0
  %433 = vmatprep.subr.bf16.mxu0 0
  %434 = vmatpush1.bf16.xpose.msra.mxu0 0
  %435 = vmatprep.subr.bf16.mxu0 0
  %436 = vmatpush1.bf16.xpose.msra.mxu0 0
  %437 = vmatprep.subr.bf16.mxu0 0
  %438 = vmatpush1.bf16.xpose.msra.mxu0 0
  %439 = vmatprep.subr.bf16.mxu0 0
  %440 = vmatpush1.bf16.xpose.msra.mxu0 0
  %441 = vmatprep.subr.bf16.mxu0 0
  %442 = vmatpush1.bf16.xpose.msra.mxu0 0
  %443 = vmatprep.subr.bf16.mxu0 0
  %444 = vmatpush1.bf16.xpose.msra.mxu0 0
  %445 = vmatprep.subr.bf16.mxu0 0
  %446 = vmatpush1.bf16.xpose.msra.mxu0 0
  %447 = vmatprep.subr.bf16.mxu0 0
  %448 = vmatpush1.bf16.xpose.msra.mxu0 0
  %449 = vmatprep.subr.bf16.mxu0 0
  %450 = vmatpush1.bf16.xpose.msra.mxu0 0
  %451 = vmatprep.subr.bf16.mxu0 0
  %452 = vmatpush1.bf16.xpose.msra.mxu0 0
  %453 = vmatprep.subr.bf16.mxu0 0
  %454 = vmatpush1.bf16.xpose.msra.mxu0 0
  %455 = vmatprep.subr.bf16.mxu0 0
  %456 = vmatpush1.bf16.xpose.msra.mxu0 0
  %457 = vmatprep.subr.bf16.mxu0 0
  %458 = vmatpush1.bf16.xpose.msra.mxu0 0
  %459 = vmatprep.mubr.bf16.mxu0 0
  %460 = vmatmul.mubr.bf16.gmra.mrb[0].mxu0 %v422
  %v461 = vpop.f32.mrb[0].mxu0
  %v462 = vadd.f32 0.0, %v461
  %v463 = vpop.f32.mrb[0].mxu0
  %v464 = vpop.f32.mrb[0].mxu0
  %v465 = vpop.f32.mrb[0].mxu0
  %466 = vdwg.mxu0
  %v467 = vmul.f32 %v412, 0.35355338
  %v468 = vmul.f32 %v462, 0.35355338
  %v469 = vadd.f32 %v467, %v235
  %v470 = vadd.f32 %v468, %v239
  %v471 = vsel %vm132, %v469, -inf
  %472 = vmax.xlane.f32.xlu0 %v471
  %v473 = vpop.xlane.xlu0 %472
  %v474 = vsel %vm132, %v470, -inf
  %475 = vmax.xlane.f32.xlu0 %v474
  %v476 = vpop.xlane.xlu0 %475
  %v477 = vsub.f32 %v469, %v473
  %v478 = vsub.f32 %v470, %v476
  %v479 = vmul.f32 %v477, 1.442695
  %v480 = vpow.pop %v479
  %v481 = vmul.f32 %v478, 1.442695
  %v482 = vpow.pop %v481
  %v483 = vsel %vm132, %v480, 0.0
  %484 = vadd.xlane.f32.xlu0 %v483
  %v485 = vpop.xlane.xlu0 %484
  %v486 = vsel %vm132, %v482, 0.0
  %487 = vadd.xlane.f32.xlu0 %v486
  %v488 = vpop.xlane.xlu0 %487
  %v489 = vrcp.pop %v485
  %v490 = vrcp.pop %v488
  %v491 = vmul.f32 %v480, %v489
  %v492 = vmul.f32 %v482, %v490
  %v493 = vpack.c.bf16 %v491, %v491
  %v494 = vpack.c.bf16 %v492, %v492
  %495 = vrot.lane.b32.xlu0 %v127, 56
  %v496 = vpop.permute.xlu0 %495
  %v498 = vsel %vm132, %v493, 0
  %v501 = vsel %vm273, %v496, 0
  %503 = vmatprep.subr.bf16.mxu0 0
  %504 = vmatpush1.bf16.msra.mxu0 %v501
  %505 = vmatprep.subr.bf16.mxu0 0
  %506 = vmatpush1.bf16.msra.mxu0 0
  %507 = vmatprep.subr.bf16.mxu0 0
  %508 = vmatpush1.bf16.msra.mxu0 0
  %509 = vmatprep.subr.bf16.mxu0 0
  %510 = vmatpush1.bf16.msra.mxu0 0
  %511 = vmatprep.subr.bf16.mxu0 0
  %512 = vmatpush1.bf16.msra.mxu0 0
  %513 = vmatprep.subr.bf16.mxu0 0
  %514 = vmatpush1.bf16.msra.mxu0 0
  %515 = vmatprep.subr.bf16.mxu0 0
  %516 = vmatpush1.bf16.msra.mxu0 0
  %517 = vmatprep.subr.bf16.mxu0 0
  %518 = vmatpush1.bf16.msra.mxu0 0
  %519 = vmatprep.subr.bf16.mxu0 0
  %520 = vmatpush1.bf16.msra.mxu0 0
  %521 = vmatprep.subr.bf16.mxu0 0
  %522 = vmatpush1.bf16.msra.mxu0 0
  %523 = vmatprep.subr.bf16.mxu0 0
  %524 = vmatpush1.bf16.msra.mxu0 0
  %525 = vmatprep.subr.bf16.mxu0 0
  %526 = vmatpush1.bf16.msra.mxu0 0
  %527 = vmatprep.subr.bf16.mxu0 0
  %528 = vmatpush1.bf16.msra.mxu0 0
  %529 = vmatprep.subr.bf16.mxu0 0
  %530 = vmatpush1.bf16.msra.mxu0 0
  %531 = vmatprep.subr.bf16.mxu0 0
  %532 = vmatpush1.bf16.msra.mxu0 0
  %533 = vmatprep.subr.bf16.mxu0 0
  %534 = vmatpush1.bf16.msra.mxu0 0
  %535 = vmatprep.mubr.bf16.mxu0 0
  %536 = vmatmul.mubr.bf16.gmra.mrb[0].mxu0 %v498
  %v537 = vpop.f32.mrb[0].mxu0
  %v538 = vadd.f32 0.0, %v537
  %v539 = vpop.f32.mrb[0].mxu0
  %v540 = vpop.f32.mrb[0].mxu0
  %v541 = vpop.f32.mrb[0].mxu0
  %542 = vdwg.mxu0
  %543 = vrot.lane.b32.xlu0 %v128, 56
  %v544 = vpop.permute.xlu0 %543
  %v546 = vsel %vm132, %v494, 0
  %v549 = vsel %vm273, %v544, 0
  %551 = vmatprep.subr.bf16.mxu0 0
  %552 = vmatpush1.bf16.msra.mxu0 %v549
  %553 = vmatprep.subr.bf16.mxu0 0
  %554 = vmatpush1.bf16.msra.mxu0 0
  %555 = vmatprep.subr.bf16.mxu0 0
  %556 = vmatpush1.bf16.msra.mxu0 0
  %557 = vmatprep.subr.bf16.mxu0 0
  %558 = vmatpush1.bf16.msra.mxu0 0
  %559 = vmatprep.subr.bf16.mxu0 0
  %560 = vmatpush1.bf16.msra.mxu0 0
  %561 = vmatprep.subr.bf16.mxu0 0
  %562 = vmatpush1.bf16.msra.mxu0 0
  %563 = vmatprep.subr.bf16.mxu0 0
  %564 = vmatpush1.bf16.msra.mxu0 0
  %565 = vmatprep.subr.bf16.mxu0 0
  %566 = vmatpush1.bf16.msra.mxu0 0
  %567 = vmatprep.subr.bf16.mxu0 0
  %568 = vmatpush1.bf16.msra.mxu0 0
  %569 = vmatprep.subr.bf16.mxu0 0
  %570 = vmatpush1.bf16.msra.mxu0 0
  %571 = vmatprep.subr.bf16.mxu0 0
  %572 = vmatpush1.bf16.msra.mxu0 0
  %573 = vmatprep.subr.bf16.mxu0 0
  %574 = vmatpush1.bf16.msra.mxu0 0
  %575 = vmatprep.subr.bf16.mxu0 0
  %576 = vmatpush1.bf16.msra.mxu0 0
  %577 = vmatprep.subr.bf16.mxu0 0
  %578 = vmatpush1.bf16.msra.mxu0 0
  %579 = vmatprep.subr.bf16.mxu0 0
  %580 = vmatpush1.bf16.msra.mxu0 0
  %581 = vmatprep.subr.bf16.mxu0 0
  %582 = vmatpush1.bf16.msra.mxu0 0
  %583 = vmatprep.mubr.bf16.mxu0 0
  %584 = vmatmul.mubr.bf16.gmra.mrb[0].mxu0 %v546
  %v585 = vpop.f32.mrb[0].mxu0
  %v586 = vadd.f32 0.0, %v585
  %v587 = vpop.f32.mrb[0].mxu0
  %v588 = vpop.f32.mrb[0].mxu0
  %v589 = vpop.f32.mrb[0].mxu0
  %590 = vdwg.mxu0
  %593 = vrot.lane.b32.xlu0 %v538, 8
  %v594 = vpop.permute.xlu0 %593
  %595 = vrot.lane.b32.xlu0 %v586, 8
  %v596 = vpop.permute.xlu0 %595
  %vm599 = vcmask 130112
  %600 = vst.msk [vmem:[#allocation2] sm:$0xff] %vm599, %v594
  %601 = vst.msk [vmem:[#allocation2 + $0x8] sm:$0xff] %vm599, %v596
  %602 = vrot.lane.b32.xlu0 %v127, 112
  %v603 = vpop.permute.xlu0 %602
  %604 = vrot.lane.b32.xlu0 %v127, 80
  %v605 = vpop.permute.xlu0 %604
  %v607 = vsel %vm132, %v603, 0
  %v610 = vsel %vm132, %v605, 0
  %612 = vmatprep.subr.bf16.mxu0 0
  %613 = vmatpush1.bf16.xpose.msra.mxu0 %v610
  %614 = vmatprep.subr.bf16.mxu0 0
  %615 = vmatpush1.bf16.xpose.msra.mxu0 0
  %616 = vmatprep.subr.bf16.mxu0 0
  %617 = vmatpush1.bf16.xpose.msra.mxu0 0
  %618 = vmatprep.subr.bf16.mxu0 0
  %619 = vmatpush1.bf16.xpose.msra.mxu0 0
  %620 = vmatprep.subr.bf16.mxu0 0
  %621 = vmatpush1.bf16.xpose.msra.mxu0 0
  %622 = vmatprep.subr.bf16.mxu0 0
  %623 = vmatpush1.bf16.xpose.msra.mxu0 0
  %624 = vmatprep.subr.bf16.mxu0 0
  %625 = vmatpush1.bf16.xpose.msra.mxu0 0
  %626 = vmatprep.subr.bf16.mxu0 0
  %627 = vmatpush1.bf16.xpose.msra.mxu0 0
  %628 = vmatprep.subr.bf16.mxu0 0
  %629 = vmatpush1.bf16.xpose.msra.mxu0 0
  %630 = vmatprep.subr.bf16.mxu0 0
  %631 = vmatpush1.bf16.xpose.msra.mxu0 0
  %632 = vmatprep.subr.bf16.mxu0 0
  %633 = vmatpush1.bf16.xpose.msra.mxu0 0
  %634 = vmatprep.subr.bf16.mxu0 0
  %635 = vmatpush1.bf16.xpose.msra.mxu0 0
  %636 = vmatprep.subr.bf16.mxu0 0
  %637 = vmatpush1.bf16.xpose.msra.mxu0 0
  %638 = vmatprep.subr.bf16.mxu0 0
  %639 = vmatpush1.bf16.xpose.msra.mxu0 0
  %640 = vmatprep.subr.bf16.mxu0 0
  %641 = vmatpush1.bf16.xpose.msra.mxu0 0
  %642 = vmatprep.subr.bf16.mxu0 0
  %643 = vmatpush1.bf16.xpose.msra.mxu0 0
  %644 = vmatprep.mubr.bf16.mxu0 0
  %645 = vmatmul.mubr.bf16.gmra.mrb[0].mxu0 %v607
  %v646 = vpop.f32.mrb[0].mxu0
  %v647 = vadd.f32 0.0, %v646
  %v648 = vpop.f32.mrb[0].mxu0
  %v649 = vpop.f32.mrb[0].mxu0
  %v650 = vpop.f32.mrb[0].mxu0
  %651 = vdwg.mxu0
  %652 = vrot.lane.b32.xlu0 %v128, 112
  %v653 = vpop.permute.xlu0 %652
  %654 = vrot.lane.b32.xlu0 %v128, 80
  %v655 = vpop.permute.xlu0 %654
  %v657 = vsel %vm132, %v653, 0
  %v660 = vsel %vm132, %v655, 0
  %662 = vmatprep.subr.bf16.mxu0 0
  %663 = vmatpush1.bf16.xpose.msra.mxu0 %v660
  %664 = vmatprep.subr.bf16.mxu0 0
  %665 = vmatpush1.bf16.xpose.msra.mxu0 0
  %666 = vmatprep.subr.bf16.mxu0 0
  %667 = vmatpush1.bf16.xpose.msra.mxu0 0
  %668 = vmatprep.subr.bf16.mxu0 0
  %669 = vmatpush1.bf16.xpose.msra.mxu0 0
  %670 = vmatprep.subr.bf16.mxu0 0
  %671 = vmatpush1.bf16.xpose.msra.mxu0 0
  %672 = vmatprep.subr.bf16.mxu0 0
  %673 = vmatpush1.bf16.xpose.msra.mxu0 0
  %674 = vmatprep.subr.bf16.mxu0 0
  %675 = vmatpush1.bf16.xpose.msra.mxu0 0
  %676 = vmatprep.subr.bf16.mxu0 0
  %677 = vmatpush1.bf16.xpose.msra.mxu0 0
  %678 = vmatprep.subr.bf16.mxu0 0
  %679 = vmatpush1.bf16.xpose.msra.mxu0 0
  %680 = vmatprep.subr.bf16.mxu0 0
  %681 = vmatpush1.bf16.xpose.msra.mxu0 0
  %682 = vmatprep.subr.bf16.mxu0 0
  %683 = vmatpush1.bf16.xpose.msra.mxu0 0
  %684 = vmatprep.subr.bf16.mxu0 0
  %685 = vmatpush1.bf16.xpose.msra.mxu0 0
  %686 = vmatprep.subr.bf16.mxu0 0
  %687 = vmatpush1.bf16.xpose.msra.mxu0 0
  %688 = vmatprep.subr.bf16.mxu0 0
  %689 = vmatpush1.bf16.xpose.msra.mxu0 0
  %690 = vmatprep.subr.bf16.mxu0 0
  %691 = vmatpush1.bf16.xpose.msra.mxu0 0
  %692 = vmatprep.subr.bf16.mxu0 0
  %693 = vmatpush1.bf16.xpose.msra.mxu0 0
  %694 = vmatprep.mubr.bf16.mxu0 0
  %695 = vmatmul.mubr.bf16.gmra.mrb[0].mxu0 %v657
  %v696 = vpop.f32.mrb[0].mxu0
  %v697 = vadd.f32 0.0, %v696
  %v698 = vpop.f32.mrb[0].mxu0
  %v699 = vpop.f32.mrb[0].mxu0
  %v700 = vpop.f32.mrb[0].mxu0
  %701 = vdwg.mxu0
  %v702 = vmul.f32 %v647, 0.35355338
  %v703 = vmul.f32 %v697, 0.35355338
  %v704 = vadd.f32 %v702, %v235
  %v705 = vadd.f32 %v703, %v239
  %v706 = vsel %vm132, %v704, -inf
  %707 = vmax.xlane.f32.xlu0 %v706
  %v708 = vpop.xlane.xlu0 %707
  %v709 = vsel %vm132, %v705, -inf
  %710 = vmax.xlane.f32.xlu0 %v709
  %v711 = vpop.xlane.xlu0 %710
  %v712 = vsub.f32 %v704, %v708
  %v713 = vsub.f32 %v705, %v711
  %v714 = vmul.f32 %v712, 1.442695
  %v715 = vpow.pop %v714
  %v716 = vmul.f32 %v713, 1.442695
  %v717 = vpow.pop %v716
  %v718 = vsel %vm132, %v715, 0.0
  %719 = vadd.xlane.f32.xlu0 %v718
  %v720 = vpop.xlane.xlu0 %719
  %v721 = vsel %vm132, %v717, 0.0
  %722 = vadd.xlane.f32.xlu0 %v721
  %v723 = vpop.xlane.xlu0 %722
  %v724 = vrcp.pop %v720
  %v725 = vrcp.pop %v723
  %v726 = vmul.f32 %v715, %v724
  %v727 = vmul.f32 %v717, %v725
  %v728 = vpack.c.bf16 %v726, %v726
  %v729 = vpack.c.bf16 %v727, %v727
  %730 = vrot.lane.b32.xlu0 %v127, 48
  %v731 = vpop.permute.xlu0 %730
  %v733 = vsel %vm132, %v728, 0
  %v736 = vsel %vm273, %v731, 0
  %738 = vmatprep.subr.bf16.mxu0 0
  %739 = vmatpush1.bf16.msra.mxu0 %v736
  %740 = vmatprep.subr.bf16.mxu0 0
  %741 = vmatpush1.bf16.msra.mxu0 0
  %742 = vmatprep.subr.bf16.mxu0 0
  %743 = vmatpush1.bf16.msra.mxu0 0
  %744 = vmatprep.subr.bf16.mxu0 0
  %745 = vmatpush1.bf16.msra.mxu0 0
  %746 = vmatprep.subr.bf16.mxu0 0
  %747 = vmatpush1.bf16.msra.mxu0 0
  %748 = vmatprep.subr.bf16.mxu0 0
  %749 = vmatpush1.bf16.msra.mxu0 0
  %750 = vmatprep.subr.bf16.mxu0 0
  %751 = vmatpush1.bf16.msra.mxu0 0
  %752 = vmatprep.subr.bf16.mxu0 0
  %753 = vmatpush1.bf16.msra.mxu0 0
  %754 = vmatprep.subr.bf16.mxu0 0
  %755 = vmatpush1.bf16.msra.mxu0 0
  %756 = vmatprep.subr.bf16.mxu0 0
  %757 = vmatpush1.bf16.msra.mxu0 0
  %758 = vmatprep.subr.bf16.mxu0 0
  %759 = vmatpush1.bf16.msra.mxu0 0
  %760 = vmatprep.subr.bf16.mxu0 0
  %761 = vmatpush1.bf16.msra.mxu0 0
  %762 = vmatprep.subr.bf16.mxu0 0
  %763 = vmatpush1.bf16.msra.mxu0 0
  %764 = vmatprep.subr.bf16.mxu0 0
  %765 = vmatpush1.bf16.msra.mxu0 0
  %766 = vmatprep.subr.bf16.mxu0 0
  %767 = vmatpush1.bf16.msra.mxu0 0
  %768 = vmatprep.subr.bf16.mxu0 0
  %769 = vmatpush1.bf16.msra.mxu0 0
  %770 = vmatprep.mubr.bf16.mxu0 0
  %771 = vmatmul.mubr.bf16.gmra.mrb[0].mxu0 %v733
  %v772 = vpop.f32.mrb[0].mxu0
  %v773 = vadd.f32 0.0, %v772
  %v774 = vpop.f32.mrb[0].mxu0
  %v775 = vpop.f32.mrb[0].mxu0
  %v776 = vpop.f32.mrb[0].mxu0
  %777 = vdwg.mxu0
  %778 = vrot.lane.b32.xlu0 %v128, 48
  %v779 = vpop.permute.xlu0 %778
  %v781 = vsel %vm132, %v729, 0
  %v784 = vsel %vm273, %v779, 0
  %786 = vmatprep.subr.bf16.mxu0 0
  %787 = vmatpush1.bf16.msra.mxu0 %v784
  %788 = vmatprep.subr.bf16.mxu0 0
  %789 = vmatpush1.bf16.msra.mxu0 0
  %790 = vmatprep.subr.bf16.mxu0 0
  %791 = vmatpush1.bf16.msra.mxu0 0
  %792 = vmatprep.subr.bf16.mxu0 0
  %793 = vmatpush1.bf16.msra.mxu0 0
  %794 = vmatprep.subr.bf16.mxu0 0
  %795 = vmatpush1.bf16.msra.mxu0 0
  %796 = vmatprep.subr.bf16.mxu0 0
  %797 = vmatpush1.bf16.msra.mxu0 0
  %798 = vmatprep.subr.bf16.mxu0 0
  %799 = vmatpush1.bf16.msra.mxu0 0
  %800 = vmatprep.subr.bf16.mxu0 0
  %801 = vmatpush1.bf16.msra.mxu0 0
  %802 = vmatprep.subr.bf16.mxu0 0
  %803 = vmatpush1.bf16.msra.mxu0 0
  %804 = vmatprep.subr.bf16.mxu0 0
  %805 = vmatpush1.bf16.msra.mxu0 0
  %806 = vmatprep.subr.bf16.mxu0 0
  %807 = vmatpush1.bf16.msra.mxu0 0
  %808 = vmatprep.subr.bf16.mxu0 0
  %809 = vmatpush1.bf16.msra.mxu0 0
  %810 = vmatprep.subr.bf16.mxu0 0
  %811 = vmatpush1.bf16.msra.mxu0 0
  %812 = vmatprep.subr.bf16.mxu0 0
  %813 = vmatpush1.bf16.msra.mxu0 0
  %814 = vmatprep.subr.bf16.mxu0 0
  %815 = vmatpush1.bf16.msra.mxu0 0
  %816 = vmatprep.subr.bf16.mxu0 0
  %817 = vmatpush1.bf16.msra.mxu0 0
  %818 = vmatprep.mubr.bf16.mxu0 0
  %819 = vmatmul.mubr.bf16.gmra.mrb[0].mxu0 %v781
  %v820 = vpop.f32.mrb[0].mxu0
  %v821 = vadd.f32 0.0, %v820
  %v822 = vpop.f32.mrb[0].mxu0
  %v823 = vpop.f32.mrb[0].mxu0
  %v824 = vpop.f32.mrb[0].mxu0
  %825 = vdwg.mxu0
  %828 = vrot.lane.b32.xlu0 %v773, 16
  %v829 = vpop.permute.xlu0 %828
  %830 = vrot.lane.b32.xlu0 %v821, 16
  %v831 = vpop.permute.xlu0 %830
  %vm834 = vcmask 195712
  %835 = vst.msk [vmem:[#allocation2] sm:$0xff] %vm834, %v829
  %836 = vst.msk [vmem:[#allocation2 + $0x8] sm:$0xff] %vm834, %v831
  %837 = vrot.lane.b32.xlu0 %v127, 104
  %v838 = vpop.permute.xlu0 %837
  %839 = vrot.lane.b32.xlu0 %v127, 72
  %v840 = vpop.permute.xlu0 %839
  %v842 = vsel %vm132, %v838, 0
  %v845 = vsel %vm132, %v840, 0
  %847 = vmatprep.subr.bf16.mxu0 0
  %848 = vmatpush1.bf16.xpose.msra.mxu0 %v845
  %849 = vmatprep.subr.bf16.mxu0 0
  %850 = vmatpush1.bf16.xpose.msra.mxu0 0
  %851 = vmatprep.subr.bf16.mxu0 0
  %852 = vmatpush1.bf16.xpose.msra.mxu0 0
  %853 = vmatprep.subr.bf16.mxu0 0
  %854 = vmatpush1.bf16.xpose.msra.mxu0 0
  %855 = vmatprep.subr.bf16.mxu0 0
  %856 = vmatpush1.bf16.xpose.msra.mxu0 0
  %857 = vmatprep.subr.bf16.mxu0 0
  %858 = vmatpush1.bf16.xpose.msra.mxu0 0
  %859 = vmatprep.subr.bf16.mxu0 0
  %860 = vmatpush1.bf16.xpose.msra.mxu0 0
  %861 = vmatprep.subr.bf16.mxu0 0
  %862 = vmatpush1.bf16.xpose.msra.mxu0 0
  %863 = vmatprep.subr.bf16.mxu0 0
  %864 = vmatpush1.bf16.xpose.msra.mxu0 0
  %865 = vmatprep.subr.bf16.mxu0 0
  %866 = vmatpush1.bf16.xpose.msra.mxu0 0
  %867 = vmatprep.subr.bf16.mxu0 0
  %868 = vmatpush1.bf16.xpose.msra.mxu0 0
  %869 = vmatprep.subr.bf16.mxu0 0
  %870 = vmatpush1.bf16.xpose.msra.mxu0 0
  %871 = vmatprep.subr.bf16.mxu0 0
  %872 = vmatpush1.bf16.xpose.msra.mxu0 0
  %873 = vmatprep.subr.bf16.mxu0 0
  %874 = vmatpush1.bf16.xpose.msra.mxu0 0
  %875 = vmatprep.subr.bf16.mxu0 0
  %876 = vmatpush1.bf16.xpose.msra.mxu0 0
  %877 = vmatprep.subr.bf16.mxu0 0
  %878 = vmatpush1.bf16.xpose.msra.mxu0 0
  %879 = vmatprep.mubr.bf16.mxu0 0
  %880 = vmatmul.mubr.bf16.gmra.mrb[0].mxu0 %v842
  %v881 = vpop.f32.mrb[0].mxu0
  %v882 = vadd.f32 0.0, %v881
  %v883 = vpop.f32.mrb[0].mxu0
  %v884 = vpop.f32.mrb[0].mxu0
  %v885 = vpop.f32.mrb[0].mxu0
  %886 = vdwg.mxu0
  %887 = vrot.lane.b32.xlu0 %v128, 104
  %v888 = vpop.permute.xlu0 %887
  %889 = vrot.lane.b32.xlu0 %v128, 72
  %v890 = vpop.permute.xlu0 %889
  %v892 = vsel %vm132, %v888, 0
  %v895 = vsel %vm132, %v890, 0
  %897 = vmatprep.subr.bf16.mxu0 0
  %898 = vmatpush1.bf16.xpose.msra.mxu0 %v895
  %899 = vmatprep.subr.bf16.mxu0 0
  %900 = vmatpush1.bf16.xpose.msra.mxu0 0
  %901 = vmatprep.subr.bf16.mxu0 0
  %902 = vmatpush1.bf16.xpose.msra.mxu0 0
  %903 = vmatprep.subr.bf16.mxu0 0
  %904 = vmatpush1.bf16.xpose.msra.mxu0 0
  %905 = vmatprep.subr.bf16.mxu0 0
  %906 = vmatpush1.bf16.xpose.msra.mxu0 0
  %907 = vmatprep.subr.bf16.mxu0 0
  %908 = vmatpush1.bf16.xpose.msra.mxu0 0
  %909 = vmatprep.subr.bf16.mxu0 0
  %910 = vmatpush1.bf16.xpose.msra.mxu0 0
  %911 = vmatprep.subr.bf16.mxu0 0
  %912 = vmatpush1.bf16.xpose.msra.mxu0 0
  %913 = vmatprep.subr.bf16.mxu0 0
  %914 = vmatpush1.bf16.xpose.msra.mxu0 0
  %915 = vmatprep.subr.bf16.mxu0 0
  %916 = vmatpush1.bf16.xpose.msra.mxu0 0
  %917 = vmatprep.subr.bf16.mxu0 0
  %918 = vmatpush1.bf16.xpose.msra.mxu0 0
  %919 = vmatprep.subr.bf16.mxu0 0
  %920 = vmatpush1.bf16.xpose.msra.mxu0 0
  %921 = vmatprep.subr.bf16.mxu0 0
  %922 = vmatpush1.bf16.xpose.msra.mxu0 0
  %923 = vmatprep.subr.bf16.mxu0 0
  %924 = vmatpush1.bf16.xpose.msra.mxu0 0
  %925 = vmatprep.subr.bf16.mxu0 0
  %926 = vmatpush1.bf16.xpose.msra.mxu0 0
  %927 = vmatprep.subr.bf16.mxu0 0
  %928 = vmatpush1.bf16.xpose.msra.mxu0 0
  %929 = vmatprep.mubr.bf16.mxu0 0
  %930 = vmatmul.mubr.bf16.gmra.mrb[0].mxu0 %v892
  %v931 = vpop.f32.mrb[0].mxu0
  %v932 = vadd.f32 0.0, %v931
  %v933 = vpop.f32.mrb[0].mxu0
  %v934 = vpop.f32.mrb[0].mxu0
  %v935 = vpop.f32.mrb[0].mxu0
  %936 = vdwg.mxu0
  %v937 = vmul.f32 %v882, 0.35355338
  %v938 = vmul.f32 %v932, 0.35355338
  %v939 = vadd.f32 %v937, %v235
  %v940 = vadd.f32 %v938, %v239
  %v941 = vsel %vm132, %v939, -inf
  %942 = vmax.xlane.f32.xlu0 %v941
  %v943 = vpop.xlane.xlu0 %942
  %v944 = vsel %vm132, %v940, -inf
  %945 = vmax.xlane.f32.xlu0 %v944
  %v946 = vpop.xlane.xlu0 %945
  %v947 = vsub.f32 %v939, %v943
  %v948 = vsub.f32 %v940, %v946
  %v949 = vmul.f32 %v947, 1.442695
  %v950 = vpow.pop %v949
  %v951 = vmul.f32 %v948, 1.442695
  %v952 = vpow.pop %v951
  %v953 = vsel %vm132, %v950, 0.0
  %954 = vadd.xlane.f32.xlu0 %v953
  %v955 = vpop.xlane.xlu0 %954
  %v956 = vsel %vm132, %v952, 0.0
  %957 = vadd.xlane.f32.xlu0 %v956
  %v958 = vpop.xlane.xlu0 %957
  %v959 = vrcp.pop %v955
  %v960 = vrcp.pop %v958
  %v961 = vmul.f32 %v950, %v959
  %v962 = vmul.f32 %v952, %v960
  %v963 = vpack.c.bf16 %v961, %v961
  %v964 = vpack.c.bf16 %v962, %v962
  %965 = vrot.lane.b32.xlu0 %v127, 40
  %v966 = vpop.permute.xlu0 %965
  %v968 = vsel %vm132, %v963, 0
  %v971 = vsel %vm273, %v966, 0
  %973 = vmatprep.subr.bf16.mxu0 0
  %974 = vmatpush1.bf16.msra.mxu0 %v971
  %975 = vmatprep.subr.bf16.mxu0 0
  %976 = vmatpush1.bf16.msra.mxu0 0
  %977 = vmatprep.subr.bf16.mxu0 0
  %978 = vmatpush1.bf16.msra.mxu0 0
  %979 = vmatprep.subr.bf16.mxu0 0
  %980 = vmatpush1.bf16.msra.mxu0 0
  %981 = vmatprep.subr.bf16.mxu0 0
  %982 = vmatpush1.bf16.msra.mxu0 0
  %983 = vmatprep.subr.bf16.mxu0 0
  %984 = vmatpush1.bf16.msra.mxu0 0
  %985 = vmatprep.subr.bf16.mxu0 0
  %986 = vmatpush1.bf16.msra.mxu0 0
  %987 = vmatprep.subr.bf16.mxu0 0
  %988 = vmatpush1.bf16.msra.mxu0 0
  %989 = vmatprep.subr.bf16.mxu0 0
  %990 = vmatpush1.bf16.msra.mxu0 0
  %991 = vmatprep.subr.bf16.mxu0 0
  %992 = vmatpush1.bf16.msra.mxu0 0
  %993 = vmatprep.subr.bf16.mxu0 0
  %994 = vmatpush1.bf16.msra.mxu0 0
  %995 = vmatprep.subr.bf16.mxu0 0
  %996 = vmatpush1.bf16.msra.mxu0 0
  %997 = vmatprep.subr.bf16.mxu0 0
  %998 = vmatpush1.bf16.msra.mxu0 0
  %999 = vmatprep.subr.bf16.mxu0 0
  %1000 = vmatpush1.bf16.msra.mxu0 0
  %1001 = vmatprep.subr.bf16.mxu0 0
  %1002 = vmatpush1.bf16.msra.mxu0 0
  %1003 = vmatprep.subr.bf16.mxu0 0
  %1004 = vmatpush1.bf16.msra.mxu0 0
  %1005 = vmatprep.mubr.bf16.mxu0 0
  %1006 = vmatmul.mubr.bf16.gmra.mrb[0].mxu0 %v968
  %v1007 = vpop.f32.mrb[0].mxu0
  %v1008 = vadd.f32 0.0, %v1007
  %v1009 = vpop.f32.mrb[0].mxu0
  %v1010 = vpop.f32.mrb[0].mxu0
  %v1011 = vpop.f32.mrb[0].mxu0
  %1012 = vdwg.mxu0
  %1013 = vrot.lane.b32.xlu0 %v128, 40
  %v1014 = vpop.permute.xlu0 %1013
  %v1016 = vsel %vm132, %v964, 0
  %v1019 = vsel %vm273, %v1014, 0
  %1021 = vmatprep.subr.bf16.mxu0 0
  %1022 = vmatpush1.bf16.msra.mxu0 %v1019
  %1023 = vmatprep.subr.bf16.mxu0 0
  %1024 = vmatpush1.bf16.msra.mxu0 0
  %1025 = vmatprep.subr.bf16.mxu0 0
  %1026 = vmatpush1.bf16.msra.mxu0 0
  %1027 = vmatprep.subr.bf16.mxu0 0
  %1028 = vmatpush1.bf16.msra.mxu0 0
  %1029 = vmatprep.subr.bf16.mxu0 0
  %1030 = vmatpush1.bf16.msra.mxu0 0
  %1031 = vmatprep.subr.bf16.mxu0 0
  %1032 = vmatpush1.bf16.msra.mxu0 0
  %1033 = vmatprep.subr.bf16.mxu0 0
  %1034 = vmatpush1.bf16.msra.mxu0 0
  %1035 = vmatprep.subr.bf16.mxu0 0
  %1036 = vmatpush1.bf16.msra.mxu0 0
  %1037 = vmatprep.subr.bf16.mxu0 0
  %1038 = vmatpush1.bf16.msra.mxu0 0
  %1039 = vmatprep.subr.bf16.mxu0 0
  %1040 = vmatpush1.bf16.msra.mxu0 0
  %1041 = vmatprep.subr.bf16.mxu0 0
  %1042 = vmatpush1.bf16.msra.mxu0 0
  %1043 = vmatprep.subr.bf16.mxu0 0
  %1044 = vmatpush1.bf16.msra.mxu0 0
  %1045 = vmatprep.subr.bf16.mxu0 0
  %1046 = vmatpush1.bf16.msra.mxu0 0
  %1047 = vmatprep.subr.bf16.mxu0 0
  %1048 = vmatpush1.bf16.msra.mxu0 0
  %1049 = vmatprep.subr.bf16.mxu0 0
  %1050 = vmatpush1.bf16.msra.mxu0 0
  %1051 = vmatprep.subr.bf16.mxu0 0
  %1052 = vmatpush1.bf16.msra.mxu0 0
  %1053 = vmatprep.mubr.bf16.mxu0 0
  %1054 = vmatmul.mubr.bf16.gmra.mrb[0].mxu0 %v1016
  %v1055 = vpop.f32.mrb[0].mxu0
  %v1056 = vadd.f32 0.0, %v1055
  %v1057 = vpop.f32.mrb[0].mxu0
  %v1058 = vpop.f32.mrb[0].mxu0
  %v1059 = vpop.f32.mrb[0].mxu0
  %1060 = vdwg.mxu0
  %1063 = vrot.lane.b32.xlu0 %v1008, 24
  %v1064 = vpop.permute.xlu0 %1063
  %1065 = vrot.lane.b32.xlu0 %v1056, 24
  %v1066 = vpop.permute.xlu0 %1065
  %vm1069 = vcmask 261312
  %1070 = vst.msk [vmem:[#allocation2] sm:$0xff] %vm1069, %v1064
  %1071 = vst.msk [vmem:[#allocation2 + $0x8] sm:$0xff] %vm1069, %v1066
  %v1072 = vld [vmem:[#allocation2] sm:$0xff]
  %v1073 = vld [vmem:[#allocation2 + $0x8] sm:$0xff]
  %v1074 = vpack.c.bf16 %v1073, %v1072
  %v1075 = vld [vmem:[%s4] sm:$0xf]
  %v1076 = vld [vmem:[%s4 + $0x4] sm:$0xf]
  %v1077 = vld [vmem:[%s4 + $0x8] sm:$0xf]
  %v1078 = vld [vmem:[%s4 + $0xc] sm:$0xf]
  %v1079 = vld [vmem:[%s5] sm:$0x1]
  %v1081 = vlaneseq
  %v1082 = vshrl.u32 %v1081, 7
  %v1083 = vsub.s32 0, %v1082
  %v1084 = vrot.slane %v1079, %v1083
  %v1090 = vunpack.c.l.b16 %v1075
  %v1091 = vunpack.c.l.b16 %v1076
  %v1092 = vunpack.c.l.b16 %v1077
  %v1093 = vunpack.c.l.b16 %v1078
  %v1094 = vpack.c.b16 %v1091, %v1090
  %v1095 = vpack.c.b16 %v1093, %v1092
  %v1099 = vsel %vm80, %v1074, 0
  %1101 = vmatprep.subr.bf16.mxu0 0
  %1102 = vmatpush1.bf16.msra.mxu0 %v1094
  %1103 = vmatprep.subr.bf16.mxu0 0
  %1104 = vmatpush1.bf16.msra.mxu0 %v1095
  %1105 = vmatprep.subr.bf16.mxu0 0
  %1106 = vmatpush1.bf16.msra.mxu0 0
  %1107 = vmatprep.subr.bf16.mxu0 0
  %1108 = vmatpush1.bf16.msra.mxu0 0
  %1109 = vmatprep.subr.bf16.mxu0 0
  %1110 = vmatpush1.bf16.msra.mxu0 0
  %1111 = vmatprep.subr.bf16.mxu0 0
  %1112 = vmatpush1.bf16.msra.mxu0 0
  %1113 = vmatprep.subr.bf16.mxu0 0
  %1114 = vmatpush1.bf16.msra.mxu0 0
  %1115 = vmatprep.subr.bf16.mxu0 0
  %1116 = vmatpush1.bf16.msra.mxu0 0
  %1117 = vmatprep.subr.bf16.mxu0 0
  %1118 = vmatpush1.bf16.msra.mxu0 0
  %1119 = vmatprep.subr.bf16.mxu0 0
  %1120 = vmatpush1.bf16.msra.mxu0 0
  %1121 = vmatprep.subr.bf16.mxu0 0
  %1122 = vmatpush1.bf16.msra.mxu0 0
  %1123 = vmatprep.subr.bf16.mxu0 0
  %1124 = vmatpush1.bf16.msra.mxu0 0
  %1125 = vmatprep.subr.bf16.mxu0 0
  %1126 = vmatpush1.bf16.msra.mxu0 0
  %1127 = vmatprep.subr.bf16.mxu0 0
  %1128 = vmatpush1.bf16.msra.mxu0 0
  %1129 = vmatprep.subr.bf16.mxu0 0
  %1130 = vmatpush1.bf16.msra.mxu0 0
  %1131 = vmatprep.subr.bf16.mxu0 0
  %1132 = vmatpush1.bf16.msra.mxu0 0
  %1133 = vmatprep.mubr.bf16.mxu0 0
  %1134 = vmatmul.mubr.bf16.gmra.mrb[0].mxu0 %v1099
  %v1135 = vpop.f32.mrb[0].mxu0
  %v1136 = vadd.f32 %v1084, %v1135
  %v1137 = vpop.f32.mrb[0].mxu0
  %v1138 = vpop.f32.mrb[0].mxu0
  %v1139 = vadd.f32 %v1084, %v1138
  %v1140 = vpop.f32.mrb[0].mxu0
  %1141 = vdwg.mxu0
  %v1142 = vadd.f32 %v50, %v1136
  %v1143 = vadd.f32 %v51, %v1139
  %v1144 = vld [vmem:[%s6] sm:$0x1]
  %v1145 = vld [vmem:[%s7] sm:$0x1]
  %v1146 = vsel %vm80, %v1142, 0.0
  %1147 = vadd.xlane.f32.xlu0 %v1146
  %v1148 = vpop.xlane.xlu0 %1147
  %v1149 = vsel %vm80, %v1143, 0.0
  %1150 = vadd.xlane.f32.xlu0 %v1149
  %v1151 = vpop.xlane.xlu0 %1150
  %v1152 = vrcp.pop 32.0
  %v1153 = vmul.f32 %v1148, %v1152
  %v1154 = vmul.f32 %v1151, %v1152
  %v1155 = vsub.f32 %v1142, %v1153
  %v1156 = vsub.f32 %v1143, %v1154
  %v1157 = vmul.f32 %v1155, %v1155
  %v1158 = vmul.f32 %v1156, %v1156
  %v1159 = vsel %vm80, %v1157, 0.0
  %1160 = vadd.xlane.f32.xlu0 %v1159
  %v1161 = vpop.xlane.xlu0 %1160
  %v1162 = vsel %vm80, %v1158, 0.0
  %1163 = vadd.xlane.f32.xlu0 %v1162
  %v1164 = vpop.xlane.xlu0 %1163
  %v1165 = vmul.f32 %v1161, %v1152
  %v1166 = vmul.f32 %v1164, %v1152
  %v1167 = vadd.f32 %v1165, 1e-05
  %v1168 = vadd.f32 %v1166, 1e-05
  %v1169 = vrsqrt.pop %v1167
  %v1170 = vrsqrt.pop %v1168
  %v1171 = vmul.f32 %v1155, %v1169
  %v1172 = vmul.f32 %v1156, %v1170
  %v1174 = vlaneseq
  %v1175 = vshrl.u32 %v1174, 7
  %v1176 = vsub.s32 0, %v1175
  %v1177 = vrot.slane %v1144, %v1176
  %v1179 = vmul.f32 %v1171, %v1177
  %v1180 = vmul.f32 %v1172, %v1177
  %v1182 = vlaneseq
  %v1183 = vshrl.u32 %v1182, 7
  %v1184 = vsub.s32 0, %v1183
  %v1185 = vrot.slane %v1145, %v1184
  %v1187 = vadd.f32 %v1179, %v1185
  %v1188 = vadd.f32 %v1180, %v1185
  %v1189 = vpack.c.bf16 %v1188, %v1187
  %v1190 = vld [vmem:[%s8] sm:$0xf]
  %v1191 = vld [vmem:[%s8 + $0x4] sm:$0xf]
  %v1192 = vld [vmem:[%s8 + $0x8] sm:$0xf]
  %v1193 = vld [vmem:[%s8 + $0xc] sm:$0xf]
  %v1194 = vld [vmem:[%s9] sm:$0x1]
  %v1196 = vlaneseq
  %v1197 = vshrl.u32 %v1196, 7
  %v1198 = vsub.s32 0, %v1197
  %v1199 = vrot.slane %v1194, %v1198
  %v1205 = vunpack.c.l.b16 %v1190
  %v1206 = vunpack.c.l.b16 %v1191
  %v1207 = vunpack.c.l.b16 %v1192
  %v1208 = vunpack.c.l.b16 %v1193
  %v1209 = vpack.c.b16 %v1206, %v1205
  %v1210 = vpack.c.b16 %v1208, %v1207
  %v1214 = vsel %vm80, %v1189, 0
  %1216 = vmatprep.subr.bf16.mxu0 0
  %1217 = vmatpush1.bf16.msra.mxu0 %v1209
  %1218 = vmatprep.subr.bf16.mxu0 0
  %1219 = vmatpush1.bf16.msra.mxu0 %v1210
  %1220 = vmatprep.subr.bf16.mxu0 0
  %1221 = vmatpush1.bf16.msra.mxu0 0
  %1222 = vmatprep.subr.bf16.mxu0 0
  %1223 = vmatpush1.bf16.msra.mxu0 0
  %1224 = vmatprep.subr.bf16.mxu0 0
  %1225 = vmatpush1.bf16.msra.mxu0 0
  %1226 = vmatprep.subr.bf16.mxu0 0
  %1227 = vmatpush1.bf16.msra.mxu0 0
  %1228 = vmatprep.subr.bf16.mxu0 0
  %1229 = vmatpush1.bf16.msra.mxu0 0
  %1230 = vmatprep.subr.bf16.mxu0 0
  %1231 = vmatpush1.bf16.msra.mxu0 0
  %1232 = vmatprep.subr.bf16.mxu0 0
  %1233 = vmatpush1.bf16.msra.mxu0 0
  %1234 = vmatprep.subr.bf16.mxu0 0
  %1235 = vmatpush1.bf16.msra.mxu0 0
  %1236 = vmatprep.subr.bf16.mxu0 0
  %1237 = vmatpush1.bf16.msra.mxu0 0
  %1238 = vmatprep.subr.bf16.mxu0 0
  %1239 = vmatpush1.bf16.msra.mxu0 0
  %1240 = vmatprep.subr.bf16.mxu0 0
  %1241 = vmatpush1.bf16.msra.mxu0 0
  %1242 = vmatprep.subr.bf16.mxu0 0
  %1243 = vmatpush1.bf16.msra.mxu0 0
  %1244 = vmatprep.subr.bf16.mxu0 0
  %1245 = vmatpush1.bf16.msra.mxu0 0
  %1246 = vmatprep.subr.bf16.mxu0 0
  %1247 = vmatpush1.bf16.msra.mxu0 0
  %1248 = vmatprep.mubr.bf16.mxu0 0
  %1249 = vmatmul.mubr.bf16.gmra.mrb[0].mxu0 %v1214
  %v1250 = vpop.f32.mrb[0].mxu0
  %v1251 = vadd.f32 %v1199, %v1250
  %v1252 = vpop.f32.mrb[0].mxu0
  %v1253 = vpop.f32.mrb[0].mxu0
  %v1254 = vadd.f32 %v1199, %v1253
  %v1255 = vpop.f32.mrb[0].mxu0
  %1256 = vdwg.mxu0
  %v1257 = vmax.f32 %v1251, 0.0
  %v1258 = vmax.f32 %v1254, 0.0
  %v1259 = vpack.c.bf16 %v1258, %v1257
  %v1260 = vld [vmem:[%s10] sm:$0xf]
  %v1261 = vld [vmem:[%s10 + $0x4] sm:$0xf]
  %v1262 = vld [vmem:[%s10 + $0x8] sm:$0xf]
  %v1263 = vld [vmem:[%s10 + $0xc] sm:$0xf]
  %v1264 = vld [vmem:[%s10 + $0x10] sm:$0xf]
  %v1265 = vld [vmem:[%s10 + $0x14] sm:$0xf]
  %v1266 = vld [vmem:[%s10 + $0x18] sm:$0xf]
  %v1267 = vld [vmem:[%s10 + $0x1c] sm:$0xf]
  %v1268 = vld [vmem:[%s11] sm:$0x1]
  %v1270 = vlaneseq
  %v1271 = vshrl.u32 %v1270, 7
  %v1272 = vsub.s32 0, %v1271
  %v1273 = vrot.slane %v1268, %v1272
  %v1283 = vunpack.c.l.b16 %v1260
  %v1284 = vunpack.c.l.b16 %v1261
  %v1285 = vunpack.c.l.b16 %v1262
  %v1286 = vunpack.c.l.b16 %v1263
  %v1287 = vunpack.c.l.b16 %v1264
  %v1288 = vunpack.c.l.b16 %v1265
  %v1289 = vunpack.c.l.b16 %v1266
  %v1290 = vunpack.c.l.b16 %v1267
  %v1291 = vpack.c.b16 %v1284, %v1283
  %v1292 = vpack.c.b16 %v1286, %v1285
  %v1293 = vpack.c.b16 %v1288, %v1287
  %v1294 = vpack.c.b16 %v1290, %v1289
  %vm1299 = vcmask 523264
  %v1301 = vsel %vm1299, %v1259, 0
  %1303 = vmatprep.subr.bf16.mxu0 0
  %1304 = vmatpush1.bf16.msra.mxu0 %v1291
  %1305 = vmatprep.subr.bf16.mxu0 0
  %1306 = vmatpush1.bf16.msra.mxu0 %v1292
  %1307 = vmatprep.subr.bf16.mxu0 0
  %1308 = vmatpush1.bf16.msra.mxu0 %v1293
  %1309 = vmatprep.subr.bf16.mxu0 0
  %1310 = vmatpush1.bf16.msra.mxu0 %v1294
  %1311 = vmatprep.subr.bf16.mxu0 0
  %1312 = vmatpush1.bf16.msra.mxu0 0
  %1313 = vmatprep.subr.bf16.mxu0 0
  %1314 = vmatpush1.bf16.msra.mxu0 0
  %1315 = vmatprep.subr.bf16.mxu0 0
  %1316 = vmatpush1.bf16.msra.mxu0 0
  %1317 = vmatprep.subr.bf16.mxu0 0
  %1318 = vmatpush1.bf16.msra.mxu0 0
  %1319 = vmatprep.subr.bf16.mxu0 0
  %1320 = vmatpush1.bf16.msra.mxu0 0
  %1321 = vmatprep.subr.bf16.mxu0 0
  %1322 = vmatpush1.bf16.msra.mxu0 0
  %1323 = vmatprep.subr.bf16.mxu0 0
  %1324 = vmatpush1.bf16.msra.mxu0 0
  %1325 = vmatprep.subr.bf16.mxu0 0
  %1326 = vmatpush1.bf16.msra.mxu0 0
  %1327 = vmatprep.subr.bf16.mxu0 0
  %1328 = vmatpush1.bf16.msra.mxu0 0
  %1329 = vmatprep.subr.bf16.mxu0 0
  %1330 = vmatpush1.bf16.msra.mxu0 0
  %1331 = vmatprep.subr.bf16.mxu0 0
  %1332 = vmatpush1.bf16.msra.mxu0 0
  %1333 = vmatprep.subr.bf16.mxu0 0
  %1334 = vmatpush1.bf16.msra.mxu0 0
  %1335 = vmatprep.mubr.bf16.mxu0 0
  %1336 = vmatmul.mubr.bf16.gmra.mrb[0].mxu0 %v1301
  %v1337 = vpop.f32.mrb[0].mxu0
  %v1338 = vadd.f32 %v1273, %v1337
  %v1339 = vpop.f32.mrb[0].mxu0
  %v1340 = vpop.f32.mrb[0].mxu0
  %v1341 = vadd.f32 %v1273, %v1340
  %v1342 = vpop.f32.mrb[0].mxu0
  %1343 = vdwg.mxu0
  %v1344 = vadd.f32 %v1187, %v1338
  %v1345 = vadd.f32 %v1188, %v1341
  %v1346 = vld [vmem:[%s12] sm:$0x1]
  %v1347 = vld [vmem:[%s13] sm:$0x1]
  %v1348 = vsel %vm80, %v1344, 0.0
  %1349 = vadd.xlane.f32.xlu0 %v1348
  %v1350 = vpop.xlane.xlu0 %1349
  %v1351 = vsel %vm80, %v1345, 0.0
  %1352 = vadd.xlane.f32.xlu0 %v1351
  %v1353 = vpop.xlane.xlu0 %1352
  %v1354 = vmul.f32 %v1350, %v1152
  %v1355 = vmul.f32 %v1353, %v1152
  %v1356 = vsub.f32 %v1344, %v1354
  %v1357 = vsub.f32 %v1345, %v1355
  %v1358 = vmul.f32 %v1356, %v1356
  %v1359 = vmul.f32 %v1357, %v1357
  %v1360 = vsel %vm80, %v1358, 0.0
  %1361 = vadd.xlane.f32.xlu0 %v1360
  %v1362 = vpop.xlane.xlu0 %1361
  %v1363 = vsel %vm80, %v1359, 0.0
  %1364 = vadd.xlane.f32.xlu0 %v1363
  %v1365 = vpop.xlane.xlu0 %1364
  %v1366 = vmul.f32 %v1362, %v1152
  %v1367 = vmul.f32 %v1365, %v1152
  %v1368 = vadd.f32 %v1366, 1e-05
  %v1369 = vadd.f32 %v1367, 1e-05
  %v1370 = vrsqrt.pop %v1368
  %v1371 = vrsqrt.pop %v1369
  %v1372 = vmul.f32 %v1356, %v1370
  %v1373 = vmul.f32 %v1357, %v1371
  %v1375 = vlaneseq
  %v1376 = vshrl.u32 %v1375, 7
  %v1377 = vsub.s32 0, %v1376
  %v1378 = vrot.slane %v1346, %v1377
  %v1380 = vmul.f32 %v1372, %v1378
  %v1381 = vmul.f32 %v1373, %v1378
  %v1383 = vlaneseq
  %v1384 = vshrl.u32 %v1383, 7
  %v1385 = vsub.s32 0, %v1384
  %v1386 = vrot.slane %v1347, %v1385
  %v1388 = vadd.f32 %v1380, %v1386
  %v1389 = vadd.f32 %v1381, %v1386
  %v1390 = vpack.c.bf16 %v1389, %v1388
  %v1392 = vunpack.c.l.b16 %v1390
  %v1393 = vunpack.c.h.b16 %v1390
  %v1394 = vpack.c.b16 %v1392, %v1392
  %v1395 = vpack.c.b16 %v1393, %v1393
  %vm1398 = vcmask 257024
  %1399 = vst.msk [vmem:[%s14] sm:$0xf] %vm1398, %v1394
  %1400 = vst.msk [vmem:[%s14 + $0x4] sm:$0xf] %vm1398, %v1395
  // Predicated region
  $region58: #{_lambda_.5} parent=0 // pred_check
    _
  $region59: #{_lambda_.5} parent=0 // pred_check_branch
    %1402 = sbr.rel (0) target = $region61
  $region60: #{_lambda_.5} parent=0 // pred_region
    _
  $region61: #{_lambda_.5} parent=0 // pred_fallthru
    _
  // Predicated region
  $region62: #{_lambda_.5} parent=0 // pred_check
    _
  $region63: #{_lambda_.5} parent=0 // pred_check_branch
    %1404 = sbr.rel (0) target = $region65
  $region64: #{_lambda_.5} parent=0 // pred_region
    _
  $region65: #{_lambda_.5} parent=0 // pred_fallthru
    _

// kernel: _lambda_.8
$region0: #{_lambda_.8}
  #allocation0 [shape = 'u32[]', space=smem, size = 0x4, offset = 0x4, fixed_abs, tag = 'smem constant byte address 0x4 - core index']
  #allocation1 [shape = 'u32[144,128]{1,0:T(1,128)}', space=vmem, size = 0x12000, scoped, tag = 'internal scratch']
  #allocation2 [shape = 'f32[16,32]{1,0:T(8,128)}', space=vmem, size = 0x2000, scoped, tag = 'scratch operand']
  %s0 = inlined_call_operand.vmem [shape: bf16[16,32], index: 0, kind: input, shape index: {}]
  %s1 = inlined_call_operand.vmem [shape: bf16[16,32], index: 1, kind: input, shape index: {}]
  %s2 = inlined_call_operand.vmem [shape: f32[2,8,8], index: 2, kind: input, shape index: {}]
  %s3 = inlined_call_operand.vmem [shape: f32[2,1,8], index: 3, kind: input, shape index: {}]
  %s4 = inlined_call_operand.vmem [shape: bf16[32,96], index: 4, kind: input, shape index: {}]
  %s5 = inlined_call_operand.vmem [shape: f32[1,96], index: 5, kind: input, shape index: {}]
  %s6 = inlined_call_operand.vmem [shape: bf16[32,32], index: 6, kind: input, shape index: {}]
  %s7 = inlined_call_operand.vmem [shape: f32[1,32], index: 7, kind: input, shape index: {}]
  %s8 = inlined_call_operand.vmem [shape: f32[1,32], index: 8, kind: input, shape index: {}]
  %s9 = inlined_call_operand.vmem [shape: f32[1,32], index: 9, kind: input, shape index: {}]
  %s10 = inlined_call_operand.vmem [shape: bf16[32,32], index: 10, kind: input, shape index: {}]
  %s11 = inlined_call_operand.vmem [shape: f32[1,32], index: 11, kind: input, shape index: {}]
  %s12 = inlined_call_operand.vmem [shape: bf16[32,64], index: 12, kind: input, shape index: {}]
  %s13 = inlined_call_operand.vmem [shape: f32[1,64], index: 13, kind: input, shape index: {}]
  %s14 = inlined_call_operand.vmem [shape: bf16[32,32], index: 14, kind: input, shape index: {}]
  %s15 = inlined_call_operand.vmem [shape: f32[1,32], index: 15, kind: input, shape index: {}]
  %s16 = inlined_call_operand.vmem [shape: f32[1,32], index: 16, kind: input, shape index: {}]
  %s17 = inlined_call_operand.vmem [shape: f32[1,32], index: 17, kind: input, shape index: {}]
  %s18 = inlined_call_operand.vmem [shape: bf16[32,64], index: 18, kind: input, shape index: {}]
  %s19 = inlined_call_operand.vmem [shape: f32[1,64], index: 19, kind: input, shape index: {}]
  %s20 = inlined_call_operand.vmem [shape: bf16[64,32], index: 20, kind: input, shape index: {}]
  %s21 = inlined_call_operand.vmem [shape: f32[1,32], index: 21, kind: input, shape index: {}]
  %s22 = inlined_call_operand.vmem [shape: f32[1,32], index: 22, kind: input, shape index: {}]
  %s23 = inlined_call_operand.hbm [shape: f32[1,32], index: 23, kind: input, shape index: {}]
  %s24 = inlined_call_operand.vmem [shape: bf16[16,32], index: 24, kind: output, shape index: {}]
  %s25 = sld [smem:[#allocation0]]
  $region110: #{_lambda_.8} parent=0
    _
  %s27 = ssub.s32 1, %s25
  %s28 = scalar_select 0, %s27, %s25
  $region1: #{_lambda_.8} parent=0
    #allocation3 [shape = 'u8[512]{0}', space=vmem, size = 0x400, scoped, tag = 'input window, operand 23, single buffered']
    #allocation4 [shape = 's32[1]{0}', space=sflag, size = 0x4, scoped, tag = 'scoped memory for _lambda_.8']
    %29 = vsyncpa [#allocation4], 0
    // Predicated region
    $region2: #{_lambda_.8} parent=1 // pred_check
      _
    $region3: #{_lambda_.8} parent=1 // pred_check_branch
      %31 = sbr.rel (0) target = $region5
    $region4: #{_lambda_.8} parent=1 // pred_region
      _
    $region5: #{_lambda_.8} parent=1 // pred_fallthru
      _
    // Predicated region
    $region6: #{_lambda_.8} parent=1 // pred_check
      _
    $region7: #{_lambda_.8} parent=1 // pred_check_branch
      %33 = sbr.rel (0) target = $region9
    $region8: #{_lambda_.8} parent=1 // pred_region
      _
    $region9: #{_lambda_.8} parent=1 // pred_fallthru
      _
    // Predicated region
    $region10: #{_lambda_.8} parent=1 // pred_check
      _
    $region11: #{_lambda_.8} parent=1 // pred_check_branch
      %35 = sbr.rel (0) target = $region13
    $region12: #{_lambda_.8} parent=1 // pred_region
      _
    $region13: #{_lambda_.8} parent=1 // pred_fallthru
      _
    // Predicated region
    $region14: #{_lambda_.8} parent=1 // pred_check
      _
    $region15: #{_lambda_.8} parent=1 // pred_check_branch
      %37 = sbr.rel (0) target = $region17
    $region16: #{_lambda_.8} parent=1 // pred_region
      _
    $region17: #{_lambda_.8} parent=1 // pred_fallthru
      _
    // Predicated region
    $region18: #{_lambda_.8} parent=1 // pred_check
      _
    $region19: #{_lambda_.8} parent=1 // pred_check_branch
      %39 = sbr.rel (0) target = $region21
    $region20: #{_lambda_.8} parent=1 // pred_region
      _
    $region21: #{_lambda_.8} parent=1 // pred_fallthru
      _
    // Predicated region
    $region22: #{_lambda_.8} parent=1 // pred_check
      _
    $region23: #{_lambda_.8} parent=1 // pred_check_branch
      %41 = sbr.rel (0) target = $region25
    $region24: #{_lambda_.8} parent=1 // pred_region
      _
    $region25: #{_lambda_.8} parent=1 // pred_fallthru
      _
    // Predicated region
    $region26: #{_lambda_.8} parent=1 // pred_check
      _
    $region27: #{_lambda_.8} parent=1 // pred_check_branch
      %43 = sbr.rel (0) target = $region29
    $region28: #{_lambda_.8} parent=1 // pred_region
      _
    $region29: #{_lambda_.8} parent=1 // pred_fallthru
      _
    // Predicated region
    $region30: #{_lambda_.8} parent=1 // pred_check
      _
    $region31: #{_lambda_.8} parent=1 // pred_check_branch
      %45 = sbr.rel (0) target = $region33
    $region32: #{_lambda_.8} parent=1 // pred_region
      _
    $region33: #{_lambda_.8} parent=1 // pred_fallthru
      _
    // Predicated region
    $region34: #{_lambda_.8} parent=1 // pred_check
      _
    $region35: #{_lambda_.8} parent=1 // pred_check_branch
      %47 = sbr.rel (0) target = $region37
    $region36: #{_lambda_.8} parent=1 // pred_region
      _
    $region37: #{_lambda_.8} parent=1 // pred_fallthru
      _
    // Predicated region
    $region38: #{_lambda_.8} parent=1 // pred_check
      _
    $region39: #{_lambda_.8} parent=1 // pred_check_branch
      %49 = sbr.rel (0) target = $region41
    $region40: #{_lambda_.8} parent=1 // pred_region
      _
    $region41: #{_lambda_.8} parent=1 // pred_fallthru
      _
    // Predicated region
    $region42: #{_lambda_.8} parent=1 // pred_check
      _
    $region43: #{_lambda_.8} parent=1 // pred_check_branch
      %51 = sbr.rel (0) target = $region45
    $region44: #{_lambda_.8} parent=1 // pred_region
      _
    $region45: #{_lambda_.8} parent=1 // pred_fallthru
      _
    // Predicated region
    $region46: #{_lambda_.8} parent=1 // pred_check
      _
    $region47: #{_lambda_.8} parent=1 // pred_check_branch
      %53 = sbr.rel (0) target = $region49
    $region48: #{_lambda_.8} parent=1 // pred_region
      _
    $region49: #{_lambda_.8} parent=1 // pred_fallthru
      _
    // Predicated region
    $region50: #{_lambda_.8} parent=1 // pred_check
      _
    $region51: #{_lambda_.8} parent=1 // pred_check_branch
      %55 = sbr.rel (0) target = $region53
    $region52: #{_lambda_.8} parent=1 // pred_region
      _
    $region53: #{_lambda_.8} parent=1 // pred_fallthru
      _
    // Predicated region
    $region54: #{_lambda_.8} parent=1 // pred_check
      _
    $region55: #{_lambda_.8} parent=1 // pred_check_branch
      %57 = sbr.rel (0) target = $region57
    $region56: #{_lambda_.8} parent=1 // pred_region
      _
    $region57: #{_lambda_.8} parent=1 // pred_fallthru
      _
    // Predicated region
    $region58: #{_lambda_.8} parent=1 // pred_check
      _
    $region59: #{_lambda_.8} parent=1 // pred_check_branch
      %59 = sbr.rel (0) target = $region61
    $region60: #{_lambda_.8} parent=1 // pred_region
      _
    $region61: #{_lambda_.8} parent=1 // pred_fallthru
      _
    // Predicated region
    $region62: #{_lambda_.8} parent=1 // pred_check
      _
    $region63: #{_lambda_.8} parent=1 // pred_check_branch
      %61 = sbr.rel (0) target = $region65
    $region64: #{_lambda_.8} parent=1 // pred_region
      _
    $region65: #{_lambda_.8} parent=1 // pred_fallthru
      _
    // Predicated region
    $region66: #{_lambda_.8} parent=1 // pred_check
      _
    $region67: #{_lambda_.8} parent=1 // pred_check_branch
      %63 = sbr.rel (0) target = $region69
    $region68: #{_lambda_.8} parent=1 // pred_region
      _
    $region69: #{_lambda_.8} parent=1 // pred_fallthru
      _
    // Predicated region
    $region70: #{_lambda_.8} parent=1 // pred_check
      _
    $region71: #{_lambda_.8} parent=1 // pred_check_branch
      %65 = sbr.rel (0) target = $region73
    $region72: #{_lambda_.8} parent=1 // pred_region
      _
    $region73: #{_lambda_.8} parent=1 // pred_fallthru
      _
    // Predicated region
    $region74: #{_lambda_.8} parent=1 // pred_check
      _
    $region75: #{_lambda_.8} parent=1 // pred_check_branch
      %67 = sbr.rel (0) target = $region77
    $region76: #{_lambda_.8} parent=1 // pred_region
      _
    $region77: #{_lambda_.8} parent=1 // pred_fallthru
      _
    // Predicated region
    $region78: #{_lambda_.8} parent=1 // pred_check
      _
    $region79: #{_lambda_.8} parent=1 // pred_check_branch
      %69 = sbr.rel (0) target = $region81
    $region80: #{_lambda_.8} parent=1 // pred_region
      _
    $region81: #{_lambda_.8} parent=1 // pred_fallthru
      _
    // Predicated region
    $region82: #{_lambda_.8} parent=1 // pred_check
      _
    $region83: #{_lambda_.8} parent=1 // pred_check_branch
      %71 = sbr.rel (0) target = $region85
    $region84: #{_lambda_.8} parent=1 // pred_region
      _
    $region85: #{_lambda_.8} parent=1 // pred_fallthru
      _
    // Predicated region
    $region86: #{_lambda_.8} parent=1 // pred_check
      _
    $region87: #{_lambda_.8} parent=1 // pred_check_branch
      %73 = sbr.rel (0) target = $region89
    $region88: #{_lambda_.8} parent=1 // pred_region
      _
    $region89: #{_lambda_.8} parent=1 // pred_fallthru
      _
    // Predicated region
    $region90: #{_lambda_.8} parent=1 // pred_check
      _
    $region91: #{_lambda_.8} parent=1 // pred_check_branch
      %75 = sbr.rel (0) target = $region93
    $region92: #{_lambda_.8} parent=1 // pred_region
      _
    $region93: #{_lambda_.8} parent=1 // pred_fallthru
      _
    // Predicated region
    $region94: #{_lambda_.8} parent=1 // pred_check
      _
    $region95: #{_lambda_.8} parent=1 // pred_check_branch
      %77 = sbr.rel (0) target = $region97
    $region96: #{_lambda_.8} parent=1 // pred_region
      %s79 = ssub.s32 16, 16
      %80 = vsyncadd [#allocation4], %s79
      %s82 = sshll.u32 [#allocation3], 4
      %s83 = int_to_ptr.vmem [resolvable:$true] %s82
      %85 = dma.hbm_to_vmem [thread:$0]  %s23, 16, %s83, [#allocation4]
    $region97: #{_lambda_.8} parent=1 // pred_fallthru
      _
    // Predicated region
    $region98: #{_lambda_.8} parent=1 // pred_check
      _
    $region99: #{_lambda_.8} parent=1 // pred_check_branch
      %87 = sbr.rel (0) target = $region101
    $region100: #{_lambda_.8} parent=1 // pred_region
      %88 = dma.done [#allocation4], 16
    $region101: #{_lambda_.8} parent=1 // pred_fallthru
      _
    %v90 = vld [vmem:[%s0] sm:$0xf]
    %v91 = vld [vmem:[%s0 + $0x4] sm:$0xf]
    %v92 = vunpack.c.l.bf16 %v90
    %v93 = vunpack.c.l.bf16 %v91
    %v94 = vld [vmem:[%s4] sm:$0xf]
    %v95 = vld [vmem:[%s4 + $0x4] sm:$0xf]
    %v96 = vld [vmem:[%s4 + $0x8] sm:$0xf]
    %v97 = vld [vmem:[%s4 + $0xc] sm:$0xf]
    %v98 = vld [vmem:[%s5] sm:$0x1]
    %v100 = vlaneseq
    %v101 = vshrl.u32 %v100, 7
    %v102 = vsub.s32 0, %v101
    %v103 = vrot.slane %v98, %v102
    %v107 = vunpack.c.l.b16 %v90
    %v108 = vunpack.c.l.b16 %v91
    %v109 = vpack.c.b16 %v108, %v107
    %v114 = vunpack.c.l.b16 %v94
    %v115 = vunpack.c.l.b16 %v95
    %v116 = vunpack.c.l.b16 %v96
    %v117 = vunpack.c.l.b16 %v97
    %v118 = vpack.c.b16 %v115, %v114
    %v119 = vpack.c.b16 %v117, %v116
    %vm122 = vcmask 261120
    %v124 = vsel %vm122, %v109, 0
    %126 = vmatprep.subr.bf16.mxu0 0
    %127 = vmatpush1.bf16.msra.mxu0 %v118
    %128 = vmatprep.subr.bf16.mxu0 0
    %129 = vmatpush1.bf16.msra.mxu0 %v119
    %130 = vmatprep.subr.bf16.mxu0 0
    %131 = vmatpush1.bf16.msra.mxu0 0
    %132 = vmatprep.subr.bf16.mxu0 0
    %133 = vmatpush1.bf16.msra.mxu0 0
    %134 = vmatprep.subr.bf16.mxu0 0
    %135 = vmatpush1.bf16.msra.mxu0 0
    %136 = vmatprep.subr.bf16.mxu0 0
    %137 = vmatpush1.bf16.msra.mxu0 0
    %138 = vmatprep.subr.bf16.mxu0 0
    %139 = vmatpush1.bf16.msra.mxu0 0
    %140 = vmatprep.subr.bf16.mxu0 0
    %141 = vmatpush1.bf16.msra.mxu0 0
    %142 = vmatprep.subr.bf16.mxu0 0
    %143 = vmatpush1.bf16.msra.mxu0 0
    %144 = vmatprep.subr.bf16.mxu0 0
    %145 = vmatpush1.bf16.msra.mxu0 0
    %146 = vmatprep.subr.bf16.mxu0 0
    %147 = vmatpush1.bf16.msra.mxu0 0
    %148 = vmatprep.subr.bf16.mxu0 0
    %149 = vmatpush1.bf16.msra.mxu0 0
    %150 = vmatprep.subr.bf16.mxu0 0
    %151 = vmatpush1.bf16.msra.mxu0 0
    %152 = vmatprep.subr.bf16.mxu0 0
    %153 = vmatpush1.bf16.msra.mxu0 0
    %154 = vmatprep.subr.bf16.mxu0 0
    %155 = vmatpush1.bf16.msra.mxu0 0
    %156 = vmatprep.subr.bf16.mxu0 0
    %157 = vmatpush1.bf16.msra.mxu0 0
    %158 = vmatprep.mubr.bf16.mxu0 0
    %159 = vmatmul.mubr.bf16.gmra.mrb[0].mxu0 %v124
    %v160 = vpop.f32.mrb[0].mxu0
    %v161 = vadd.f32 %v103, %v160
    %v162 = vpop.f32.mrb[0].mxu0
    %v163 = vpop.f32.mrb[0].mxu0
    %v164 = vadd.f32 %v103, %v163
    %v165 = vpop.f32.mrb[0].mxu0
    %166 = vdwg.mxu0
    %v167 = vld [vmem:[%s2] sm:$0xff]
    %v168 = vld [vmem:[%s2 + $0x8] sm:$0xff]
    %v169 = vpack.c.bf16 %v161, %v161
    %v170 = vpack.c.bf16 %v164, %v164
    %172 = vrot.lane.b32.xlu0 %v169, 96
    %v173 = vpop.permute.xlu0 %172
    %vm174 = vcmask 64512
    %v176 = vsel %vm174, %v169, 0
    %v179 = vsel %vm174, %v173, 0
    %181 = vmatprep.subr.bf16.mxu0 0
    %182 = vmatpush1.bf16.xpose.msra.mxu0 %v179
    %183 = vmatprep.subr.bf16.mxu0 0
    %184 = vmatpush1.bf16.xpose.msra.mxu0 0
    %185 = vmatprep.subr.bf16.mxu0 0
    %186 = vmatpush1.bf16.xpose.msra.mxu0 0
    %187 = vmatprep.subr.bf16.mxu0 0
    %188 = vmatpush1.bf16.xpose.msra.mxu0 0
    %189 = vmatprep.subr.bf16.mxu0 0
    %190 = vmatpush1.bf16.xpose.msra.mxu0 0
    %191 = vmatprep.subr.bf16.mxu0 0
    %192 = vmatpush1.bf16.xpose.msra.mxu0 0
    %193 = vmatprep.subr.bf16.mxu0 0
    %194 = vmatpush1.bf16.xpose.msra.mxu0 0
    %195 = vmatprep.subr.bf16.mxu0 0
    %196 = vmatpush1.bf16.xpose.msra.mxu0 0
    %197 = vmatprep.subr.bf16.mxu0 0
    %198 = vmatpush1.bf16.xpose.msra.mxu0 0
    %199 = vmatprep.subr.bf16.mxu0 0
    %200 = vmatpush1.bf16.xpose.msra.mxu0 0
    %201 = vmatprep.subr.bf16.mxu0 0
    %202 = vmatpush1.bf16.xpose.msra.mxu0 0
    %203 = vmatprep.subr.bf16.mxu0 0
    %204 = vmatpush1.bf16.xpose.msra.mxu0 0
    %205 = vmatprep.subr.bf16.mxu0 0
    %206 = vmatpush1.bf16.xpose.msra.mxu0 0
    %207 = vmatprep.subr.bf16.mxu0 0
    %208 = vmatpush1.bf16.xpose.msra.mxu0 0
    %209 = vmatprep.subr.bf16.mxu0 0
    %210 = vmatpush1.bf16.xpose.msra.mxu0 0
    %211 = vmatprep.subr.bf16.mxu0 0
    %212 = vmatpush1.bf16.xpose.msra.mxu0 0
    %213 = vmatprep.mubr.bf16.mxu0 0
    %214 = vmatmul.mubr.bf16.gmra.mrb[0].mxu0 %v176
    %v215 = vpop.f32.mrb[0].mxu0
    %v216 = vadd.f32 0.0, %v215
    %v217 = vpop.f32.mrb[0].mxu0
    %v218 = vpop.f32.mrb[0].mxu0
    %v219 = vpop.f32.mrb[0].mxu0
    %220 = vdwg.mxu0
    %222 = vrot.lane.b32.xlu0 %v170, 96
    %v223 = vpop.permute.xlu0 %222
    %v225 = vsel %vm174, %v170, 0
    %v228 = vsel %vm174, %v223, 0
    %230 = vmatprep.subr.bf16.mxu0 0
    %231 = vmatpush1.bf16.xpose.msra.mxu0 %v228
    %232 = vmatprep.subr.bf16.mxu0 0
    %233 = vmatpush1.bf16.xpose.msra.mxu0 0
    %234 = vmatprep.subr.bf16.mxu0 0
    %235 = vmatpush1.bf16.xpose.msra.mxu0 0
    %236 = vmatprep.subr.bf16.mxu0 0
    %237 = vmatpush1.bf16.xpose.msra.mxu0 0
    %238 = vmatprep.subr.bf16.mxu0 0
    %239 = vmatpush1.bf16.xpose.msra.mxu0 0
    %240 = vmatprep.subr.bf16.mxu0 0
    %241 = vmatpush1.bf16.xpose.msra.mxu0 0
    %242 = vmatprep.subr.bf16.mxu0 0
    %243 = vmatpush1.bf16.xpose.msra.mxu0 0
    %244 = vmatprep.subr.bf16.mxu0 0
    %245 = vmatpush1.bf16.xpose.msra.mxu0 0
    %246 = vmatprep.subr.bf16.mxu0 0
    %247 = vmatpush1.bf16.xpose.msra.mxu0 0
    %248 = vmatprep.subr.bf16.mxu0 0
    %249 = vmatpush1.bf16.xpose.msra.mxu0 0
    %250 = vmatprep.subr.bf16.mxu0 0
    %251 = vmatpush1.bf16.xpose.msra.mxu0 0
    %252 = vmatprep.subr.bf16.mxu0 0
    %253 = vmatpush1.bf16.xpose.msra.mxu0 0
    %254 = vmatprep.subr.bf16.mxu0 0
    %255 = vmatpush1.bf16.xpose.msra.mxu0 0
    %256 = vmatprep.subr.bf16.mxu0 0
    %257 = vmatpush1.bf16.xpose.msra.mxu0 0
    %258 = vmatprep.subr.bf16.mxu0 0
    %259 = vmatpush1.bf16.xpose.msra.mxu0 0
    %260 = vmatprep.subr.bf16.mxu0 0
    %261 = vmatpush1.bf16.xpose.msra.mxu0 0
    %262 = vmatprep.mubr.bf16.mxu0 0
    %263 = vmatmul.mubr.bf16.gmra.mrb[0].mxu0 %v225
    %v264 = vpop.f32.mrb[0].mxu0
    %v265 = vadd.f32 0.0, %v264
    %v266 = vpop.f32.mrb[0].mxu0
    %v267 = vpop.f32.mrb[0].mxu0
    %v268 = vpop.f32.mrb[0].mxu0
    %269 = vdwg.mxu0
    %v270 = vmul.f32 %v216, 0.35355338
    %v271 = vmul.f32 %v265, 0.35355338
    %v272 = vadd.f32 %v270, %v167
    %v273 = vadd.f32 %v271, %v168
    %v274 = vsel %vm174, %v272, -inf
    %275 = vmax.xlane.f32.xlu0 %v274
    %v276 = vpop.xlane.xlu0 %275
    %v277 = vsel %vm174, %v273, -inf
    %278 = vmax.xlane.f32.xlu0 %v277
    %v279 = vpop.xlane.xlu0 %278
    %v280 = vsub.f32 %v272, %v276
    %v281 = vsub.f32 %v273, %v279
    %v282 = vmul.f32 %v280, 1.442695
    %v283 = vpow.pop %v282
    %v284 = vmul.f32 %v281, 1.442695
    %v285 = vpow.pop %v284
    %v286 = vsel %vm174, %v283, 0.0
    %287 = vadd.xlane.f32.xlu0 %v286
    %v288 = vpop.xlane.xlu0 %287
    %v289 = vsel %vm174, %v285, 0.0
    %290 = vadd.xlane.f32.xlu0 %v289
    %v291 = vpop.xlane.xlu0 %290
    %v292 = vrcp.pop %v288
    %v293 = vrcp.pop %v291
    %v294 = vmul.f32 %v283, %v292
    %v295 = vmul.f32 %v285, %v293
    %v296 = vpack.c.bf16 %v294, %v294
    %v297 = vpack.c.bf16 %v295, %v295
    %298 = vrot.lane.b32.xlu0 %v169, 64
    %v299 = vpop.permute.xlu0 %298
    %v301 = vsel %vm174, %v296, 0
    %vm303 = vcmask 1043456
    %v305 = vsel %vm303, %v299, 0
    %307 = vmatprep.subr.bf16.mxu0 0
    %308 = vmatpush1.bf16.msra.mxu0 %v305
    %309 = vmatprep.subr.bf16.mxu0 0
    %310 = vmatpush1.bf16.msra.mxu0 0
    %311 = vmatprep.subr.bf16.mxu0 0
    %312 = vmatpush1.bf16.msra.mxu0 0
    %313 = vmatprep.subr.bf16.mxu0 0
    %314 = vmatpush1.bf16.msra.mxu0 0
    %315 = vmatprep.subr.bf16.mxu0 0
    %316 = vmatpush1.bf16.msra.mxu0 0
    %317 = vmatprep.subr.bf16.mxu0 0
    %318 = vmatpush1.bf16.msra.mxu0 0
    %319 = vmatprep.subr.bf16.mxu0 0
    %320 = vmatpush1.bf16.msra.mxu0 0
    %321 = vmatprep.subr.bf16.mxu0 0
    %322 = vmatpush1.bf16.msra.mxu0 0
    %323 = vmatprep.subr.bf16.mxu0 0
    %324 = vmatpush1.bf16.msra.mxu0 0
    %325 = vmatprep.subr.bf16.mxu0 0
    %326 = vmatpush1.bf16.msra.mxu0 0
    %327 = vmatprep.subr.bf16.mxu0 0
    %328 = vmatpush1.bf16.msra.mxu0 0
    %329 = vmatprep.subr.bf16.mxu0 0
    %330 = vmatpush1.bf16.msra.mxu0 0
    %331 = vmatprep.subr.bf16.mxu0 0
    %332 = vmatpush1.bf16.msra.mxu0 0
    %333 = vmatprep.subr.bf16.mxu0 0
    %334 = vmatpush1.bf16.msra.mxu0 0
    %335 = vmatprep.subr.bf16.mxu0 0
    %336 = vmatpush1.bf16.msra.mxu0 0
    %337 = vmatprep.subr.bf16.mxu0 0
    %338 = vmatpush1.bf16.msra.mxu0 0
    %339 = vmatprep.mubr.bf16.mxu0 0
    %340 = vmatmul.mubr.bf16.gmra.mrb[0].mxu0 %v301
    %v341 = vpop.f32.mrb[0].mxu0
    %v342 = vadd.f32 0.0, %v341
    %v343 = vpop.f32.mrb[0].mxu0
    %v344 = vpop.f32.mrb[0].mxu0
    %v345 = vpop.f32.mrb[0].mxu0
    %346 = vdwg.mxu0
    %347 = vrot.lane.b32.xlu0 %v170, 64
    %v348 = vpop.permute.xlu0 %347
    %v350 = vsel %vm174, %v297, 0
    %v353 = vsel %vm303, %v348, 0
    %355 = vmatprep.subr.bf16.mxu0 0
    %356 = vmatpush1.bf16.msra.mxu0 %v353
    %357 = vmatprep.subr.bf16.mxu0 0
    %358 = vmatpush1.bf16.msra.mxu0 0
    %359 = vmatprep.subr.bf16.mxu0 0
    %360 = vmatpush1.bf16.msra.mxu0 0
    %361 = vmatprep.subr.bf16.mxu0 0
    %362 = vmatpush1.bf16.msra.mxu0 0
    %363 = vmatprep.subr.bf16.mxu0 0
    %364 = vmatpush1.bf16.msra.mxu0 0
    %365 = vmatprep.subr.bf16.mxu0 0
    %366 = vmatpush1.bf16.msra.mxu0 0
    %367 = vmatprep.subr.bf16.mxu0 0
    %368 = vmatpush1.bf16.msra.mxu0 0
    %369 = vmatprep.subr.bf16.mxu0 0
    %370 = vmatpush1.bf16.msra.mxu0 0
    %371 = vmatprep.subr.bf16.mxu0 0
    %372 = vmatpush1.bf16.msra.mxu0 0
    %373 = vmatprep.subr.bf16.mxu0 0
    %374 = vmatpush1.bf16.msra.mxu0 0
    %375 = vmatprep.subr.bf16.mxu0 0
    %376 = vmatpush1.bf16.msra.mxu0 0
    %377 = vmatprep.subr.bf16.mxu0 0
    %378 = vmatpush1.bf16.msra.mxu0 0
    %379 = vmatprep.subr.bf16.mxu0 0
    %380 = vmatpush1.bf16.msra.mxu0 0
    %381 = vmatprep.subr.bf16.mxu0 0
    %382 = vmatpush1.bf16.msra.mxu0 0
    %383 = vmatprep.subr.bf16.mxu0 0
    %384 = vmatpush1.bf16.msra.mxu0 0
    %385 = vmatprep.subr.bf16.mxu0 0
    %386 = vmatpush1.bf16.msra.mxu0 0
    %387 = vmatprep.mubr.bf16.mxu0 0
    %388 = vmatmul.mubr.bf16.gmra.mrb[0].mxu0 %v350
    %v389 = vpop.f32.mrb[0].mxu0
    %v390 = vadd.f32 0.0, %v389
    %v391 = vpop.f32.mrb[0].mxu0
    %v392 = vpop.f32.mrb[0].mxu0
    %v393 = vpop.f32.mrb[0].mxu0
    %394 = vdwg.mxu0
    %395 = vst.msk [vmem:[#allocation2] sm:$0xff] %vm174, %v342
    %396 = vst.msk [vmem:[#allocation2 + $0x8] sm:$0xff] %vm174, %v390
    %397 = vrot.lane.b32.xlu0 %v169, 120
    %v398 = vpop.permute.xlu0 %397
    %399 = vrot.lane.b32.xlu0 %v169, 88
    %v400 = vpop.permute.xlu0 %399
    %v402 = vsel %vm174, %v398, 0
    %v405 = vsel %vm174, %v400, 0
    %407 = vmatprep.subr.bf16.mxu0 0
    %408 = vmatpush1.bf16.xpose.msra.mxu0 %v405
    %409 = vmatprep.subr.bf16.mxu0 0
    %410 = vmatpush1.bf16.xpose.msra.mxu0 0
    %411 = vmatprep.subr.bf16.mxu0 0
    %412 = vmatpush1.bf16.xpose.msra.mxu0 0
    %413 = vmatprep.subr.bf16.mxu0 0
    %414 = vmatpush1.bf16.xpose.msra.mxu0 0
    %415 = vmatprep.subr.bf16.mxu0 0
    %416 = vmatpush1.bf16.xpose.msra.mxu0 0
    %417 = vmatprep.subr.bf16.mxu0 0
    %418 = vmatpush1.bf16.xpose.msra.mxu0 0
    %419 = vmatprep.subr.bf16.mxu0 0
    %420 = vmatpush1.bf16.xpose.msra.mxu0 0
    %421 = vmatprep.subr.bf16.mxu0 0
    %422 = vmatpush1.bf16.xpose.msra.mxu0 0
    %423 = vmatprep.subr.bf16.mxu0 0
    %424 = vmatpush1.bf16.xpose.msra.mxu0 0
    %425 = vmatprep.subr.bf16.mxu0 0
    %426 = vmatpush1.bf16.xpose.msra.mxu0 0
    %427 = vmatprep.subr.bf16.mxu0 0
    %428 = vmatpush1.bf16.xpose.msra.mxu0 0
    %429 = vmatprep.subr.bf16.mxu0 0
    %430 = vmatpush1.bf16.xpose.msra.mxu0 0
    %431 = vmatprep.subr.bf16.mxu0 0
    %432 = vmatpush1.bf16.xpose.msra.mxu0 0
    %433 = vmatprep.subr.bf16.mxu0 0
    %434 = vmatpush1.bf16.xpose.msra.mxu0 0
    %435 = vmatprep.subr.bf16.mxu0 0
    %436 = vmatpush1.bf16.xpose.msra.mxu0 0
    %437 = vmatprep.subr.bf16.mxu0 0
    %438 = vmatpush1.bf16.xpose.msra.mxu0 0
    %439 = vmatprep.mubr.bf16.mxu0 0
    %440 = vmatmul.mubr.bf16.gmra.mrb[0].mxu0 %v402
    %v441 = vpop.f32.mrb[0].mxu0
    %v442 = vadd.f32 0.0, %v441
    %v443 = vpop.f32.mrb[0].mxu0
    %v444 = vpop.f32.mrb[0].mxu0
    %v445 = vpop.f32.mrb[0].mxu0
    %446 = vdwg.mxu0
    %447 = vrot.lane.b32.xlu0 %v170, 120
    %v448 = vpop.permute.xlu0 %447
    %449 = vrot.lane.b32.xlu0 %v170, 88
    %v450 = vpop.permute.xlu0 %449
    %v452 = vsel %vm174, %v448, 0
    %v455 = vsel %vm174, %v450, 0
    %457 = vmatprep.subr.bf16.mxu0 0
    %458 = vmatpush1.bf16.xpose.msra.mxu0 %v455
    %459 = vmatprep.subr.bf16.mxu0 0
    %460 = vmatpush1.bf16.xpose.msra.mxu0 0
    %461 = vmatprep.subr.bf16.mxu0 0
    %462 = vmatpush1.bf16.xpose.msra.mxu0 0
    %463 = vmatprep.subr.bf16.mxu0 0
    %464 = vmatpush1.bf16.xpose.msra.mxu0 0
    %465 = vmatprep.subr.bf16.mxu0 0
    %466 = vmatpush1.bf16.xpose.msra.mxu0 0
    %467 = vmatprep.subr.bf16.mxu0 0
    %468 = vmatpush1.bf16.xpose.msra.mxu0 0
    %469 = vmatprep.subr.bf16.mxu0 0
    %470 = vmatpush1.bf16.xpose.msra.mxu0 0
    %471 = vmatprep.subr.bf16.mxu0 0
    %472 = vmatpush1.bf16.xpose.msra.mxu0 0
    %473 = vmatprep.subr.bf16.mxu0 0
    %474 = vmatpush1.bf16.xpose.msra.mxu0 0
    %475 = vmatprep.subr.bf16.mxu0 0
    %476 = vmatpush1.bf16.xpose.msra.mxu0 0
    %477 = vmatprep.subr.bf16.mxu0 0
    %478 = vmatpush1.bf16.xpose.msra.mxu0 0
    %479 = vmatprep.subr.bf16.mxu0 0
    %480 = vmatpush1.bf16.xpose.msra.mxu0 0
    %481 = vmatprep.subr.bf16.mxu0 0
    %482 = vmatpush1.bf16.xpose.msra.mxu0 0
    %483 = vmatprep.subr.bf16.mxu0 0
    %484 = vmatpush1.bf16.xpose.msra.mxu0 0
    %485 = vmatprep.subr.bf16.mxu0 0
    %486 = vmatpush1.bf16.xpose.msra.mxu0 0
    %487 = vmatprep.subr.bf16.mxu0 0
    %488 = vmatpush1.bf16.xpose.msra.mxu0 0
    %489 = vmatprep.mubr.bf16.mxu0 0
    %490 = vmatmul.mubr.bf16.gmra.mrb[0].mxu0 %v452
    %v491 = vpop.f32.mrb[0].mxu0
    %v492 = vadd.f32 0.0, %v491
    %v493 = vpop.f32.mrb[0].mxu0
    %v494 = vpop.f32.mrb[0].mxu0
    %v495 = vpop.f32.mrb[0].mxu0
    %496 = vdwg.mxu0
    %v497 = vmul.f32 %v442, 0.35355338
    %v498 = vmul.f32 %v492, 0.35355338
    %v499 = vadd.f32 %v497, %v167
    %v500 = vadd.f32 %v498, %v168
    %v501 = vsel %vm174, %v499, -inf
    %502 = vmax.xlane.f32.xlu0 %v501
    %v503 = vpop.xlane.xlu0 %502
    %v504 = vsel %vm174, %v500, -inf
    %505 = vmax.xlane.f32.xlu0 %v504
    %v506 = vpop.xlane.xlu0 %505
    %v507 = vsub.f32 %v499, %v503
    %v508 = vsub.f32 %v500, %v506
    %v509 = vmul.f32 %v507, 1.442695
    %v510 = vpow.pop %v509
    %v511 = vmul.f32 %v508, 1.442695
    %v512 = vpow.pop %v511
    %v513 = vsel %vm174, %v510, 0.0
    %514 = vadd.xlane.f32.xlu0 %v513
    %v515 = vpop.xlane.xlu0 %514
    %v516 = vsel %vm174, %v512, 0.0
    %517 = vadd.xlane.f32.xlu0 %v516
    %v518 = vpop.xlane.xlu0 %517
    %v519 = vrcp.pop %v515
    %v520 = vrcp.pop %v518
    %v521 = vmul.f32 %v510, %v519
    %v522 = vmul.f32 %v512, %v520
    %v523 = vpack.c.bf16 %v521, %v521
    %v524 = vpack.c.bf16 %v522, %v522
    %525 = vrot.lane.b32.xlu0 %v169, 56
    %v526 = vpop.permute.xlu0 %525
    %v528 = vsel %vm174, %v523, 0
    %v531 = vsel %vm303, %v526, 0
    %533 = vmatprep.subr.bf16.mxu0 0
    %534 = vmatpush1.bf16.msra.mxu0 %v531
    %535 = vmatprep.subr.bf16.mxu0 0
    %536 = vmatpush1.bf16.msra.mxu0 0
    %537 = vmatprep.subr.bf16.mxu0 0
    %538 = vmatpush1.bf16.msra.mxu0 0
    %539 = vmatprep.subr.bf16.mxu0 0
    %540 = vmatpush1.bf16.msra.mxu0 0
    %541 = vmatprep.subr.bf16.mxu0 0
    %542 = vmatpush1.bf16.msra.mxu0 0
    %543 = vmatprep.subr.bf16.mxu0 0
    %544 = vmatpush1.bf16.msra.mxu0 0
    %545 = vmatprep.subr.bf16.mxu0 0
    %546 = vmatpush1.bf16.msra.mxu0 0
    %547 = vmatprep.subr.bf16.mxu0 0
    %548 = vmatpush1.bf16.msra.mxu0 0
    %549 = vmatprep.subr.bf16.mxu0 0
    %550 = vmatpush1.bf16.msra.mxu0 0
    %551 = vmatprep.subr.bf16.mxu0 0
    %552 = vmatpush1.bf16.msra.mxu0 0
    %553 = vmatprep.subr.bf16.mxu0 0
    %554 = vmatpush1.bf16.msra.mxu0 0
    %555 = vmatprep.subr.bf16.mxu0 0
    %556 = vmatpush1.bf16.msra.mxu0 0
    %557 = vmatprep.subr.bf16.mxu0 0
    %558 = vmatpush1.bf16.msra.mxu0 0
    %559 = vmatprep.subr.bf16.mxu0 0
    %560 = vmatpush1.bf16.msra.mxu0 0
    %561 = vmatprep.subr.bf16.mxu0 0
    %562 = vmatpush1.bf16.msra.mxu0 0
    %563 = vmatprep.subr.bf16.mxu0 0
    %564 = vmatpush1.bf16.msra.mxu0 0
    %565 = vmatprep.mubr.bf16.mxu0 0
    %566 = vmatmul.mubr.bf16.gmra.mrb[0].mxu0 %v528
    %v567 = vpop.f32.mrb[0].mxu0
    %v568 = vadd.f32 0.0, %v567
    %v569 = vpop.f32.mrb[0].mxu0
    %v570 = vpop.f32.mrb[0].mxu0
    %v571 = vpop.f32.mrb[0].mxu0
    %572 = vdwg.mxu0
    %573 = vrot.lane.b32.xlu0 %v170, 56
    %v574 = vpop.permute.xlu0 %573
    %v576 = vsel %vm174, %v524, 0
    %v579 = vsel %vm303, %v574, 0
    %581 = vmatprep.subr.bf16.mxu0 0
    %582 = vmatpush1.bf16.msra.mxu0 %v579
    %583 = vmatprep.subr.bf16.mxu0 0
    %584 = vmatpush1.bf16.msra.mxu0 0
    %585 = vmatprep.subr.bf16.mxu0 0
    %586 = vmatpush1.bf16.msra.mxu0 0
    %587 = vmatprep.subr.bf16.mxu0 0
    %588 = vmatpush1.bf16.msra.mxu0 0
    %589 = vmatprep.subr.bf16.mxu0 0
    %590 = vmatpush1.bf16.msra.mxu0 0
    %591 = vmatprep.subr.bf16.mxu0 0
    %592 = vmatpush1.bf16.msra.mxu0 0
    %593 = vmatprep.subr.bf16.mxu0 0
    %594 = vmatpush1.bf16.msra.mxu0 0
    %595 = vmatprep.subr.bf16.mxu0 0
    %596 = vmatpush1.bf16.msra.mxu0 0
    %597 = vmatprep.subr.bf16.mxu0 0
    %598 = vmatpush1.bf16.msra.mxu0 0
    %599 = vmatprep.subr.bf16.mxu0 0
    %600 = vmatpush1.bf16.msra.mxu0 0
    %601 = vmatprep.subr.bf16.mxu0 0
    %602 = vmatpush1.bf16.msra.mxu0 0
    %603 = vmatprep.subr.bf16.mxu0 0
    %604 = vmatpush1.bf16.msra.mxu0 0
    %605 = vmatprep.subr.bf16.mxu0 0
    %606 = vmatpush1.bf16.msra.mxu0 0
    %607 = vmatprep.subr.bf16.mxu0 0
    %608 = vmatpush1.bf16.msra.mxu0 0
    %609 = vmatprep.subr.bf16.mxu0 0
    %610 = vmatpush1.bf16.msra.mxu0 0
    %611 = vmatprep.subr.bf16.mxu0 0
    %612 = vmatpush1.bf16.msra.mxu0 0
    %613 = vmatprep.mubr.bf16.mxu0 0
    %614 = vmatmul.mubr.bf16.gmra.mrb[0].mxu0 %v576
    %v615 = vpop.f32.mrb[0].mxu0
    %v616 = vadd.f32 0.0, %v615
    %v617 = vpop.f32.mrb[0].mxu0
    %v618 = vpop.f32.mrb[0].mxu0
    %v619 = vpop.f32.mrb[0].mxu0
    %620 = vdwg.mxu0
    %623 = vrot.lane.b32.xlu0 %v568, 8
    %v624 = vpop.permute.xlu0 %623
    %625 = vrot.lane.b32.xlu0 %v616, 8
    %v626 = vpop.permute.xlu0 %625
    %vm629 = vcmask 130112
    %630 = vst.msk [vmem:[#allocation2] sm:$0xff] %vm629, %v624
    %631 = vst.msk [vmem:[#allocation2 + $0x8] sm:$0xff] %vm629, %v626
    %632 = vrot.lane.b32.xlu0 %v169, 112
    %v633 = vpop.permute.xlu0 %632
    %634 = vrot.lane.b32.xlu0 %v169, 80
    %v635 = vpop.permute.xlu0 %634
    %v637 = vsel %vm174, %v633, 0
    %v640 = vsel %vm174, %v635, 0
    %642 = vmatprep.subr.bf16.mxu0 0
    %643 = vmatpush1.bf16.xpose.msra.mxu0 %v640
    %644 = vmatprep.subr.bf16.mxu0 0
    %645 = vmatpush1.bf16.xpose.msra.mxu0 0
    %646 = vmatprep.subr.bf16.mxu0 0
    %647 = vmatpush1.bf16.xpose.msra.mxu0 0
    %648 = vmatprep.subr.bf16.mxu0 0
    %649 = vmatpush1.bf16.xpose.msra.mxu0 0
    %650 = vmatprep.subr.bf16.mxu0 0
    %651 = vmatpush1.bf16.xpose.msra.mxu0 0
    %652 = vmatprep.subr.bf16.mxu0 0
    %653 = vmatpush1.bf16.xpose.msra.mxu0 0
    %654 = vmatprep.subr.bf16.mxu0 0
    %655 = vmatpush1.bf16.xpose.msra.mxu0 0
    %656 = vmatprep.subr.bf16.mxu0 0
    %657 = vmatpush1.bf16.xpose.msra.mxu0 0
    %658 = vmatprep.subr.bf16.mxu0 0
    %659 = vmatpush1.bf16.xpose.msra.mxu0 0
    %660 = vmatprep.subr.bf16.mxu0 0
    %661 = vmatpush1.bf16.xpose.msra.mxu0 0
    %662 = vmatprep.subr.bf16.mxu0 0
    %663 = vmatpush1.bf16.xpose.msra.mxu0 0
    %664 = vmatprep.subr.bf16.mxu0 0
    %665 = vmatpush1.bf16.xpose.msra.mxu0 0
    %666 = vmatprep.subr.bf16.mxu0 0
    %667 = vmatpush1.bf16.xpose.msra.mxu0 0
    %668 = vmatprep.subr.bf16.mxu0 0
    %669 = vmatpush1.bf16.xpose.msra.mxu0 0
    %670 = vmatprep.subr.bf16.mxu0 0
    %671 = vmatpush1.bf16.xpose.msra.mxu0 0
    %672 = vmatprep.subr.bf16.mxu0 0
    %673 = vmatpush1.bf16.xpose.msra.mxu0 0
    %674 = vmatprep.mubr.bf16.mxu0 0
    %675 = vmatmul.mubr.bf16.gmra.mrb[0].mxu0 %v637
    %v676 = vpop.f32.mrb[0].mxu0
    %v677 = vadd.f32 0.0, %v676
    %v678 = vpop.f32.mrb[0].mxu0
    %v679 = vpop.f32.mrb[0].mxu0
    %v680 = vpop.f32.mrb[0].mxu0
    %681 = vdwg.mxu0
    %682 = vrot.lane.b32.xlu0 %v170, 112
    %v683 = vpop.permute.xlu0 %682
    %684 = vrot.lane.b32.xlu0 %v170, 80
    %v685 = vpop.permute.xlu0 %684
    %v687 = vsel %vm174, %v683, 0
    %v690 = vsel %vm174, %v685, 0
    %692 = vmatprep.subr.bf16.mxu0 0
    %693 = vmatpush1.bf16.xpose.msra.mxu0 %v690
    %694 = vmatprep.subr.bf16.mxu0 0
    %695 = vmatpush1.bf16.xpose.msra.mxu0 0
    %696 = vmatprep.subr.bf16.mxu0 0
    %697 = vmatpush1.bf16.xpose.msra.mxu0 0
    %698 = vmatprep.subr.bf16.mxu0 0
    %699 = vmatpush1.bf16.xpose.msra.mxu0 0
    %700 = vmatprep.subr.bf16.mxu0 0
    %701 = vmatpush1.bf16.xpose.msra.mxu0 0
    %702 = vmatprep.subr.bf16.mxu0 0
    %703 = vmatpush1.bf16.xpose.msra.mxu0 0
    %704 = vmatprep.subr.bf16.mxu0 0
    %705 = vmatpush1.bf16.xpose.msra.mxu0 0
    %706 = vmatprep.subr.bf16.mxu0 0
    %707 = vmatpush1.bf16.xpose.msra.mxu0 0
    %708 = vmatprep.subr.bf16.mxu0 0
    %709 = vmatpush1.bf16.xpose.msra.mxu0 0
    %710 = vmatprep.subr.bf16.mxu0 0
    %711 = vmatpush1.bf16.xpose.msra.mxu0 0
    %712 = vmatprep.subr.bf16.mxu0 0
    %713 = vmatpush1.bf16.xpose.msra.mxu0 0
    %714 = vmatprep.subr.bf16.mxu0 0
    %715 = vmatpush1.bf16.xpose.msra.mxu0 0
    %716 = vmatprep.subr.bf16.mxu0 0
    %717 = vmatpush1.bf16.xpose.msra.mxu0 0
    %718 = vmatprep.subr.bf16.mxu0 0
    %719 = vmatpush1.bf16.xpose.msra.mxu0 0
    %720 = vmatprep.subr.bf16.mxu0 0
    %721 = vmatpush1.bf16.xpose.msra.mxu0 0
    %722 = vmatprep.subr.bf16.mxu0 0
    %723 = vmatpush1.bf16.xpose.msra.mxu0 0
    %724 = vmatprep.mubr.bf16.mxu0 0
    %725 = vmatmul.mubr.bf16.gmra.mrb[0].mxu0 %v687
    %v726 = vpop.f32.mrb[0].mxu0
    %v727 = vadd.f32 0.0, %v726
    %v728 = vpop.f32.mrb[0].mxu0
    %v729 = vpop.f32.mrb[0].mxu0
    %v730 = vpop.f32.mrb[0].mxu0
    %731 = vdwg.mxu0
    %v732 = vmul.f32 %v677, 0.35355338
    %v733 = vmul.f32 %v727, 0.35355338
    %v734 = vadd.f32 %v732, %v167
    %v735 = vadd.f32 %v733, %v168
    %v736 = vsel %vm174, %v734, -inf
    %737 = vmax.xlane.f32.xlu0 %v736
    %v738 = vpop.xlane.xlu0 %737
    %v739 = vsel %vm174, %v735, -inf
    %740 = vmax.xlane.f32.xlu0 %v739
    %v741 = vpop.xlane.xlu0 %740
    %v742 = vsub.f32 %v734, %v738
    %v743 = vsub.f32 %v735, %v741
    %v744 = vmul.f32 %v742, 1.442695
    %v745 = vpow.pop %v744
    %v746 = vmul.f32 %v743, 1.442695
    %v747 = vpow.pop %v746
    %v748 = vsel %vm174, %v745, 0.0
    %749 = vadd.xlane.f32.xlu0 %v748
    %v750 = vpop.xlane.xlu0 %749
    %v751 = vsel %vm174, %v747, 0.0
    %752 = vadd.xlane.f32.xlu0 %v751
    %v753 = vpop.xlane.xlu0 %752
    %v754 = vrcp.pop %v750
    %v755 = vrcp.pop %v753
    %v756 = vmul.f32 %v745, %v754
    %v757 = vmul.f32 %v747, %v755
    %v758 = vpack.c.bf16 %v756, %v756
    %v759 = vpack.c.bf16 %v757, %v757
    %760 = vrot.lane.b32.xlu0 %v169, 48
    %v761 = vpop.permute.xlu0 %760
    %v763 = vsel %vm174, %v758, 0
    %v766 = vsel %vm303, %v761, 0
    %768 = vmatprep.subr.bf16.mxu0 0
    %769 = vmatpush1.bf16.msra.mxu0 %v766
    %770 = vmatprep.subr.bf16.mxu0 0
    %771 = vmatpush1.bf16.msra.mxu0 0
    %772 = vmatprep.subr.bf16.mxu0 0
    %773 = vmatpush1.bf16.msra.mxu0 0
    %774 = vmatprep.subr.bf16.mxu0 0
    %775 = vmatpush1.bf16.msra.mxu0 0
    %776 = vmatprep.subr.bf16.mxu0 0
    %777 = vmatpush1.bf16.msra.mxu0 0
    %778 = vmatprep.subr.bf16.mxu0 0
    %779 = vmatpush1.bf16.msra.mxu0 0
    %780 = vmatprep.subr.bf16.mxu0 0
    %781 = vmatpush1.bf16.msra.mxu0 0
    %782 = vmatprep.subr.bf16.mxu0 0
    %783 = vmatpush1.bf16.msra.mxu0 0
    %784 = vmatprep.subr.bf16.mxu0 0
    %785 = vmatpush1.bf16.msra.mxu0 0
    %786 = vmatprep.subr.bf16.mxu0 0
    %787 = vmatpush1.bf16.msra.mxu0 0
    %788 = vmatprep.subr.bf16.mxu0 0
    %789 = vmatpush1.bf16.msra.mxu0 0
    %790 = vmatprep.subr.bf16.mxu0 0
    %791 = vmatpush1.bf16.msra.mxu0 0
    %792 = vmatprep.subr.bf16.mxu0 0
    %793 = vmatpush1.bf16.msra.mxu0 0
    %794 = vmatprep.subr.bf16.mxu0 0
    %795 = vmatpush1.bf16.msra.mxu0 0
    %796 = vmatprep.subr.bf16.mxu0 0
    %797 = vmatpush1.bf16.msra.mxu0 0
    %798 = vmatprep.subr.bf16.mxu0 0
    %799 = vmatpush1.bf16.msra.mxu0 0
    %800 = vmatprep.mubr.bf16.mxu0 0
    %801 = vmatmul.mubr.bf16.gmra.mrb[0].mxu0 %v763
    %v802 = vpop.f32.mrb[0].mxu0
    %v803 = vadd.f32 0.0, %v802
    %v804 = vpop.f32.mrb[0].mxu0
    %v805 = vpop.f32.mrb[0].mxu0
    %v806 = vpop.f32.mrb[0].mxu0
    %807 = vdwg.mxu0
    %808 = vrot.lane.b32.xlu0 %v170, 48
    %v809 = vpop.permute.xlu0 %808
    %v811 = vsel %vm174, %v759, 0
    %v814 = vsel %vm303, %v809, 0
    %816 = vmatprep.subr.bf16.mxu0 0
    %817 = vmatpush1.bf16.msra.mxu0 %v814
    %818 = vmatprep.subr.bf16.mxu0 0
    %819 = vmatpush1.bf16.msra.mxu0 0
    %820 = vmatprep.subr.bf16.mxu0 0
    %821 = vmatpush1.bf16.msra.mxu0 0
    %822 = vmatprep.subr.bf16.mxu0 0
    %823 = vmatpush1.bf16.msra.mxu0 0
    %824 = vmatprep.subr.bf16.mxu0 0
    %825 = vmatpush1.bf16.msra.mxu0 0
    %826 = vmatprep.subr.bf16.mxu0 0
    %827 = vmatpush1.bf16.msra.mxu0 0
    %828 = vmatprep.subr.bf16.mxu0 0
    %829 = vmatpush1.bf16.msra.mxu0 0
    %830 = vmatprep.subr.bf16.mxu0 0
    %831 = vmatpush1.bf16.msra.mxu0 0
    %832 = vmatprep.subr.bf16.mxu0 0
    %833 = vmatpush1.bf16.msra.mxu0 0
    %834 = vmatprep.subr.bf16.mxu0 0
    %835 = vmatpush1.bf16.msra.mxu0 0
    %836 = vmatprep.subr.bf16.mxu0 0
    %837 = vmatpush1.bf16.msra.mxu0 0
    %838 = vmatprep.subr.bf16.mxu0 0
    %839 = vmatpush1.bf16.msra.mxu0 0
    %840 = vmatprep.subr.bf16.mxu0 0
    %841 = vmatpush1.bf16.msra.mxu0 0
    %842 = vmatprep.subr.bf16.mxu0 0
    %843 = vmatpush1.bf16.msra.mxu0 0
    %844 = vmatprep.subr.bf16.mxu0 0
    %845 = vmatpush1.bf16.msra.mxu0 0
    %846 = vmatprep.subr.bf16.mxu0 0
    %847 = vmatpush1.bf16.msra.mxu0 0
    %848 = vmatprep.mubr.bf16.mxu0 0
    %849 = vmatmul.mubr.bf16.gmra.mrb[0].mxu0 %v811
    %v850 = vpop.f32.mrb[0].mxu0
    %v851 = vadd.f32 0.0, %v850
    %v852 = vpop.f32.mrb[0].mxu0
    %v853 = vpop.f32.mrb[0].mxu0
    %v854 = vpop.f32.mrb[0].mxu0
    %855 = vdwg.mxu0
    %858 = vrot.lane.b32.xlu0 %v803, 16
    %v859 = vpop.permute.xlu0 %858
    %860 = vrot.lane.b32.xlu0 %v851, 16
    %v861 = vpop.permute.xlu0 %860
    %vm864 = vcmask 195712
    %865 = vst.msk [vmem:[#allocation2] sm:$0xff] %vm864, %v859
    %866 = vst.msk [vmem:[#allocation2 + $0x8] sm:$0xff] %vm864, %v861
    %867 = vrot.lane.b32.xlu0 %v169, 104
    %v868 = vpop.permute.xlu0 %867
    %869 = vrot.lane.b32.xlu0 %v169, 72
    %v870 = vpop.permute.xlu0 %869
    %v872 = vsel %vm174, %v868, 0
    %v875 = vsel %vm174, %v870, 0
    %877 = vmatprep.subr.bf16.mxu0 0
    %878 = vmatpush1.bf16.xpose.msra.mxu0 %v875
    %879 = vmatprep.subr.bf16.mxu0 0
    %880 = vmatpush1.bf16.xpose.msra.mxu0 0
    %881 = vmatprep.subr.bf16.mxu0 0
    %882 = vmatpush1.bf16.xpose.msra.mxu0 0
    %883 = vmatprep.subr.bf16.mxu0 0
    %884 = vmatpush1.bf16.xpose.msra.mxu0 0
    %885 = vmatprep.subr.bf16.mxu0 0
    %886 = vmatpush1.bf16.xpose.msra.mxu0 0
    %887 = vmatprep.subr.bf16.mxu0 0
    %888 = vmatpush1.bf16.xpose.msra.mxu0 0
    %889 = vmatprep.subr.bf16.mxu0 0
    %890 = vmatpush1.bf16.xpose.msra.mxu0 0
    %891 = vmatprep.subr.bf16.mxu0 0
    %892 = vmatpush1.bf16.xpose.msra.mxu0 0
    %893 = vmatprep.subr.bf16.mxu0 0
    %894 = vmatpush1.bf16.xpose.msra.mxu0 0
    %895 = vmatprep.subr.bf16.mxu0 0
    %896 = vmatpush1.bf16.xpose.msra.mxu0 0
    %897 = vmatprep.subr.bf16.mxu0 0
    %898 = vmatpush1.bf16.xpose.msra.mxu0 0
    %899 = vmatprep.subr.bf16.mxu0 0
    %900 = vmatpush1.bf16.xpose.msra.mxu0 0
    %901 = vmatprep.subr.bf16.mxu0 0
    %902 = vmatpush1.bf16.xpose.msra.mxu0 0
    %903 = vmatprep.subr.bf16.mxu0 0
    %904 = vmatpush1.bf16.xpose.msra.mxu0 0
    %905 = vmatprep.subr.bf16.mxu0 0
    %906 = vmatpush1.bf16.xpose.msra.mxu0 0
    %907 = vmatprep.subr.bf16.mxu0 0
    %908 = vmatpush1.bf16.xpose.msra.mxu0 0
    %909 = vmatprep.mubr.bf16.mxu0 0
    %910 = vmatmul.mubr.bf16.gmra.mrb[0].mxu0 %v872
    %v911 = vpop.f32.mrb[0].mxu0
    %v912 = vadd.f32 0.0, %v911
    %v913 = vpop.f32.mrb[0].mxu0
    %v914 = vpop.f32.mrb[0].mxu0
    %v915 = vpop.f32.mrb[0].mxu0
    %916 = vdwg.mxu0
    %917 = vrot.lane.b32.xlu0 %v170, 104
    %v918 = vpop.permute.xlu0 %917
    %919 = vrot.lane.b32.xlu0 %v170, 72
    %v920 = vpop.permute.xlu0 %919
    %v922 = vsel %vm174, %v918, 0
    %v925 = vsel %vm174, %v920, 0
    %927 = vmatprep.subr.bf16.mxu0 0
    %928 = vmatpush1.bf16.xpose.msra.mxu0 %v925
    %929 = vmatprep.subr.bf16.mxu0 0
    %930 = vmatpush1.bf16.xpose.msra.mxu0 0
    %931 = vmatprep.subr.bf16.mxu0 0
    %932 = vmatpush1.bf16.xpose.msra.mxu0 0
    %933 = vmatprep.subr.bf16.mxu0 0
    %934 = vmatpush1.bf16.xpose.msra.mxu0 0
    %935 = vmatprep.subr.bf16.mxu0 0
    %936 = vmatpush1.bf16.xpose.msra.mxu0 0
    %937 = vmatprep.subr.bf16.mxu0 0
    %938 = vmatpush1.bf16.xpose.msra.mxu0 0
    %939 = vmatprep.subr.bf16.mxu0 0
    %940 = vmatpush1.bf16.xpose.msra.mxu0 0
    %941 = vmatprep.subr.bf16.mxu0 0
    %942 = vmatpush1.bf16.xpose.msra.mxu0 0
    %943 = vmatprep.subr.bf16.mxu0 0
    %944 = vmatpush1.bf16.xpose.msra.mxu0 0
    %945 = vmatprep.subr.bf16.mxu0 0
    %946 = vmatpush1.bf16.xpose.msra.mxu0 0
    %947 = vmatprep.subr.bf16.mxu0 0
    %948 = vmatpush1.bf16.xpose.msra.mxu0 0
    %949 = vmatprep.subr.bf16.mxu0 0
    %950 = vmatpush1.bf16.xpose.msra.mxu0 0
    %951 = vmatprep.subr.bf16.mxu0 0
    %952 = vmatpush1.bf16.xpose.msra.mxu0 0
    %953 = vmatprep.subr.bf16.mxu0 0
    %954 = vmatpush1.bf16.xpose.msra.mxu0 0
    %955 = vmatprep.subr.bf16.mxu0 0
    %956 = vmatpush1.bf16.xpose.msra.mxu0 0
    %957 = vmatprep.subr.bf16.mxu0 0
    %958 = vmatpush1.bf16.xpose.msra.mxu0 0
    %959 = vmatprep.mubr.bf16.mxu0 0
    %960 = vmatmul.mubr.bf16.gmra.mrb[0].mxu0 %v922
    %v961 = vpop.f32.mrb[0].mxu0
    %v962 = vadd.f32 0.0, %v961
    %v963 = vpop.f32.mrb[0].mxu0
    %v964 = vpop.f32.mrb[0].mxu0
    %v965 = vpop.f32.mrb[0].mxu0
    %966 = vdwg.mxu0
    %v967 = vmul.f32 %v912, 0.35355338
    %v968 = vmul.f32 %v962, 0.35355338
    %v969 = vadd.f32 %v967, %v167
    %v970 = vadd.f32 %v968, %v168
    %v971 = vsel %vm174, %v969, -inf
    %972 = vmax.xlane.f32.xlu0 %v971
    %v973 = vpop.xlane.xlu0 %972
    %v974 = vsel %vm174, %v970, -inf
    %975 = vmax.xlane.f32.xlu0 %v974
    %v976 = vpop.xlane.xlu0 %975
    %v977 = vsub.f32 %v969, %v973
    %v978 = vsub.f32 %v970, %v976
    %v979 = vmul.f32 %v977, 1.442695
    %v980 = vpow.pop %v979
    %v981 = vmul.f32 %v978, 1.442695
    %v982 = vpow.pop %v981
    %v983 = vsel %vm174, %v980, 0.0
    %984 = vadd.xlane.f32.xlu0 %v983
    %v985 = vpop.xlane.xlu0 %984
    %v986 = vsel %vm174, %v982, 0.0
    %987 = vadd.xlane.f32.xlu0 %v986
    %v988 = vpop.xlane.xlu0 %987
    %v989 = vrcp.pop %v985
    %v990 = vrcp.pop %v988
    %v991 = vmul.f32 %v980, %v989
    %v992 = vmul.f32 %v982, %v990
    %v993 = vpack.c.bf16 %v991, %v991
    %v994 = vpack.c.bf16 %v992, %v992
    %995 = vrot.lane.b32.xlu0 %v169, 40
    %v996 = vpop.permute.xlu0 %995
    %v998 = vsel %vm174, %v993, 0
    %v1001 = vsel %vm303, %v996, 0
    %1003 = vmatprep.subr.bf16.mxu0 0
    %1004 = vmatpush1.bf16.msra.mxu0 %v1001
    %1005 = vmatprep.subr.bf16.mxu0 0
    %1006 = vmatpush1.bf16.msra.mxu0 0
    %1007 = vmatprep.subr.bf16.mxu0 0
    %1008 = vmatpush1.bf16.msra.mxu0 0
    %1009 = vmatprep.subr.bf16.mxu0 0
    %1010 = vmatpush1.bf16.msra.mxu0 0
    %1011 = vmatprep.subr.bf16.mxu0 0
    %1012 = vmatpush1.bf16.msra.mxu0 0
    %1013 = vmatprep.subr.bf16.mxu0 0
    %1014 = vmatpush1.bf16.msra.mxu0 0
    %1015 = vmatprep.subr.bf16.mxu0 0
    %1016 = vmatpush1.bf16.msra.mxu0 0
    %1017 = vmatprep.subr.bf16.mxu0 0
    %1018 = vmatpush1.bf16.msra.mxu0 0
    %1019 = vmatprep.subr.bf16.mxu0 0
    %1020 = vmatpush1.bf16.msra.mxu0 0
    %1021 = vmatprep.subr.bf16.mxu0 0
    %1022 = vmatpush1.bf16.msra.mxu0 0
    %1023 = vmatprep.subr.bf16.mxu0 0
    %1024 = vmatpush1.bf16.msra.mxu0 0
    %1025 = vmatprep.subr.bf16.mxu0 0
    %1026 = vmatpush1.bf16.msra.mxu0 0
    %1027 = vmatprep.subr.bf16.mxu0 0
    %1028 = vmatpush1.bf16.msra.mxu0 0
    %1029 = vmatprep.subr.bf16.mxu0 0
    %1030 = vmatpush1.bf16.msra.mxu0 0
    %1031 = vmatprep.subr.bf16.mxu0 0
    %1032 = vmatpush1.bf16.msra.mxu0 0
    %1033 = vmatprep.subr.bf16.mxu0 0
    %1034 = vmatpush1.bf16.msra.mxu0 0
    %1035 = vmatprep.mubr.bf16.mxu0 0
    %1036 = vmatmul.mubr.bf16.gmra.mrb[0].mxu0 %v998
    %v1037 = vpop.f32.mrb[0].mxu0
    %v1038 = vadd.f32 0.0, %v1037
    %v1039 = vpop.f32.mrb[0].mxu0
    %v1040 = vpop.f32.mrb[0].mxu0
    %v1041 = vpop.f32.mrb[0].mxu0
    %1042 = vdwg.mxu0
    %1043 = vrot.lane.b32.xlu0 %v170, 40
    %v1044 = vpop.permute.xlu0 %1043
    %v1046 = vsel %vm174, %v994, 0
    %v1049 = vsel %vm303, %v1044, 0
    %1051 = vmatprep.subr.bf16.mxu0 0
    %1052 = vmatpush1.bf16.msra.mxu0 %v1049
    %1053 = vmatprep.subr.bf16.mxu0 0
    %1054 = vmatpush1.bf16.msra.mxu0 0
    %1055 = vmatprep.subr.bf16.mxu0 0
    %1056 = vmatpush1.bf16.msra.mxu0 0
    %1057 = vmatprep.subr.bf16.mxu0 0
    %1058 = vmatpush1.bf16.msra.mxu0 0
    %1059 = vmatprep.subr.bf16.mxu0 0
    %1060 = vmatpush1.bf16.msra.mxu0 0
    %1061 = vmatprep.subr.bf16.mxu0 0
    %1062 = vmatpush1.bf16.msra.mxu0 0
    %1063 = vmatprep.subr.bf16.mxu0 0
    %1064 = vmatpush1.bf16.msra.mxu0 0
    %1065 = vmatprep.subr.bf16.mxu0 0
    %1066 = vmatpush1.bf16.msra.mxu0 0
    %1067 = vmatprep.subr.bf16.mxu0 0
    %1068 = vmatpush1.bf16.msra.mxu0 0
    %1069 = vmatprep.subr.bf16.mxu0 0
    %1070 = vmatpush1.bf16.msra.mxu0 0
    %1071 = vmatprep.subr.bf16.mxu0 0
    %1072 = vmatpush1.bf16.msra.mxu0 0
    %1073 = vmatprep.subr.bf16.mxu0 0
    %1074 = vmatpush1.bf16.msra.mxu0 0
    %1075 = vmatprep.subr.bf16.mxu0 0
    %1076 = vmatpush1.bf16.msra.mxu0 0
    %1077 = vmatprep.subr.bf16.mxu0 0
    %1078 = vmatpush1.bf16.msra.mxu0 0
    %1079 = vmatprep.subr.bf16.mxu0 0
    %1080 = vmatpush1.bf16.msra.mxu0 0
    %1081 = vmatprep.subr.bf16.mxu0 0
    %1082 = vmatpush1.bf16.msra.mxu0 0
    %1083 = vmatprep.mubr.bf16.mxu0 0
    %1084 = vmatmul.mubr.bf16.gmra.mrb[0].mxu0 %v1046
    %v1085 = vpop.f32.mrb[0].mxu0
    %v1086 = vadd.f32 0.0, %v1085
    %v1087 = vpop.f32.mrb[0].mxu0
    %v1088 = vpop.f32.mrb[0].mxu0
    %v1089 = vpop.f32.mrb[0].mxu0
    %1090 = vdwg.mxu0
    %1093 = vrot.lane.b32.xlu0 %v1038, 24
    %v1094 = vpop.permute.xlu0 %1093
    %1095 = vrot.lane.b32.xlu0 %v1086, 24
    %v1096 = vpop.permute.xlu0 %1095
    %vm1099 = vcmask 261312
    %1100 = vst.msk [vmem:[#allocation2] sm:$0xff] %vm1099, %v1094
    %1101 = vst.msk [vmem:[#allocation2 + $0x8] sm:$0xff] %vm1099, %v1096
    %v1102 = vld [vmem:[#allocation2] sm:$0xff]
    %v1103 = vld [vmem:[#allocation2 + $0x8] sm:$0xff]
    %v1104 = vpack.c.bf16 %v1103, %v1102
    %v1105 = vld [vmem:[%s6] sm:$0xf]
    %v1106 = vld [vmem:[%s6 + $0x4] sm:$0xf]
    %v1107 = vld [vmem:[%s6 + $0x8] sm:$0xf]
    %v1108 = vld [vmem:[%s6 + $0xc] sm:$0xf]
    %v1109 = vld [vmem:[%s7] sm:$0x1]
    %v1111 = vlaneseq
    %v1112 = vshrl.u32 %v1111, 7
    %v1113 = vsub.s32 0, %v1112
    %v1114 = vrot.slane %v1109, %v1113
    %v1120 = vunpack.c.l.b16 %v1105
    %v1121 = vunpack.c.l.b16 %v1106
    %v1122 = vunpack.c.l.b16 %v1107
    %v1123 = vunpack.c.l.b16 %v1108
    %v1124 = vpack.c.b16 %v1121, %v1120
    %v1125 = vpack.c.b16 %v1123, %v1122
    %v1129 = vsel %vm122, %v1104, 0
    %1131 = vmatprep.subr.bf16.mxu0 0
    %1132 = vmatpush1.bf16.msra.mxu0 %v1124
    %1133 = vmatprep.subr.bf16.mxu0 0
    %1134 = vmatpush1.bf16.msra.mxu0 %v1125
    %1135 = vmatprep.subr.bf16.mxu0 0
    %1136 = vmatpush1.bf16.msra.mxu0 0
    %1137 = vmatprep.subr.bf16.mxu0 0
    %1138 = vmatpush1.bf16.msra.mxu0 0
    %1139 = vmatprep.subr.bf16.mxu0 0
    %1140 = vmatpush1.bf16.msra.mxu0 0
    %1141 = vmatprep.subr.bf16.mxu0 0
    %1142 = vmatpush1.bf16.msra.mxu0 0
    %1143 = vmatprep.subr.bf16.mxu0 0
    %1144 = vmatpush1.bf16.msra.mxu0 0
    %1145 = vmatprep.subr.bf16.mxu0 0
    %1146 = vmatpush1.bf16.msra.mxu0 0
    %1147 = vmatprep.subr.bf16.mxu0 0
    %1148 = vmatpush1.bf16.msra.mxu0 0
    %1149 = vmatprep.subr.bf16.mxu0 0
    %1150 = vmatpush1.bf16.msra.mxu0 0
    %1151 = vmatprep.subr.bf16.mxu0 0
    %1152 = vmatpush1.bf16.msra.mxu0 0
    %1153 = vmatprep.subr.bf16.mxu0 0
    %1154 = vmatpush1.bf16.msra.mxu0 0
    %1155 = vmatprep.subr.bf16.mxu0 0
    %1156 = vmatpush1.bf16.msra.mxu0 0
    %1157 = vmatprep.subr.bf16.mxu0 0
    %1158 = vmatpush1.bf16.msra.mxu0 0
    %1159 = vmatprep.subr.bf16.mxu0 0
    %1160 = vmatpush1.bf16.msra.mxu0 0
    %1161 = vmatprep.subr.bf16.mxu0 0
    %1162 = vmatpush1.bf16.msra.mxu0 0
    %1163 = vmatprep.mubr.bf16.mxu0 0
    %1164 = vmatmul.mubr.bf16.gmra.mrb[0].mxu0 %v1129
    %v1165 = vpop.f32.mrb[0].mxu0
    %v1166 = vadd.f32 %v1114, %v1165
    %v1167 = vpop.f32.mrb[0].mxu0
    %v1168 = vpop.f32.mrb[0].mxu0
    %v1169 = vadd.f32 %v1114, %v1168
    %v1170 = vpop.f32.mrb[0].mxu0
    %1171 = vdwg.mxu0
    %v1172 = vadd.f32 %v92, %v1166
    %v1173 = vadd.f32 %v93, %v1169
    %v1174 = vld [vmem:[%s8] sm:$0x1]
    %v1175 = vld [vmem:[%s9] sm:$0x1]
    %v1176 = vsel %vm122, %v1172, 0.0
    %1177 = vadd.xlane.f32.xlu0 %v1176
    %v1178 = vpop.xlane.xlu0 %1177
    %v1179 = vsel %vm122, %v1173, 0.0
    %1180 = vadd.xlane.f32.xlu0 %v1179
    %v1181 = vpop.xlane.xlu0 %1180
    %v1182 = vrcp.pop 32.0
    %v1183 = vmul.f32 %v1178, %v1182
    %v1184 = vmul.f32 %v1181, %v1182
    %v1185 = vsub.f32 %v1172, %v1183
    %v1186 = vsub.f32 %v1173, %v1184
    %v1187 = vmul.f32 %v1185, %v1185
    %v1188 = vmul.f32 %v1186, %v1186
    %v1189 = vsel %vm122, %v1187, 0.0
    %1190 = vadd.xlane.f32.xlu0 %v1189
    %v1191 = vpop.xlane.xlu0 %1190
    %v1192 = vsel %vm122, %v1188, 0.0
    %1193 = vadd.xlane.f32.xlu0 %v1192
    %v1194 = vpop.xlane.xlu0 %1193
    %v1195 = vmul.f32 %v1191, %v1182
    %v1196 = vmul.f32 %v1194, %v1182
    %v1197 = vadd.f32 %v1195, 1e-05
    %v1198 = vadd.f32 %v1196, 1e-05
    %v1199 = vrsqrt.pop %v1197
    %v1200 = vrsqrt.pop %v1198
    %v1201 = vmul.f32 %v1185, %v1199
    %v1202 = vmul.f32 %v1186, %v1200
    %v1204 = vlaneseq
    %v1205 = vshrl.u32 %v1204, 7
    %v1206 = vsub.s32 0, %v1205
    %v1207 = vrot.slane %v1174, %v1206
    %v1209 = vmul.f32 %v1201, %v1207
    %v1210 = vmul.f32 %v1202, %v1207
    %v1212 = vlaneseq
    %v1213 = vshrl.u32 %v1212, 7
    %v1214 = vsub.s32 0, %v1213
    %v1215 = vrot.slane %v1175, %v1214
    %v1217 = vadd.f32 %v1209, %v1215
    %v1218 = vadd.f32 %v1210, %v1215
    %v1219 = vpack.c.bf16 %v1218, %v1217
    %v1220 = vld [vmem:[%s10] sm:$0xf]
    %v1221 = vld [vmem:[%s10 + $0x4] sm:$0xf]
    %v1222 = vld [vmem:[%s10 + $0x8] sm:$0xf]
    %v1223 = vld [vmem:[%s10 + $0xc] sm:$0xf]
    %v1224 = vld [vmem:[%s11] sm:$0x1]
    %v1226 = vlaneseq
    %v1227 = vshrl.u32 %v1226, 7
    %v1228 = vsub.s32 0, %v1227
    %v1229 = vrot.slane %v1224, %v1228
    %v1235 = vunpack.c.l.b16 %v1220
    %v1236 = vunpack.c.l.b16 %v1221
    %v1237 = vunpack.c.l.b16 %v1222
    %v1238 = vunpack.c.l.b16 %v1223
    %v1239 = vpack.c.b16 %v1236, %v1235
    %v1240 = vpack.c.b16 %v1238, %v1237
    %v1244 = vsel %vm122, %v1219, 0
    %1246 = vmatprep.subr.bf16.mxu0 0
    %1247 = vmatpush1.bf16.msra.mxu0 %v1239
    %1248 = vmatprep.subr.bf16.mxu0 0
    %1249 = vmatpush1.bf16.msra.mxu0 %v1240
    %1250 = vmatprep.subr.bf16.mxu0 0
    %1251 = vmatpush1.bf16.msra.mxu0 0
    %1252 = vmatprep.subr.bf16.mxu0 0
    %1253 = vmatpush1.bf16.msra.mxu0 0
    %1254 = vmatprep.subr.bf16.mxu0 0
    %1255 = vmatpush1.bf16.msra.mxu0 0
    %1256 = vmatprep.subr.bf16.mxu0 0
    %1257 = vmatpush1.bf16.msra.mxu0 0
    %1258 = vmatprep.subr.bf16.mxu0 0
    %1259 = vmatpush1.bf16.msra.mxu0 0
    %1260 = vmatprep.subr.bf16.mxu0 0
    %1261 = vmatpush1.bf16.msra.mxu0 0
    %1262 = vmatprep.subr.bf16.mxu0 0
    %1263 = vmatpush1.bf16.msra.mxu0 0
    %1264 = vmatprep.subr.bf16.mxu0 0
    %1265 = vmatpush1.bf16.msra.mxu0 0
    %1266 = vmatprep.subr.bf16.mxu0 0
    %1267 = vmatpush1.bf16.msra.mxu0 0
    %1268 = vmatprep.subr.bf16.mxu0 0
    %1269 = vmatpush1.bf16.msra.mxu0 0
    %1270 = vmatprep.subr.bf16.mxu0 0
    %1271 = vmatpush1.bf16.msra.mxu0 0
    %1272 = vmatprep.subr.bf16.mxu0 0
    %1273 = vmatpush1.bf16.msra.mxu0 0
    %1274 = vmatprep.subr.bf16.mxu0 0
    %1275 = vmatpush1.bf16.msra.mxu0 0
    %1276 = vmatprep.subr.bf16.mxu0 0
    %1277 = vmatpush1.bf16.msra.mxu0 0
    %1278 = vmatprep.mubr.bf16.mxu0 0
    %1279 = vmatmul.mubr.bf16.gmra.mrb[0].mxu0 %v1244
    %v1280 = vpop.f32.mrb[0].mxu0
    %v1281 = vadd.f32 %v1229, %v1280
    %v1282 = vpop.f32.mrb[0].mxu0
    %v1283 = vpop.f32.mrb[0].mxu0
    %v1284 = vadd.f32 %v1229, %v1283
    %v1285 = vpop.f32.mrb[0].mxu0
    %1286 = vdwg.mxu0
    %v1287 = vld [vmem:[%s1] sm:$0xf]
    %v1288 = vld [vmem:[%s1 + $0x4] sm:$0xf]
    %v1289 = vld [vmem:[%s12] sm:$0xf]
    %v1290 = vld [vmem:[%s12 + $0x4] sm:$0xf]
    %v1291 = vld [vmem:[%s12 + $0x8] sm:$0xf]
    %v1292 = vld [vmem:[%s12 + $0xc] sm:$0xf]
    %v1293 = vld [vmem:[%s13] sm:$0x1]
    %v1295 = vlaneseq
    %v1296 = vshrl.u32 %v1295, 7
    %v1297 = vsub.s32 0, %v1296
    %v1298 = vrot.slane %v1293, %v1297
    %v1302 = vunpack.c.l.b16 %v1287
    %v1303 = vunpack.c.l.b16 %v1288
    %v1304 = vpack.c.b16 %v1303, %v1302
    %v1309 = vunpack.c.l.b16 %v1289
    %v1310 = vunpack.c.l.b16 %v1290
    %v1311 = vunpack.c.l.b16 %v1291
    %v1312 = vunpack.c.l.b16 %v1292
    %v1313 = vpack.c.b16 %v1310, %v1309
    %v1314 = vpack.c.b16 %v1312, %v1311
    %v1318 = vsel %vm122, %v1304, 0
    %1320 = vmatprep.subr.bf16.mxu0 0
    %1321 = vmatpush1.bf16.msra.mxu0 %v1313
    %1322 = vmatprep.subr.bf16.mxu0 0
    %1323 = vmatpush1.bf16.msra.mxu0 %v1314
    %1324 = vmatprep.subr.bf16.mxu0 0
    %1325 = vmatpush1.bf16.msra.mxu0 0
    %1326 = vmatprep.subr.bf16.mxu0 0
    %1327 = vmatpush1.bf16.msra.mxu0 0
    %1328 = vmatprep.subr.bf16.mxu0 0
    %1329 = vmatpush1.bf16.msra.mxu0 0
    %1330 = vmatprep.subr.bf16.mxu0 0
    %1331 = vmatpush1.bf16.msra.mxu0 0
    %1332 = vmatprep.subr.bf16.mxu0 0
    %1333 = vmatpush1.bf16.msra.mxu0 0
    %1334 = vmatprep.subr.bf16.mxu0 0
    %1335 = vmatpush1.bf16.msra.mxu0 0
    %1336 = vmatprep.subr.bf16.mxu0 0
    %1337 = vmatpush1.bf16.msra.mxu0 0
    %1338 = vmatprep.subr.bf16.mxu0 0
    %1339 = vmatpush1.bf16.msra.mxu0 0
    %1340 = vmatprep.subr.bf16.mxu0 0
    %1341 = vmatpush1.bf16.msra.mxu0 0
    %1342 = vmatprep.subr.bf16.mxu0 0
    %1343 = vmatpush1.bf16.msra.mxu0 0
    %1344 = vmatprep.subr.bf16.mxu0 0
    %1345 = vmatpush1.bf16.msra.mxu0 0
    %1346 = vmatprep.subr.bf16.mxu0 0
    %1347 = vmatpush1.bf16.msra.mxu0 0
    %1348 = vmatprep.subr.bf16.mxu0 0
    %1349 = vmatpush1.bf16.msra.mxu0 0
    %1350 = vmatprep.subr.bf16.mxu0 0
    %1351 = vmatpush1.bf16.msra.mxu0 0
    %1352 = vmatprep.mubr.bf16.mxu0 0
    %1353 = vmatmul.mubr.bf16.gmra.mrb[0].mxu0 %v1318
    %v1354 = vpop.f32.mrb[0].mxu0
    %v1355 = vadd.f32 %v1298, %v1354
    %v1356 = vpop.f32.mrb[0].mxu0
    %v1357 = vpop.f32.mrb[0].mxu0
    %v1358 = vadd.f32 %v1298, %v1357
    %v1359 = vpop.f32.mrb[0].mxu0
    %1360 = vdwg.mxu0
    %v1361 = vld [vmem:[%s3] sm:$0x1]
    %v1362 = vld [vmem:[%s3 + $0x1] sm:$0x1]
    %v1363 = vpack.c.bf16 %v1281, %v1281
    %v1364 = vpack.c.bf16 %v1284, %v1284
    %v1365 = vpack.c.bf16 %v1355, %v1355
    %v1366 = vpack.c.bf16 %v1358, %v1358
    %v1368 = vsel %vm174, %v1363, 0
    %v1371 = vsel %vm174, %v1365, 0
    %1373 = vmatprep.subr.bf16.mxu0 0
    %1374 = vmatpush1.bf16.xpose.msra.mxu0 %v1371
    %1375 = vmatprep.subr.bf16.mxu0 0
    %1376 = vmatpush1.bf16.xpose.msra.mxu0 0
    %1377 = vmatprep.subr.bf16.mxu0 0
    %1378 = vmatpush1.bf16.xpose.msra.mxu0 0
    %1379 = vmatprep.subr.bf16.mxu0 0
    %1380 = vmatpush1.bf16.xpose.msra.mxu0 0
    %1381 = vmatprep.subr.bf16.mxu0 0
    %1382 = vmatpush1.bf16.xpose.msra.mxu0 0
    %1383 = vmatprep.subr.bf16.mxu0 0
    %1384 = vmatpush1.bf16.xpose.msra.mxu0 0
    %1385 = vmatprep.subr.bf16.mxu0 0
    %1386 = vmatpush1.bf16.xpose.msra.mxu0 0
    %1387 = vmatprep.subr.bf16.mxu0 0
    %1388 = vmatpush1.bf16.xpose.msra.mxu0 0
    %1389 = vmatprep.subr.bf16.mxu0 0
    %1390 = vmatpush1.bf16.xpose.msra.mxu0 0
    %1391 = vmatprep.subr.bf16.mxu0 0
    %1392 = vmatpush1.bf16.xpose.msra.mxu0 0
    %1393 = vmatprep.subr.bf16.mxu0 0
    %1394 = vmatpush1.bf16.xpose.msra.mxu0 0
    %1395 = vmatprep.subr.bf16.mxu0 0
    %1396 = vmatpush1.bf16.xpose.msra.mxu0 0
    %1397 = vmatprep.subr.bf16.mxu0 0
    %1398 = vmatpush1.bf16.xpose.msra.mxu0 0
    %1399 = vmatprep.subr.bf16.mxu0 0
    %1400 = vmatpush1.bf16.xpose.msra.mxu0 0
    %1401 = vmatprep.subr.bf16.mxu0 0
    %1402 = vmatpush1.bf16.xpose.msra.mxu0 0
    %1403 = vmatprep.subr.bf16.mxu0 0
    %1404 = vmatpush1.bf16.xpose.msra.mxu0 0
    %1405 = vmatprep.mubr.bf16.mxu0 0
    %1406 = vmatmul.mubr.bf16.gmra.mrb[0].mxu0 %v1368
    %v1407 = vpop.f32.mrb[0].mxu0
    %v1408 = vadd.f32 0.0, %v1407
    %v1409 = vpop.f32.mrb[0].mxu0
    %v1410 = vpop.f32.mrb[0].mxu0
    %v1411 = vpop.f32.mrb[0].mxu0
    %1412 = vdwg.mxu0
    %v1414 = vsel %vm174, %v1364, 0
    %v1417 = vsel %vm174, %v1366, 0
    %1419 = vmatprep.subr.bf16.mxu0 0
    %1420 = vmatpush1.bf16.xpose.msra.mxu0 %v1417
    %1421 = vmatprep.subr.bf16.mxu0 0
    %1422 = vmatpush1.bf16.xpose.msra.mxu0 0
    %1423 = vmatprep.subr.bf16.mxu0 0
    %1424 = vmatpush1.bf16.xpose.msra.mxu0 0
    %1425 = vmatprep.subr.bf16.mxu0 0
    %1426 = vmatpush1.bf16.xpose.msra.mxu0 0
    %1427 = vmatprep.subr.bf16.mxu0 0
    %1428 = vmatpush1.bf16.xpose.msra.mxu0 0
    %1429 = vmatprep.subr.bf16.mxu0 0
    %1430 = vmatpush1.bf16.xpose.msra.mxu0 0
    %1431 = vmatprep.subr.bf16.mxu0 0
    %1432 = vmatpush1.bf16.xpose.msra.mxu0 0
    %1433 = vmatprep.subr.bf16.mxu0 0
    %1434 = vmatpush1.bf16.xpose.msra.mxu0 0
    %1435 = vmatprep.subr.bf16.mxu0 0
    %1436 = vmatpush1.bf16.xpose.msra.mxu0 0
    %1437 = vmatprep.subr.bf16.mxu0 0
    %1438 = vmatpush1.bf16.xpose.msra.mxu0 0
    %1439 = vmatprep.subr.bf16.mxu0 0
    %1440 = vmatpush1.bf16.xpose.msra.mxu0 0
    %1441 = vmatprep.subr.bf16.mxu0 0
    %1442 = vmatpush1.bf16.xpose.msra.mxu0 0
    %1443 = vmatprep.subr.bf16.mxu0 0
    %1444 = vmatpush1.bf16.xpose.msra.mxu0 0
    %1445 = vmatprep.subr.bf16.mxu0 0
    %1446 = vmatpush1.bf16.xpose.msra.mxu0 0
    %1447 = vmatprep.subr.bf16.mxu0 0
    %1448 = vmatpush1.bf16.xpose.msra.mxu0 0
    %1449 = vmatprep.subr.bf16.mxu0 0
    %1450 = vmatpush1.bf16.xpose.msra.mxu0 0
    %1451 = vmatprep.mubr.bf16.mxu0 0
    %1452 = vmatmul.mubr.bf16.gmra.mrb[0].mxu0 %v1414
    %v1453 = vpop.f32.mrb[0].mxu0
    %v1454 = vadd.f32 0.0, %v1453
    %v1455 = vpop.f32.mrb[0].mxu0
    %v1456 = vpop.f32.mrb[0].mxu0
    %v1457 = vpop.f32.mrb[0].mxu0
    %1458 = vdwg.mxu0
    %v1459 = vmul.f32 %v1408, 0.35355338
    %v1460 = vmul.f32 %v1454, 0.35355338
    %v1463 = vlaneseq
    %v1464 = vshrl.u32 %v1463, 7
    %v1465 = vsub.s32 0, %v1464
    %v1466 = vrot.slane %v1361, %v1465
    %v1467 = vlaneseq
    %v1468 = vshrl.u32 %v1467, 7
    %v1469 = vsub.s32 0, %v1468
    %v1470 = vrot.slane %v1362, %v1469
    %v1473 = vadd.f32 %v1459, %v1466
    %v1474 = vadd.f32 %v1460, %v1470
    %v1475 = vsel %vm174, %v1473, -inf
    %1476 = vmax.xlane.f32.xlu0 %v1475
    %v1477 = vpop.xlane.xlu0 %1476
    %v1478 = vsel %vm174, %v1474, -inf
    %1479 = vmax.xlane.f32.xlu0 %v1478
    %v1480 = vpop.xlane.xlu0 %1479
    %v1481 = vsub.f32 %v1473, %v1477
    %v1482 = vsub.f32 %v1474, %v1480
    %v1483 = vmul.f32 %v1481, 1.442695
    %v1484 = vpow.pop %v1483
    %v1485 = vmul.f32 %v1482, 1.442695
    %v1486 = vpow.pop %v1485
    %v1487 = vsel %vm174, %v1484, 0.0
    %1488 = vadd.xlane.f32.xlu0 %v1487
    %v1489 = vpop.xlane.xlu0 %1488
    %v1490 = vsel %vm174, %v1486, 0.0
    %1491 = vadd.xlane.f32.xlu0 %v1490
    %v1492 = vpop.xlane.xlu0 %1491
    %v1493 = vrcp.pop %v1489
    %v1494 = vrcp.pop %v1492
    %v1495 = vmul.f32 %v1484, %v1493
    %v1496 = vmul.f32 %v1486, %v1494
    %v1497 = vpack.c.bf16 %v1495, %v1495
    %v1498 = vpack.c.bf16 %v1496, %v1496
    %1500 = vrot.lane.b32.xlu0 %v1365, 96
    %v1501 = vpop.permute.xlu0 %1500
    %v1503 = vsel %vm174, %v1497, 0
    %v1506 = vsel %vm303, %v1501, 0
    %1508 = vmatprep.subr.bf16.mxu0 0
    %1509 = vmatpush1.bf16.msra.mxu0 %v1506
    %1510 = vmatprep.subr.bf16.mxu0 0
    %1511 = vmatpush1.bf16.msra.mxu0 0
    %1512 = vmatprep.subr.bf16.mxu0 0
    %1513 = vmatpush1.bf16.msra.mxu0 0
    %1514 = vmatprep.subr.bf16.mxu0 0
    %1515 = vmatpush1.bf16.msra.mxu0 0
    %1516 = vmatprep.subr.bf16.mxu0 0
    %1517 = vmatpush1.bf16.msra.mxu0 0
    %1518 = vmatprep.subr.bf16.mxu0 0
    %1519 = vmatpush1.bf16.msra.mxu0 0
    %1520 = vmatprep.subr.bf16.mxu0 0
    %1521 = vmatpush1.bf16.msra.mxu0 0
    %1522 = vmatprep.subr.bf16.mxu0 0
    %1523 = vmatpush1.bf16.msra.mxu0 0
    %1524 = vmatprep.subr.bf16.mxu0 0
    %1525 = vmatpush1.bf16.msra.mxu0 0
    %1526 = vmatprep.subr.bf16.mxu0 0
    %1527 = vmatpush1.bf16.msra.mxu0 0
    %1528 = vmatprep.subr.bf16.mxu0 0
    %1529 = vmatpush1.bf16.msra.mxu0 0
    %1530 = vmatprep.subr.bf16.mxu0 0
    %1531 = vmatpush1.bf16.msra.mxu0 0
    %1532 = vmatprep.subr.bf16.mxu0 0
    %1533 = vmatpush1.bf16.msra.mxu0 0
    %1534 = vmatprep.subr.bf16.mxu0 0
    %1535 = vmatpush1.bf16.msra.mxu0 0
    %1536 = vmatprep.subr.bf16.mxu0 0
    %1537 = vmatpush1.bf16.msra.mxu0 0
    %1538 = vmatprep.subr.bf16.mxu0 0
    %1539 = vmatpush1.bf16.msra.mxu0 0
    %1540 = vmatprep.mubr.bf16.mxu0 0
    %1541 = vmatmul.mubr.bf16.gmra.mrb[0].mxu0 %v1503
    %v1542 = vpop.f32.mrb[0].mxu0
    %v1543 = vadd.f32 0.0, %v1542
    %v1544 = vpop.f32.mrb[0].mxu0
    %v1545 = vpop.f32.mrb[0].mxu0
    %v1546 = vpop.f32.mrb[0].mxu0
    %1547 = vdwg.mxu0
    %1549 = vrot.lane.b32.xlu0 %v1366, 96
    %v1550 = vpop.permute.xlu0 %1549
    %v1552 = vsel %vm174, %v1498, 0
    %v1555 = vsel %vm303, %v1550, 0
    %1557 = vmatprep.subr.bf16.mxu0 0
    %1558 = vmatpush1.bf16.msra.mxu0 %v1555
    %1559 = vmatprep.subr.bf16.mxu0 0
    %1560 = vmatpush1.bf16.msra.mxu0 0
    %1561 = vmatprep.subr.bf16.mxu0 0
    %1562 = vmatpush1.bf16.msra.mxu0 0
    %1563 = vmatprep.subr.bf16.mxu0 0
    %1564 = vmatpush1.bf16.msra.mxu0 0
    %1565 = vmatprep.subr.bf16.mxu0 0
    %1566 = vmatpush1.bf16.msra.mxu0 0
    %1567 = vmatprep.subr.bf16.mxu0 0
    %1568 = vmatpush1.bf16.msra.mxu0 0
    %1569 = vmatprep.subr.bf16.mxu0 0
    %1570 = vmatpush1.bf16.msra.mxu0 0
    %1571 = vmatprep.subr.bf16.mxu0 0
    %1572 = vmatpush1.bf16.msra.mxu0 0
    %1573 = vmatprep.subr.bf16.mxu0 0
    %1574 = vmatpush1.bf16.msra.mxu0 0
    %1575 = vmatprep.subr.bf16.mxu0 0
    %1576 = vmatpush1.bf16.msra.mxu0 0
    %1577 = vmatprep.subr.bf16.mxu0 0
    %1578 = vmatpush1.bf16.msra.mxu0 0
    %1579 = vmatprep.subr.bf16.mxu0 0
    %1580 = vmatpush1.bf16.msra.mxu0 0
    %1581 = vmatprep.subr.bf16.mxu0 0
    %1582 = vmatpush1.bf16.msra.mxu0 0
    %1583 = vmatprep.subr.bf16.mxu0 0
    %1584 = vmatpush1.bf16.msra.mxu0 0
    %1585 = vmatprep.subr.bf16.mxu0 0
    %1586 = vmatpush1.bf16.msra.mxu0 0
    %1587 = vmatprep.subr.bf16.mxu0 0
    %1588 = vmatpush1.bf16.msra.mxu0 0
    %1589 = vmatprep.mubr.bf16.mxu0 0
    %1590 = vmatmul.mubr.bf16.gmra.mrb[0].mxu0 %v1552
    %v1591 = vpop.f32.mrb[0].mxu0
    %v1592 = vadd.f32 0.0, %v1591
    %v1593 = vpop.f32.mrb[0].mxu0
    %v1594 = vpop.f32.mrb[0].mxu0
    %v1595 = vpop.f32.mrb[0].mxu0
    %1596 = vdwg.mxu0
    %1597 = vst.msk [vmem:[#allocation2] sm:$0xff] %vm174, %v1543
    %1598 = vst.msk [vmem:[#allocation2 + $0x8] sm:$0xff] %vm174, %v1592
    %1600 = vrot.lane.b32.xlu0 %v1363, 120
    %v1601 = vpop.permute.xlu0 %1600
    %1602 = vrot.lane.b32.xlu0 %v1365, 120
    %v1603 = vpop.permute.xlu0 %1602
    %v1605 = vsel %vm174, %v1601, 0
    %v1608 = vsel %vm174, %v1603, 0
    %1610 = vmatprep.subr.bf16.mxu0 0
    %1611 = vmatpush1.bf16.xpose.msra.mxu0 %v1608
    %1612 = vmatprep.subr.bf16.mxu0 0
    %1613 = vmatpush1.bf16.xpose.msra.mxu0 0
    %1614 = vmatprep.subr.bf16.mxu0 0
    %1615 = vmatpush1.bf16.xpose.msra.mxu0 0
    %1616 = vmatprep.subr.bf16.mxu0 0
    %1617 = vmatpush1.bf16.xpose.msra.mxu0 0
    %1618 = vmatprep.subr.bf16.mxu0 0
    %1619 = vmatpush1.bf16.xpose.msra.mxu0 0
    %1620 = vmatprep.subr.bf16.mxu0 0
    %1621 = vmatpush1.bf16.xpose.msra.mxu0 0
    %1622 = vmatprep.subr.bf16.mxu0 0
    %1623 = vmatpush1.bf16.xpose.msra.mxu0 0
    %1624 = vmatprep.subr.bf16.mxu0 0
    %1625 = vmatpush1.bf16.xpose.msra.mxu0 0
    %1626 = vmatprep.subr.bf16.mxu0 0
    %1627 = vmatpush1.bf16.xpose.msra.mxu0 0
    %1628 = vmatprep.subr.bf16.mxu0 0
    %1629 = vmatpush1.bf16.xpose.msra.mxu0 0
    %1630 = vmatprep.subr.bf16.mxu0 0
    %1631 = vmatpush1.bf16.xpose.msra.mxu0 0
    %1632 = vmatprep.subr.bf16.mxu0 0
    %1633 = vmatpush1.bf16.xpose.msra.mxu0 0
    %1634 = vmatprep.subr.bf16.mxu0 0
    %1635 = vmatpush1.bf16.xpose.msra.mxu0 0
    %1636 = vmatprep.subr.bf16.mxu0 0
    %1637 = vmatpush1.bf16.xpose.msra.mxu0 0
    %1638 = vmatprep.subr.bf16.mxu0 0
    %1639 = vmatpush1.bf16.xpose.msra.mxu0 0
    %1640 = vmatprep.subr.bf16.mxu0 0
    %1641 = vmatpush1.bf16.xpose.msra.mxu0 0
    %1642 = vmatprep.mubr.bf16.mxu0 0
    %1643 = vmatmul.mubr.bf16.gmra.mrb[0].mxu0 %v1605
    %v1644 = vpop.f32.mrb[0].mxu0
    %v1645 = vadd.f32 0.0, %v1644
    %v1646 = vpop.f32.mrb[0].mxu0
    %v1647 = vpop.f32.mrb[0].mxu0
    %v1648 = vpop.f32.mrb[0].mxu0
    %1649 = vdwg.mxu0
    %1651 = vrot.lane.b32.xlu0 %v1364, 120
    %v1652 = vpop.permute.xlu0 %1651
    %1653 = vrot.lane.b32.xlu0 %v1366, 120
    %v1654 = vpop.permute.xlu0 %1653
    %v1656 = vsel %vm174, %v1652, 0
    %v1659 = vsel %vm174, %v1654, 0
    %1661 = vmatprep.subr.bf16.mxu0 0
    %1662 = vmatpush1.bf16.xpose.msra.mxu0 %v1659
    %1663 = vmatprep.subr.bf16.mxu0 0
    %1664 = vmatpush1.bf16.xpose.msra.mxu0 0
    %1665 = vmatprep.subr.bf16.mxu0 0
    %1666 = vmatpush1.bf16.xpose.msra.mxu0 0
    %1667 = vmatprep.subr.bf16.mxu0 0
    %1668 = vmatpush1.bf16.xpose.msra.mxu0 0
    %1669 = vmatprep.subr.bf16.mxu0 0
    %1670 = vmatpush1.bf16.xpose.msra.mxu0 0
    %1671 = vmatprep.subr.bf16.mxu0 0
    %1672 = vmatpush1.bf16.xpose.msra.mxu0 0
    %1673 = vmatprep.subr.bf16.mxu0 0
    %1674 = vmatpush1.bf16.xpose.msra.mxu0 0
    %1675 = vmatprep.subr.bf16.mxu0 0
    %1676 = vmatpush1.bf16.xpose.msra.mxu0 0
    %1677 = vmatprep.subr.bf16.mxu0 0
    %1678 = vmatpush1.bf16.xpose.msra.mxu0 0
    %1679 = vmatprep.subr.bf16.mxu0 0
    %1680 = vmatpush1.bf16.xpose.msra.mxu0 0
    %1681 = vmatprep.subr.bf16.mxu0 0
    %1682 = vmatpush1.bf16.xpose.msra.mxu0 0
    %1683 = vmatprep.subr.bf16.mxu0 0
    %1684 = vmatpush1.bf16.xpose.msra.mxu0 0
    %1685 = vmatprep.subr.bf16.mxu0 0
    %1686 = vmatpush1.bf16.xpose.msra.mxu0 0
    %1687 = vmatprep.subr.bf16.mxu0 0
    %1688 = vmatpush1.bf16.xpose.msra.mxu0 0
    %1689 = vmatprep.subr.bf16.mxu0 0
    %1690 = vmatpush1.bf16.xpose.msra.mxu0 0
    %1691 = vmatprep.subr.bf16.mxu0 0
    %1692 = vmatpush1.bf16.xpose.msra.mxu0 0
    %1693 = vmatprep.mubr.bf16.mxu0 0
    %1694 = vmatmul.mubr.bf16.gmra.mrb[0].mxu0 %v1656
    %v1695 = vpop.f32.mrb[0].mxu0
    %v1696 = vadd.f32 0.0, %v1695
    %v1697 = vpop.f32.mrb[0].mxu0
    %v1698 = vpop.f32.mrb[0].mxu0
    %v1699 = vpop.f32.mrb[0].mxu0
    %1700 = vdwg.mxu0
    %v1701 = vmul.f32 %v1645, 0.35355338
    %v1702 = vmul.f32 %v1696, 0.35355338
    %v1703 = vadd.f32 %v1701, %v1466
    %v1704 = vadd.f32 %v1702, %v1470
    %v1705 = vsel %vm174, %v1703, -inf
    %1706 = vmax.xlane.f32.xlu0 %v1705
    %v1707 = vpop.xlane.xlu0 %1706
    %v1708 = vsel %vm174, %v1704, -inf
    %1709 = vmax.xlane.f32.xlu0 %v1708
    %v1710 = vpop.xlane.xlu0 %1709
    %v1711 = vsub.f32 %v1703, %v1707
    %v1712 = vsub.f32 %v1704, %v1710
    %v1713 = vmul.f32 %v1711, 1.442695
    %v1714 = vpow.pop %v1713
    %v1715 = vmul.f32 %v1712, 1.442695
    %v1716 = vpow.pop %v1715
    %v1717 = vsel %vm174, %v1714, 0.0
    %1718 = vadd.xlane.f32.xlu0 %v1717
    %v1719 = vpop.xlane.xlu0 %1718
    %v1720 = vsel %vm174, %v1716, 0.0
    %1721 = vadd.xlane.f32.xlu0 %v1720
    %v1722 = vpop.xlane.xlu0 %1721
    %v1723 = vrcp.pop %v1719
    %v1724 = vrcp.pop %v1722
    %v1725 = vmul.f32 %v1714, %v1723
    %v1726 = vmul.f32 %v1716, %v1724
    %v1727 = vpack.c.bf16 %v1725, %v1725
    %v1728 = vpack.c.bf16 %v1726, %v1726
    %1729 = vrot.lane.b32.xlu0 %v1365, 88
    %v1730 = vpop.permute.xlu0 %1729
    %v1732 = vsel %vm174, %v1727, 0
    %v1735 = vsel %vm303, %v1730, 0
    %1737 = vmatprep.subr.bf16.mxu0 0
    %1738 = vmatpush1.bf16.msra.mxu0 %v1735
    %1739 = vmatprep.subr.bf16.mxu0 0
    %1740 = vmatpush1.bf16.msra.mxu0 0
    %1741 = vmatprep.subr.bf16.mxu0 0
    %1742 = vmatpush1.bf16.msra.mxu0 0
    %1743 = vmatprep.subr.bf16.mxu0 0
    %1744 = vmatpush1.bf16.msra.mxu0 0
    %1745 = vmatprep.subr.bf16.mxu0 0
    %1746 = vmatpush1.bf16.msra.mxu0 0
    %1747 = vmatprep.subr.bf16.mxu0 0
    %1748 = vmatpush1.bf16.msra.mxu0 0
    %1749 = vmatprep.subr.bf16.mxu0 0
    %1750 = vmatpush1.bf16.msra.mxu0 0
    %1751 = vmatprep.subr.bf16.mxu0 0
    %1752 = vmatpush1.bf16.msra.mxu0 0
    %1753 = vmatprep.subr.bf16.mxu0 0
    %1754 = vmatpush1.bf16.msra.mxu0 0
    %1755 = vmatprep.subr.bf16.mxu0 0
    %1756 = vmatpush1.bf16.msra.mxu0 0
    %1757 = vmatprep.subr.bf16.mxu0 0
    %1758 = vmatpush1.bf16.msra.mxu0 0
    %1759 = vmatprep.subr.bf16.mxu0 0
    %1760 = vmatpush1.bf16.msra.mxu0 0
    %1761 = vmatprep.subr.bf16.mxu0 0
    %1762 = vmatpush1.bf16.msra.mxu0 0
    %1763 = vmatprep.subr.bf16.mxu0 0
    %1764 = vmatpush1.bf16.msra.mxu0 0
    %1765 = vmatprep.subr.bf16.mxu0 0
    %1766 = vmatpush1.bf16.msra.mxu0 0
    %1767 = vmatprep.subr.bf16.mxu0 0
    %1768 = vmatpush1.bf16.msra.mxu0 0
    %1769 = vmatprep.mubr.bf16.mxu0 0
    %1770 = vmatmul.mubr.bf16.gmra.mrb[0].mxu0 %v1732
    %v1771 = vpop.f32.mrb[0].mxu0
    %v1772 = vadd.f32 0.0, %v1771
    %v1773 = vpop.f32.mrb[0].mxu0
    %v1774 = vpop.f32.mrb[0].mxu0
    %v1775 = vpop.f32.mrb[0].mxu0
    %1776 = vdwg.mxu0
    %1777 = vrot.lane.b32.xlu0 %v1366, 88
    %v1778 = vpop.permute.xlu0 %1777
    %v1780 = vsel %vm174, %v1728, 0
    %v1783 = vsel %vm303, %v1778, 0
    %1785 = vmatprep.subr.bf16.mxu0 0
    %1786 = vmatpush1.bf16.msra.mxu0 %v1783
    %1787 = vmatprep.subr.bf16.mxu0 0
    %1788 = vmatpush1.bf16.msra.mxu0 0
    %1789 = vmatprep.subr.bf16.mxu0 0
    %1790 = vmatpush1.bf16.msra.mxu0 0
    %1791 = vmatprep.subr.bf16.mxu0 0
    %1792 = vmatpush1.bf16.msra.mxu0 0
    %1793 = vmatprep.subr.bf16.mxu0 0
    %1794 = vmatpush1.bf16.msra.mxu0 0
    %1795 = vmatprep.subr.bf16.mxu0 0
    %1796 = vmatpush1.bf16.msra.mxu0 0
    %1797 = vmatprep.subr.bf16.mxu0 0
    %1798 = vmatpush1.bf16.msra.mxu0 0
    %1799 = vmatprep.subr.bf16.mxu0 0
    %1800 = vmatpush1.bf16.msra.mxu0 0
    %1801 = vmatprep.subr.bf16.mxu0 0
    %1802 = vmatpush1.bf16.msra.mxu0 0
    %1803 = vmatprep.subr.bf16.mxu0 0
    %1804 = vmatpush1.bf16.msra.mxu0 0
    %1805 = vmatprep.subr.bf16.mxu0 0
    %1806 = vmatpush1.bf16.msra.mxu0 0
    %1807 = vmatprep.subr.bf16.mxu0 0
    %1808 = vmatpush1.bf16.msra.mxu0 0
    %1809 = vmatprep.subr.bf16.mxu0 0
    %1810 = vmatpush1.bf16.msra.mxu0 0
    %1811 = vmatprep.subr.bf16.mxu0 0
    %1812 = vmatpush1.bf16.msra.mxu0 0
    %1813 = vmatprep.subr.bf16.mxu0 0
    %1814 = vmatpush1.bf16.msra.mxu0 0
    %1815 = vmatprep.subr.bf16.mxu0 0
    %1816 = vmatpush1.bf16.msra.mxu0 0
    %1817 = vmatprep.mubr.bf16.mxu0 0
    %1818 = vmatmul.mubr.bf16.gmra.mrb[0].mxu0 %v1780
    %v1819 = vpop.f32.mrb[0].mxu0
    %v1820 = vadd.f32 0.0, %v1819
    %v1821 = vpop.f32.mrb[0].mxu0
    %v1822 = vpop.f32.mrb[0].mxu0
    %v1823 = vpop.f32.mrb[0].mxu0
    %1824 = vdwg.mxu0
    %1827 = vrot.lane.b32.xlu0 %v1772, 8
    %v1828 = vpop.permute.xlu0 %1827
    %1829 = vrot.lane.b32.xlu0 %v1820, 8
    %v1830 = vpop.permute.xlu0 %1829
    %1833 = vst.msk [vmem:[#allocation2] sm:$0xff] %vm629, %v1828
    %1834 = vst.msk [vmem:[#allocation2 + $0x8] sm:$0xff] %vm629, %v1830
    %1835 = vrot.lane.b32.xlu0 %v1363, 112
    %v1836 = vpop.permute.xlu0 %1835
    %1837 = vrot.lane.b32.xlu0 %v1365, 112
    %v1838 = vpop.permute.xlu0 %1837
    %v1840 = vsel %vm174, %v1836, 0
    %v1843 = vsel %vm174, %v1838, 0
    %1845 = vmatprep.subr.bf16.mxu0 0
    %1846 = vmatpush1.bf16.xpose.msra.mxu0 %v1843
    %1847 = vmatprep.subr.bf16.mxu0 0
    %1848 = vmatpush1.bf16.xpose.msra.mxu0 0
    %1849 = vmatprep.subr.bf16.mxu0 0
    %1850 = vmatpush1.bf16.xpose.msra.mxu0 0
    %1851 = vmatprep.subr.bf16.mxu0 0
    %1852 = vmatpush1.bf16.xpose.msra.mxu0 0
    %1853 = vmatprep.subr.bf16.mxu0 0
    %1854 = vmatpush1.bf16.xpose.msra.mxu0 0
    %1855 = vmatprep.subr.bf16.mxu0 0
    %1856 = vmatpush1.bf16.xpose.msra.mxu0 0
    %1857 = vmatprep.subr.bf16.mxu0 0
    %1858 = vmatpush1.bf16.xpose.msra.mxu0 0
    %1859 = vmatprep.subr.bf16.mxu0 0
    %1860 = vmatpush1.bf16.xpose.msra.mxu0 0
    %1861 = vmatprep.subr.bf16.mxu0 0
    %1862 = vmatpush1.bf16.xpose.msra.mxu0 0
    %1863 = vmatprep.subr.bf16.mxu0 0
    %1864 = vmatpush1.bf16.xpose.msra.mxu0 0
    %1865 = vmatprep.subr.bf16.mxu0 0
    %1866 = vmatpush1.bf16.xpose.msra.mxu0 0
    %1867 = vmatprep.subr.bf16.mxu0 0
    %1868 = vmatpush1.bf16.xpose.msra.mxu0 0
    %1869 = vmatprep.subr.bf16.mxu0 0
    %1870 = vmatpush1.bf16.xpose.msra.mxu0 0
    %1871 = vmatprep.subr.bf16.mxu0 0
    %1872 = vmatpush1.bf16.xpose.msra.mxu0 0
    %1873 = vmatprep.subr.bf16.mxu0 0
    %1874 = vmatpush1.bf16.xpose.msra.mxu0 0
    %1875 = vmatprep.subr.bf16.mxu0 0
    %1876 = vmatpush1.bf16.xpose.msra.mxu0 0
    %1877 = vmatprep.mubr.bf16.mxu0 0
    %1878 = vmatmul.mubr.bf16.gmra.mrb[0].mxu0 %v1840
    %v1879 = vpop.f32.mrb[0].mxu0
    %v1880 = vadd.f32 0.0, %v1879
    %v1881 = vpop.f32.mrb[0].mxu0
    %v1882 = vpop.f32.mrb[0].mxu0
    %v1883 = vpop.f32.mrb[0].mxu0
    %1884 = vdwg.mxu0
    %1885 = vrot.lane.b32.xlu0 %v1364, 112
    %v1886 = vpop.permute.xlu0 %1885
    %1887 = vrot.lane.b32.xlu0 %v1366, 112
    %v1888 = vpop.permute.xlu0 %1887
    %v1890 = vsel %vm174, %v1886, 0
    %v1893 = vsel %vm174, %v1888, 0
    %1895 = vmatprep.subr.bf16.mxu0 0
    %1896 = vmatpush1.bf16.xpose.msra.mxu0 %v1893
    %1897 = vmatprep.subr.bf16.mxu0 0
    %1898 = vmatpush1.bf16.xpose.msra.mxu0 0
    %1899 = vmatprep.subr.bf16.mxu0 0
    %1900 = vmatpush1.bf16.xpose.msra.mxu0 0
    %1901 = vmatprep.subr.bf16.mxu0 0
    %1902 = vmatpush1.bf16.xpose.msra.mxu0 0
    %1903 = vmatprep.subr.bf16.mxu0 0
    %1904 = vmatpush1.bf16.xpose.msra.mxu0 0
    %1905 = vmatprep.subr.bf16.mxu0 0
    %1906 = vmatpush1.bf16.xpose.msra.mxu0 0
    %1907 = vmatprep.subr.bf16.mxu0 0
    %1908 = vmatpush1.bf16.xpose.msra.mxu0 0
    %1909 = vmatprep.subr.bf16.mxu0 0
    %1910 = vmatpush1.bf16.xpose.msra.mxu0 0
    %1911 = vmatprep.subr.bf16.mxu0 0
    %1912 = vmatpush1.bf16.xpose.msra.mxu0 0
    %1913 = vmatprep.subr.bf16.mxu0 0
    %1914 = vmatpush1.bf16.xpose.msra.mxu0 0
    %1915 = vmatprep.subr.bf16.mxu0 0
    %1916 = vmatpush1.bf16.xpose.msra.mxu0 0
    %1917 = vmatprep.subr.bf16.mxu0 0
    %1918 = vmatpush1.bf16.xpose.msra.mxu0 0
    %1919 = vmatprep.subr.bf16.mxu0 0
    %1920 = vmatpush1.bf16.xpose.msra.mxu0 0
    %1921 = vmatprep.subr.bf16.mxu0 0
    %1922 = vmatpush1.bf16.xpose.msra.mxu0 0
    %1923 = vmatprep.subr.bf16.mxu0 0
    %1924 = vmatpush1.bf16.xpose.msra.mxu0 0
    %1925 = vmatprep.subr.bf16.mxu0 0
    %1926 = vmatpush1.bf16.xpose.msra.mxu0 0
    %1927 = vmatprep.mubr.bf16.mxu0 0
    %1928 = vmatmul.mubr.bf16.gmra.mrb[0].mxu0 %v1890
    %v1929 = vpop.f32.mrb[0].mxu0
    %v1930 = vadd.f32 0.0, %v1929
    %v1931 = vpop.f32.mrb[0].mxu0
    %v1932 = vpop.f32.mrb[0].mxu0
    %v1933 = vpop.f32.mrb[0].mxu0
    %1934 = vdwg.mxu0
    %v1935 = vmul.f32 %v1880, 0.35355338
    %v1936 = vmul.f32 %v1930, 0.35355338
    %v1937 = vadd.f32 %v1935, %v1466
    %v1938 = vadd.f32 %v1936, %v1470
    %v1939 = vsel %vm174, %v1937, -inf
    %1940 = vmax.xlane.f32.xlu0 %v1939
    %v1941 = vpop.xlane.xlu0 %1940
    %v1942 = vsel %vm174, %v1938, -inf
    %1943 = vmax.xlane.f32.xlu0 %v1942
    %v1944 = vpop.xlane.xlu0 %1943
    %v1945 = vsub.f32 %v1937, %v1941
    %v1946 = vsub.f32 %v1938, %v1944
    %v1947 = vmul.f32 %v1945, 1.442695
    %v1948 = vpow.pop %v1947
    %v1949 = vmul.f32 %v1946, 1.442695
    %v1950 = vpow.pop %v1949
    %v1951 = vsel %vm174, %v1948, 0.0
    %1952 = vadd.xlane.f32.xlu0 %v1951
    %v1953 = vpop.xlane.xlu0 %1952
    %v1954 = vsel %vm174, %v1950, 0.0
    %1955 = vadd.xlane.f32.xlu0 %v1954
    %v1956 = vpop.xlane.xlu0 %1955
    %v1957 = vrcp.pop %v1953
    %v1958 = vrcp.pop %v1956
    %v1959 = vmul.f32 %v1948, %v1957
    %v1960 = vmul.f32 %v1950, %v1958
    %v1961 = vpack.c.bf16 %v1959, %v1959
    %v1962 = vpack.c.bf16 %v1960, %v1960
    %1963 = vrot.lane.b32.xlu0 %v1365, 80
    %v1964 = vpop.permute.xlu0 %1963
    %v1966 = vsel %vm174, %v1961, 0
    %v1969 = vsel %vm303, %v1964, 0
    %1971 = vmatprep.subr.bf16.mxu0 0
    %1972 = vmatpush1.bf16.msra.mxu0 %v1969
    %1973 = vmatprep.subr.bf16.mxu0 0
    %1974 = vmatpush1.bf16.msra.mxu0 0
    %1975 = vmatprep.subr.bf16.mxu0 0
    %1976 = vmatpush1.bf16.msra.mxu0 0
    %1977 = vmatprep.subr.bf16.mxu0 0
    %1978 = vmatpush1.bf16.msra.mxu0 0
    %1979 = vmatprep.subr.bf16.mxu0 0
    %1980 = vmatpush1.bf16.msra.mxu0 0
    %1981 = vmatprep.subr.bf16.mxu0 0
    %1982 = vmatpush1.bf16.msra.mxu0 0
    %1983 = vmatprep.subr.bf16.mxu0 0
    %1984 = vmatpush1.bf16.msra.mxu0 0
    %1985 = vmatprep.subr.bf16.mxu0 0
    %1986 = vmatpush1.bf16.msra.mxu0 0
    %1987 = vmatprep.subr.bf16.mxu0 0
    %1988 = vmatpush1.bf16.msra.mxu0 0
    %1989 = vmatprep.subr.bf16.mxu0 0
    %1990 = vmatpush1.bf16.msra.mxu0 0
    %1991 = vmatprep.subr.bf16.mxu0 0
    %1992 = vmatpush1.bf16.msra.mxu0 0
    %1993 = vmatprep.subr.bf16.mxu0 0
    %1994 = vmatpush1.bf16.msra.mxu0 0
    %1995 = vmatprep.subr.bf16.mxu0 0
    %1996 = vmatpush1.bf16.msra.mxu0 0
    %1997 = vmatprep.subr.bf16.mxu0 0
    %1998 = vmatpush1.bf16.msra.mxu0 0
    %1999 = vmatprep.subr.bf16.mxu0 0
    %2000 = vmatpush1.bf16.msra.mxu0 0
    %2001 = vmatprep.subr.bf16.mxu0 0
    %2002 = vmatpush1.bf16.msra.mxu0 0
    %2003 = vmatprep.mubr.bf16.mxu0 0
    %2004 = vmatmul.mubr.bf16.gmra.mrb[0].mxu0 %v1966
    %v2005 = vpop.f32.mrb[0].mxu0
    %v2006 = vadd.f32 0.0, %v2005
    %v2007 = vpop.f32.mrb[0].mxu0
    %v2008 = vpop.f32.mrb[0].mxu0
    %v2009 = vpop.f32.mrb[0].mxu0
    %2010 = vdwg.mxu0
    %2011 = vrot.lane.b32.xlu0 %v1366, 80
    %v2012 = vpop.permute.xlu0 %2011
    %v2014 = vsel %vm174, %v1962, 0
    %v2017 = vsel %vm303, %v2012, 0
    %2019 = vmatprep.subr.bf16.mxu0 0
    %2020 = vmatpush1.bf16.msra.mxu0 %v2017
    %2021 = vmatprep.subr.bf16.mxu0 0
    %2022 = vmatpush1.bf16.msra.mxu0 0
    %2023 = vmatprep.subr.bf16.mxu0 0
    %2024 = vmatpush1.bf16.msra.mxu0 0
    %2025 = vmatprep.subr.bf16.mxu0 0
    %2026 = vmatpush1.bf16.msra.mxu0 0
    %2027 = vmatprep.subr.bf16.mxu0 0
    %2028 = vmatpush1.bf16.msra.mxu0 0
    %2029 = vmatprep.subr.bf16.mxu0 0
    %2030 = vmatpush1.bf16.msra.mxu0 0
    %2031 = vmatprep.subr.bf16.mxu0 0
    %2032 = vmatpush1.bf16.msra.mxu0 0
    %2033 = vmatprep.subr.bf16.mxu0 0
    %2034 = vmatpush1.bf16.msra.mxu0 0
    %2035 = vmatprep.subr.bf16.mxu0 0
    %2036 = vmatpush1.bf16.msra.mxu0 0
    %2037 = vmatprep.subr.bf16.mxu0 0
    %2038 = vmatpush1.bf16.msra.mxu0 0
    %2039 = vmatprep.subr.bf16.mxu0 0
    %2040 = vmatpush1.bf16.msra.mxu0 0
    %2041 = vmatprep.subr.bf16.mxu0 0
    %2042 = vmatpush1.bf16.msra.mxu0 0
    %2043 = vmatprep.subr.bf16.mxu0 0
    %2044 = vmatpush1.bf16.msra.mxu0 0
    %2045 = vmatprep.subr.bf16.mxu0 0
    %2046 = vmatpush1.bf16.msra.mxu0 0
    %2047 = vmatprep.subr.bf16.mxu0 0
    %2048 = vmatpush1.bf16.msra.mxu0 0
    %2049 = vmatprep.subr.bf16.mxu0 0
    %2050 = vmatpush1.bf16.msra.mxu0 0
    %2051 = vmatprep.mubr.bf16.mxu0 0
    %2052 = vmatmul.mubr.bf16.gmra.mrb[0].mxu0 %v2014
    %v2053 = vpop.f32.mrb[0].mxu0
    %v2054 = vadd.f32 0.0, %v2053
    %v2055 = vpop.f32.mrb[0].mxu0
    %v2056 = vpop.f32.mrb[0].mxu0
    %v2057 = vpop.f32.mrb[0].mxu0
    %2058 = vdwg.mxu0
    %2061 = vrot.lane.b32.xlu0 %v2006, 16
    %v2062 = vpop.permute.xlu0 %2061
    %2063 = vrot.lane.b32.xlu0 %v2054, 16
    %v2064 = vpop.permute.xlu0 %2063
    %2067 = vst.msk [vmem:[#allocation2] sm:$0xff] %vm864, %v2062
    %2068 = vst.msk [vmem:[#allocation2 + $0x8] sm:$0xff] %vm864, %v2064
    %2069 = vrot.lane.b32.xlu0 %v1363, 104
    %v2070 = vpop.permute.xlu0 %2069
    %2071 = vrot.lane.b32.xlu0 %v1365, 104
    %v2072 = vpop.permute.xlu0 %2071
    %v2074 = vsel %vm174, %v2070, 0
    %v2077 = vsel %vm174, %v2072, 0
    %2079 = vmatprep.subr.bf16.mxu0 0
    %2080 = vmatpush1.bf16.xpose.msra.mxu0 %v2077
    %2081 = vmatprep.subr.bf16.mxu0 0
    %2082 = vmatpush1.bf16.xpose.msra.mxu0 0
    %2083 = vmatprep.subr.bf16.mxu0 0
    %2084 = vmatpush1.bf16.xpose.msra.mxu0 0
    %2085 = vmatprep.subr.bf16.mxu0 0
    %2086 = vmatpush1.bf16.xpose.msra.mxu0 0
    %2087 = vmatprep.subr.bf16.mxu0 0
    %2088 = vmatpush1.bf16.xpose.msra.mxu0 0
    %2089 = vmatprep.subr.bf16.mxu0 0
    %2090 = vmatpush1.bf16.xpose.msra.mxu0 0
    %2091 = vmatprep.subr.bf16.mxu0 0
    %2092 = vmatpush1.bf16.xpose.msra.mxu0 0
    %2093 = vmatprep.subr.bf16.mxu0 0
    %2094 = vmatpush1.bf16.xpose.msra.mxu0 0
    %2095 = vmatprep.subr.bf16.mxu0 0
    %2096 = vmatpush1.bf16.xpose.msra.mxu0 0
    %2097 = vmatprep.subr.bf16.mxu0 0
    %2098 = vmatpush1.bf16.xpose.msra.mxu0 0
    %2099 = vmatprep.subr.bf16.mxu0 0
    %2100 = vmatpush1.bf16.xpose.msra.mxu0 0
    %2101 = vmatprep.subr.bf16.mxu0 0
    %2102 = vmatpush1.bf16.xpose.msra.mxu0 0
    %2103 = vmatprep.subr.bf16.mxu0 0
    %2104 = vmatpush1.bf16.xpose.msra.mxu0 0
    %2105 = vmatprep.subr.bf16.mxu0 0
    %2106 = vmatpush1.bf16.xpose.msra.mxu0 0
    %2107 = vmatprep.subr.bf16.mxu0 0
    %2108 = vmatpush1.bf16.xpose.msra.mxu0 0
    %2109 = vmatprep.subr.bf16.mxu0 0
    %2110 = vmatpush1.bf16.xpose.msra.mxu0 0
    %2111 = vmatprep.mubr.bf16.mxu0 0
    %2112 = vmatmul.mubr.bf16.gmra.mrb[0].mxu0 %v2074
    %v2113 = vpop.f32.mrb[0].mxu0
    %v2114 = vadd.f32 0.0, %v2113
    %v2115 = vpop.f32.mrb[0].mxu0
    %v2116 = vpop.f32.mrb[0].mxu0
    %v2117 = vpop.f32.mrb[0].mxu0
    %2118 = vdwg.mxu0
    %2119 = vrot.lane.b32.xlu0 %v1364, 104
    %v2120 = vpop.permute.xlu0 %2119
    %2121 = vrot.lane.b32.xlu0 %v1366, 104
    %v2122 = vpop.permute.xlu0 %2121
    %v2124 = vsel %vm174, %v2120, 0
    %v2127 = vsel %vm174, %v2122, 0
    %2129 = vmatprep.subr.bf16.mxu0 0
    %2130 = vmatpush1.bf16.xpose.msra.mxu0 %v2127
    %2131 = vmatprep.subr.bf16.mxu0 0
    %2132 = vmatpush1.bf16.xpose.msra.mxu0 0
    %2133 = vmatprep.subr.bf16.mxu0 0
    %2134 = vmatpush1.bf16.xpose.msra.mxu0 0
    %2135 = vmatprep.subr.bf16.mxu0 0
    %2136 = vmatpush1.bf16.xpose.msra.mxu0 0
    %2137 = vmatprep.subr.bf16.mxu0 0
    %2138 = vmatpush1.bf16.xpose.msra.mxu0 0
    %2139 = vmatprep.subr.bf16.mxu0 0
    %2140 = vmatpush1.bf16.xpose.msra.mxu0 0
    %2141 = vmatprep.subr.bf16.mxu0 0
    %2142 = vmatpush1.bf16.xpose.msra.mxu0 0
    %2143 = vmatprep.subr.bf16.mxu0 0
    %2144 = vmatpush1.bf16.xpose.msra.mxu0 0
    %2145 = vmatprep.subr.bf16.mxu0 0
    %2146 = vmatpush1.bf16.xpose.msra.mxu0 0
    %2147 = vmatprep.subr.bf16.mxu0 0
    %2148 = vmatpush1.bf16.xpose.msra.mxu0 0
    %2149 = vmatprep.subr.bf16.mxu0 0
    %2150 = vmatpush1.bf16.xpose.msra.mxu0 0
    %2151 = vmatprep.subr.bf16.mxu0 0
    %2152 = vmatpush1.bf16.xpose.msra.mxu0 0
    %2153 = vmatprep.subr.bf16.mxu0 0
    %2154 = vmatpush1.bf16.xpose.msra.mxu0 0
    %2155 = vmatprep.subr.bf16.mxu0 0
    %2156 = vmatpush1.bf16.xpose.msra.mxu0 0
    %2157 = vmatprep.subr.bf16.mxu0 0
    %2158 = vmatpush1.bf16.xpose.msra.mxu0 0
    %2159 = vmatprep.subr.bf16.mxu0 0
    %2160 = vmatpush1.bf16.xpose.msra.mxu0 0
    %2161 = vmatprep.mubr.bf16.mxu0 0
    %2162 = vmatmul.mubr.bf16.gmra.mrb[0].mxu0 %v2124
    %v2163 = vpop.f32.mrb[0].mxu0
    %v2164 = vadd.f32 0.0, %v2163
    %v2165 = vpop.f32.mrb[0].mxu0
    %v2166 = vpop.f32.mrb[0].mxu0
    %v2167 = vpop.f32.mrb[0].mxu0
    %2168 = vdwg.mxu0
    %v2169 = vmul.f32 %v2114, 0.35355338
    %v2170 = vmul.f32 %v2164, 0.35355338
    %v2171 = vadd.f32 %v2169, %v1466
    %v2172 = vadd.f32 %v2170, %v1470
    %v2173 = vsel %vm174, %v2171, -inf
    %2174 = vmax.xlane.f32.xlu0 %v2173
    %v2175 = vpop.xlane.xlu0 %2174
    %v2176 = vsel %vm174, %v2172, -inf
    %2177 = vmax.xlane.f32.xlu0 %v2176
    %v2178 = vpop.xlane.xlu0 %2177
    %v2179 = vsub.f32 %v2171, %v2175
    %v2180 = vsub.f32 %v2172, %v2178
    %v2181 = vmul.f32 %v2179, 1.442695
    %v2182 = vpow.pop %v2181
    %v2183 = vmul.f32 %v2180, 1.442695
    %v2184 = vpow.pop %v2183
    %v2185 = vsel %vm174, %v2182, 0.0
    %2186 = vadd.xlane.f32.xlu0 %v2185
    %v2187 = vpop.xlane.xlu0 %2186
    %v2188 = vsel %vm174, %v2184, 0.0
    %2189 = vadd.xlane.f32.xlu0 %v2188
    %v2190 = vpop.xlane.xlu0 %2189
    %v2191 = vrcp.pop %v2187
    %v2192 = vrcp.pop %v2190
    %v2193 = vmul.f32 %v2182, %v2191
    %v2194 = vmul.f32 %v2184, %v2192
    %v2195 = vpack.c.bf16 %v2193, %v2193
    %v2196 = vpack.c.bf16 %v2194, %v2194
    %2197 = vrot.lane.b32.xlu0 %v1365, 72
    %v2198 = vpop.permute.xlu0 %2197
    %v2200 = vsel %vm174, %v2195, 0
    %v2203 = vsel %vm303, %v2198, 0
    %2205 = vmatprep.subr.bf16.mxu0 0
    %2206 = vmatpush1.bf16.msra.mxu0 %v2203
    %2207 = vmatprep.subr.bf16.mxu0 0
    %2208 = vmatpush1.bf16.msra.mxu0 0
    %2209 = vmatprep.subr.bf16.mxu0 0
    %2210 = vmatpush1.bf16.msra.mxu0 0
    %2211 = vmatprep.subr.bf16.mxu0 0
    %2212 = vmatpush1.bf16.msra.mxu0 0
    %2213 = vmatprep.subr.bf16.mxu0 0
    %2214 = vmatpush1.bf16.msra.mxu0 0
    %2215 = vmatprep.subr.bf16.mxu0 0
    %2216 = vmatpush1.bf16.msra.mxu0 0
    %2217 = vmatprep.subr.bf16.mxu0 0
    %2218 = vmatpush1.bf16.msra.mxu0 0
    %2219 = vmatprep.subr.bf16.mxu0 0
    %2220 = vmatpush1.bf16.msra.mxu0 0
    %2221 = vmatprep.subr.bf16.mxu0 0
    %2222 = vmatpush1.bf16.msra.mxu0 0
    %2223 = vmatprep.subr.bf16.mxu0 0
    %2224 = vmatpush1.bf16.msra.mxu0 0
    %2225 = vmatprep.subr.bf16.mxu0 0
    %2226 = vmatpush1.bf16.msra.mxu0 0
    %2227 = vmatprep.subr.bf16.mxu0 0
    %2228 = vmatpush1.bf16.msra.mxu0 0
    %2229 = vmatprep.subr.bf16.mxu0 0
    %2230 = vmatpush1.bf16.msra.mxu0 0
    %2231 = vmatprep.subr.bf16.mxu0 0
    %2232 = vmatpush1.bf16.msra.mxu0 0
    %2233 = vmatprep.subr.bf16.mxu0 0
    %2234 = vmatpush1.bf16.msra.mxu0 0
    %2235 = vmatprep.subr.bf16.mxu0 0
    %2236 = vmatpush1.bf16.msra.mxu0 0
    %2237 = vmatprep.mubr.bf16.mxu0 0
    %2238 = vmatmul.mubr.bf16.gmra.mrb[0].mxu0 %v2200
    %v2239 = vpop.f32.mrb[0].mxu0
    %v2240 = vadd.f32 0.0, %v2239
    %v2241 = vpop.f32.mrb[0].mxu0
    %v2242 = vpop.f32.mrb[0].mxu0
    %v2243 = vpop.f32.mrb[0].mxu0
    %2244 = vdwg.mxu0
    %2245 = vrot.lane.b32.xlu0 %v1366, 72
    %v2246 = vpop.permute.xlu0 %2245
    %v2248 = vsel %vm174, %v2196, 0
    %v2251 = vsel %vm303, %v2246, 0
    %2253 = vmatprep.subr.bf16.mxu0 0
    %2254 = vmatpush1.bf16.msra.mxu0 %v2251
    %2255 = vmatprep.subr.bf16.mxu0 0
    %2256 = vmatpush1.bf16.msra.mxu0 0
    %2257 = vmatprep.subr.bf16.mxu0 0
    %2258 = vmatpush1.bf16.msra.mxu0 0
    %2259 = vmatprep.subr.bf16.mxu0 0
    %2260 = vmatpush1.bf16.msra.mxu0 0
    %2261 = vmatprep.subr.bf16.mxu0 0
    %2262 = vmatpush1.bf16.msra.mxu0 0
    %2263 = vmatprep.subr.bf16.mxu0 0
    %2264 = vmatpush1.bf16.msra.mxu0 0
    %2265 = vmatprep.subr.bf16.mxu0 0
    %2266 = vmatpush1.bf16.msra.mxu0 0
    %2267 = vmatprep.subr.bf16.mxu0 0
    %2268 = vmatpush1.bf16.msra.mxu0 0
    %2269 = vmatprep.subr.bf16.mxu0 0
    %2270 = vmatpush1.bf16.msra.mxu0 0
    %2271 = vmatprep.subr.bf16.mxu0 0
    %2272 = vmatpush1.bf16.msra.mxu0 0
    %2273 = vmatprep.subr.bf16.mxu0 0
    %2274 = vmatpush1.bf16.msra.mxu0 0
    %2275 = vmatprep.subr.bf16.mxu0 0
    %2276 = vmatpush1.bf16.msra.mxu0 0
    %2277 = vmatprep.subr.bf16.mxu0 0
    %2278 = vmatpush1.bf16.msra.mxu0 0
    %2279 = vmatprep.subr.bf16.mxu0 0
    %2280 = vmatpush1.bf16.msra.mxu0 0
    %2281 = vmatprep.subr.bf16.mxu0 0
    %2282 = vmatpush1.bf16.msra.mxu0 0
    %2283 = vmatprep.subr.bf16.mxu0 0
    %2284 = vmatpush1.bf16.msra.mxu0 0
    %2285 = vmatprep.mubr.bf16.mxu0 0
    %2286 = vmatmul.mubr.bf16.gmra.mrb[0].mxu0 %v2248
    %v2287 = vpop.f32.mrb[0].mxu0
    %v2288 = vadd.f32 0.0, %v2287
    %v2289 = vpop.f32.mrb[0].mxu0
    %v2290 = vpop.f32.mrb[0].mxu0
    %v2291 = vpop.f32.mrb[0].mxu0
    %2292 = vdwg.mxu0
    %2295 = vrot.lane.b32.xlu0 %v2240, 24
    %v2296 = vpop.permute.xlu0 %2295
    %2297 = vrot.lane.b32.xlu0 %v2288, 24
    %v2298 = vpop.permute.xlu0 %2297
    %2301 = vst.msk [vmem:[#allocation2] sm:$0xff] %vm1099, %v2296
    %2302 = vst.msk [vmem:[#allocation2 + $0x8] sm:$0xff] %vm1099, %v2298
    %v2303 = vld [vmem:[#allocation2] sm:$0xff]
    %v2304 = vld [vmem:[#allocation2 + $0x8] sm:$0xff]
    %v2305 = vpack.c.bf16 %v2304, %v2303
    %v2306 = vld [vmem:[%s14] sm:$0xf]
    %v2307 = vld [vmem:[%s14 + $0x4] sm:$0xf]
    %v2308 = vld [vmem:[%s14 + $0x8] sm:$0xf]
    %v2309 = vld [vmem:[%s14 + $0xc] sm:$0xf]
    %v2310 = vld [vmem:[%s15] sm:$0x1]
    %v2312 = vlaneseq
    %v2313 = vshrl.u32 %v2312, 7
    %v2314 = vsub.s32 0, %v2313
    %v2315 = vrot.slane %v2310, %v2314
    %v2321 = vunpack.c.l.b16 %v2306
    %v2322 = vunpack.c.l.b16 %v2307
    %v2323 = vunpack.c.l.b16 %v2308
    %v2324 = vunpack.c.l.b16 %v2309
    %v2325 = vpack.c.b16 %v2322, %v2321
    %v2326 = vpack.c.b16 %v2324, %v2323
    %v2330 = vsel %vm122, %v2305, 0
    %2332 = vmatprep.subr.bf16.mxu0 0
    %2333 = vmatpush1.bf16.msra.mxu0 %v2325
    %2334 = vmatprep.subr.bf16.mxu0 0
    %2335 = vmatpush1.bf16.msra.mxu0 %v2326
    %2336 = vmatprep.subr.bf16.mxu0 0
    %2337 = vmatpush1.bf16.msra.mxu0 0
    %2338 = vmatprep.subr.bf16.mxu0 0
    %2339 = vmatpush1.bf16.msra.mxu0 0
    %2340 = vmatprep.subr.bf16.mxu0 0
    %2341 = vmatpush1.bf16.msra.mxu0 0
    %2342 = vmatprep.subr.bf16.mxu0 0
    %2343 = vmatpush1.bf16.msra.mxu0 0
    %2344 = vmatprep.subr.bf16.mxu0 0
    %2345 = vmatpush1.bf16.msra.mxu0 0
    %2346 = vmatprep.subr.bf16.mxu0 0
    %2347 = vmatpush1.bf16.msra.mxu0 0
    %2348 = vmatprep.subr.bf16.mxu0 0
    %2349 = vmatpush1.bf16.msra.mxu0 0
    %2350 = vmatprep.subr.bf16.mxu0 0
    %2351 = vmatpush1.bf16.msra.mxu0 0
    %2352 = vmatprep.subr.bf16.mxu0 0
    %2353 = vmatpush1.bf16.msra.mxu0 0
    %2354 = vmatprep.subr.bf16.mxu0 0
    %2355 = vmatpush1.bf16.msra.mxu0 0
    %2356 = vmatprep.subr.bf16.mxu0 0
    %2357 = vmatpush1.bf16.msra.mxu0 0
    %2358 = vmatprep.subr.bf16.mxu0 0
    %2359 = vmatpush1.bf16.msra.mxu0 0
    %2360 = vmatprep.subr.bf16.mxu0 0
    %2361 = vmatpush1.bf16.msra.mxu0 0
    %2362 = vmatprep.subr.bf16.mxu0 0
    %2363 = vmatpush1.bf16.msra.mxu0 0
    %2364 = vmatprep.mubr.bf16.mxu0 0
    %2365 = vmatmul.mubr.bf16.gmra.mrb[0].mxu0 %v2330
    %v2366 = vpop.f32.mrb[0].mxu0
    %v2367 = vadd.f32 %v2315, %v2366
    %v2368 = vpop.f32.mrb[0].mxu0
    %v2369 = vpop.f32.mrb[0].mxu0
    %v2370 = vadd.f32 %v2315, %v2369
    %v2371 = vpop.f32.mrb[0].mxu0
    %2372 = vdwg.mxu0
    %v2373 = vadd.f32 %v1217, %v2367
    %v2374 = vadd.f32 %v1218, %v2370
    %v2375 = vld [vmem:[%s16] sm:$0x1]
    %v2376 = vld [vmem:[%s17] sm:$0x1]
    %v2377 = vsel %vm122, %v2373, 0.0
    %2378 = vadd.xlane.f32.xlu0 %v2377
    %v2379 = vpop.xlane.xlu0 %2378
    %v2380 = vsel %vm122, %v2374, 0.0
    %2381 = vadd.xlane.f32.xlu0 %v2380
    %v2382 = vpop.xlane.xlu0 %2381
    %v2383 = vmul.f32 %v2379, %v1182
    %v2384 = vmul.f32 %v2382, %v1182
    %v2385 = vsub.f32 %v2373, %v2383
    %v2386 = vsub.f32 %v2374, %v2384
    %v2387 = vmul.f32 %v2385, %v2385
    %v2388 = vmul.f32 %v2386, %v2386
    %v2389 = vsel %vm122, %v2387, 0.0
    %2390 = vadd.xlane.f32.xlu0 %v2389
    %v2391 = vpop.xlane.xlu0 %2390
    %v2392 = vsel %vm122, %v2388, 0.0
    %2393 = vadd.xlane.f32.xlu0 %v2392
    %v2394 = vpop.xlane.xlu0 %2393
    %v2395 = vmul.f32 %v2391, %v1182
    %v2396 = vmul.f32 %v2394, %v1182
    %v2397 = vadd.f32 %v2395, 1e-05
    %v2398 = vadd.f32 %v2396, 1e-05
    %v2399 = vrsqrt.pop %v2397
    %v2400 = vrsqrt.pop %v2398
    %v2401 = vmul.f32 %v2385, %v2399
    %v2402 = vmul.f32 %v2386, %v2400
    %v2404 = vlaneseq
    %v2405 = vshrl.u32 %v2404, 7
    %v2406 = vsub.s32 0, %v2405
    %v2407 = vrot.slane %v2375, %v2406
    %v2409 = vmul.f32 %v2401, %v2407
    %v2410 = vmul.f32 %v2402, %v2407
    %v2412 = vlaneseq
    %v2413 = vshrl.u32 %v2412, 7
    %v2414 = vsub.s32 0, %v2413
    %v2415 = vrot.slane %v2376, %v2414
    %v2417 = vadd.f32 %v2409, %v2415
    %v2418 = vadd.f32 %v2410, %v2415
    %v2419 = vpack.c.bf16 %v2418, %v2417
    %v2420 = vld [vmem:[%s18] sm:$0xf]
    %v2421 = vld [vmem:[%s18 + $0x4] sm:$0xf]
    %v2422 = vld [vmem:[%s18 + $0x8] sm:$0xf]
    %v2423 = vld [vmem:[%s18 + $0xc] sm:$0xf]
    %v2424 = vld [vmem:[%s19] sm:$0x1]
    %v2426 = vlaneseq
    %v2427 = vshrl.u32 %v2426, 7
    %v2428 = vsub.s32 0, %v2427
    %v2429 = vrot.slane %v2424, %v2428
    %v2435 = vunpack.c.l.b16 %v2420
    %v2436 = vunpack.c.l.b16 %v2421
    %v2437 = vunpack.c.l.b16 %v2422
    %v2438 = vunpack.c.l.b16 %v2423
    %v2439 = vpack.c.b16 %v2436, %v2435
    %v2440 = vpack.c.b16 %v2438, %v2437
    %v2444 = vsel %vm122, %v2419, 0
    %2446 = vmatprep.subr.bf16.mxu0 0
    %2447 = vmatpush1.bf16.msra.mxu0 %v2439
    %2448 = vmatprep.subr.bf16.mxu0 0
    %2449 = vmatpush1.bf16.msra.mxu0 %v2440
    %2450 = vmatprep.subr.bf16.mxu0 0
    %2451 = vmatpush1.bf16.msra.mxu0 0
    %2452 = vmatprep.subr.bf16.mxu0 0
    %2453 = vmatpush1.bf16.msra.mxu0 0
    %2454 = vmatprep.subr.bf16.mxu0 0
    %2455 = vmatpush1.bf16.msra.mxu0 0
    %2456 = vmatprep.subr.bf16.mxu0 0
    %2457 = vmatpush1.bf16.msra.mxu0 0
    %2458 = vmatprep.subr.bf16.mxu0 0
    %2459 = vmatpush1.bf16.msra.mxu0 0
    %2460 = vmatprep.subr.bf16.mxu0 0
    %2461 = vmatpush1.bf16.msra.mxu0 0
    %2462 = vmatprep.subr.bf16.mxu0 0
    %2463 = vmatpush1.bf16.msra.mxu0 0
    %2464 = vmatprep.subr.bf16.mxu0 0
    %2465 = vmatpush1.bf16.msra.mxu0 0
    %2466 = vmatprep.subr.bf16.mxu0 0
    %2467 = vmatpush1.bf16.msra.mxu0 0
    %2468 = vmatprep.subr.bf16.mxu0 0
    %2469 = vmatpush1.bf16.msra.mxu0 0
    %2470 = vmatprep.subr.bf16.mxu0 0
    %2471 = vmatpush1.bf16.msra.mxu0 0
    %2472 = vmatprep.subr.bf16.mxu0 0
    %2473 = vmatpush1.bf16.msra.mxu0 0
    %2474 = vmatprep.subr.bf16.mxu0 0
    %2475 = vmatpush1.bf16.msra.mxu0 0
    %2476 = vmatprep.subr.bf16.mxu0 0
    %2477 = vmatpush1.bf16.msra.mxu0 0
    %2478 = vmatprep.mubr.bf16.mxu0 0
    %2479 = vmatmul.mubr.bf16.gmra.mrb[0].mxu0 %v2444
    %v2480 = vpop.f32.mrb[0].mxu0
    %v2481 = vadd.f32 %v2429, %v2480
    %v2482 = vpop.f32.mrb[0].mxu0
    %v2483 = vpop.f32.mrb[0].mxu0
    %v2484 = vadd.f32 %v2429, %v2483
    %v2485 = vpop.f32.mrb[0].mxu0
    %2486 = vdwg.mxu0
    %v2487 = vmax.f32 %v2481, 0.0
    %v2488 = vmax.f32 %v2484, 0.0
    %v2489 = vpack.c.bf16 %v2488, %v2487
    %v2490 = vld [vmem:[%s20] sm:$0xf]
    %v2491 = vld [vmem:[%s20 + $0x4] sm:$0xf]
    %v2492 = vld [vmem:[%s20 + $0x8] sm:$0xf]
    %v2493 = vld [vmem:[%s20 + $0xc] sm:$0xf]
    %v2494 = vld [vmem:[%s20 + $0x10] sm:$0xf]
    %v2495 = vld [vmem:[%s20 + $0x14] sm:$0xf]
    %v2496 = vld [vmem:[%s20 + $0x18] sm:$0xf]
    %v2497 = vld [vmem:[%s20 + $0x1c] sm:$0xf]
    %v2498 = vld [vmem:[%s21] sm:$0x1]
    %v2500 = vlaneseq
    %v2501 = vshrl.u32 %v2500, 7
    %v2502 = vsub.s32 0, %v2501
    %v2503 = vrot.slane %v2498, %v2502
    %v2513 = vunpack.c.l.b16 %v2490
    %v2514 = vunpack.c.l.b16 %v2491
    %v2515 = vunpack.c.l.b16 %v2492
    %v2516 = vunpack.c.l.b16 %v2493
    %v2517 = vunpack.c.l.b16 %v2494
    %v2518 = vunpack.c.l.b16 %v2495
    %v2519 = vunpack.c.l.b16 %v2496
    %v2520 = vunpack.c.l.b16 %v2497
    %v2521 = vpack.c.b16 %v2514, %v2513
    %v2522 = vpack.c.b16 %v2516, %v2515
    %v2523 = vpack.c.b16 %v2518, %v2517
    %v2524 = vpack.c.b16 %v2520, %v2519
    %vm2529 = vcmask 523264
    %v2531 = vsel %vm2529, %v2489, 0
    %2533 = vmatprep.subr.bf16.mxu0 0
    %2534 = vmatpush1.bf16.msra.mxu0 %v2521
    %2535 = vmatprep.subr.bf16.mxu0 0
    %2536 = vmatpush1.bf16.msra.mxu0 %v2522
    %2537 = vmatprep.subr.bf16.mxu0 0
    %2538 = vmatpush1.bf16.msra.mxu0 %v2523
    %2539 = vmatprep.subr.bf16.mxu0 0
    %2540 = vmatpush1.bf16.msra.mxu0 %v2524
    %2541 = vmatprep.subr.bf16.mxu0 0
    %2542 = vmatpush1.bf16.msra.mxu0 0
    %2543 = vmatprep.subr.bf16.mxu0 0
    %2544 = vmatpush1.bf16.msra.mxu0 0
    %2545 = vmatprep.subr.bf16.mxu0 0
    %2546 = vmatpush1.bf16.msra.mxu0 0
    %2547 = vmatprep.subr.bf16.mxu0 0
    %2548 = vmatpush1.bf16.msra.mxu0 0
    %2549 = vmatprep.subr.bf16.mxu0 0
    %2550 = vmatpush1.bf16.msra.mxu0 0
    %2551 = vmatprep.subr.bf16.mxu0 0
    %2552 = vmatpush1.bf16.msra.mxu0 0
    %2553 = vmatprep.subr.bf16.mxu0 0
    %2554 = vmatpush1.bf16.msra.mxu0 0
    %2555 = vmatprep.subr.bf16.mxu0 0
    %2556 = vmatpush1.bf16.msra.mxu0 0
    %2557 = vmatprep.subr.bf16.mxu0 0
    %2558 = vmatpush1.bf16.msra.mxu0 0
    %2559 = vmatprep.subr.bf16.mxu0 0
    %2560 = vmatpush1.bf16.msra.mxu0 0
    %2561 = vmatprep.subr.bf16.mxu0 0
    %2562 = vmatpush1.bf16.msra.mxu0 0
    %2563 = vmatprep.subr.bf16.mxu0 0
    %2564 = vmatpush1.bf16.msra.mxu0 0
    %2565 = vmatprep.mubr.bf16.mxu0 0
    %2566 = vmatmul.mubr.bf16.gmra.mrb[0].mxu0 %v2531
    %v2567 = vpop.f32.mrb[0].mxu0
    %v2568 = vadd.f32 %v2503, %v2567
    %v2569 = vpop.f32.mrb[0].mxu0
    %v2570 = vpop.f32.mrb[0].mxu0
    %v2571 = vadd.f32 %v2503, %v2570
    %v2572 = vpop.f32.mrb[0].mxu0
    %2573 = vdwg.mxu0
    %v2574 = vadd.f32 %v2417, %v2568
    %v2575 = vadd.f32 %v2418, %v2571
    %v2576 = vld [vmem:[%s22] sm:$0x1]
    %v2577 = vld [vmem:[#allocation3] sm:$0x1]
    %v2578 = vsel %vm122, %v2574, 0.0
    %2579 = vadd.xlane.f32.xlu0 %v2578
    %v2580 = vpop.xlane.xlu0 %2579
    %v2581 = vsel %vm122, %v2575, 0.0
    %2582 = vadd.xlane.f32.xlu0 %v2581
    %v2583 = vpop.xlane.xlu0 %2582
    %v2584 = vmul.f32 %v2580, %v1182
    %v2585 = vmul.f32 %v2583, %v1182
    %v2586 = vsub.f32 %v2574, %v2584
    %v2587 = vsub.f32 %v2575, %v2585
    %v2588 = vmul.f32 %v2586, %v2586
    %v2589 = vmul.f32 %v2587, %v2587
    %v2590 = vsel %vm122, %v2588, 0.0
    %2591 = vadd.xlane.f32.xlu0 %v2590
    %v2592 = vpop.xlane.xlu0 %2591
    %v2593 = vsel %vm122, %v2589, 0.0
    %2594 = vadd.xlane.f32.xlu0 %v2593
    %v2595 = vpop.xlane.xlu0 %2594
    %v2596 = vmul.f32 %v2592, %v1182
    %v2597 = vmul.f32 %v2595, %v1182
    %v2598 = vadd.f32 %v2596, 1e-05
    %v2599 = vadd.f32 %v2597, 1e-05
    %v2600 = vrsqrt.pop %v2598
    %v2601 = vrsqrt.pop %v2599
    %v2602 = vmul.f32 %v2586, %v2600
    %v2603 = vmul.f32 %v2587, %v2601
    %v2605 = vlaneseq
    %v2606 = vshrl.u32 %v2605, 7
    %v2607 = vsub.s32 0, %v2606
    %v2608 = vrot.slane %v2576, %v2607
    %v2610 = vmul.f32 %v2602, %v2608
    %v2611 = vmul.f32 %v2603, %v2608
    %v2613 = vlaneseq
    %v2614 = vshrl.u32 %v2613, 7
    %v2615 = vsub.s32 0, %v2614
    %v2616 = vrot.slane %v2577, %v2615
    %v2618 = vadd.f32 %v2610, %v2616
    %v2619 = vadd.f32 %v2611, %v2616
    %v2620 = vpack.c.bf16 %v2619, %v2618
    %v2622 = vunpack.c.l.b16 %v2620
    %v2623 = vunpack.c.h.b16 %v2620
    %v2624 = vpack.c.b16 %v2622, %v2622
    %v2625 = vpack.c.b16 %v2623, %v2623
    %vm2628 = vcmask 257024
    %2629 = vst.msk [vmem:[%s24] sm:$0xf] %vm2628, %v2624
    %2630 = vst.msk [vmem:[%s24 + $0x4] sm:$0xf] %vm2628, %v2625
    // Predicated region
    $region102: #{_lambda_.8} parent=1 // pred_check
      _
    $region103: #{_lambda_.8} parent=1 // pred_check_branch
      %2632 = sbr.rel (0) target = $region105
    $region104: #{_lambda_.8} parent=1 // pred_region
      _
    $region105: #{_lambda_.8} parent=1 // pred_fallthru
      _
    // Predicated region
    $region106: #{_lambda_.8} parent=1 // pred_check
      _
    $region107: #{_lambda_.8} parent=1 // pred_check_branch
      %2634 = sbr.rel (0) target = $region109
    $region108: #{_lambda_.8} parent=1 // pred_region
      _
    $region109: #{_lambda_.8} parent=1 // pred_fallthru
      _
    %2635 = vsyncpa [#allocation4], 1

// kernel: _lambda_.7
$region0: #{_lambda_.7}
  #allocation0 [shape = 'u32[]', space=smem, size = 0x4, offset = 0x4, fixed_abs, tag = 'smem constant byte address 0x4 - core index']
  #allocation1 [shape = 'u32[144,128]{1,0:T(1,128)}', space=vmem, size = 0x12000, scoped, tag = 'internal scratch']
  #allocation2 [shape = 'f32[16,32]{1,0:T(8,128)}', space=vmem, size = 0x2000, scoped, tag = 'scratch operand']
  %s0 = inlined_call_operand.vmem [shape: bf16[16,32], index: 0, kind: input, shape index: {}]
  %s1 = inlined_call_operand.vmem [shape: bf16[16,32], index: 1, kind: input, shape index: {}]
  %s2 = inlined_call_operand.vmem [shape: f32[2,8,8], index: 2, kind: input, shape index: {}]
  %s3 = inlined_call_operand.vmem [shape: f32[2,1,8], index: 3, kind: input, shape index: {}]
  %s4 = inlined_call_operand.vmem [shape: bf16[32,96], index: 4, kind: input, shape index: {}]
  %s5 = inlined_call_operand.vmem [shape: f32[1,96], index: 5, kind: input, shape index: {}]
  %s6 = inlined_call_operand.vmem [shape: bf16[32,32], index: 6, kind: input, shape index: {}]
  %s7 = inlined_call_operand.vmem [shape: f32[1,32], index: 7, kind: input, shape index: {}]
  %s8 = inlined_call_operand.vmem [shape: f32[1,32], index: 8, kind: input, shape index: {}]
  %s9 = inlined_call_operand.vmem [shape: f32[1,32], index: 9, kind: input, shape index: {}]
  %s10 = inlined_call_operand.vmem [shape: bf16[32,32], index: 10, kind: input, shape index: {}]
  %s11 = inlined_call_operand.vmem [shape: f32[1,32], index: 11, kind: input, shape index: {}]
  %s12 = inlined_call_operand.vmem [shape: bf16[32,64], index: 12, kind: input, shape index: {}]
  %s13 = inlined_call_operand.vmem [shape: f32[1,64], index: 13, kind: input, shape index: {}]
  %s14 = inlined_call_operand.vmem [shape: bf16[32,32], index: 14, kind: input, shape index: {}]
  %s15 = inlined_call_operand.vmem [shape: f32[1,32], index: 15, kind: input, shape index: {}]
  %s16 = inlined_call_operand.vmem [shape: f32[1,32], index: 16, kind: input, shape index: {}]
  %s17 = inlined_call_operand.vmem [shape: f32[1,32], index: 17, kind: input, shape index: {}]
  %s18 = inlined_call_operand.vmem [shape: bf16[32,64], index: 18, kind: input, shape index: {}]
  %s19 = inlined_call_operand.vmem [shape: f32[1,64], index: 19, kind: input, shape index: {}]
  %s20 = inlined_call_operand.vmem [shape: bf16[64,32], index: 20, kind: input, shape index: {}]
  %s21 = inlined_call_operand.vmem [shape: f32[1,32], index: 21, kind: input, shape index: {}]
  %s22 = inlined_call_operand.vmem [shape: f32[1,32], index: 22, kind: input, shape index: {}]
  %s23 = inlined_call_operand.vmem [shape: f32[1,32], index: 23, kind: input, shape index: {}]
  %s24 = inlined_call_operand.vmem [shape: bf16[16,32], index: 24, kind: output, shape index: {}]
  %s25 = sld [smem:[#allocation0]]
  $region106: #{_lambda_.7} parent=0
    _
  %s27 = ssub.s32 1, %s25
  %s28 = scalar_select 0, %s27, %s25
  // Predicated region
  $region2: #{_lambda_.7} parent=0 // pred_check
    _
  $region3: #{_lambda_.7} parent=0 // pred_check_branch
    %30 = sbr.rel (0) target = $region5
  $region4: #{_lambda_.7} parent=0 // pred_region
    _
  $region5: #{_lambda_.7} parent=0 // pred_fallthru
    _
  // Predicated region
  $region6: #{_lambda_.7} parent=0 // pred_check
    _
  $region7: #{_lambda_.7} parent=0 // pred_check_branch
    %32 = sbr.rel (0) target = $region9
  $region8: #{_lambda_.7} parent=0 // pred_region
    _
  $region9: #{_lambda_.7} parent=0 // pred_fallthru
    _
  // Predicated region
  $region10: #{_lambda_.7} parent=0 // pred_check
    _
  $region11: #{_lambda_.7} parent=0 // pred_check_branch
    %34 = sbr.rel (0) target = $region13
  $region12: #{_lambda_.7} parent=0 // pred_region
    _
  $region13: #{_lambda_.7} parent=0 // pred_fallthru
    _
  // Predicated region
  $region14: #{_lambda_.7} parent=0 // pred_check
    _
  $region15: #{_lambda_.7} parent=0 // pred_check_branch
    %36 = sbr.rel (0) target = $region17
  $region16: #{_lambda_.7} parent=0 // pred_region
    _
  $region17: #{_lambda_.7} parent=0 // pred_fallthru
    _
  // Predicated region
  $region18: #{_lambda_.7} parent=0 // pred_check
    _
  $region19: #{_lambda_.7} parent=0 // pred_check_branch
    %38 = sbr.rel (0) target = $region21
  $region20: #{_lambda_.7} parent=0 // pred_region
    _
  $region21: #{_lambda_.7} parent=0 // pred_fallthru
    _
  // Predicated region
  $region22: #{_lambda_.7} parent=0 // pred_check
    _
  $region23: #{_lambda_.7} parent=0 // pred_check_branch
    %40 = sbr.rel (0) target = $region25
  $region24: #{_lambda_.7} parent=0 // pred_region
    _
  $region25: #{_lambda_.7} parent=0 // pred_fallthru
    _
  // Predicated region
  $region26: #{_lambda_.7} parent=0 // pred_check
    _
  $region27: #{_lambda_.7} parent=0 // pred_check_branch
    %42 = sbr.rel (0) target = $region29
  $region28: #{_lambda_.7} parent=0 // pred_region
    _
  $region29: #{_lambda_.7} parent=0 // pred_fallthru
    _
  // Predicated region
  $region30: #{_lambda_.7} parent=0 // pred_check
    _
  $region31: #{_lambda_.7} parent=0 // pred_check_branch
    %44 = sbr.rel (0) target = $region33
  $region32: #{_lambda_.7} parent=0 // pred_region
    _
  $region33: #{_lambda_.7} parent=0 // pred_fallthru
    _
  // Predicated region
  $region34: #{_lambda_.7} parent=0 // pred_check
    _
  $region35: #{_lambda_.7} parent=0 // pred_check_branch
    %46 = sbr.rel (0) target = $region37
  $region36: #{_lambda_.7} parent=0 // pred_region
    _
  $region37: #{_lambda_.7} parent=0 // pred_fallthru
    _
  // Predicated region
  $region38: #{_lambda_.7} parent=0 // pred_check
    _
  $region39: #{_lambda_.7} parent=0 // pred_check_branch
    %48 = sbr.rel (0) target = $region41
  $region40: #{_lambda_.7} parent=0 // pred_region
    _
  $region41: #{_lambda_.7} parent=0 // pred_fallthru
    _
  // Predicated region
  $region42: #{_lambda_.7} parent=0 // pred_check
    _
  $region43: #{_lambda_.7} parent=0 // pred_check_branch
    %50 = sbr.rel (0) target = $region45
  $region44: #{_lambda_.7} parent=0 // pred_region
    _
  $region45: #{_lambda_.7} parent=0 // pred_fallthru
    _
  // Predicated region
  $region46: #{_lambda_.7} parent=0 // pred_check
    _
  $region47: #{_lambda_.7} parent=0 // pred_check_branch
    %52 = sbr.rel (0) target = $region49
  $region48: #{_lambda_.7} parent=0 // pred_region
    _
  $region49: #{_lambda_.7} parent=0 // pred_fallthru
    _
  // Predicated region
  $region50: #{_lambda_.7} parent=0 // pred_check
    _
  $region51: #{_lambda_.7} parent=0 // pred_check_branch
    %54 = sbr.rel (0) target = $region53
  $region52: #{_lambda_.7} parent=0 // pred_region
    _
  $region53: #{_lambda_.7} parent=0 // pred_fallthru
    _
  // Predicated region
  $region54: #{_lambda_.7} parent=0 // pred_check
    _
  $region55: #{_lambda_.7} parent=0 // pred_check_branch
    %56 = sbr.rel (0) target = $region57
  $region56: #{_lambda_.7} parent=0 // pred_region
    _
  $region57: #{_lambda_.7} parent=0 // pred_fallthru
    _
  // Predicated region
  $region58: #{_lambda_.7} parent=0 // pred_check
    _
  $region59: #{_lambda_.7} parent=0 // pred_check_branch
    %58 = sbr.rel (0) target = $region61
  $region60: #{_lambda_.7} parent=0 // pred_region
    _
  $region61: #{_lambda_.7} parent=0 // pred_fallthru
    _
  // Predicated region
  $region62: #{_lambda_.7} parent=0 // pred_check
    _
  $region63: #{_lambda_.7} parent=0 // pred_check_branch
    %60 = sbr.rel (0) target = $region65
  $region64: #{_lambda_.7} parent=0 // pred_region
    _
  $region65: #{_lambda_.7} parent=0 // pred_fallthru
    _
  // Predicated region
  $region66: #{_lambda_.7} parent=0 // pred_check
    _
  $region67: #{_lambda_.7} parent=0 // pred_check_branch
    %62 = sbr.rel (0) target = $region69
  $region68: #{_lambda_.7} parent=0 // pred_region
    _
  $region69: #{_lambda_.7} parent=0 // pred_fallthru
    _
  // Predicated region
  $region70: #{_lambda_.7} parent=0 // pred_check
    _
  $region71: #{_lambda_.7} parent=0 // pred_check_branch
    %64 = sbr.rel (0) target = $region73
  $region72: #{_lambda_.7} parent=0 // pred_region
    _
  $region73: #{_lambda_.7} parent=0 // pred_fallthru
    _
  // Predicated region
  $region74: #{_lambda_.7} parent=0 // pred_check
    _
  $region75: #{_lambda_.7} parent=0 // pred_check_branch
    %66 = sbr.rel (0) target = $region77
  $region76: #{_lambda_.7} parent=0 // pred_region
    _
  $region77: #{_lambda_.7} parent=0 // pred_fallthru
    _
  // Predicated region
  $region78: #{_lambda_.7} parent=0 // pred_check
    _
  $region79: #{_lambda_.7} parent=0 // pred_check_branch
    %68 = sbr.rel (0) target = $region81
  $region80: #{_lambda_.7} parent=0 // pred_region
    _
  $region81: #{_lambda_.7} parent=0 // pred_fallthru
    _
  // Predicated region
  $region82: #{_lambda_.7} parent=0 // pred_check
    _
  $region83: #{_lambda_.7} parent=0 // pred_check_branch
    %70 = sbr.rel (0) target = $region85
  $region84: #{_lambda_.7} parent=0 // pred_region
    _
  $region85: #{_lambda_.7} parent=0 // pred_fallthru
    _
  // Predicated region
  $region86: #{_lambda_.7} parent=0 // pred_check
    _
  $region87: #{_lambda_.7} parent=0 // pred_check_branch
    %72 = sbr.rel (0) target = $region89
  $region88: #{_lambda_.7} parent=0 // pred_region
    _
  $region89: #{_lambda_.7} parent=0 // pred_fallthru
    _
  // Predicated region
  $region90: #{_lambda_.7} parent=0 // pred_check
    _
  $region91: #{_lambda_.7} parent=0 // pred_check_branch
    %74 = sbr.rel (0) target = $region93
  $region92: #{_lambda_.7} parent=0 // pred_region
    _
  $region93: #{_lambda_.7} parent=0 // pred_fallthru
    _
  // Predicated region
  $region94: #{_lambda_.7} parent=0 // pred_check
    _
  $region95: #{_lambda_.7} parent=0 // pred_check_branch
    %76 = sbr.rel (0) target = $region97
  $region96: #{_lambda_.7} parent=0 // pred_region
    _
  $region97: #{_lambda_.7} parent=0 // pred_fallthru
    _
  %v78 = vld [vmem:[%s0] sm:$0xf]
  %v79 = vld [vmem:[%s0 + $0x4] sm:$0xf]
  %v80 = vunpack.c.l.bf16 %v78
  %v81 = vunpack.c.l.bf16 %v79
  %v82 = vld [vmem:[%s4] sm:$0xf]
  %v83 = vld [vmem:[%s4 + $0x4] sm:$0xf]
  %v84 = vld [vmem:[%s4 + $0x8] sm:$0xf]
  %v85 = vld [vmem:[%s4 + $0xc] sm:$0xf]
  %v86 = vld [vmem:[%s5] sm:$0x1]
  %v88 = vlaneseq
  %v89 = vshrl.u32 %v88, 7
  %v90 = vsub.s32 0, %v89
  %v91 = vrot.slane %v86, %v90
  %v95 = vunpack.c.l.b16 %v78
  %v96 = vunpack.c.l.b16 %v79
  %v97 = vpack.c.b16 %v96, %v95
  %v102 = vunpack.c.l.b16 %v82
  %v103 = vunpack.c.l.b16 %v83
  %v104 = vunpack.c.l.b16 %v84
  %v105 = vunpack.c.l.b16 %v85
  %v106 = vpack.c.b16 %v103, %v102
  %v107 = vpack.c.b16 %v105, %v104
  %vm110 = vcmask 261120
  %v112 = vsel %vm110, %v97, 0
  %114 = vmatprep.subr.bf16.mxu0 0
  %115 = vmatpush1.bf16.msra.mxu0 %v106
  %116 = vmatprep.subr.bf16.mxu0 0
  %117 = vmatpush1.bf16.msra.mxu0 %v107
  %118 = vmatprep.subr.bf16.mxu0 0
  %119 = vmatpush1.bf16.msra.mxu0 0
  %120 = vmatprep.subr.bf16.mxu0 0
  %121 = vmatpush1.bf16.msra.mxu0 0
  %122 = vmatprep.subr.bf16.mxu0 0
  %123 = vmatpush1.bf16.msra.mxu0 0
  %124 = vmatprep.subr.bf16.mxu0 0
  %125 = vmatpush1.bf16.msra.mxu0 0
  %126 = vmatprep.subr.bf16.mxu0 0
  %127 = vmatpush1.bf16.msra.mxu0 0
  %128 = vmatprep.subr.bf16.mxu0 0
  %129 = vmatpush1.bf16.msra.mxu0 0
  %130 = vmatprep.subr.bf16.mxu0 0
  %131 = vmatpush1.bf16.msra.mxu0 0
  %132 = vmatprep.subr.bf16.mxu0 0
  %133 = vmatpush1.bf16.msra.mxu0 0
  %134 = vmatprep.subr.bf16.mxu0 0
  %135 = vmatpush1.bf16.msra.mxu0 0
  %136 = vmatprep.subr.bf16.mxu0 0
  %137 = vmatpush1.bf16.msra.mxu0 0
  %138 = vmatprep.subr.bf16.mxu0 0
  %139 = vmatpush1.bf16.msra.mxu0 0
  %140 = vmatprep.subr.bf16.mxu0 0
  %141 = vmatpush1.bf16.msra.mxu0 0
  %142 = vmatprep.subr.bf16.mxu0 0
  %143 = vmatpush1.bf16.msra.mxu0 0
  %144 = vmatprep.subr.bf16.mxu0 0
  %145 = vmatpush1.bf16.msra.mxu0 0
  %146 = vmatprep.mubr.bf16.mxu0 0
  %147 = vmatmul.mubr.bf16.gmra.mrb[0].mxu0 %v112
  %v148 = vpop.f32.mrb[0].mxu0
  %v149 = vadd.f32 %v91, %v148
  %v150 = vpop.f32.mrb[0].mxu0
  %v151 = vpop.f32.mrb[0].mxu0
  %v152 = vadd.f32 %v91, %v151
  %v153 = vpop.f32.mrb[0].mxu0
  %154 = vdwg.mxu0
  %v155 = vld [vmem:[%s2] sm:$0xff]
  %v156 = vld [vmem:[%s2 + $0x8] sm:$0xff]
  %v157 = vpack.c.bf16 %v149, %v149
  %v158 = vpack.c.bf16 %v152, %v152
  %160 = vrot.lane.b32.xlu0 %v157, 96
  %v161 = vpop.permute.xlu0 %160
  %vm162 = vcmask 64512
  %v164 = vsel %vm162, %v157, 0
  %v167 = vsel %vm162, %v161, 0
  %169 = vmatprep.subr.bf16.mxu0 0
  %170 = vmatpush1.bf16.xpose.msra.mxu0 %v167
  %171 = vmatprep.subr.bf16.mxu0 0
  %172 = vmatpush1.bf16.xpose.msra.mxu0 0
  %173 = vmatprep.subr.bf16.mxu0 0
  %174 = vmatpush1.bf16.xpose.msra.mxu0 0
  %175 = vmatprep.subr.bf16.mxu0 0
  %176 = vmatpush1.bf16.xpose.msra.mxu0 0
  %177 = vmatprep.subr.bf16.mxu0 0
  %178 = vmatpush1.bf16.xpose.msra.mxu0 0
  %179 = vmatprep.subr.bf16.mxu0 0
  %180 = vmatpush1.bf16.xpose.msra.mxu0 0
  %181 = vmatprep.subr.bf16.mxu0 0
  %182 = vmatpush1.bf16.xpose.msra.mxu0 0
  %183 = vmatprep.subr.bf16.mxu0 0
  %184 = vmatpush1.bf16.xpose.msra.mxu0 0
  %185 = vmatprep.subr.bf16.mxu0 0
  %186 = vmatpush1.bf16.xpose.msra.mxu0 0
  %187 = vmatprep.subr.bf16.mxu0 0
  %188 = vmatpush1.bf16.xpose.msra.mxu0 0
  %189 = vmatprep.subr.bf16.mxu0 0
  %190 = vmatpush1.bf16.xpose.msra.mxu0 0
  %191 = vmatprep.subr.bf16.mxu0 0
  %192 = vmatpush1.bf16.xpose.msra.mxu0 0
  %193 = vmatprep.subr.bf16.mxu0 0
  %194 = vmatpush1.bf16.xpose.msra.mxu0 0
  %195 = vmatprep.subr.bf16.mxu0 0
  %196 = vmatpush1.bf16.xpose.msra.mxu0 0
  %197 = vmatprep.subr.bf16.mxu0 0
  %198 = vmatpush1.bf16.xpose.msra.mxu0 0
  %199 = vmatprep.subr.bf16.mxu0 0
  %200 = vmatpush1.bf16.xpose.msra.mxu0 0
  %201 = vmatprep.mubr.bf16.mxu0 0
  %202 = vmatmul.mubr.bf16.gmra.mrb[0].mxu0 %v164
  %v203 = vpop.f32.mrb[0].mxu0
  %v204 = vadd.f32 0.0, %v203
  %v205 = vpop.f32.mrb[0].mxu0
  %v206 = vpop.f32.mrb[0].mxu0
  %v207 = vpop.f32.mrb[0].mxu0
  %208 = vdwg.mxu0
  %210 = vrot.lane.b32.xlu0 %v158, 96
  %v211 = vpop.permute.xlu0 %210
  %v213 = vsel %vm162, %v158, 0
  %v216 = vsel %vm162, %v211, 0
  %218 = vmatprep.subr.bf16.mxu0 0
  %219 = vmatpush1.bf16.xpose.msra.mxu0 %v216
  %220 = vmatprep.subr.bf16.mxu0 0
  %221 = vmatpush1.bf16.xpose.msra.mxu0 0
  %222 = vmatprep.subr.bf16.mxu0 0
  %223 = vmatpush1.bf16.xpose.msra.mxu0 0
  %224 = vmatprep.subr.bf16.mxu0 0
  %225 = vmatpush1.bf16.xpose.msra.mxu0 0
  %226 = vmatprep.subr.bf16.mxu0 0
  %227 = vmatpush1.bf16.xpose.msra.mxu0 0
  %228 = vmatprep.subr.bf16.mxu0 0
  %229 = vmatpush1.bf16.xpose.msra.mxu0 0
  %230 = vmatprep.subr.bf16.mxu0 0
  %231 = vmatpush1.bf16.xpose.msra.mxu0 0
  %232 = vmatprep.subr.bf16.mxu0 0
  %233 = vmatpush1.bf16.xpose.msra.mxu0 0
  %234 = vmatprep.subr.bf16.mxu0 0
  %235 = vmatpush1.bf16.xpose.msra.mxu0 0
  %236 = vmatprep.subr.bf16.mxu0 0
  %237 = vmatpush1.bf16.xpose.msra.mxu0 0
  %238 = vmatprep.subr.bf16.mxu0 0
  %239 = vmatpush1.bf16.xpose.msra.mxu0 0
  %240 = vmatprep.subr.bf16.mxu0 0
  %241 = vmatpush1.bf16.xpose.msra.mxu0 0
  %242 = vmatprep.subr.bf16.mxu0 0
  %243 = vmatpush1.bf16.xpose.msra.mxu0 0
  %244 = vmatprep.subr.bf16.mxu0 0
  %245 = vmatpush1.bf16.xpose.msra.mxu0 0
  %246 = vmatprep.subr.bf16.mxu0 0
  %247 = vmatpush1.bf16.xpose.msra.mxu0 0
  %248 = vmatprep.subr.bf16.mxu0 0
  %249 = vmatpush1.bf16.xpose.msra.mxu0 0
  %250 = vmatprep.mubr.bf16.mxu0 0
  %251 = vmatmul.mubr.bf16.gmra.mrb[0].mxu0 %v213
  %v252 = vpop.f32.mrb[0].mxu0
  %v253 = vadd.f32 0.0, %v252
  %v254 = vpop.f32.mrb[0].mxu0
  %v255 = vpop.f32.mrb[0].mxu0
  %v256 = vpop.f32.mrb[0].mxu0
  %257 = vdwg.mxu0
  %v258 = vmul.f32 %v204, 0.35355338
  %v259 = vmul.f32 %v253, 0.35355338
  %v260 = vadd.f32 %v258, %v155
  %v261 = vadd.f32 %v259, %v156
  %v262 = vsel %vm162, %v260, -inf
  %263 = vmax.xlane.f32.xlu0 %v262
  %v264 = vpop.xlane.xlu0 %263
  %v265 = vsel %vm162, %v261, -inf
  %266 = vmax.xlane.f32.xlu0 %v265
  %v267 = vpop.xlane.xlu0 %266
  %v268 = vsub.f32 %v260, %v264
  %v269 = vsub.f32 %v261, %v267
  %v270 = vmul.f32 %v268, 1.442695
  %v271 = vpow.pop %v270
  %v272 = vmul.f32 %v269, 1.442695
  %v273 = vpow.pop %v272
  %v274 = vsel %vm162, %v271, 0.0
  %275 = vadd.xlane.f32.xlu0 %v274
  %v276 = vpop.xlane.xlu0 %275
  %v277 = vsel %vm162, %v273, 0.0
  %278 = vadd.xlane.f32.xlu0 %v277
  %v279 = vpop.xlane.xlu0 %278
  %v280 = vrcp.pop %v276
  %v281 = vrcp.pop %v279
  %v282 = vmul.f32 %v271, %v280
  %v283 = vmul.f32 %v273, %v281
  %v284 = vpack.c.bf16 %v282, %v282
  %v285 = vpack.c.bf16 %v283, %v283
  %286 = vrot.lane.b32.xlu0 %v157, 64
  %v287 = vpop.permute.xlu0 %286
  %v289 = vsel %vm162, %v284, 0
  %vm291 = vcmask 1043456
  %v293 = vsel %vm291, %v287, 0
  %295 = vmatprep.subr.bf16.mxu0 0
  %296 = vmatpush1.bf16.msra.mxu0 %v293
  %297 = vmatprep.subr.bf16.mxu0 0
  %298 = vmatpush1.bf16.msra.mxu0 0
  %299 = vmatprep.subr.bf16.mxu0 0
  %300 = vmatpush1.bf16.msra.mxu0 0
  %301 = vmatprep.subr.bf16.mxu0 0
  %302 = vmatpush1.bf16.msra.mxu0 0
  %303 = vmatprep.subr.bf16.mxu0 0
  %304 = vmatpush1.bf16.msra.mxu0 0
  %305 = vmatprep.subr.bf16.mxu0 0
  %306 = vmatpush1.bf16.msra.mxu0 0
  %307 = vmatprep.subr.bf16.mxu0 0
  %308 = vmatpush1.bf16.msra.mxu0 0
  %309 = vmatprep.subr.bf16.mxu0 0
  %310 = vmatpush1.bf16.msra.mxu0 0
  %311 = vmatprep.subr.bf16.mxu0 0
  %312 = vmatpush1.bf16.msra.mxu0 0
  %313 = vmatprep.subr.bf16.mxu0 0
  %314 = vmatpush1.bf16.msra.mxu0 0
  %315 = vmatprep.subr.bf16.mxu0 0
  %316 = vmatpush1.bf16.msra.mxu0 0
  %317 = vmatprep.subr.bf16.mxu0 0
  %318 = vmatpush1.bf16.msra.mxu0 0
  %319 = vmatprep.subr.bf16.mxu0 0
  %320 = vmatpush1.bf16.msra.mxu0 0
  %321 = vmatprep.subr.bf16.mxu0 0
  %322 = vmatpush1.bf16.msra.mxu0 0
  %323 = vmatprep.subr.bf16.mxu0 0
  %324 = vmatpush1.bf16.msra.mxu0 0
  %325 = vmatprep.subr.bf16.mxu0 0
  %326 = vmatpush1.bf16.msra.mxu0 0
  %327 = vmatprep.mubr.bf16.mxu0 0
  %328 = vmatmul.mubr.bf16.gmra.mrb[0].mxu0 %v289
  %v329 = vpop.f32.mrb[0].mxu0
  %v330 = vadd.f32 0.0, %v329
  %v331 = vpop.f32.mrb[0].mxu0
  %v332 = vpop.f32.mrb[0].mxu0
  %v333 = vpop.f32.mrb[0].mxu0
  %334 = vdwg.mxu0
  %335 = vrot.lane.b32.xlu0 %v158, 64
  %v336 = vpop.permute.xlu0 %335
  %v338 = vsel %vm162, %v285, 0
  %v341 = vsel %vm291, %v336, 0
  %343 = vmatprep.subr.bf16.mxu0 0
  %344 = vmatpush1.bf16.msra.mxu0 %v341
  %345 = vmatprep.subr.bf16.mxu0 0
  %346 = vmatpush1.bf16.msra.mxu0 0
  %347 = vmatprep.subr.bf16.mxu0 0
  %348 = vmatpush1.bf16.msra.mxu0 0
  %349 = vmatprep.subr.bf16.mxu0 0
  %350 = vmatpush1.bf16.msra.mxu0 0
  %351 = vmatprep.subr.bf16.mxu0 0
  %352 = vmatpush1.bf16.msra.mxu0 0
  %353 = vmatprep.subr.bf16.mxu0 0
  %354 = vmatpush1.bf16.msra.mxu0 0
  %355 = vmatprep.subr.bf16.mxu0 0
  %356 = vmatpush1.bf16.msra.mxu0 0
  %357 = vmatprep.subr.bf16.mxu0 0
  %358 = vmatpush1.bf16.msra.mxu0 0
  %359 = vmatprep.subr.bf16.mxu0 0
  %360 = vmatpush1.bf16.msra.mxu0 0
  %361 = vmatprep.subr.bf16.mxu0 0
  %362 = vmatpush1.bf16.msra.mxu0 0
  %363 = vmatprep.subr.bf16.mxu0 0
  %364 = vmatpush1.bf16.msra.mxu0 0
  %365 = vmatprep.subr.bf16.mxu0 0
  %366 = vmatpush1.bf16.msra.mxu0 0
  %367 = vmatprep.subr.bf16.mxu0 0
  %368 = vmatpush1.bf16.msra.mxu0 0
  %369 = vmatprep.subr.bf16.mxu0 0
  %370 = vmatpush1.bf16.msra.mxu0 0
  %371 = vmatprep.subr.bf16.mxu0 0
  %372 = vmatpush1.bf16.msra.mxu0 0
  %373 = vmatprep.subr.bf16.mxu0 0
  %374 = vmatpush1.bf16.msra.mxu0 0
  %375 = vmatprep.mubr.bf16.mxu0 0
  %376 = vmatmul.mubr.bf16.gmra.mrb[0].mxu0 %v338
  %v377 = vpop.f32.mrb[0].mxu0
  %v378 = vadd.f32 0.0, %v377
  %v379 = vpop.f32.mrb[0].mxu0
  %v380 = vpop.f32.mrb[0].mxu0
  %v381 = vpop.f32.mrb[0].mxu0
  %382 = vdwg.mxu0
  %383 = vst.msk [vmem:[#allocation2] sm:$0xff] %vm162, %v330
  %384 = vst.msk [vmem:[#allocation2 + $0x8] sm:$0xff] %vm162, %v378
  %385 = vrot.lane.b32.xlu0 %v157, 120
  %v386 = vpop.permute.xlu0 %385
  %387 = vrot.lane.b32.xlu0 %v157, 88
  %v388 = vpop.permute.xlu0 %387
  %v390 = vsel %vm162, %v386, 0
  %v393 = vsel %vm162, %v388, 0
  %395 = vmatprep.subr.bf16.mxu0 0
  %396 = vmatpush1.bf16.xpose.msra.mxu0 %v393
  %397 = vmatprep.subr.bf16.mxu0 0
  %398 = vmatpush1.bf16.xpose.msra.mxu0 0
  %399 = vmatprep.subr.bf16.mxu0 0
  %400 = vmatpush1.bf16.xpose.msra.mxu0 0
  %401 = vmatprep.subr.bf16.mxu0 0
  %402 = vmatpush1.bf16.xpose.msra.mxu0 0
  %403 = vmatprep.subr.bf16.mxu0 0
  %404 = vmatpush1.bf16.xpose.msra.mxu0 0
  %405 = vmatprep.subr.bf16.mxu0 0
  %406 = vmatpush1.bf16.xpose.msra.mxu0 0
  %407 = vmatprep.subr.bf16.mxu0 0
  %408 = vmatpush1.bf16.xpose.msra.mxu0 0
  %409 = vmatprep.subr.bf16.mxu0 0
  %410 = vmatpush1.bf16.xpose.msra.mxu0 0
  %411 = vmatprep.subr.bf16.mxu0 0
  %412 = vmatpush1.bf16.xpose.msra.mxu0 0
  %413 = vmatprep.subr.bf16.mxu0 0
  %414 = vmatpush1.bf16.xpose.msra.mxu0 0
  %415 = vmatprep.subr.bf16.mxu0 0
  %416 = vmatpush1.bf16.xpose.msra.mxu0 0
  %417 = vmatprep.subr.bf16.mxu0 0
  %418 = vmatpush1.bf16.xpose.msra.mxu0 0
  %419 = vmatprep.subr.bf16.mxu0 0
  %420 = vmatpush1.bf16.xpose.msra.mxu0 0
  %421 = vmatprep.subr.bf16.mxu0 0
  %422 = vmatpush1.bf16.xpose.msra.mxu0 0
  %423 = vmatprep.subr.bf16.mxu0 0
  %424 = vmatpush1.bf16.xpose.msra.mxu0 0
  %425 = vmatprep.subr.bf16.mxu0 0
  %426 = vmatpush1.bf16.xpose.msra.mxu0 0
  %427 = vmatprep.mubr.bf16.mxu0 0
  %428 = vmatmul.mubr.bf16.gmra.mrb[0].mxu0 %v390
  %v429 = vpop.f32.mrb[0].mxu0
  %v430 = vadd.f32 0.0, %v429
  %v431 = vpop.f32.mrb[0].mxu0
  %v432 = vpop.f32.mrb[0].mxu0
  %v433 = vpop.f32.mrb[0].mxu0
  %434 = vdwg.mxu0
  %435 = vrot.lane.b32.xlu0 %v158, 120
  %v436 = vpop.permute.xlu0 %435
  %437 = vrot.lane.b32.xlu0 %v158, 88
  %v438 = vpop.permute.xlu0 %437
  %v440 = vsel %vm162, %v436, 0
  %v443 = vsel %vm162, %v438, 0
  %445 = vmatprep.subr.bf16.mxu0 0
  %446 = vmatpush1.bf16.xpose.msra.mxu0 %v443
  %447 = vmatprep.subr.bf16.mxu0 0
  %448 = vmatpush1.bf16.xpose.msra.mxu0 0
  %449 = vmatprep.subr.bf16.mxu0 0
  %450 = vmatpush1.bf16.xpose.msra.mxu0 0
  %451 = vmatprep.subr.bf16.mxu0 0
  %452 = vmatpush1.bf16.xpose.msra.mxu0 0
  %453 = vmatprep.subr.bf16.mxu0 0
  %454 = vmatpush1.bf16.xpose.msra.mxu0 0
  %455 = vmatprep.subr.bf16.mxu0 0
  %456 = vmatpush1.bf16.xpose.msra.mxu0 0
  %457 = vmatprep.subr.bf16.mxu0 0
  %458 = vmatpush1.bf16.xpose.msra.mxu0 0
  %459 = vmatprep.subr.bf16.mxu0 0
  %460 = vmatpush1.bf16.xpose.msra.mxu0 0
  %461 = vmatprep.subr.bf16.mxu0 0
  %462 = vmatpush1.bf16.xpose.msra.mxu0 0
  %463 = vmatprep.subr.bf16.mxu0 0
  %464 = vmatpush1.bf16.xpose.msra.mxu0 0
  %465 = vmatprep.subr.bf16.mxu0 0
  %466 = vmatpush1.bf16.xpose.msra.mxu0 0
  %467 = vmatprep.subr.bf16.mxu0 0
  %468 = vmatpush1.bf16.xpose.msra.mxu0 0
  %469 = vmatprep.subr.bf16.mxu0 0
  %470 = vmatpush1.bf16.xpose.msra.mxu0 0
  %471 = vmatprep.subr.bf16.mxu0 0
  %472 = vmatpush1.bf16.xpose.msra.mxu0 0
  %473 = vmatprep.subr.bf16.mxu0 0
  %474 = vmatpush1.bf16.xpose.msra.mxu0 0
  %475 = vmatprep.subr.bf16.mxu0 0
  %476 = vmatpush1.bf16.xpose.msra.mxu0 0
  %477 = vmatprep.mubr.bf16.mxu0 0
  %478 = vmatmul.mubr.bf16.gmra.mrb[0].mxu0 %v440
  %v479 = vpop.f32.mrb[0].mxu0
  %v480 = vadd.f32 0.0, %v479
  %v481 = vpop.f32.mrb[0].mxu0
  %v482 = vpop.f32.mrb[0].mxu0
  %v483 = vpop.f32.mrb[0].mxu0
  %484 = vdwg.mxu0
  %v485 = vmul.f32 %v430, 0.35355338
  %v486 = vmul.f32 %v480, 0.35355338
  %v487 = vadd.f32 %v485, %v155
  %v488 = vadd.f32 %v486, %v156
  %v489 = vsel %vm162, %v487, -inf
  %490 = vmax.xlane.f32.xlu0 %v489
  %v491 = vpop.xlane.xlu0 %490
  %v492 = vsel %vm162, %v488, -inf
  %493 = vmax.xlane.f32.xlu0 %v492
  %v494 = vpop.xlane.xlu0 %493
  %v495 = vsub.f32 %v487, %v491
  %v496 = vsub.f32 %v488, %v494
  %v497 = vmul.f32 %v495, 1.442695
  %v498 = vpow.pop %v497
  %v499 = vmul.f32 %v496, 1.442695
  %v500 = vpow.pop %v499
  %v501 = vsel %vm162, %v498, 0.0
  %502 = vadd.xlane.f32.xlu0 %v501
  %v503 = vpop.xlane.xlu0 %502
  %v504 = vsel %vm162, %v500, 0.0
  %505 = vadd.xlane.f32.xlu0 %v504
  %v506 = vpop.xlane.xlu0 %505
  %v507 = vrcp.pop %v503
  %v508 = vrcp.pop %v506
  %v509 = vmul.f32 %v498, %v507
  %v510 = vmul.f32 %v500, %v508
  %v511 = vpack.c.bf16 %v509, %v509
  %v512 = vpack.c.bf16 %v510, %v510
  %513 = vrot.lane.b32.xlu0 %v157, 56
  %v514 = vpop.permute.xlu0 %513
  %v516 = vsel %vm162, %v511, 0
  %v519 = vsel %vm291, %v514, 0
  %521 = vmatprep.subr.bf16.mxu0 0
  %522 = vmatpush1.bf16.msra.mxu0 %v519
  %523 = vmatprep.subr.bf16.mxu0 0
  %524 = vmatpush1.bf16.msra.mxu0 0
  %525 = vmatprep.subr.bf16.mxu0 0
  %526 = vmatpush1.bf16.msra.mxu0 0
  %527 = vmatprep.subr.bf16.mxu0 0
  %528 = vmatpush1.bf16.msra.mxu0 0
  %529 = vmatprep.subr.bf16.mxu0 0
  %530 = vmatpush1.bf16.msra.mxu0 0
  %531 = vmatprep.subr.bf16.mxu0 0
  %532 = vmatpush1.bf16.msra.mxu0 0
  %533 = vmatprep.subr.bf16.mxu0 0
  %534 = vmatpush1.bf16.msra.mxu0 0
  %535 = vmatprep.subr.bf16.mxu0 0
  %536 = vmatpush1.bf16.msra.mxu0 0
  %537 = vmatprep.subr.bf16.mxu0 0
  %538 = vmatpush1.bf16.msra.mxu0 0
  %539 = vmatprep.subr.bf16.mxu0 0
  %540 = vmatpush1.bf16.msra.mxu0 0
  %541 = vmatprep.subr.bf16.mxu0 0
  %542 = vmatpush1.bf16.msra.mxu0 0
  %543 = vmatprep.subr.bf16.mxu0 0
  %544 = vmatpush1.bf16.msra.mxu0 0
  %545 = vmatprep.subr.bf16.mxu0 0
  %546 = vmatpush1.bf16.msra.mxu0 0
  %547 = vmatprep.subr.bf16.mxu0 0
  %548 = vmatpush1.bf16.msra.mxu0 0
  %549 = vmatprep.subr.bf16.mxu0 0
  %550 = vmatpush1.bf16.msra.mxu0 0
  %551 = vmatprep.subr.bf16.mxu0 0
  %552 = vmatpush1.bf16.msra.mxu0 0
  %553 = vmatprep.mubr.bf16.mxu0 0
  %554 = vmatmul.mubr.bf16.gmra.mrb[0].mxu0 %v516
  %v555 = vpop.f32.mrb[0].mxu0
  %v556 = vadd.f32 0.0, %v555
  %v557 = vpop.f32.mrb[0].mxu0
  %v558 = vpop.f32.mrb[0].mxu0
  %v559 = vpop.f32.mrb[0].mxu0
  %560 = vdwg.mxu0
  %561 = vrot.lane.b32.xlu0 %v158, 56
  %v562 = vpop.permute.xlu0 %561
  %v564 = vsel %vm162, %v512, 0
  %v567 = vsel %vm291, %v562, 0
  %569 = vmatprep.subr.bf16.mxu0 0
  %570 = vmatpush1.bf16.msra.mxu0 %v567
  %571 = vmatprep.subr.bf16.mxu0 0
  %572 = vmatpush1.bf16.msra.mxu0 0
  %573 = vmatprep.subr.bf16.mxu0 0
  %574 = vmatpush1.bf16.msra.mxu0 0
  %575 = vmatprep.subr.bf16.mxu0 0
  %576 = vmatpush1.bf16.msra.mxu0 0
  %577 = vmatprep.subr.bf16.mxu0 0
  %578 = vmatpush1.bf16.msra.mxu0 0
  %579 = vmatprep.subr.bf16.mxu0 0
  %580 = vmatpush1.bf16.msra.mxu0 0
  %581 = vmatprep.subr.bf16.mxu0 0
  %582 = vmatpush1.bf16.msra.mxu0 0
  %583 = vmatprep.subr.bf16.mxu0 0
  %584 = vmatpush1.bf16.msra.mxu0 0
  %585 = vmatprep.subr.bf16.mxu0 0
  %586 = vmatpush1.bf16.msra.mxu0 0
  %587 = vmatprep.subr.bf16.mxu0 0
  %588 = vmatpush1.bf16.msra.mxu0 0
  %589 = vmatprep.subr.bf16.mxu0 0
  %590 = vmatpush1.bf16.msra.mxu0 0
  %591 = vmatprep.subr.bf16.mxu0 0
  %592 = vmatpush1.bf16.msra.mxu0 0
  %593 = vmatprep.subr.bf16.mxu0 0
  %594 = vmatpush1.bf16.msra.mxu0 0
  %595 = vmatprep.subr.bf16.mxu0 0
  %596 = vmatpush1.bf16.msra.mxu0 0
  %597 = vmatprep.subr.bf16.mxu0 0
  %598 = vmatpush1.bf16.msra.mxu0 0
  %599 = vmatprep.subr.bf16.mxu0 0
  %600 = vmatpush1.bf16.msra.mxu0 0
  %601 = vmatprep.mubr.bf16.mxu0 0
  %602 = vmatmul.mubr.bf16.gmra.mrb[0].mxu0 %v564
  %v603 = vpop.f32.mrb[0].mxu0
  %v604 = vadd.f32 0.0, %v603
  %v605 = vpop.f32.mrb[0].mxu0
  %v606 = vpop.f32.mrb[0].mxu0
  %v607 = vpop.f32.mrb[0].mxu0
  %608 = vdwg.mxu0
  %611 = vrot.lane.b32.xlu0 %v556, 8
  %v612 = vpop.permute.xlu0 %611
  %613 = vrot.lane.b32.xlu0 %v604, 8
  %v614 = vpop.permute.xlu0 %613
  %vm617 = vcmask 130112
  %618 = vst.msk [vmem:[#allocation2] sm:$0xff] %vm617, %v612
  %619 = vst.msk [vmem:[#allocation2 + $0x8] sm:$0xff] %vm617, %v614
  %620 = vrot.lane.b32.xlu0 %v157, 112
  %v621 = vpop.permute.xlu0 %620
  %622 = vrot.lane.b32.xlu0 %v157, 80
  %v623 = vpop.permute.xlu0 %622
  %v625 = vsel %vm162, %v621, 0
  %v628 = vsel %vm162, %v623, 0
  %630 = vmatprep.subr.bf16.mxu0 0
  %631 = vmatpush1.bf16.xpose.msra.mxu0 %v628
  %632 = vmatprep.subr.bf16.mxu0 0
  %633 = vmatpush1.bf16.xpose.msra.mxu0 0
  %634 = vmatprep.subr.bf16.mxu0 0
  %635 = vmatpush1.bf16.xpose.msra.mxu0 0
  %636 = vmatprep.subr.bf16.mxu0 0
  %637 = vmatpush1.bf16.xpose.msra.mxu0 0
  %638 = vmatprep.subr.bf16.mxu0 0
  %639 = vmatpush1.bf16.xpose.msra.mxu0 0
  %640 = vmatprep.subr.bf16.mxu0 0
  %641 = vmatpush1.bf16.xpose.msra.mxu0 0
  %642 = vmatprep.subr.bf16.mxu0 0
  %643 = vmatpush1.bf16.xpose.msra.mxu0 0
  %644 = vmatprep.subr.bf16.mxu0 0
  %645 = vmatpush1.bf16.xpose.msra.mxu0 0
  %646 = vmatprep.subr.bf16.mxu0 0
  %647 = vmatpush1.bf16.xpose.msra.mxu0 0
  %648 = vmatprep.subr.bf16.mxu0 0
  %649 = vmatpush1.bf16.xpose.msra.mxu0 0
  %650 = vmatprep.subr.bf16.mxu0 0
  %651 = vmatpush1.bf16.xpose.msra.mxu0 0
  %652 = vmatprep.subr.bf16.mxu0 0
  %653 = vmatpush1.bf16.xpose.msra.mxu0 0
  %654 = vmatprep.subr.bf16.mxu0 0
  %655 = vmatpush1.bf16.xpose.msra.mxu0 0
  %656 = vmatprep.subr.bf16.mxu0 0
  %657 = vmatpush1.bf16.xpose.msra.mxu0 0
  %658 = vmatprep.subr.bf16.mxu0 0
  %659 = vmatpush1.bf16.xpose.msra.mxu0 0
  %660 = vmatprep.subr.bf16.mxu0 0
  %661 = vmatpush1.bf16.xpose.msra.mxu0 0
  %662 = vmatprep.mubr.bf16.mxu0 0
  %663 = vmatmul.mubr.bf16.gmra.mrb[0].mxu0 %v625
  %v664 = vpop.f32.mrb[0].mxu0
  %v665 = vadd.f32 0.0, %v664
  %v666 = vpop.f32.mrb[0].mxu0
  %v667 = vpop.f32.mrb[0].mxu0
  %v668 = vpop.f32.mrb[0].mxu0
  %669 = vdwg.mxu0
  %670 = vrot.lane.b32.xlu0 %v158, 112
  %v671 = vpop.permute.xlu0 %670
  %672 = vrot.lane.b32.xlu0 %v158, 80
  %v673 = vpop.permute.xlu0 %672
  %v675 = vsel %vm162, %v671, 0
  %v678 = vsel %vm162, %v673, 0
  %680 = vmatprep.subr.bf16.mxu0 0
  %681 = vmatpush1.bf16.xpose.msra.mxu0 %v678
  %682 = vmatprep.subr.bf16.mxu0 0
  %683 = vmatpush1.bf16.xpose.msra.mxu0 0
  %684 = vmatprep.subr.bf16.mxu0 0
  %685 = vmatpush1.bf16.xpose.msra.mxu0 0
  %686 = vmatprep.subr.bf16.mxu0 0
  %687 = vmatpush1.bf16.xpose.msra.mxu0 0
  %688 = vmatprep.subr.bf16.mxu0 0
  %689 = vmatpush1.bf16.xpose.msra.mxu0 0
  %690 = vmatprep.subr.bf16.mxu0 0
  %691 = vmatpush1.bf16.xpose.msra.mxu0 0
  %692 = vmatprep.subr.bf16.mxu0 0
  %693 = vmatpush1.bf16.xpose.msra.mxu0 0
  %694 = vmatprep.subr.bf16.mxu0 0
  %695 = vmatpush1.bf16.xpose.msra.mxu0 0
  %696 = vmatprep.subr.bf16.mxu0 0
  %697 = vmatpush1.bf16.xpose.msra.mxu0 0
  %698 = vmatprep.subr.bf16.mxu0 0
  %699 = vmatpush1.bf16.xpose.msra.mxu0 0
  %700 = vmatprep.subr.bf16.mxu0 0
  %701 = vmatpush1.bf16.xpose.msra.mxu0 0
  %702 = vmatprep.subr.bf16.mxu0 0
  %703 = vmatpush1.bf16.xpose.msra.mxu0 0
  %704 = vmatprep.subr.bf16.mxu0 0
  %705 = vmatpush1.bf16.xpose.msra.mxu0 0
  %706 = vmatprep.subr.bf16.mxu0 0
  %707 = vmatpush1.bf16.xpose.msra.mxu0 0
  %708 = vmatprep.subr.bf16.mxu0 0
  %709 = vmatpush1.bf16.xpose.msra.mxu0 0
  %710 = vmatprep.subr.bf16.mxu0 0
  %711 = vmatpush1.bf16.xpose.msra.mxu0 0
  %712 = vmatprep.mubr.bf16.mxu0 0
  %713 = vmatmul.mubr.bf16.gmra.mrb[0].mxu0 %v675
  %v714 = vpop.f32.mrb[0].mxu0
  %v715 = vadd.f32 0.0, %v714
  %v716 = vpop.f32.mrb[0].mxu0
  %v717 = vpop.f32.mrb[0].mxu0
  %v718 = vpop.f32.mrb[0].mxu0
  %719 = vdwg.mxu0
  %v720 = vmul.f32 %v665, 0.35355338
  %v721 = vmul.f32 %v715, 0.35355338
  %v722 = vadd.f32 %v720, %v155
  %v723 = vadd.f32 %v721, %v156
  %v724 = vsel %vm162, %v722, -inf
  %725 = vmax.xlane.f32.xlu0 %v724
  %v726 = vpop.xlane.xlu0 %725
  %v727 = vsel %vm162, %v723, -inf
  %728 = vmax.xlane.f32.xlu0 %v727
  %v729 = vpop.xlane.xlu0 %728
  %v730 = vsub.f32 %v722, %v726
  %v731 = vsub.f32 %v723, %v729
  %v732 = vmul.f32 %v730, 1.442695
  %v733 = vpow.pop %v732
  %v734 = vmul.f32 %v731, 1.442695
  %v735 = vpow.pop %v734
  %v736 = vsel %vm162, %v733, 0.0
  %737 = vadd.xlane.f32.xlu0 %v736
  %v738 = vpop.xlane.xlu0 %737
  %v739 = vsel %vm162, %v735, 0.0
  %740 = vadd.xlane.f32.xlu0 %v739
  %v741 = vpop.xlane.xlu0 %740
  %v742 = vrcp.pop %v738
  %v743 = vrcp.pop %v741
  %v744 = vmul.f32 %v733, %v742
  %v745 = vmul.f32 %v735, %v743
  %v746 = vpack.c.bf16 %v744, %v744
  %v747 = vpack.c.bf16 %v745, %v745
  %748 = vrot.lane.b32.xlu0 %v157, 48
  %v749 = vpop.permute.xlu0 %748
  %v751 = vsel %vm162, %v746, 0
  %v754 = vsel %vm291, %v749, 0
  %756 = vmatprep.subr.bf16.mxu0 0
  %757 = vmatpush1.bf16.msra.mxu0 %v754
  %758 = vmatprep.subr.bf16.mxu0 0
  %759 = vmatpush1.bf16.msra.mxu0 0
  %760 = vmatprep.subr.bf16.mxu0 0
  %761 = vmatpush1.bf16.msra.mxu0 0
  %762 = vmatprep.subr.bf16.mxu0 0
  %763 = vmatpush1.bf16.msra.mxu0 0
  %764 = vmatprep.subr.bf16.mxu0 0
  %765 = vmatpush1.bf16.msra.mxu0 0
  %766 = vmatprep.subr.bf16.mxu0 0
  %767 = vmatpush1.bf16.msra.mxu0 0
  %768 = vmatprep.subr.bf16.mxu0 0
  %769 = vmatpush1.bf16.msra.mxu0 0
  %770 = vmatprep.subr.bf16.mxu0 0
  %771 = vmatpush1.bf16.msra.mxu0 0
  %772 = vmatprep.subr.bf16.mxu0 0
  %773 = vmatpush1.bf16.msra.mxu0 0
  %774 = vmatprep.subr.bf16.mxu0 0
  %775 = vmatpush1.bf16.msra.mxu0 0
  %776 = vmatprep.subr.bf16.mxu0 0
  %777 = vmatpush1.bf16.msra.mxu0 0
  %778 = vmatprep.subr.bf16.mxu0 0
  %779 = vmatpush1.bf16.msra.mxu0 0
  %780 = vmatprep.subr.bf16.mxu0 0
  %781 = vmatpush1.bf16.msra.mxu0 0
  %782 = vmatprep.subr.bf16.mxu0 0
  %783 = vmatpush1.bf16.msra.mxu0 0
  %784 = vmatprep.subr.bf16.mxu0 0
  %785 = vmatpush1.bf16.msra.mxu0 0
  %786 = vmatprep.subr.bf16.mxu0 0
  %787 = vmatpush1.bf16.msra.mxu0 0
  %788 = vmatprep.mubr.bf16.mxu0 0
  %789 = vmatmul.mubr.bf16.gmra.mrb[0].mxu0 %v751
  %v790 = vpop.f32.mrb[0].mxu0
  %v791 = vadd.f32 0.0, %v790
  %v792 = vpop.f32.mrb[0].mxu0
  %v793 = vpop.f32.mrb[0].mxu0
  %v794 = vpop.f32.mrb[0].mxu0
  %795 = vdwg.mxu0
  %796 = vrot.lane.b32.xlu0 %v158, 48
  %v797 = vpop.permute.xlu0 %796
  %v799 = vsel %vm162, %v747, 0
  %v802 = vsel %vm291, %v797, 0
  %804 = vmatprep.subr.bf16.mxu0 0
  %805 = vmatpush1.bf16.msra.mxu0 %v802
  %806 = vmatprep.subr.bf16.mxu0 0
  %807 = vmatpush1.bf16.msra.mxu0 0
  %808 = vmatprep.subr.bf16.mxu0 0
  %809 = vmatpush1.bf16.msra.mxu0 0
  %810 = vmatprep.subr.bf16.mxu0 0
  %811 = vmatpush1.bf16.msra.mxu0 0
  %812 = vmatprep.subr.bf16.mxu0 0
  %813 = vmatpush1.bf16.msra.mxu0 0
  %814 = vmatprep.subr.bf16.mxu0 0
  %815 = vmatpush1.bf16.msra.mxu0 0
  %816 = vmatprep.subr.bf16.mxu0 0
  %817 = vmatpush1.bf16.msra.mxu0 0
  %818 = vmatprep.subr.bf16.mxu0 0
  %819 = vmatpush1.bf16.msra.mxu0 0
  %820 = vmatprep.subr.bf16.mxu0 0
  %821 = vmatpush1.bf16.msra.mxu0 0
  %822 = vmatprep.subr.bf16.mxu0 0
  %823 = vmatpush1.bf16.msra.mxu0 0
  %824 = vmatprep.subr.bf16.mxu0 0
  %825 = vmatpush1.bf16.msra.mxu0 0
  %826 = vmatprep.subr.bf16.mxu0 0
  %827 = vmatpush1.bf16.msra.mxu0 0
  %828 = vmatprep.subr.bf16.mxu0 0
  %829 = vmatpush1.bf16.msra.mxu0 0
  %830 = vmatprep.subr.bf16.mxu0 0
  %831 = vmatpush1.bf16.msra.mxu0 0
  %832 = vmatprep.subr.bf16.mxu0 0
  %833 = vmatpush1.bf16.msra.mxu0 0
  %834 = vmatprep.subr.bf16.mxu0 0
  %835 = vmatpush1.bf16.msra.mxu0 0
  %836 = vmatprep.mubr.bf16.mxu0 0
  %837 = vmatmul.mubr.bf16.gmra.mrb[0].mxu0 %v799
  %v838 = vpop.f32.mrb[0].mxu0
  %v839 = vadd.f32 0.0, %v838
  %v840 = vpop.f32.mrb[0].mxu0
  %v841 = vpop.f32.mrb[0].mxu0
  %v842 = vpop.f32.mrb[0].mxu0
  %843 = vdwg.mxu0
  %846 = vrot.lane.b32.xlu0 %v791, 16
  %v847 = vpop.permute.xlu0 %846
  %848 = vrot.lane.b32.xlu0 %v839, 16
  %v849 = vpop.permute.xlu0 %848
  %vm852 = vcmask 195712
  %853 = vst.msk [vmem:[#allocation2] sm:$0xff] %vm852, %v847
  %854 = vst.msk [vmem:[#allocation2 + $0x8] sm:$0xff] %vm852, %v849
  %855 = vrot.lane.b32.xlu0 %v157, 104
  %v856 = vpop.permute.xlu0 %855
  %857 = vrot.lane.b32.xlu0 %v157, 72
  %v858 = vpop.permute.xlu0 %857
  %v860 = vsel %vm162, %v856, 0
  %v863 = vsel %vm162, %v858, 0
  %865 = vmatprep.subr.bf16.mxu0 0
  %866 = vmatpush1.bf16.xpose.msra.mxu0 %v863
  %867 = vmatprep.subr.bf16.mxu0 0
  %868 = vmatpush1.bf16.xpose.msra.mxu0 0
  %869 = vmatprep.subr.bf16.mxu0 0
  %870 = vmatpush1.bf16.xpose.msra.mxu0 0
  %871 = vmatprep.subr.bf16.mxu0 0
  %872 = vmatpush1.bf16.xpose.msra.mxu0 0
  %873 = vmatprep.subr.bf16.mxu0 0
  %874 = vmatpush1.bf16.xpose.msra.mxu0 0
  %875 = vmatprep.subr.bf16.mxu0 0
  %876 = vmatpush1.bf16.xpose.msra.mxu0 0
  %877 = vmatprep.subr.bf16.mxu0 0
  %878 = vmatpush1.bf16.xpose.msra.mxu0 0
  %879 = vmatprep.subr.bf16.mxu0 0
  %880 = vmatpush1.bf16.xpose.msra.mxu0 0
  %881 = vmatprep.subr.bf16.mxu0 0
  %882 = vmatpush1.bf16.xpose.msra.mxu0 0
  %883 = vmatprep.subr.bf16.mxu0 0
  %884 = vmatpush1.bf16.xpose.msra.mxu0 0
  %885 = vmatprep.subr.bf16.mxu0 0
  %886 = vmatpush1.bf16.xpose.msra.mxu0 0
  %887 = vmatprep.subr.bf16.mxu0 0
  %888 = vmatpush1.bf16.xpose.msra.mxu0 0
  %889 = vmatprep.subr.bf16.mxu0 0
  %890 = vmatpush1.bf16.xpose.msra.mxu0 0
  %891 = vmatprep.subr.bf16.mxu0 0
  %892 = vmatpush1.bf16.xpose.msra.mxu0 0
  %893 = vmatprep.subr.bf16.mxu0 0
  %894 = vmatpush1.bf16.xpose.msra.mxu0 0
  %895 = vmatprep.subr.bf16.mxu0 0
  %896 = vmatpush1.bf16.xpose.msra.mxu0 0
  %897 = vmatprep.mubr.bf16.mxu0 0
  %898 = vmatmul.mubr.bf16.gmra.mrb[0].mxu0 %v860
  %v899 = vpop.f32.mrb[0].mxu0
  %v900 = vadd.f32 0.0, %v899
  %v901 = vpop.f32.mrb[0].mxu0
  %v902 = vpop.f32.mrb[0].mxu0
  %v903 = vpop.f32.mrb[0].mxu0
  %904 = vdwg.mxu0
  %905 = vrot.lane.b32.xlu0 %v158, 104
  %v906 = vpop.permute.xlu0 %905
  %907 = vrot.lane.b32.xlu0 %v158, 72
  %v908 = vpop.permute.xlu0 %907
  %v910 = vsel %vm162, %v906, 0
  %v913 = vsel %vm162, %v908, 0
  %915 = vmatprep.subr.bf16.mxu0 0
  %916 = vmatpush1.bf16.xpose.msra.mxu0 %v913
  %917 = vmatprep.subr.bf16.mxu0 0
  %918 = vmatpush1.bf16.xpose.msra.mxu0 0
  %919 = vmatprep.subr.bf16.mxu0 0
  %920 = vmatpush1.bf16.xpose.msra.mxu0 0
  %921 = vmatprep.subr.bf16.mxu0 0
  %922 = vmatpush1.bf16.xpose.msra.mxu0 0
  %923 = vmatprep.subr.bf16.mxu0 0
  %924 = vmatpush1.bf16.xpose.msra.mxu0 0
  %925 = vmatprep.subr.bf16.mxu0 0
  %926 = vmatpush1.bf16.xpose.msra.mxu0 0
  %927 = vmatprep.subr.bf16.mxu0 0
  %928 = vmatpush1.bf16.xpose.msra.mxu0 0
  %929 = vmatprep.subr.bf16.mxu0 0
  %930 = vmatpush1.bf16.xpose.msra.mxu0 0
  %931 = vmatprep.subr.bf16.mxu0 0
  %932 = vmatpush1.bf16.xpose.msra.mxu0 0
  %933 = vmatprep.subr.bf16.mxu0 0
  %934 = vmatpush1.bf16.xpose.msra.mxu0 0
  %935 = vmatprep.subr.bf16.mxu0 0
  %936 = vmatpush1.bf16.xpose.msra.mxu0 0
  %937 = vmatprep.subr.bf16.mxu0 0
  %938 = vmatpush1.bf16.xpose.msra.mxu0 0
  %939 = vmatprep.subr.bf16.mxu0 0
  %940 = vmatpush1.bf16.xpose.msra.mxu0 0
  %941 = vmatprep.subr.bf16.mxu0 0
  %942 = vmatpush1.bf16.xpose.msra.mxu0 0
  %943 = vmatprep.subr.bf16.mxu0 0
  %944 = vmatpush1.bf16.xpose.msra.mxu0 0
  %945 = vmatprep.subr.bf16.mxu0 0
  %946 = vmatpush1.bf16.xpose.msra.mxu0 0
  %947 = vmatprep.mubr.bf16.mxu0 0
  %948 = vmatmul.mubr.bf16.gmra.mrb[0].mxu0 %v910
  %v949 = vpop.f32.mrb[0].mxu0
  %v950 = vadd.f32 0.0, %v949
  %v951 = vpop.f32.mrb[0].mxu0
  %v952 = vpop.f32.mrb[0].mxu0
  %v953 = vpop.f32.mrb[0].mxu0
  %954 = vdwg.mxu0
  %v955 = vmul.f32 %v900, 0.35355338
  %v956 = vmul.f32 %v950, 0.35355338
  %v957 = vadd.f32 %v955, %v155
  %v958 = vadd.f32 %v956, %v156
  %v959 = vsel %vm162, %v957, -inf
  %960 = vmax.xlane.f32.xlu0 %v959
  %v961 = vpop.xlane.xlu0 %960
  %v962 = vsel %vm162, %v958, -inf
  %963 = vmax.xlane.f32.xlu0 %v962
  %v964 = vpop.xlane.xlu0 %963
  %v965 = vsub.f32 %v957, %v961
  %v966 = vsub.f32 %v958, %v964
  %v967 = vmul.f32 %v965, 1.442695
  %v968 = vpow.pop %v967
  %v969 = vmul.f32 %v966, 1.442695
  %v970 = vpow.pop %v969
  %v971 = vsel %vm162, %v968, 0.0
  %972 = vadd.xlane.f32.xlu0 %v971
  %v973 = vpop.xlane.xlu0 %972
  %v974 = vsel %vm162, %v970, 0.0
  %975 = vadd.xlane.f32.xlu0 %v974
  %v976 = vpop.xlane.xlu0 %975
  %v977 = vrcp.pop %v973
  %v978 = vrcp.pop %v976
  %v979 = vmul.f32 %v968, %v977
  %v980 = vmul.f32 %v970, %v978
  %v981 = vpack.c.bf16 %v979, %v979
  %v982 = vpack.c.bf16 %v980, %v980
  %983 = vrot.lane.b32.xlu0 %v157, 40
  %v984 = vpop.permute.xlu0 %983
  %v986 = vsel %vm162, %v981, 0
  %v989 = vsel %vm291, %v984, 0
  %991 = vmatprep.subr.bf16.mxu0 0
  %992 = vmatpush1.bf16.msra.mxu0 %v989
  %993 = vmatprep.subr.bf16.mxu0 0
  %994 = vmatpush1.bf16.msra.mxu0 0
  %995 = vmatprep.subr.bf16.mxu0 0
  %996 = vmatpush1.bf16.msra.mxu0 0
  %997 = vmatprep.subr.bf16.mxu0 0
  %998 = vmatpush1.bf16.msra.mxu0 0
  %999 = vmatprep.subr.bf16.mxu0 0
  %1000 = vmatpush1.bf16.msra.mxu0 0
  %1001 = vmatprep.subr.bf16.mxu0 0
  %1002 = vmatpush1.bf16.msra.mxu0 0
  %1003 = vmatprep.subr.bf16.mxu0 0
  %1004 = vmatpush1.bf16.msra.mxu0 0
  %1005 = vmatprep.subr.bf16.mxu0 0
  %1006 = vmatpush1.bf16.msra.mxu0 0
  %1007 = vmatprep.subr.bf16.mxu0 0
  %1008 = vmatpush1.bf16.msra.mxu0 0
  %1009 = vmatprep.subr.bf16.mxu0 0
  %1010 = vmatpush1.bf16.msra.mxu0 0
  %1011 = vmatprep.subr.bf16.mxu0 0
  %1012 = vmatpush1.bf16.msra.mxu0 0
  %1013 = vmatprep.subr.bf16.mxu0 0
  %1014 = vmatpush1.bf16.msra.mxu0 0
  %1015 = vmatprep.subr.bf16.mxu0 0
  %1016 = vmatpush1.bf16.msra.mxu0 0
  %1017 = vmatprep.subr.bf16.mxu0 0
  %1018 = vmatpush1.bf16.msra.mxu0 0
  %1019 = vmatprep.subr.bf16.mxu0 0
  %1020 = vmatpush1.bf16.msra.mxu0 0
  %1021 = vmatprep.subr.bf16.mxu0 0
  %1022 = vmatpush1.bf16.msra.mxu0 0
  %1023 = vmatprep.mubr.bf16.mxu0 0
  %1024 = vmatmul.mubr.bf16.gmra.mrb[0].mxu0 %v986
  %v1025 = vpop.f32.mrb[0].mxu0
  %v1026 = vadd.f32 0.0, %v1025
  %v1027 = vpop.f32.mrb[0].mxu0
  %v1028 = vpop.f32.mrb[0].mxu0
  %v1029 = vpop.f32.mrb[0].mxu0
  %1030 = vdwg.mxu0
  %1031 = vrot.lane.b32.xlu0 %v158, 40
  %v1032 = vpop.permute.xlu0 %1031
  %v1034 = vsel %vm162, %v982, 0
  %v1037 = vsel %vm291, %v1032, 0
  %1039 = vmatprep.subr.bf16.mxu0 0
  %1040 = vmatpush1.bf16.msra.mxu0 %v1037
  %1041 = vmatprep.subr.bf16.mxu0 0
  %1042 = vmatpush1.bf16.msra.mxu0 0
  %1043 = vmatprep.subr.bf16.mxu0 0
  %1044 = vmatpush1.bf16.msra.mxu0 0
  %1045 = vmatprep.subr.bf16.mxu0 0
  %1046 = vmatpush1.bf16.msra.mxu0 0
  %1047 = vmatprep.subr.bf16.mxu0 0
  %1048 = vmatpush1.bf16.msra.mxu0 0
  %1049 = vmatprep.subr.bf16.mxu0 0
  %1050 = vmatpush1.bf16.msra.mxu0 0
  %1051 = vmatprep.subr.bf16.mxu0 0
  %1052 = vmatpush1.bf16.msra.mxu0 0
  %1053 = vmatprep.subr.bf16.mxu0 0
  %1054 = vmatpush1.bf16.msra.mxu0 0
  %1055 = vmatprep.subr.bf16.mxu0 0
  %1056 = vmatpush1.bf16.msra.mxu0 0
  %1057 = vmatprep.subr.bf16.mxu0 0
  %1058 = vmatpush1.bf16.msra.mxu0 0
  %1059 = vmatprep.subr.bf16.mxu0 0
  %1060 = vmatpush1.bf16.msra.mxu0 0
  %1061 = vmatprep.subr.bf16.mxu0 0
  %1062 = vmatpush1.bf16.msra.mxu0 0
  %1063 = vmatprep.subr.bf16.mxu0 0
  %1064 = vmatpush1.bf16.msra.mxu0 0
  %1065 = vmatprep.subr.bf16.mxu0 0
  %1066 = vmatpush1.bf16.msra.mxu0 0
  %1067 = vmatprep.subr.bf16.mxu0 0
  %1068 = vmatpush1.bf16.msra.mxu0 0
  %1069 = vmatprep.subr.bf16.mxu0 0
  %1070 = vmatpush1.bf16.msra.mxu0 0
  %1071 = vmatprep.mubr.bf16.mxu0 0
  %1072 = vmatmul.mubr.bf16.gmra.mrb[0].mxu0 %v1034
  %v1073 = vpop.f32.mrb[0].mxu0
  %v1074 = vadd.f32 0.0, %v1073
  %v1075 = vpop.f32.mrb[0].mxu0
  %v1076 = vpop.f32.mrb[0].mxu0
  %v1077 = vpop.f32.mrb[0].mxu0
  %1078 = vdwg.mxu0
  %1081 = vrot.lane.b32.xlu0 %v1026, 24
  %v1082 = vpop.permute.xlu0 %1081
  %1083 = vrot.lane.b32.xlu0 %v1074, 24
  %v1084 = vpop.permute.xlu0 %1083
  %vm1087 = vcmask 261312
  %1088 = vst.msk [vmem:[#allocation2] sm:$0xff] %vm1087, %v1082
  %1089 = vst.msk [vmem:[#allocation2 + $0x8] sm:$0xff] %vm1087, %v1084
  %v1090 = vld [vmem:[#allocation2] sm:$0xff]
  %v1091 = vld [vmem:[#allocation2 + $0x8] sm:$0xff]
  %v1092 = vpack.c.bf16 %v1091, %v1090
  %v1093 = vld [vmem:[%s6] sm:$0xf]
  %v1094 = vld [vmem:[%s6 + $0x4] sm:$0xf]
  %v1095 = vld [vmem:[%s6 + $0x8] sm:$0xf]
  %v1096 = vld [vmem:[%s6 + $0xc] sm:$0xf]
  %v1097 = vld [vmem:[%s7] sm:$0x1]
  %v1099 = vlaneseq
  %v1100 = vshrl.u32 %v1099, 7
  %v1101 = vsub.s32 0, %v1100
  %v1102 = vrot.slane %v1097, %v1101
  %v1108 = vunpack.c.l.b16 %v1093
  %v1109 = vunpack.c.l.b16 %v1094
  %v1110 = vunpack.c.l.b16 %v1095
  %v1111 = vunpack.c.l.b16 %v1096
  %v1112 = vpack.c.b16 %v1109, %v1108
  %v1113 = vpack.c.b16 %v1111, %v1110
  %v1117 = vsel %vm110, %v1092, 0
  %1119 = vmatprep.subr.bf16.mxu0 0
  %1120 = vmatpush1.bf16.msra.mxu0 %v1112
  %1121 = vmatprep.subr.bf16.mxu0 0
  %1122 = vmatpush1.bf16.msra.mxu0 %v1113
  %1123 = vmatprep.subr.bf16.mxu0 0
  %1124 = vmatpush1.bf16.msra.mxu0 0
  %1125 = vmatprep.subr.bf16.mxu0 0
  %1126 = vmatpush1.bf16.msra.mxu0 0
  %1127 = vmatprep.subr.bf16.mxu0 0
  %1128 = vmatpush1.bf16.msra.mxu0 0
  %1129 = vmatprep.subr.bf16.mxu0 0
  %1130 = vmatpush1.bf16.msra.mxu0 0
  %1131 = vmatprep.subr.bf16.mxu0 0
  %1132 = vmatpush1.bf16.msra.mxu0 0
  %1133 = vmatprep.subr.bf16.mxu0 0
  %1134 = vmatpush1.bf16.msra.mxu0 0
  %1135 = vmatprep.subr.bf16.mxu0 0
  %1136 = vmatpush1.bf16.msra.mxu0 0
  %1137 = vmatprep.subr.bf16.mxu0 0
  %1138 = vmatpush1.bf16.msra.mxu0 0
  %1139 = vmatprep.subr.bf16.mxu0 0
  %1140 = vmatpush1.bf16.msra.mxu0 0
  %1141 = vmatprep.subr.bf16.mxu0 0
  %1142 = vmatpush1.bf16.msra.mxu0 0
  %1143 = vmatprep.subr.bf16.mxu0 0
  %1144 = vmatpush1.bf16.msra.mxu0 0
  %1145 = vmatprep.subr.bf16.mxu0 0
  %1146 = vmatpush1.bf16.msra.mxu0 0
  %1147 = vmatprep.subr.bf16.mxu0 0
  %1148 = vmatpush1.bf16.msra.mxu0 0
  %1149 = vmatprep.subr.bf16.mxu0 0
  %1150 = vmatpush1.bf16.msra.mxu0 0
  %1151 = vmatprep.mubr.bf16.mxu0 0
  %1152 = vmatmul.mubr.bf16.gmra.mrb[0].mxu0 %v1117
  %v1153 = vpop.f32.mrb[0].mxu0
  %v1154 = vadd.f32 %v1102, %v1153
  %v1155 = vpop.f32.mrb[0].mxu0
  %v1156 = vpop.f32.mrb[0].mxu0
  %v1157 = vadd.f32 %v1102, %v1156
  %v1158 = vpop.f32.mrb[0].mxu0
  %1159 = vdwg.mxu0
  %v1160 = vadd.f32 %v80, %v1154
  %v1161 = vadd.f32 %v81, %v1157
  %v1162 = vld [vmem:[%s8] sm:$0x1]
  %v1163 = vld [vmem:[%s9] sm:$0x1]
  %v1164 = vsel %vm110, %v1160, 0.0
  %1165 = vadd.xlane.f32.xlu0 %v1164
  %v1166 = vpop.xlane.xlu0 %1165
  %v1167 = vsel %vm110, %v1161, 0.0
  %1168 = vadd.xlane.f32.xlu0 %v1167
  %v1169 = vpop.xlane.xlu0 %1168
  %v1170 = vrcp.pop 32.0
  %v1171 = vmul.f32 %v1166, %v1170
  %v1172 = vmul.f32 %v1169, %v1170
  %v1173 = vsub.f32 %v1160, %v1171
  %v1174 = vsub.f32 %v1161, %v1172
  %v1175 = vmul.f32 %v1173, %v1173
  %v1176 = vmul.f32 %v1174, %v1174
  %v1177 = vsel %vm110, %v1175, 0.0
  %1178 = vadd.xlane.f32.xlu0 %v1177
  %v1179 = vpop.xlane.xlu0 %1178
  %v1180 = vsel %vm110, %v1176, 0.0
  %1181 = vadd.xlane.f32.xlu0 %v1180
  %v1182 = vpop.xlane.xlu0 %1181
  %v1183 = vmul.f32 %v1179, %v1170
  %v1184 = vmul.f32 %v1182, %v1170
  %v1185 = vadd.f32 %v1183, 1e-05
  %v1186 = vadd.f32 %v1184, 1e-05
  %v1187 = vrsqrt.pop %v1185
  %v1188 = vrsqrt.pop %v1186
  %v1189 = vmul.f32 %v1173, %v1187
  %v1190 = vmul.f32 %v1174, %v1188
  %v1192 = vlaneseq
  %v1193 = vshrl.u32 %v1192, 7
  %v1194 = vsub.s32 0, %v1193
  %v1195 = vrot.slane %v1162, %v1194
  %v1197 = vmul.f32 %v1189, %v1195
  %v1198 = vmul.f32 %v1190, %v1195
  %v1200 = vlaneseq
  %v1201 = vshrl.u32 %v1200, 7
  %v1202 = vsub.s32 0, %v1201
  %v1203 = vrot.slane %v1163, %v1202
  %v1205 = vadd.f32 %v1197, %v1203
  %v1206 = vadd.f32 %v1198, %v1203
  %v1207 = vpack.c.bf16 %v1206, %v1205
  %v1208 = vld [vmem:[%s10] sm:$0xf]
  %v1209 = vld [vmem:[%s10 + $0x4] sm:$0xf]
  %v1210 = vld [vmem:[%s10 + $0x8] sm:$0xf]
  %v1211 = vld [vmem:[%s10 + $0xc] sm:$0xf]
  %v1212 = vld [vmem:[%s11] sm:$0x1]
  %v1214 = vlaneseq
  %v1215 = vshrl.u32 %v1214, 7
  %v1216 = vsub.s32 0, %v1215
  %v1217 = vrot.slane %v1212, %v1216
  %v1223 = vunpack.c.l.b16 %v1208
  %v1224 = vunpack.c.l.b16 %v1209
  %v1225 = vunpack.c.l.b16 %v1210
  %v1226 = vunpack.c.l.b16 %v1211
  %v1227 = vpack.c.b16 %v1224, %v1223
  %v1228 = vpack.c.b16 %v1226, %v1225
  %v1232 = vsel %vm110, %v1207, 0
  %1234 = vmatprep.subr.bf16.mxu0 0
  %1235 = vmatpush1.bf16.msra.mxu0 %v1227
  %1236 = vmatprep.subr.bf16.mxu0 0
  %1237 = vmatpush1.bf16.msra.mxu0 %v1228
  %1238 = vmatprep.subr.bf16.mxu0 0
  %1239 = vmatpush1.bf16.msra.mxu0 0
  %1240 = vmatprep.subr.bf16.mxu0 0
  %1241 = vmatpush1.bf16.msra.mxu0 0
  %1242 = vmatprep.subr.bf16.mxu0 0
  %1243 = vmatpush1.bf16.msra.mxu0 0
  %1244 = vmatprep.subr.bf16.mxu0 0
  %1245 = vmatpush1.bf16.msra.mxu0 0
  %1246 = vmatprep.subr.bf16.mxu0 0
  %1247 = vmatpush1.bf16.msra.mxu0 0
  %1248 = vmatprep.subr.bf16.mxu0 0
  %1249 = vmatpush1.bf16.msra.mxu0 0
  %1250 = vmatprep.subr.bf16.mxu0 0
  %1251 = vmatpush1.bf16.msra.mxu0 0
  %1252 = vmatprep.subr.bf16.mxu0 0
  %1253 = vmatpush1.bf16.msra.mxu0 0
  %1254 = vmatprep.subr.bf16.mxu0 0
  %1255 = vmatpush1.bf16.msra.mxu0 0
  %1256 = vmatprep.subr.bf16.mxu0 0
  %1257 = vmatpush1.bf16.msra.mxu0 0
  %1258 = vmatprep.subr.bf16.mxu0 0
  %1259 = vmatpush1.bf16.msra.mxu0 0
  %1260 = vmatprep.subr.bf16.mxu0 0
  %1261 = vmatpush1.bf16.msra.mxu0 0
  %1262 = vmatprep.subr.bf16.mxu0 0
  %1263 = vmatpush1.bf16.msra.mxu0 0
  %1264 = vmatprep.subr.bf16.mxu0 0
  %1265 = vmatpush1.bf16.msra.mxu0 0
  %1266 = vmatprep.mubr.bf16.mxu0 0
  %1267 = vmatmul.mubr.bf16.gmra.mrb[0].mxu0 %v1232
  %v1268 = vpop.f32.mrb[0].mxu0
  %v1269 = vadd.f32 %v1217, %v1268
  %v1270 = vpop.f32.mrb[0].mxu0
  %v1271 = vpop.f32.mrb[0].mxu0
  %v1272 = vadd.f32 %v1217, %v1271
  %v1273 = vpop.f32.mrb[0].mxu0
  %1274 = vdwg.mxu0
  %v1275 = vld [vmem:[%s1] sm:$0xf]
  %v1276 = vld [vmem:[%s1 + $0x4] sm:$0xf]
  %v1277 = vld [vmem:[%s12] sm:$0xf]
  %v1278 = vld [vmem:[%s12 + $0x4] sm:$0xf]
  %v1279 = vld [vmem:[%s12 + $0x8] sm:$0xf]
  %v1280 = vld [vmem:[%s12 + $0xc] sm:$0xf]
  %v1281 = vld [vmem:[%s13] sm:$0x1]
  %v1283 = vlaneseq
  %v1284 = vshrl.u32 %v1283, 7
  %v1285 = vsub.s32 0, %v1284
  %v1286 = vrot.slane %v1281, %v1285
  %v1290 = vunpack.c.l.b16 %v1275
  %v1291 = vunpack.c.l.b16 %v1276
  %v1292 = vpack.c.b16 %v1291, %v1290
  %v1297 = vunpack.c.l.b16 %v1277
  %v1298 = vunpack.c.l.b16 %v1278
  %v1299 = vunpack.c.l.b16 %v1279
  %v1300 = vunpack.c.l.b16 %v1280
  %v1301 = vpack.c.b16 %v1298, %v1297
  %v1302 = vpack.c.b16 %v1300, %v1299
  %v1306 = vsel %vm110, %v1292, 0
  %1308 = vmatprep.subr.bf16.mxu0 0
  %1309 = vmatpush1.bf16.msra.mxu0 %v1301
  %1310 = vmatprep.subr.bf16.mxu0 0
  %1311 = vmatpush1.bf16.msra.mxu0 %v1302
  %1312 = vmatprep.subr.bf16.mxu0 0
  %1313 = vmatpush1.bf16.msra.mxu0 0
  %1314 = vmatprep.subr.bf16.mxu0 0
  %1315 = vmatpush1.bf16.msra.mxu0 0
  %1316 = vmatprep.subr.bf16.mxu0 0
  %1317 = vmatpush1.bf16.msra.mxu0 0
  %1318 = vmatprep.subr.bf16.mxu0 0
  %1319 = vmatpush1.bf16.msra.mxu0 0
  %1320 = vmatprep.subr.bf16.mxu0 0
  %1321 = vmatpush1.bf16.msra.mxu0 0
  %1322 = vmatprep.subr.bf16.mxu0 0
  %1323 = vmatpush1.bf16.msra.mxu0 0
  %1324 = vmatprep.subr.bf16.mxu0 0
  %1325 = vmatpush1.bf16.msra.mxu0 0
  %1326 = vmatprep.subr.bf16.mxu0 0
  %1327 = vmatpush1.bf16.msra.mxu0 0
  %1328 = vmatprep.subr.bf16.mxu0 0
  %1329 = vmatpush1.bf16.msra.mxu0 0
  %1330 = vmatprep.subr.bf16.mxu0 0
  %1331 = vmatpush1.bf16.msra.mxu0 0
  %1332 = vmatprep.subr.bf16.mxu0 0
  %1333 = vmatpush1.bf16.msra.mxu0 0
  %1334 = vmatprep.subr.bf16.mxu0 0
  %1335 = vmatpush1.bf16.msra.mxu0 0
  %1336 = vmatprep.subr.bf16.mxu0 0
  %1337 = vmatpush1.bf16.msra.mxu0 0
  %1338 = vmatprep.subr.bf16.mxu0 0
  %1339 = vmatpush1.bf16.msra.mxu0 0
  %1340 = vmatprep.mubr.bf16.mxu0 0
  %1341 = vmatmul.mubr.bf16.gmra.mrb[0].mxu0 %v1306
  %v1342 = vpop.f32.mrb[0].mxu0
  %v1343 = vadd.f32 %v1286, %v1342
  %v1344 = vpop.f32.mrb[0].mxu0
  %v1345 = vpop.f32.mrb[0].mxu0
  %v1346 = vadd.f32 %v1286, %v1345
  %v1347 = vpop.f32.mrb[0].mxu0
  %1348 = vdwg.mxu0
  %v1349 = vld [vmem:[%s3] sm:$0x1]
  %v1350 = vld [vmem:[%s3 + $0x1] sm:$0x1]
  %v1351 = vpack.c.bf16 %v1269, %v1269
  %v1352 = vpack.c.bf16 %v1272, %v1272
  %v1353 = vpack.c.bf16 %v1343, %v1343
  %v1354 = vpack.c.bf16 %v1346, %v1346
  %v1356 = vsel %vm162, %v1351, 0
  %v1359 = vsel %vm162, %v1353, 0
  %1361 = vmatprep.subr.bf16.mxu0 0
  %1362 = vmatpush1.bf16.xpose.msra.mxu0 %v1359
  %1363 = vmatprep.subr.bf16.mxu0 0
  %1364 = vmatpush1.bf16.xpose.msra.mxu0 0
  %1365 = vmatprep.subr.bf16.mxu0 0
  %1366 = vmatpush1.bf16.xpose.msra.mxu0 0
  %1367 = vmatprep.subr.bf16.mxu0 0
  %1368 = vmatpush1.bf16.xpose.msra.mxu0 0
  %1369 = vmatprep.subr.bf16.mxu0 0
  %1370 = vmatpush1.bf16.xpose.msra.mxu0 0
  %1371 = vmatprep.subr.bf16.mxu0 0
  %1372 = vmatpush1.bf16.xpose.msra.mxu0 0
  %1373 = vmatprep.subr.bf16.mxu0 0
  %1374 = vmatpush1.bf16.xpose.msra.mxu0 0
  %1375 = vmatprep.subr.bf16.mxu0 0
  %1376 = vmatpush1.bf16.xpose.msra.mxu0 0
  %1377 = vmatprep.subr.bf16.mxu0 0
  %1378 = vmatpush1.bf16.xpose.msra.mxu0 0
  %1379 = vmatprep.subr.bf16.mxu0 0
  %1380 = vmatpush1.bf16.xpose.msra.mxu0 0
  %1381 = vmatprep.subr.bf16.mxu0 0
  %1382 = vmatpush1.bf16.xpose.msra.mxu0 0
  %1383 = vmatprep.subr.bf16.mxu0 0
  %1384 = vmatpush1.bf16.xpose.msra.mxu0 0
  %1385 = vmatprep.subr.bf16.mxu0 0
  %1386 = vmatpush1.bf16.xpose.msra.mxu0 0
  %1387 = vmatprep.subr.bf16.mxu0 0
  %1388 = vmatpush1.bf16.xpose.msra.mxu0 0
  %1389 = vmatprep.subr.bf16.mxu0 0
  %1390 = vmatpush1.bf16.xpose.msra.mxu0 0
  %1391 = vmatprep.subr.bf16.mxu0 0
  %1392 = vmatpush1.bf16.xpose.msra.mxu0 0
  %1393 = vmatprep.mubr.bf16.mxu0 0
  %1394 = vmatmul.mubr.bf16.gmra.mrb[0].mxu0 %v1356
  %v1395 = vpop.f32.mrb[0].mxu0
  %v1396 = vadd.f32 0.0, %v1395
  %v1397 = vpop.f32.mrb[0].mxu0
  %v1398 = vpop.f32.mrb[0].mxu0
  %v1399 = vpop.f32.mrb[0].mxu0
  %1400 = vdwg.mxu0
  %v1402 = vsel %vm162, %v1352, 0
  %v1405 = vsel %vm162, %v1354, 0
  %1407 = vmatprep.subr.bf16.mxu0 0
  %1408 = vmatpush1.bf16.xpose.msra.mxu0 %v1405
  %1409 = vmatprep.subr.bf16.mxu0 0
  %1410 = vmatpush1.bf16.xpose.msra.mxu0 0
  %1411 = vmatprep.subr.bf16.mxu0 0
  %1412 = vmatpush1.bf16.xpose.msra.mxu0 0
  %1413 = vmatprep.subr.bf16.mxu0 0
  %1414 = vmatpush1.bf16.xpose.msra.mxu0 0
  %1415 = vmatprep.subr.bf16.mxu0 0
  %1416 = vmatpush1.bf16.xpose.msra.mxu0 0
  %1417 = vmatprep.subr.bf16.mxu0 0
  %1418 = vmatpush1.bf16.xpose.msra.mxu0 0
  %1419 = vmatprep.subr.bf16.mxu0 0
  %1420 = vmatpush1.bf16.xpose.msra.mxu0 0
  %1421 = vmatprep.subr.bf16.mxu0 0
  %1422 = vmatpush1.bf16.xpose.msra.mxu0 0
  %1423 = vmatprep.subr.bf16.mxu0 0
  %1424 = vmatpush1.bf16.xpose.msra.mxu0 0
  %1425 = vmatprep.subr.bf16.mxu0 0
  %1426 = vmatpush1.bf16.xpose.msra.mxu0 0
  %1427 = vmatprep.subr.bf16.mxu0 0
  %1428 = vmatpush1.bf16.xpose.msra.mxu0 0
  %1429 = vmatprep.subr.bf16.mxu0 0
  %1430 = vmatpush1.bf16.xpose.msra.mxu0 0
  %1431 = vmatprep.subr.bf16.mxu0 0
  %1432 = vmatpush1.bf16.xpose.msra.mxu0 0
  %1433 = vmatprep.subr.bf16.mxu0 0
  %1434 = vmatpush1.bf16.xpose.msra.mxu0 0
  %1435 = vmatprep.subr.bf16.mxu0 0
  %1436 = vmatpush1.bf16.xpose.msra.mxu0 0
  %1437 = vmatprep.subr.bf16.mxu0 0
  %1438 = vmatpush1.bf16.xpose.msra.mxu0 0
  %1439 = vmatprep.mubr.bf16.mxu0 0
  %1440 = vmatmul.mubr.bf16.gmra.mrb[0].mxu0 %v1402
  %v1441 = vpop.f32.mrb[0].mxu0
  %v1442 = vadd.f32 0.0, %v1441
  %v1443 = vpop.f32.mrb[0].mxu0
  %v1444 = vpop.f32.mrb[0].mxu0
  %v1445 = vpop.f32.mrb[0].mxu0
  %1446 = vdwg.mxu0
  %v1447 = vmul.f32 %v1396, 0.35355338
  %v1448 = vmul.f32 %v1442, 0.35355338
  %v1451 = vlaneseq
  %v1452 = vshrl.u32 %v1451, 7
  %v1453 = vsub.s32 0, %v1452
  %v1454 = vrot.slane %v1349, %v1453
  %v1455 = vlaneseq
  %v1456 = vshrl.u32 %v1455, 7
  %v1457 = vsub.s32 0, %v1456
  %v1458 = vrot.slane %v1350, %v1457
  %v1461 = vadd.f32 %v1447, %v1454
  %v1462 = vadd.f32 %v1448, %v1458
  %v1463 = vsel %vm162, %v1461, -inf
  %1464 = vmax.xlane.f32.xlu0 %v1463
  %v1465 = vpop.xlane.xlu0 %1464
  %v1466 = vsel %vm162, %v1462, -inf
  %1467 = vmax.xlane.f32.xlu0 %v1466
  %v1468 = vpop.xlane.xlu0 %1467
  %v1469 = vsub.f32 %v1461, %v1465
  %v1470 = vsub.f32 %v1462, %v1468
  %v1471 = vmul.f32 %v1469, 1.442695
  %v1472 = vpow.pop %v1471
  %v1473 = vmul.f32 %v1470, 1.442695
  %v1474 = vpow.pop %v1473
  %v1475 = vsel %vm162, %v1472, 0.0
  %1476 = vadd.xlane.f32.xlu0 %v1475
  %v1477 = vpop.xlane.xlu0 %1476
  %v1478 = vsel %vm162, %v1474, 0.0
  %1479 = vadd.xlane.f32.xlu0 %v1478
  %v1480 = vpop.xlane.xlu0 %1479
  %v1481 = vrcp.pop %v1477
  %v1482 = vrcp.pop %v1480
  %v1483 = vmul.f32 %v1472, %v1481
  %v1484 = vmul.f32 %v1474, %v1482
  %v1485 = vpack.c.bf16 %v1483, %v1483
  %v1486 = vpack.c.bf16 %v1484, %v1484
  %1488 = vrot.lane.b32.xlu0 %v1353, 96
  %v1489 = vpop.permute.xlu0 %1488
  %v1491 = vsel %vm162, %v1485, 0
  %v1494 = vsel %vm291, %v1489, 0
  %1496 = vmatprep.subr.bf16.mxu0 0
  %1497 = vmatpush1.bf16.msra.mxu0 %v1494
  %1498 = vmatprep.subr.bf16.mxu0 0
  %1499 = vmatpush1.bf16.msra.mxu0 0
  %1500 = vmatprep.subr.bf16.mxu0 0
  %1501 = vmatpush1.bf16.msra.mxu0 0
  %1502 = vmatprep.subr.bf16.mxu0 0
  %1503 = vmatpush1.bf16.msra.mxu0 0
  %1504 = vmatprep.subr.bf16.mxu0 0
  %1505 = vmatpush1.bf16.msra.mxu0 0
  %1506 = vmatprep.subr.bf16.mxu0 0
  %1507 = vmatpush1.bf16.msra.mxu0 0
  %1508 = vmatprep.subr.bf16.mxu0 0
  %1509 = vmatpush1.bf16.msra.mxu0 0
  %1510 = vmatprep.subr.bf16.mxu0 0
  %1511 = vmatpush1.bf16.msra.mxu0 0
  %1512 = vmatprep.subr.bf16.mxu0 0
  %1513 = vmatpush1.bf16.msra.mxu0 0
  %1514 = vmatprep.subr.bf16.mxu0 0
  %1515 = vmatpush1.bf16.msra.mxu0 0
  %1516 = vmatprep.subr.bf16.mxu0 0
  %1517 = vmatpush1.bf16.msra.mxu0 0
  %1518 = vmatprep.subr.bf16.mxu0 0
  %1519 = vmatpush1.bf16.msra.mxu0 0
  %1520 = vmatprep.subr.bf16.mxu0 0
  %1521 = vmatpush1.bf16.msra.mxu0 0
  %1522 = vmatprep.subr.bf16.mxu0 0
  %1523 = vmatpush1.bf16.msra.mxu0 0
  %1524 = vmatprep.subr.bf16.mxu0 0
  %1525 = vmatpush1.bf16.msra.mxu0 0
  %1526 = vmatprep.subr.bf16.mxu0 0
  %1527 = vmatpush1.bf16.msra.mxu0 0
  %1528 = vmatprep.mubr.bf16.mxu0 0
  %1529 = vmatmul.mubr.bf16.gmra.mrb[0].mxu0 %v1491
  %v1530 = vpop.f32.mrb[0].mxu0
  %v1531 = vadd.f32 0.0, %v1530
  %v1532 = vpop.f32.mrb[0].mxu0
  %v1533 = vpop.f32.mrb[0].mxu0
  %v1534 = vpop.f32.mrb[0].mxu0
  %1535 = vdwg.mxu0
  %1537 = vrot.lane.b32.xlu0 %v1354, 96
  %v1538 = vpop.permute.xlu0 %1537
  %v1540 = vsel %vm162, %v1486, 0
  %v1543 = vsel %vm291, %v1538, 0
  %1545 = vmatprep.subr.bf16.mxu0 0
  %1546 = vmatpush1.bf16.msra.mxu0 %v1543
  %1547 = vmatprep.subr.bf16.mxu0 0
  %1548 = vmatpush1.bf16.msra.mxu0 0
  %1549 = vmatprep.subr.bf16.mxu0 0
  %1550 = vmatpush1.bf16.msra.mxu0 0
  %1551 = vmatprep.subr.bf16.mxu0 0
  %1552 = vmatpush1.bf16.msra.mxu0 0
  %1553 = vmatprep.subr.bf16.mxu0 0
  %1554 = vmatpush1.bf16.msra.mxu0 0
  %1555 = vmatprep.subr.bf16.mxu0 0
  %1556 = vmatpush1.bf16.msra.mxu0 0
  %1557 = vmatprep.subr.bf16.mxu0 0
  %1558 = vmatpush1.bf16.msra.mxu0 0
  %1559 = vmatprep.subr.bf16.mxu0 0
  %1560 = vmatpush1.bf16.msra.mxu0 0
  %1561 = vmatprep.subr.bf16.mxu0 0
  %1562 = vmatpush1.bf16.msra.mxu0 0
  %1563 = vmatprep.subr.bf16.mxu0 0
  %1564 = vmatpush1.bf16.msra.mxu0 0
  %1565 = vmatprep.subr.bf16.mxu0 0
  %1566 = vmatpush1.bf16.msra.mxu0 0
  %1567 = vmatprep.subr.bf16.mxu0 0
  %1568 = vmatpush1.bf16.msra.mxu0 0
  %1569 = vmatprep.subr.bf16.mxu0 0
  %1570 = vmatpush1.bf16.msra.mxu0 0
  %1571 = vmatprep.subr.bf16.mxu0 0
  %1572 = vmatpush1.bf16.msra.mxu0 0
  %1573 = vmatprep.subr.bf16.mxu0 0
  %1574 = vmatpush1.bf16.msra.mxu0 0
  %1575 = vmatprep.subr.bf16.mxu0 0
  %1576 = vmatpush1.bf16.msra.mxu0 0
  %1577 = vmatprep.mubr.bf16.mxu0 0
  %1578 = vmatmul.mubr.bf16.gmra.mrb[0].mxu0 %v1540
  %v1579 = vpop.f32.mrb[0].mxu0
  %v1580 = vadd.f32 0.0, %v1579
  %v1581 = vpop.f32.mrb[0].mxu0
  %v1582 = vpop.f32.mrb[0].mxu0
  %v1583 = vpop.f32.mrb[0].mxu0
  %1584 = vdwg.mxu0
  %1585 = vst.msk [vmem:[#allocation2] sm:$0xff] %vm162, %v1531
  %1586 = vst.msk [vmem:[#allocation2 + $0x8] sm:$0xff] %vm162, %v1580
  %1588 = vrot.lane.b32.xlu0 %v1351, 120
  %v1589 = vpop.permute.xlu0 %1588
  %1590 = vrot.lane.b32.xlu0 %v1353, 120
  %v1591 = vpop.permute.xlu0 %1590
  %v1593 = vsel %vm162, %v1589, 0
  %v1596 = vsel %vm162, %v1591, 0
  %1598 = vmatprep.subr.bf16.mxu0 0
  %1599 = vmatpush1.bf16.xpose.msra.mxu0 %v1596
  %1600 = vmatprep.subr.bf16.mxu0 0
  %1601 = vmatpush1.bf16.xpose.msra.mxu0 0
  %1602 = vmatprep.subr.bf16.mxu0 0
  %1603 = vmatpush1.bf16.xpose.msra.mxu0 0
  %1604 = vmatprep.subr.bf16.mxu0 0
  %1605 = vmatpush1.bf16.xpose.msra.mxu0 0
  %1606 = vmatprep.subr.bf16.mxu0 0
  %1607 = vmatpush1.bf16.xpose.msra.mxu0 0
  %1608 = vmatprep.subr.bf16.mxu0 0
  %1609 = vmatpush1.bf16.xpose.msra.mxu0 0
  %1610 = vmatprep.subr.bf16.mxu0 0
  %1611 = vmatpush1.bf16.xpose.msra.mxu0 0
  %1612 = vmatprep.subr.bf16.mxu0 0
  %1613 = vmatpush1.bf16.xpose.msra.mxu0 0
  %1614 = vmatprep.subr.bf16.mxu0 0
  %1615 = vmatpush1.bf16.xpose.msra.mxu0 0
  %1616 = vmatprep.subr.bf16.mxu0 0
  %1617 = vmatpush1.bf16.xpose.msra.mxu0 0
  %1618 = vmatprep.subr.bf16.mxu0 0
  %1619 = vmatpush1.bf16.xpose.msra.mxu0 0
  %1620 = vmatprep.subr.bf16.mxu0 0
  %1621 = vmatpush1.bf16.xpose.msra.mxu0 0
  %1622 = vmatprep.subr.bf16.mxu0 0
  %1623 = vmatpush1.bf16.xpose.msra.mxu0 0
  %1624 = vmatprep.subr.bf16.mxu0 0
  %1625 = vmatpush1.bf16.xpose.msra.mxu0 0
  %1626 = vmatprep.subr.bf16.mxu0 0
  %1627 = vmatpush1.bf16.xpose.msra.mxu0 0
  %1628 = vmatprep.subr.bf16.mxu0 0
  %1629 = vmatpush1.bf16.xpose.msra.mxu0 0
  %1630 = vmatprep.mubr.bf16.mxu0 0
  %1631 = vmatmul.mubr.bf16.gmra.mrb[0].mxu0 %v1593
  %v1632 = vpop.f32.mrb[0].mxu0
  %v1633 = vadd.f32 0.0, %v1632
  %v1634 = vpop.f32.mrb[0].mxu0
  %v1635 = vpop.f32.mrb[0].mxu0
  %v1636 = vpop.f32.mrb[0].mxu0
  %1637 = vdwg.mxu0
  %1639 = vrot.lane.b32.xlu0 %v1352, 120
  %v1640 = vpop.permute.xlu0 %1639
  %1641 = vrot.lane.b32.xlu0 %v1354, 120
  %v1642 = vpop.permute.xlu0 %1641
  %v1644 = vsel %vm162, %v1640, 0
  %v1647 = vsel %vm162, %v1642, 0
  %1649 = vmatprep.subr.bf16.mxu0 0
  %1650 = vmatpush1.bf16.xpose.msra.mxu0 %v1647
  %1651 = vmatprep.subr.bf16.mxu0 0
  %1652 = vmatpush1.bf16.xpose.msra.mxu0 0
  %1653 = vmatprep.subr.bf16.mxu0 0
  %1654 = vmatpush1.bf16.xpose.msra.mxu0 0
  %1655 = vmatprep.subr.bf16.mxu0 0
  %1656 = vmatpush1.bf16.xpose.msra.mxu0 0
  %1657 = vmatprep.subr.bf16.mxu0 0
  %1658 = vmatpush1.bf16.xpose.msra.mxu0 0
  %1659 = vmatprep.subr.bf16.mxu0 0
  %1660 = vmatpush1.bf16.xpose.msra.mxu0 0
  %1661 = vmatprep.subr.bf16.mxu0 0
  %1662 = vmatpush1.bf16.xpose.msra.mxu0 0
  %1663 = vmatprep.subr.bf16.mxu0 0
  %1664 = vmatpush1.bf16.xpose.msra.mxu0 0
  %1665 = vmatprep.subr.bf16.mxu0 0
  %1666 = vmatpush1.bf16.xpose.msra.mxu0 0
  %1667 = vmatprep.subr.bf16.mxu0 0
  %1668 = vmatpush1.bf16.xpose.msra.mxu0 0
  %1669 = vmatprep.subr.bf16.mxu0 0
  %1670 = vmatpush1.bf16.xpose.msra.mxu0 0
  %1671 = vmatprep.subr.bf16.mxu0 0
  %1672 = vmatpush1.bf16.xpose.msra.mxu0 0
  %1673 = vmatprep.subr.bf16.mxu0 0
  %1674 = vmatpush1.bf16.xpose.msra.mxu0 0
  %1675 = vmatprep.subr.bf16.mxu0 0
  %1676 = vmatpush1.bf16.xpose.msra.mxu0 0
  %1677 = vmatprep.subr.bf16.mxu0 0
  %1678 = vmatpush1.bf16.xpose.msra.mxu0 0
  %1679 = vmatprep.subr.bf16.mxu0 0
  %1680 = vmatpush1.bf16.xpose.msra.mxu0 0
  %1681 = vmatprep.mubr.bf16.mxu0 0
  %1682 = vmatmul.mubr.bf16.gmra.mrb[0].mxu0 %v1644
  %v1683 = vpop.f32.mrb[0].mxu0
  %v1684 = vadd.f32 0.0, %v1683
  %v1685 = vpop.f32.mrb[0].mxu0
  %v1686 = vpop.f32.mrb[0].mxu0
  %v1687 = vpop.f32.mrb[0].mxu0
  %1688 = vdwg.mxu0
  %v1689 = vmul.f32 %v1633, 0.35355338
  %v1690 = vmul.f32 %v1684, 0.35355338
  %v1691 = vadd.f32 %v1689, %v1454
  %v1692 = vadd.f32 %v1690, %v1458
  %v1693 = vsel %vm162, %v1691, -inf
  %1694 = vmax.xlane.f32.xlu0 %v1693
  %v1695 = vpop.xlane.xlu0 %1694
  %v1696 = vsel %vm162, %v1692, -inf
  %1697 = vmax.xlane.f32.xlu0 %v1696
  %v1698 = vpop.xlane.xlu0 %1697
  %v1699 = vsub.f32 %v1691, %v1695
  %v1700 = vsub.f32 %v1692, %v1698
  %v1701 = vmul.f32 %v1699, 1.442695
  %v1702 = vpow.pop %v1701
  %v1703 = vmul.f32 %v1700, 1.442695
  %v1704 = vpow.pop %v1703
  %v1705 = vsel %vm162, %v1702, 0.0
  %1706 = vadd.xlane.f32.xlu0 %v1705
  %v1707 = vpop.xlane.xlu0 %1706
  %v1708 = vsel %vm162, %v1704, 0.0
  %1709 = vadd.xlane.f32.xlu0 %v1708
  %v1710 = vpop.xlane.xlu0 %1709
  %v1711 = vrcp.pop %v1707
  %v1712 = vrcp.pop %v1710
  %v1713 = vmul.f32 %v1702, %v1711
  %v1714 = vmul.f32 %v1704, %v1712
  %v1715 = vpack.c.bf16 %v1713, %v1713
  %v1716 = vpack.c.bf16 %v1714, %v1714
  %1717 = vrot.lane.b32.xlu0 %v1353, 88
  %v1718 = vpop.permute.xlu0 %1717
  %v1720 = vsel %vm162, %v1715, 0
  %v1723 = vsel %vm291, %v1718, 0
  %1725 = vmatprep.subr.bf16.mxu0 0
  %1726 = vmatpush1.bf16.msra.mxu0 %v1723
  %1727 = vmatprep.subr.bf16.mxu0 0
  %1728 = vmatpush1.bf16.msra.mxu0 0
  %1729 = vmatprep.subr.bf16.mxu0 0
  %1730 = vmatpush1.bf16.msra.mxu0 0
  %1731 = vmatprep.subr.bf16.mxu0 0
  %1732 = vmatpush1.bf16.msra.mxu0 0
  %1733 = vmatprep.subr.bf16.mxu0 0
  %1734 = vmatpush1.bf16.msra.mxu0 0
  %1735 = vmatprep.subr.bf16.mxu0 0
  %1736 = vmatpush1.bf16.msra.mxu0 0
  %1737 = vmatprep.subr.bf16.mxu0 0
  %1738 = vmatpush1.bf16.msra.mxu0 0
  %1739 = vmatprep.subr.bf16.mxu0 0
  %1740 = vmatpush1.bf16.msra.mxu0 0
  %1741 = vmatprep.subr.bf16.mxu0 0
  %1742 = vmatpush1.bf16.msra.mxu0 0
  %1743 = vmatprep.subr.bf16.mxu0 0
  %1744 = vmatpush1.bf16.msra.mxu0 0
  %1745 = vmatprep.subr.bf16.mxu0 0
  %1746 = vmatpush1.bf16.msra.mxu0 0
  %1747 = vmatprep.subr.bf16.mxu0 0
  %1748 = vmatpush1.bf16.msra.mxu0 0
  %1749 = vmatprep.subr.bf16.mxu0 0
  %1750 = vmatpush1.bf16.msra.mxu0 0
  %1751 = vmatprep.subr.bf16.mxu0 0
  %1752 = vmatpush1.bf16.msra.mxu0 0
  %1753 = vmatprep.subr.bf16.mxu0 0
  %1754 = vmatpush1.bf16.msra.mxu0 0
  %1755 = vmatprep.subr.bf16.mxu0 0
  %1756 = vmatpush1.bf16.msra.mxu0 0
  %1757 = vmatprep.mubr.bf16.mxu0 0
  %1758 = vmatmul.mubr.bf16.gmra.mrb[0].mxu0 %v1720
  %v1759 = vpop.f32.mrb[0].mxu0
  %v1760 = vadd.f32 0.0, %v1759
  %v1761 = vpop.f32.mrb[0].mxu0
  %v1762 = vpop.f32.mrb[0].mxu0
  %v1763 = vpop.f32.mrb[0].mxu0
  %1764 = vdwg.mxu0
  %1765 = vrot.lane.b32.xlu0 %v1354, 88
  %v1766 = vpop.permute.xlu0 %1765
  %v1768 = vsel %vm162, %v1716, 0
  %v1771 = vsel %vm291, %v1766, 0
  %1773 = vmatprep.subr.bf16.mxu0 0
  %1774 = vmatpush1.bf16.msra.mxu0 %v1771
  %1775 = vmatprep.subr.bf16.mxu0 0
  %1776 = vmatpush1.bf16.msra.mxu0 0
  %1777 = vmatprep.subr.bf16.mxu0 0
  %1778 = vmatpush1.bf16.msra.mxu0 0
  %1779 = vmatprep.subr.bf16.mxu0 0
  %1780 = vmatpush1.bf16.msra.mxu0 0
  %1781 = vmatprep.subr.bf16.mxu0 0
  %1782 = vmatpush1.bf16.msra.mxu0 0
  %1783 = vmatprep.subr.bf16.mxu0 0
  %1784 = vmatpush1.bf16.msra.mxu0 0
  %1785 = vmatprep.subr.bf16.mxu0 0
  %1786 = vmatpush1.bf16.msra.mxu0 0
  %1787 = vmatprep.subr.bf16.mxu0 0
  %1788 = vmatpush1.bf16.msra.mxu0 0
  %1789 = vmatprep.subr.bf16.mxu0 0
  %1790 = vmatpush1.bf16.msra.mxu0 0
  %1791 = vmatprep.subr.bf16.mxu0 0
  %1792 = vmatpush1.bf16.msra.mxu0 0
  %1793 = vmatprep.subr.bf16.mxu0 0
  %1794 = vmatpush1.bf16.msra.mxu0 0
  %1795 = vmatprep.subr.bf16.mxu0 0
  %1796 = vmatpush1.bf16.msra.mxu0 0
  %1797 = vmatprep.subr.bf16.mxu0 0
  %1798 = vmatpush1.bf16.msra.mxu0 0
  %1799 = vmatprep.subr.bf16.mxu0 0
  %1800 = vmatpush1.bf16.msra.mxu0 0
  %1801 = vmatprep.subr.bf16.mxu0 0
  %1802 = vmatpush1.bf16.msra.mxu0 0
  %1803 = vmatprep.subr.bf16.mxu0 0
  %1804 = vmatpush1.bf16.msra.mxu0 0
  %1805 = vmatprep.mubr.bf16.mxu0 0
  %1806 = vmatmul.mubr.bf16.gmra.mrb[0].mxu0 %v1768
  %v1807 = vpop.f32.mrb[0].mxu0
  %v1808 = vadd.f32 0.0, %v1807
  %v1809 = vpop.f32.mrb[0].mxu0
  %v1810 = vpop.f32.mrb[0].mxu0
  %v1811 = vpop.f32.mrb[0].mxu0
  %1812 = vdwg.mxu0
  %1815 = vrot.lane.b32.xlu0 %v1760, 8
  %v1816 = vpop.permute.xlu0 %1815
  %1817 = vrot.lane.b32.xlu0 %v1808, 8
  %v1818 = vpop.permute.xlu0 %1817
  %1821 = vst.msk [vmem:[#allocation2] sm:$0xff] %vm617, %v1816
  %1822 = vst.msk [vmem:[#allocation2 + $0x8] sm:$0xff] %vm617, %v1818
  %1823 = vrot.lane.b32.xlu0 %v1351, 112
  %v1824 = vpop.permute.xlu0 %1823
  %1825 = vrot.lane.b32.xlu0 %v1353, 112
  %v1826 = vpop.permute.xlu0 %1825
  %v1828 = vsel %vm162, %v1824, 0
  %v1831 = vsel %vm162, %v1826, 0
  %1833 = vmatprep.subr.bf16.mxu0 0
  %1834 = vmatpush1.bf16.xpose.msra.mxu0 %v1831
  %1835 = vmatprep.subr.bf16.mxu0 0
  %1836 = vmatpush1.bf16.xpose.msra.mxu0 0
  %1837 = vmatprep.subr.bf16.mxu0 0
  %1838 = vmatpush1.bf16.xpose.msra.mxu0 0
  %1839 = vmatprep.subr.bf16.mxu0 0
  %1840 = vmatpush1.bf16.xpose.msra.mxu0 0
  %1841 = vmatprep.subr.bf16.mxu0 0
  %1842 = vmatpush1.bf16.xpose.msra.mxu0 0
  %1843 = vmatprep.subr.bf16.mxu0 0
  %1844 = vmatpush1.bf16.xpose.msra.mxu0 0
  %1845 = vmatprep.subr.bf16.mxu0 0
  %1846 = vmatpush1.bf16.xpose.msra.mxu0 0
  %1847 = vmatprep.subr.bf16.mxu0 0
  %1848 = vmatpush1.bf16.xpose.msra.mxu0 0
  %1849 = vmatprep.subr.bf16.mxu0 0
  %1850 = vmatpush1.bf16.xpose.msra.mxu0 0
  %1851 = vmatprep.subr.bf16.mxu0 0
  %1852 = vmatpush1.bf16.xpose.msra.mxu0 0
  %1853 = vmatprep.subr.bf16.mxu0 0
  %1854 = vmatpush1.bf16.xpose.msra.mxu0 0
  %1855 = vmatprep.subr.bf16.mxu0 0
  %1856 = vmatpush1.bf16.xpose.msra.mxu0 0
  %1857 = vmatprep.subr.bf16.mxu0 0
  %1858 = vmatpush1.bf16.xpose.msra.mxu0 0
  %1859 = vmatprep.subr.bf16.mxu0 0
  %1860 = vmatpush1.bf16.xpose.msra.mxu0 0
  %1861 = vmatprep.subr.bf16.mxu0 0
  %1862 = vmatpush1.bf16.xpose.msra.mxu0 0
  %1863 = vmatprep.subr.bf16.mxu0 0
  %1864 = vmatpush1.bf16.xpose.msra.mxu0 0
  %1865 = vmatprep.mubr.bf16.mxu0 0
  %1866 = vmatmul.mubr.bf16.gmra.mrb[0].mxu0 %v1828
  %v1867 = vpop.f32.mrb[0].mxu0
  %v1868 = vadd.f32 0.0, %v1867
  %v1869 = vpop.f32.mrb[0].mxu0
  %v1870 = vpop.f32.mrb[0].mxu0
  %v1871 = vpop.f32.mrb[0].mxu0
  %1872 = vdwg.mxu0
  %1873 = vrot.lane.b32.xlu0 %v1352, 112
  %v1874 = vpop.permute.xlu0 %1873
  %1875 = vrot.lane.b32.xlu0 %v1354, 112
  %v1876 = vpop.permute.xlu0 %1875
  %v1878 = vsel %vm162, %v1874, 0
  %v1881 = vsel %vm162, %v1876, 0
  %1883 = vmatprep.subr.bf16.mxu0 0
  %1884 = vmatpush1.bf16.xpose.msra.mxu0 %v1881
  %1885 = vmatprep.subr.bf16.mxu0 0
  %1886 = vmatpush1.bf16.xpose.msra.mxu0 0
  %1887 = vmatprep.subr.bf16.mxu0 0
  %1888 = vmatpush1.bf16.xpose.msra.mxu0 0
  %1889 = vmatprep.subr.bf16.mxu0 0
  %1890 = vmatpush1.bf16.xpose.msra.mxu0 0
  %1891 = vmatprep.subr.bf16.mxu0 0
  %1892 = vmatpush1.bf16.xpose.msra.mxu0 0
  %1893 = vmatprep.subr.bf16.mxu0 0
  %1894 = vmatpush1.bf16.xpose.msra.mxu0 0
  %1895 = vmatprep.subr.bf16.mxu0 0
  %1896 = vmatpush1.bf16.xpose.msra.mxu0 0
  %1897 = vmatprep.subr.bf16.mxu0 0
  %1898 = vmatpush1.bf16.xpose.msra.mxu0 0
  %1899 = vmatprep.subr.bf16.mxu0 0
  %1900 = vmatpush1.bf16.xpose.msra.mxu0 0
  %1901 = vmatprep.subr.bf16.mxu0 0
  %1902 = vmatpush1.bf16.xpose.msra.mxu0 0
  %1903 = vmatprep.subr.bf16.mxu0 0
  %1904 = vmatpush1.bf16.xpose.msra.mxu0 0
  %1905 = vmatprep.subr.bf16.mxu0 0
  %1906 = vmatpush1.bf16.xpose.msra.mxu0 0
  %1907 = vmatprep.subr.bf16.mxu0 0
  %1908 = vmatpush1.bf16.xpose.msra.mxu0 0
  %1909 = vmatprep.subr.bf16.mxu0 0
  %1910 = vmatpush1.bf16.xpose.msra.mxu0 0
  %1911 = vmatprep.subr.bf16.mxu0 0
  %1912 = vmatpush1.bf16.xpose.msra.mxu0 0
  %1913 = vmatprep.subr.bf16.mxu0 0
  %1914 = vmatpush1.bf16.xpose.msra.mxu0 0
  %1915 = vmatprep.mubr.bf16.mxu0 0
  %1916 = vmatmul.mubr.bf16.gmra.mrb[0].mxu0 %v1878
  %v1917 = vpop.f32.mrb[0].mxu0
  %v1918 = vadd.f32 0.0, %v1917
  %v1919 = vpop.f32.mrb[0].mxu0
  %v1920 = vpop.f32.mrb[0].mxu0
  %v1921 = vpop.f32.mrb[0].mxu0
  %1922 = vdwg.mxu0
  %v1923 = vmul.f32 %v1868, 0.35355338
  %v1924 = vmul.f32 %v1918, 0.35355338
  %v1925 = vadd.f32 %v1923, %v1454
  %v1926 = vadd.f32 %v1924, %v1458
  %v1927 = vsel %vm162, %v1925, -inf
  %1928 = vmax.xlane.f32.xlu0 %v1927
  %v1929 = vpop.xlane.xlu0 %1928
  %v1930 = vsel %vm162, %v1926, -inf
  %1931 = vmax.xlane.f32.xlu0 %v1930
  %v1932 = vpop.xlane.xlu0 %1931
  %v1933 = vsub.f32 %v1925, %v1929
  %v1934 = vsub.f32 %v1926, %v1932
  %v1935 = vmul.f32 %v1933, 1.442695
  %v1936 = vpow.pop %v1935
  %v1937 = vmul.f32 %v1934, 1.442695
  %v1938 = vpow.pop %v1937
  %v1939 = vsel %vm162, %v1936, 0.0
  %1940 = vadd.xlane.f32.xlu0 %v1939
  %v1941 = vpop.xlane.xlu0 %1940
  %v1942 = vsel %vm162, %v1938, 0.0
  %1943 = vadd.xlane.f32.xlu0 %v1942
  %v1944 = vpop.xlane.xlu0 %1943
  %v1945 = vrcp.pop %v1941
  %v1946 = vrcp.pop %v1944
  %v1947 = vmul.f32 %v1936, %v1945
  %v1948 = vmul.f32 %v1938, %v1946
  %v1949 = vpack.c.bf16 %v1947, %v1947
  %v1950 = vpack.c.bf16 %v1948, %v1948
  %1951 = vrot.lane.b32.xlu0 %v1353, 80
  %v1952 = vpop.permute.xlu0 %1951
  %v1954 = vsel %vm162, %v1949, 0
  %v1957 = vsel %vm291, %v1952, 0
  %1959 = vmatprep.subr.bf16.mxu0 0
  %1960 = vmatpush1.bf16.msra.mxu0 %v1957
  %1961 = vmatprep.subr.bf16.mxu0 0
  %1962 = vmatpush1.bf16.msra.mxu0 0
  %1963 = vmatprep.subr.bf16.mxu0 0
  %1964 = vmatpush1.bf16.msra.mxu0 0
  %1965 = vmatprep.subr.bf16.mxu0 0
  %1966 = vmatpush1.bf16.msra.mxu0 0
  %1967 = vmatprep.subr.bf16.mxu0 0
  %1968 = vmatpush1.bf16.msra.mxu0 0
  %1969 = vmatprep.subr.bf16.mxu0 0
  %1970 = vmatpush1.bf16.msra.mxu0 0
  %1971 = vmatprep.subr.bf16.mxu0 0
  %1972 = vmatpush1.bf16.msra.mxu0 0
  %1973 = vmatprep.subr.bf16.mxu0 0
  %1974 = vmatpush1.bf16.msra.mxu0 0
  %1975 = vmatprep.subr.bf16.mxu0 0
  %1976 = vmatpush1.bf16.msra.mxu0 0
  %1977 = vmatprep.subr.bf16.mxu0 0
  %1978 = vmatpush1.bf16.msra.mxu0 0
  %1979 = vmatprep.subr.bf16.mxu0 0
  %1980 = vmatpush1.bf16.msra.mxu0 0
  %1981 = vmatprep.subr.bf16.mxu0 0
  %1982 = vmatpush1.bf16.msra.mxu0 0
  %1983 = vmatprep.subr.bf16.mxu0 0
  %1984 = vmatpush1.bf16.msra.mxu0 0
  %1985 = vmatprep.subr.bf16.mxu0 0
  %1986 = vmatpush1.bf16.msra.mxu0 0
  %1987 = vmatprep.subr.bf16.mxu0 0
  %1988 = vmatpush1.bf16.msra.mxu0 0
  %1989 = vmatprep.subr.bf16.mxu0 0
  %1990 = vmatpush1.bf16.msra.mxu0 0
  %1991 = vmatprep.mubr.bf16.mxu0 0
  %1992 = vmatmul.mubr.bf16.gmra.mrb[0].mxu0 %v1954
  %v1993 = vpop.f32.mrb[0].mxu0
  %v1994 = vadd.f32 0.0, %v1993
  %v1995 = vpop.f32.mrb[0].mxu0
  %v1996 = vpop.f32.mrb[0].mxu0
  %v1997 = vpop.f32.mrb[0].mxu0
  %1998 = vdwg.mxu0
  %1999 = vrot.lane.b32.xlu0 %v1354, 80
  %v2000 = vpop.permute.xlu0 %1999
  %v2002 = vsel %vm162, %v1950, 0
  %v2005 = vsel %vm291, %v2000, 0
  %2007 = vmatprep.subr.bf16.mxu0 0
  %2008 = vmatpush1.bf16.msra.mxu0 %v2005
  %2009 = vmatprep.subr.bf16.mxu0 0
  %2010 = vmatpush1.bf16.msra.mxu0 0
  %2011 = vmatprep.subr.bf16.mxu0 0
  %2012 = vmatpush1.bf16.msra.mxu0 0
  %2013 = vmatprep.subr.bf16.mxu0 0
  %2014 = vmatpush1.bf16.msra.mxu0 0
  %2015 = vmatprep.subr.bf16.mxu0 0
  %2016 = vmatpush1.bf16.msra.mxu0 0
  %2017 = vmatprep.subr.bf16.mxu0 0
  %2018 = vmatpush1.bf16.msra.mxu0 0
  %2019 = vmatprep.subr.bf16.mxu0 0
  %2020 = vmatpush1.bf16.msra.mxu0 0
  %2021 = vmatprep.subr.bf16.mxu0 0
  %2022 = vmatpush1.bf16.msra.mxu0 0
  %2023 = vmatprep.subr.bf16.mxu0 0
  %2024 = vmatpush1.bf16.msra.mxu0 0
  %2025 = vmatprep.subr.bf16.mxu0 0
  %2026 = vmatpush1.bf16.msra.mxu0 0
  %2027 = vmatprep.subr.bf16.mxu0 0
  %2028 = vmatpush1.bf16.msra.mxu0 0
  %2029 = vmatprep.subr.bf16.mxu0 0
  %2030 = vmatpush1.bf16.msra.mxu0 0
  %2031 = vmatprep.subr.bf16.mxu0 0
  %2032 = vmatpush1.bf16.msra.mxu0 0
  %2033 = vmatprep.subr.bf16.mxu0 0
  %2034 = vmatpush1.bf16.msra.mxu0 0
  %2035 = vmatprep.subr.bf16.mxu0 0
  %2036 = vmatpush1.bf16.msra.mxu0 0
  %2037 = vmatprep.subr.bf16.mxu0 0
  %2038 = vmatpush1.bf16.msra.mxu0 0
  %2039 = vmatprep.mubr.bf16.mxu0 0
  %2040 = vmatmul.mubr.bf16.gmra.mrb[0].mxu0 %v2002
  %v2041 = vpop.f32.mrb[0].mxu0
  %v2042 = vadd.f32 0.0, %v2041
  %v2043 = vpop.f32.mrb[0].mxu0
  %v2044 = vpop.f32.mrb[0].mxu0
  %v2045 = vpop.f32.mrb[0].mxu0
  %2046 = vdwg.mxu0
  %2049 = vrot.lane.b32.xlu0 %v1994, 16
  %v2050 = vpop.permute.xlu0 %2049
  %2051 = vrot.lane.b32.xlu0 %v2042, 16
  %v2052 = vpop.permute.xlu0 %2051
  %2055 = vst.msk [vmem:[#allocation2] sm:$0xff] %vm852, %v2050
  %2056 = vst.msk [vmem:[#allocation2 + $0x8] sm:$0xff] %vm852, %v2052
  %2057 = vrot.lane.b32.xlu0 %v1351, 104
  %v2058 = vpop.permute.xlu0 %2057
  %2059 = vrot.lane.b32.xlu0 %v1353, 104
  %v2060 = vpop.permute.xlu0 %2059
  %v2062 = vsel %vm162, %v2058, 0
  %v2065 = vsel %vm162, %v2060, 0
  %2067 = vmatprep.subr.bf16.mxu0 0
  %2068 = vmatpush1.bf16.xpose.msra.mxu0 %v2065
  %2069 = vmatprep.subr.bf16.mxu0 0
  %2070 = vmatpush1.bf16.xpose.msra.mxu0 0
  %2071 = vmatprep.subr.bf16.mxu0 0
  %2072 = vmatpush1.bf16.xpose.msra.mxu0 0
  %2073 = vmatprep.subr.bf16.mxu0 0
  %2074 = vmatpush1.bf16.xpose.msra.mxu0 0
  %2075 = vmatprep.subr.bf16.mxu0 0
  %2076 = vmatpush1.bf16.xpose.msra.mxu0 0
  %2077 = vmatprep.subr.bf16.mxu0 0
  %2078 = vmatpush1.bf16.xpose.msra.mxu0 0
  %2079 = vmatprep.subr.bf16.mxu0 0
  %2080 = vmatpush1.bf16.xpose.msra.mxu0 0
  %2081 = vmatprep.subr.bf16.mxu0 0
  %2082 = vmatpush1.bf16.xpose.msra.mxu0 0
  %2083 = vmatprep.subr.bf16.mxu0 0
  %2084 = vmatpush1.bf16.xpose.msra.mxu0 0
  %2085 = vmatprep.subr.bf16.mxu0 0
  %2086 = vmatpush1.bf16.xpose.msra.mxu0 0
  %2087 = vmatprep.subr.bf16.mxu0 0
  %2088 = vmatpush1.bf16.xpose.msra.mxu0 0
  %2089 = vmatprep.subr.bf16.mxu0 0
  %2090 = vmatpush1.bf16.xpose.msra.mxu0 0
  %2091 = vmatprep.subr.bf16.mxu0 0
  %2092 = vmatpush1.bf16.xpose.msra.mxu0 0
  %2093 = vmatprep.subr.bf16.mxu0 0
  %2094 = vmatpush1.bf16.xpose.msra.mxu0 0
  %2095 = vmatprep.subr.bf16.mxu0 0
  %2096 = vmatpush1.bf16.xpose.msra.mxu0 0
  %2097 = vmatprep.subr.bf16.mxu0 0
  %2098 = vmatpush1.bf16.xpose.msra.mxu0 0
  %2099 = vmatprep.mubr.bf16.mxu0 0
  %2100 = vmatmul.mubr.bf16.gmra.mrb[0].mxu0 %v2062
  %v2101 = vpop.f32.mrb[0].mxu0
  %v2102 = vadd.f32 0.0, %v2101
  %v2103 = vpop.f32.mrb[0].mxu0
  %v2104 = vpop.f32.mrb[0].mxu0
  %v2105 = vpop.f32.mrb[0].mxu0
  %2106 = vdwg.mxu0
  %2107 = vrot.lane.b32.xlu0 %v1352, 104
  %v2108 = vpop.permute.xlu0 %2107
  %2109 = vrot.lane.b32.xlu0 %v1354, 104
  %v2110 = vpop.permute.xlu0 %2109
  %v2112 = vsel %vm162, %v2108, 0
  %v2115 = vsel %vm162, %v2110, 0
  %2117 = vmatprep.subr.bf16.mxu0 0
  %2118 = vmatpush1.bf16.xpose.msra.mxu0 %v2115
  %2119 = vmatprep.subr.bf16.mxu0 0
  %2120 = vmatpush1.bf16.xpose.msra.mxu0 0
  %2121 = vmatprep.subr.bf16.mxu0 0
  %2122 = vmatpush1.bf16.xpose.msra.mxu0 0
  %2123 = vmatprep.subr.bf16.mxu0 0
  %2124 = vmatpush1.bf16.xpose.msra.mxu0 0
  %2125 = vmatprep.subr.bf16.mxu0 0
  %2126 = vmatpush1.bf16.xpose.msra.mxu0 0
  %2127 = vmatprep.subr.bf16.mxu0 0
  %2128 = vmatpush1.bf16.xpose.msra.mxu0 0
  %2129 = vmatprep.subr.bf16.mxu0 0
  %2130 = vmatpush1.bf16.xpose.msra.mxu0 0
  %2131 = vmatprep.subr.bf16.mxu0 0
  %2132 = vmatpush1.bf16.xpose.msra.mxu0 0
  %2133 = vmatprep.subr.bf16.mxu0 0
  %2134 = vmatpush1.bf16.xpose.msra.mxu0 0
  %2135 = vmatprep.subr.bf16.mxu0 0
  %2136 = vmatpush1.bf16.xpose.msra.mxu0 0
  %2137 = vmatprep.subr.bf16.mxu0 0
  %2138 = vmatpush1.bf16.xpose.msra.mxu0 0
  %2139 = vmatprep.subr.bf16.mxu0 0
  %2140 = vmatpush1.bf16.xpose.msra.mxu0 0
  %2141 = vmatprep.subr.bf16.mxu0 0
  %2142 = vmatpush1.bf16.xpose.msra.mxu0 0
  %2143 = vmatprep.subr.bf16.mxu0 0
  %2144 = vmatpush1.bf16.xpose.msra.mxu0 0
  %2145 = vmatprep.subr.bf16.mxu0 0
  %2146 = vmatpush1.bf16.xpose.msra.mxu0 0
  %2147 = vmatprep.subr.bf16.mxu0 0
  %2148 = vmatpush1.bf16.xpose.msra.mxu0 0
  %2149 = vmatprep.mubr.bf16.mxu0 0
  %2150 = vmatmul.mubr.bf16.gmra.mrb[0].mxu0 %v2112
  %v2151 = vpop.f32.mrb[0].mxu0
  %v2152 = vadd.f32 0.0, %v2151
  %v2153 = vpop.f32.mrb[0].mxu0
  %v2154 = vpop.f32.mrb[0].mxu0
  %v2155 = vpop.f32.mrb[0].mxu0
  %2156 = vdwg.mxu0
  %v2157 = vmul.f32 %v2102, 0.35355338
  %v2158 = vmul.f32 %v2152, 0.35355338
  %v2159 = vadd.f32 %v2157, %v1454
  %v2160 = vadd.f32 %v2158, %v1458
  %v2161 = vsel %vm162, %v2159, -inf
  %2162 = vmax.xlane.f32.xlu0 %v2161
  %v2163 = vpop.xlane.xlu0 %2162
  %v2164 = vsel %vm162, %v2160, -inf
  %2165 = vmax.xlane.f32.xlu0 %v2164
  %v2166 = vpop.xlane.xlu0 %2165
  %v2167 = vsub.f32 %v2159, %v2163
  %v2168 = vsub.f32 %v2160, %v2166
  %v2169 = vmul.f32 %v2167, 1.442695
  %v2170 = vpow.pop %v2169
  %v2171 = vmul.f32 %v2168, 1.442695
  %v2172 = vpow.pop %v2171
  %v2173 = vsel %vm162, %v2170, 0.0
  %2174 = vadd.xlane.f32.xlu0 %v2173
  %v2175 = vpop.xlane.xlu0 %2174
  %v2176 = vsel %vm162, %v2172, 0.0
  %2177 = vadd.xlane.f32.xlu0 %v2176
  %v2178 = vpop.xlane.xlu0 %2177
  %v2179 = vrcp.pop %v2175
  %v2180 = vrcp.pop %v2178
  %v2181 = vmul.f32 %v2170, %v2179
  %v2182 = vmul.f32 %v2172, %v2180
  %v2183 = vpack.c.bf16 %v2181, %v2181
  %v2184 = vpack.c.bf16 %v2182, %v2182
  %2185 = vrot.lane.b32.xlu0 %v1353, 72
  %v2186 = vpop.permute.xlu0 %2185
  %v2188 = vsel %vm162, %v2183, 0
  %v2191 = vsel %vm291, %v2186, 0
  %2193 = vmatprep.subr.bf16.mxu0 0
  %2194 = vmatpush1.bf16.msra.mxu0 %v2191
  %2195 = vmatprep.subr.bf16.mxu0 0
  %2196 = vmatpush1.bf16.msra.mxu0 0
  %2197 = vmatprep.subr.bf16.mxu0 0
  %2198 = vmatpush1.bf16.msra.mxu0 0
  %2199 = vmatprep.subr.bf16.mxu0 0
  %2200 = vmatpush1.bf16.msra.mxu0 0
  %2201 = vmatprep.subr.bf16.mxu0 0
  %2202 = vmatpush1.bf16.msra.mxu0 0
  %2203 = vmatprep.subr.bf16.mxu0 0
  %2204 = vmatpush1.bf16.msra.mxu0 0
  %2205 = vmatprep.subr.bf16.mxu0 0
  %2206 = vmatpush1.bf16.msra.mxu0 0
  %2207 = vmatprep.subr.bf16.mxu0 0
  %2208 = vmatpush1.bf16.msra.mxu0 0
  %2209 = vmatprep.subr.bf16.mxu0 0
  %2210 = vmatpush1.bf16.msra.mxu0 0
  %2211 = vmatprep.subr.bf16.mxu0 0
  %2212 = vmatpush1.bf16.msra.mxu0 0
  %2213 = vmatprep.subr.bf16.mxu0 0
  %2214 = vmatpush1.bf16.msra.mxu0 0
  %2215 = vmatprep.subr.bf16.mxu0 0
  %2216 = vmatpush1.bf16.msra.mxu0 0
  %2217 = vmatprep.subr.bf16.mxu0 0
  %2218 = vmatpush1.bf16.msra.mxu0 0
  %2219 = vmatprep.subr.bf16.mxu0 0
  %2220 = vmatpush1.bf16.msra.mxu0 0
  %2221 = vmatprep.subr.bf16.mxu0 0
  %2222 = vmatpush1.bf16.msra.mxu0 0
  %2223 = vmatprep.subr.bf16.mxu0 0
  %2224 = vmatpush1.bf16.msra.mxu0 0
  %2225 = vmatprep.mubr.bf16.mxu0 0
  %2226 = vmatmul.mubr.bf16.gmra.mrb[0].mxu0 %v2188
  %v2227 = vpop.f32.mrb[0].mxu0
  %v2228 = vadd.f32 0.0, %v2227
  %v2229 = vpop.f32.mrb[0].mxu0
  %v2230 = vpop.f32.mrb[0].mxu0
  %v2231 = vpop.f32.mrb[0].mxu0
  %2232 = vdwg.mxu0
  %2233 = vrot.lane.b32.xlu0 %v1354, 72
  %v2234 = vpop.permute.xlu0 %2233
  %v2236 = vsel %vm162, %v2184, 0
  %v2239 = vsel %vm291, %v2234, 0
  %2241 = vmatprep.subr.bf16.mxu0 0
  %2242 = vmatpush1.bf16.msra.mxu0 %v2239
  %2243 = vmatprep.subr.bf16.mxu0 0
  %2244 = vmatpush1.bf16.msra.mxu0 0
  %2245 = vmatprep.subr.bf16.mxu0 0
  %2246 = vmatpush1.bf16.msra.mxu0 0
  %2247 = vmatprep.subr.bf16.mxu0 0
  %2248 = vmatpush1.bf16.msra.mxu0 0
  %2249 = vmatprep.subr.bf16.mxu0 0
  %2250 = vmatpush1.bf16.msra.mxu0 0
  %2251 = vmatprep.subr.bf16.mxu0 0
  %2252 = vmatpush1.bf16.msra.mxu0 0
  %2253 = vmatprep.subr.bf16.mxu0 0
  %2254 = vmatpush1.bf16.msra.mxu0 0
  %2255 = vmatprep.subr.bf16.mxu0 0
  %2256 = vmatpush1.bf16.msra.mxu0 0
  %2257 = vmatprep.subr.bf16.mxu0 0
  %2258 = vmatpush1.bf16.msra.mxu0 0
  %2259 = vmatprep.subr.bf16.mxu0 0
  %2260 = vmatpush1.bf16.msra.mxu0 0
  %2261 = vmatprep.subr.bf16.mxu0 0
  %2262 = vmatpush1.bf16.msra.mxu0 0
  %2263 = vmatprep.subr.bf16.mxu0 0
  %2264 = vmatpush1.bf16.msra.mxu0 0
  %2265 = vmatprep.subr.bf16.mxu0 0
  %2266 = vmatpush1.bf16.msra.mxu0 0
  %2267 = vmatprep.subr.bf16.mxu0 0
  %2268 = vmatpush1.bf16.msra.mxu0 0
  %2269 = vmatprep.subr.bf16.mxu0 0
  %2270 = vmatpush1.bf16.msra.mxu0 0
  %2271 = vmatprep.subr.bf16.mxu0 0
  %2272 = vmatpush1.bf16.msra.mxu0 0
  %2273 = vmatprep.mubr.bf16.mxu0 0
  %2274 = vmatmul.mubr.bf16.gmra.mrb[0].mxu0 %v2236
  %v2275 = vpop.f32.mrb[0].mxu0
  %v2276 = vadd.f32 0.0, %v2275
  %v2277 = vpop.f32.mrb[0].mxu0
  %v2278 = vpop.f32.mrb[0].mxu0
  %v2279 = vpop.f32.mrb[0].mxu0
  %2280 = vdwg.mxu0
  %2283 = vrot.lane.b32.xlu0 %v2228, 24
  %v2284 = vpop.permute.xlu0 %2283
  %2285 = vrot.lane.b32.xlu0 %v2276, 24
  %v2286 = vpop.permute.xlu0 %2285
  %2289 = vst.msk [vmem:[#allocation2] sm:$0xff] %vm1087, %v2284
  %2290 = vst.msk [vmem:[#allocation2 + $0x8] sm:$0xff] %vm1087, %v2286
  %v2291 = vld [vmem:[#allocation2] sm:$0xff]
  %v2292 = vld [vmem:[#allocation2 + $0x8] sm:$0xff]
  %v2293 = vpack.c.bf16 %v2292, %v2291
  %v2294 = vld [vmem:[%s14] sm:$0xf]
  %v2295 = vld [vmem:[%s14 + $0x4] sm:$0xf]
  %v2296 = vld [vmem:[%s14 + $0x8] sm:$0xf]
  %v2297 = vld [vmem:[%s14 + $0xc] sm:$0xf]
  %v2298 = vld [vmem:[%s15] sm:$0x1]
  %v2300 = vlaneseq
  %v2301 = vshrl.u32 %v2300, 7
  %v2302 = vsub.s32 0, %v2301
  %v2303 = vrot.slane %v2298, %v2302
  %v2309 = vunpack.c.l.b16 %v2294
  %v2310 = vunpack.c.l.b16 %v2295
  %v2311 = vunpack.c.l.b16 %v2296
  %v2312 = vunpack.c.l.b16 %v2297
  %v2313 = vpack.c.b16 %v2310, %v2309
  %v2314 = vpack.c.b16 %v2312, %v2311
  %v2318 = vsel %vm110, %v2293, 0
  %2320 = vmatprep.subr.bf16.mxu0 0
  %2321 = vmatpush1.bf16.msra.mxu0 %v2313
  %2322 = vmatprep.subr.bf16.mxu0 0
  %2323 = vmatpush1.bf16.msra.mxu0 %v2314
  %2324 = vmatprep.subr.bf16.mxu0 0
  %2325 = vmatpush1.bf16.msra.mxu0 0
  %2326 = vmatprep.subr.bf16.mxu0 0
  %2327 = vmatpush1.bf16.msra.mxu0 0
  %2328 = vmatprep.subr.bf16.mxu0 0
  %2329 = vmatpush1.bf16.msra.mxu0 0
  %2330 = vmatprep.subr.bf16.mxu0 0
  %2331 = vmatpush1.bf16.msra.mxu0 0
  %2332 = vmatprep.subr.bf16.mxu0 0
  %2333 = vmatpush1.bf16.msra.mxu0 0
  %2334 = vmatprep.subr.bf16.mxu0 0
  %2335 = vmatpush1.bf16.msra.mxu0 0
  %2336 = vmatprep.subr.bf16.mxu0 0
  %2337 = vmatpush1.bf16.msra.mxu0 0
  %2338 = vmatprep.subr.bf16.mxu0 0
  %2339 = vmatpush1.bf16.msra.mxu0 0
  %2340 = vmatprep.subr.bf16.mxu0 0
  %2341 = vmatpush1.bf16.msra.mxu0 0
  %2342 = vmatprep.subr.bf16.mxu0 0
  %2343 = vmatpush1.bf16.msra.mxu0 0
  %2344 = vmatprep.subr.bf16.mxu0 0
  %2345 = vmatpush1.bf16.msra.mxu0 0
  %2346 = vmatprep.subr.bf16.mxu0 0
  %2347 = vmatpush1.bf16.msra.mxu0 0
  %2348 = vmatprep.subr.bf16.mxu0 0
  %2349 = vmatpush1.bf16.msra.mxu0 0
  %2350 = vmatprep.subr.bf16.mxu0 0
  %2351 = vmatpush1.bf16.msra.mxu0 0
  %2352 = vmatprep.mubr.bf16.mxu0 0
  %2353 = vmatmul.mubr.bf16.gmra.mrb[0].mxu0 %v2318
  %v2354 = vpop.f32.mrb[0].mxu0
  %v2355 = vadd.f32 %v2303, %v2354
  %v2356 = vpop.f32.mrb[0].mxu0
  %v2357 = vpop.f32.mrb[0].mxu0
  %v2358 = vadd.f32 %v2303, %v2357
  %v2359 = vpop.f32.mrb[0].mxu0
  %2360 = vdwg.mxu0
  %v2361 = vadd.f32 %v1205, %v2355
  %v2362 = vadd.f32 %v1206, %v2358
  %v2363 = vld [vmem:[%s16] sm:$0x1]
  %v2364 = vld [vmem:[%s17] sm:$0x1]
  %v2365 = vsel %vm110, %v2361, 0.0
  %2366 = vadd.xlane.f32.xlu0 %v2365
  %v2367 = vpop.xlane.xlu0 %2366
  %v2368 = vsel %vm110, %v2362, 0.0
  %2369 = vadd.xlane.f32.xlu0 %v2368
  %v2370 = vpop.xlane.xlu0 %2369
  %v2371 = vmul.f32 %v2367, %v1170
  %v2372 = vmul.f32 %v2370, %v1170
  %v2373 = vsub.f32 %v2361, %v2371
  %v2374 = vsub.f32 %v2362, %v2372
  %v2375 = vmul.f32 %v2373, %v2373
  %v2376 = vmul.f32 %v2374, %v2374
  %v2377 = vsel %vm110, %v2375, 0.0
  %2378 = vadd.xlane.f32.xlu0 %v2377
  %v2379 = vpop.xlane.xlu0 %2378
  %v2380 = vsel %vm110, %v2376, 0.0
  %2381 = vadd.xlane.f32.xlu0 %v2380
  %v2382 = vpop.xlane.xlu0 %2381
  %v2383 = vmul.f32 %v2379, %v1170
  %v2384 = vmul.f32 %v2382, %v1170
  %v2385 = vadd.f32 %v2383, 1e-05
  %v2386 = vadd.f32 %v2384, 1e-05
  %v2387 = vrsqrt.pop %v2385
  %v2388 = vrsqrt.pop %v2386
  %v2389 = vmul.f32 %v2373, %v2387
  %v2390 = vmul.f32 %v2374, %v2388
  %v2392 = vlaneseq
  %v2393 = vshrl.u32 %v2392, 7
  %v2394 = vsub.s32 0, %v2393
  %v2395 = vrot.slane %v2363, %v2394
  %v2397 = vmul.f32 %v2389, %v2395
  %v2398 = vmul.f32 %v2390, %v2395
  %v2400 = vlaneseq
  %v2401 = vshrl.u32 %v2400, 7
  %v2402 = vsub.s32 0, %v2401
  %v2403 = vrot.slane %v2364, %v2402
  %v2405 = vadd.f32 %v2397, %v2403
  %v2406 = vadd.f32 %v2398, %v2403
  %v2407 = vpack.c.bf16 %v2406, %v2405
  %v2408 = vld [vmem:[%s18] sm:$0xf]
  %v2409 = vld [vmem:[%s18 + $0x4] sm:$0xf]
  %v2410 = vld [vmem:[%s18 + $0x8] sm:$0xf]
  %v2411 = vld [vmem:[%s18 + $0xc] sm:$0xf]
  %v2412 = vld [vmem:[%s19] sm:$0x1]
  %v2414 = vlaneseq
  %v2415 = vshrl.u32 %v2414, 7
  %v2416 = vsub.s32 0, %v2415
  %v2417 = vrot.slane %v2412, %v2416
  %v2423 = vunpack.c.l.b16 %v2408
  %v2424 = vunpack.c.l.b16 %v2409
  %v2425 = vunpack.c.l.b16 %v2410
  %v2426 = vunpack.c.l.b16 %v2411
  %v2427 = vpack.c.b16 %v2424, %v2423
  %v2428 = vpack.c.b16 %v2426, %v2425
  %v2432 = vsel %vm110, %v2407, 0
  %2434 = vmatprep.subr.bf16.mxu0 0
  %2435 = vmatpush1.bf16.msra.mxu0 %v2427
  %2436 = vmatprep.subr.bf16.mxu0 0
  %2437 = vmatpush1.bf16.msra.mxu0 %v2428
  %2438 = vmatprep.subr.bf16.mxu0 0
  %2439 = vmatpush1.bf16.msra.mxu0 0
  %2440 = vmatprep.subr.bf16.mxu0 0
  %2441 = vmatpush1.bf16.msra.mxu0 0
  %2442 = vmatprep.subr.bf16.mxu0 0
  %2443 = vmatpush1.bf16.msra.mxu0 0
  %2444 = vmatprep.subr.bf16.mxu0 0
  %2445 = vmatpush1.bf16.msra.mxu0 0
  %2446 = vmatprep.subr.bf16.mxu0 0
  %2447 = vmatpush1.bf16.msra.mxu0 0
  %2448 = vmatprep.subr.bf16.mxu0 0
  %2449 = vmatpush1.bf16.msra.mxu0 0
  %2450 = vmatprep.subr.bf16.mxu0 0
  %2451 = vmatpush1.bf16.msra.mxu0 0
  %2452 = vmatprep.subr.bf16.mxu0 0
  %2453 = vmatpush1.bf16.msra.mxu0 0
  %2454 = vmatprep.subr.bf16.mxu0 0
  %2455 = vmatpush1.bf16.msra.mxu0 0
  %2456 = vmatprep.subr.bf16.mxu0 0
  %2457 = vmatpush1.bf16.msra.mxu0 0
  %2458 = vmatprep.subr.bf16.mxu0 0
  %2459 = vmatpush1.bf16.msra.mxu0 0
  %2460 = vmatprep.subr.bf16.mxu0 0
  %2461 = vmatpush1.bf16.msra.mxu0 0
  %2462 = vmatprep.subr.bf16.mxu0 0
  %2463 = vmatpush1.bf16.msra.mxu0 0
  %2464 = vmatprep.subr.bf16.mxu0 0
  %2465 = vmatpush1.bf16.msra.mxu0 0
  %2466 = vmatprep.mubr.bf16.mxu0 0
  %2467 = vmatmul.mubr.bf16.gmra.mrb[0].mxu0 %v2432
  %v2468 = vpop.f32.mrb[0].mxu0
  %v2469 = vadd.f32 %v2417, %v2468
  %v2470 = vpop.f32.mrb[0].mxu0
  %v2471 = vpop.f32.mrb[0].mxu0
  %v2472 = vadd.f32 %v2417, %v2471
  %v2473 = vpop.f32.mrb[0].mxu0
  %2474 = vdwg.mxu0
  %v2475 = vmax.f32 %v2469, 0.0
  %v2476 = vmax.f32 %v2472, 0.0
  %v2477 = vpack.c.bf16 %v2476, %v2475
  %v2478 = vld [vmem:[%s20] sm:$0xf]
  %v2479 = vld [vmem:[%s20 + $0x4] sm:$0xf]
  %v2480 = vld [vmem:[%s20 + $0x8] sm:$0xf]
  %v2481 = vld [vmem:[%s20 + $0xc] sm:$0xf]
  %v2482 = vld [vmem:[%s20 + $0x10] sm:$0xf]
  %v2483 = vld [vmem:[%s20 + $0x14] sm:$0xf]
  %v2484 = vld [vmem:[%s20 + $0x18] sm:$0xf]
  %v2485 = vld [vmem:[%s20 + $0x1c] sm:$0xf]
  %v2486 = vld [vmem:[%s21] sm:$0x1]
  %v2488 = vlaneseq
  %v2489 = vshrl.u32 %v2488, 7
  %v2490 = vsub.s32 0, %v2489
  %v2491 = vrot.slane %v2486, %v2490
  %v2501 = vunpack.c.l.b16 %v2478
  %v2502 = vunpack.c.l.b16 %v2479
  %v2503 = vunpack.c.l.b16 %v2480
  %v2504 = vunpack.c.l.b16 %v2481
  %v2505 = vunpack.c.l.b16 %v2482
  %v2506 = vunpack.c.l.b16 %v2483
  %v2507 = vunpack.c.l.b16 %v2484
  %v2508 = vunpack.c.l.b16 %v2485
  %v2509 = vpack.c.b16 %v2502, %v2501
  %v2510 = vpack.c.b16 %v2504, %v2503
  %v2511 = vpack.c.b16 %v2506, %v2505
  %v2512 = vpack.c.b16 %v2508, %v2507
  %vm2517 = vcmask 523264
  %v2519 = vsel %vm2517, %v2477, 0
  %2521 = vmatprep.subr.bf16.mxu0 0
  %2522 = vmatpush1.bf16.msra.mxu0 %v2509
  %2523 = vmatprep.subr.bf16.mxu0 0
  %2524 = vmatpush1.bf16.msra.mxu0 %v2510
  %2525 = vmatprep.subr.bf16.mxu0 0
  %2526 = vmatpush1.bf16.msra.mxu0 %v2511
  %2527 = vmatprep.subr.bf16.mxu0 0
  %2528 = vmatpush1.bf16.msra.mxu0 %v2512
  %2529 = vmatprep.subr.bf16.mxu0 0
  %2530 = vmatpush1.bf16.msra.mxu0 0
  %2531 = vmatprep.subr.bf16.mxu0 0
  %2532 = vmatpush1.bf16.msra.mxu0 0
  %2533 = vmatprep.subr.bf16.mxu0 0
  %2534 = vmatpush1.bf16.msra.mxu0 0
  %2535 = vmatprep.subr.bf16.mxu0 0
  %2536 = vmatpush1.bf16.msra.mxu0 0
  %2537 = vmatprep.subr.bf16.mxu0 0
  %2538 = vmatpush1.bf16.msra.mxu0 0
  %2539 = vmatprep.subr.bf16.mxu0 0
  %2540 = vmatpush1.bf16.msra.mxu0 0
  %2541 = vmatprep.subr.bf16.mxu0 0
  %2542 = vmatpush1.bf16.msra.mxu0 0
  %2543 = vmatprep.subr.bf16.mxu0 0
  %2544 = vmatpush1.bf16.msra.mxu0 0
  %2545 = vmatprep.subr.bf16.mxu0 0
  %2546 = vmatpush1.bf16.msra.mxu0 0
  %2547 = vmatprep.subr.bf16.mxu0 0
  %2548 = vmatpush1.bf16.msra.mxu0 0
  %2549 = vmatprep.subr.bf16.mxu0 0
  %2550 = vmatpush1.bf16.msra.mxu0 0
  %2551 = vmatprep.subr.bf16.mxu0 0
  %2552 = vmatpush1.bf16.msra.mxu0 0
  %2553 = vmatprep.mubr.bf16.mxu0 0
  %2554 = vmatmul.mubr.bf16.gmra.mrb[0].mxu0 %v2519
  %v2555 = vpop.f32.mrb[0].mxu0
  %v2556 = vadd.f32 %v2491, %v2555
  %v2557 = vpop.f32.mrb[0].mxu0
  %v2558 = vpop.f32.mrb[0].mxu0
  %v2559 = vadd.f32 %v2491, %v2558
  %v2560 = vpop.f32.mrb[0].mxu0
  %2561 = vdwg.mxu0
  %v2562 = vadd.f32 %v2405, %v2556
  %v2563 = vadd.f32 %v2406, %v2559
  %v2564 = vld [vmem:[%s22] sm:$0x1]
  %v2565 = vld [vmem:[%s23] sm:$0x1]
  %v2566 = vsel %vm110, %v2562, 0.0
  %2567 = vadd.xlane.f32.xlu0 %v2566
  %v2568 = vpop.xlane.xlu0 %2567
  %v2569 = vsel %vm110, %v2563, 0.0
  %2570 = vadd.xlane.f32.xlu0 %v2569
  %v2571 = vpop.xlane.xlu0 %2570
  %v2572 = vmul.f32 %v2568, %v1170
  %v2573 = vmul.f32 %v2571, %v1170
  %v2574 = vsub.f32 %v2562, %v2572
  %v2575 = vsub.f32 %v2563, %v2573
  %v2576 = vmul.f32 %v2574, %v2574
  %v2577 = vmul.f32 %v2575, %v2575
  %v2578 = vsel %vm110, %v2576, 0.0
  %2579 = vadd.xlane.f32.xlu0 %v2578
  %v2580 = vpop.xlane.xlu0 %2579
  %v2581 = vsel %vm110, %v2577, 0.0
  %2582 = vadd.xlane.f32.xlu0 %v2581
  %v2583 = vpop.xlane.xlu0 %2582
  %v2584 = vmul.f32 %v2580, %v1170
  %v2585 = vmul.f32 %v2583, %v1170
  %v2586 = vadd.f32 %v2584, 1e-05
  %v2587 = vadd.f32 %v2585, 1e-05
  %v2588 = vrsqrt.pop %v2586
  %v2589 = vrsqrt.pop %v2587
  %v2590 = vmul.f32 %v2574, %v2588
  %v2591 = vmul.f32 %v2575, %v2589
  %v2593 = vlaneseq
  %v2594 = vshrl.u32 %v2593, 7
  %v2595 = vsub.s32 0, %v2594
  %v2596 = vrot.slane %v2564, %v2595
  %v2598 = vmul.f32 %v2590, %v2596
  %v2599 = vmul.f32 %v2591, %v2596
  %v2601 = vlaneseq
  %v2602 = vshrl.u32 %v2601, 7
  %v2603 = vsub.s32 0, %v2602
  %v2604 = vrot.slane %v2565, %v2603
  %v2606 = vadd.f32 %v2598, %v2604
  %v2607 = vadd.f32 %v2599, %v2604
  %v2608 = vpack.c.bf16 %v2607, %v2606
  %v2610 = vunpack.c.l.b16 %v2608
  %v2611 = vunpack.c.h.b16 %v2608
  %v2612 = vpack.c.b16 %v2610, %v2610
  %v2613 = vpack.c.b16 %v2611, %v2611
  %vm2616 = vcmask 257024
  %2617 = vst.msk [vmem:[%s24] sm:$0xf] %vm2616, %v2612
  %2618 = vst.msk [vmem:[%s24 + $0x4] sm:$0xf] %vm2616, %v2613
  // Predicated region
  $region98: #{_lambda_.7} parent=0 // pred_check
    _
  $region99: #{_lambda_.7} parent=0 // pred_check_branch
    %2620 = sbr.rel (0) target = $region101
  $region100: #{_lambda_.7} parent=0 // pred_region
    _
  $region101: #{_lambda_.7} parent=0 // pred_fallthru
    _
  // Predicated region
  $region102: #{_lambda_.7} parent=0 // pred_check
    _
  $region103: #{_lambda_.7} parent=0 // pred_check_branch
    %2622 = sbr.rel (0) target = $region105
  $region104: #{_lambda_.7} parent=0 // pred_region
    _
  $region105: #{_lambda_.7} parent=0 // pred_fallthru
    _

</llo_original>
